<compile_context>
chip_gen: v5e
topology: v5e:2x2
jax: 0.10.0
libtpu: 0.0.40
codegen_flags: <defaults>
</compile_context>

<pallas_src>
import functools
import re

import jax
import jax.numpy as jnp
import numpy as np
from jax import lax
from jax.experimental import pallas as pl
from jax.experimental.pallas import tpu as pltpu

LANE = 128
BF16_SUBLANE = 16  # bf16 vregs pack [16, 128]; pad batch to 16 for dense MXU LHS feed


def _round_up(x, m):
    return (x + m - 1) // m * m


# ----------------------------------------------------------------------------
# Generation-aware configuration.
# ----------------------------------------------------------------------------
def _tpu_generation():
    """Best-effort TPU generation from device_kind (e.g. 'TPU v6e' -> 6)."""
    try:
        kind = jax.devices()[0].device_kind.lower()
    except Exception:
        return 0
    m = re.search(r"v(\d+)", kind)
    return int(m.group(1)) if m else 0


def _gen_config():
    gen = _tpu_generation()
    if gen >= 7:
        vmem_limit = 56 * 1024 * 1024    # headroom below v7x's 64 MiB physical VMEM
        k_round = 256                    # 2x256^2 MXU: round K/N padding to 256
    elif gen == 6:
        vmem_limit = 100 * 1024 * 1024   # 128 MiB physical
        k_round = 256
    elif gen == 5:
        vmem_limit = 100 * 1024 * 1024   # 128 MiB physical
        k_round = 128                    # 4x128^2 MXU is already matched at 128
    else:
        vmem_limit = 32 * 1024 * 1024    # unknown / older: stay conservative
        k_round = 128
    return gen, vmem_limit, k_round


# ----------------------------------------------------------------------------
# Fused LSTM kernel: input projection (time-block matmul) + unrolled recurrence.
# Grid = (batch blocks [parallel], time blocks [arbitrary, innermost]).
# ----------------------------------------------------------------------------
def _lstm_fused_kernel(x_ref, wih_ref, bias_ref, whh_ref, out_ref,
                       h_ref, c_ref, pre_ref, *, unroll):
    """One (batch-block, time-block) grid step of a single-layer LSTM.

    x_ref    : (t_blk, b_blk, in_p) bf16  -- this time block's inputs
    wih_ref  : (in_p, 4*hp)         bf16  -- resident input-projection weight
    bias_ref : (1, 4*hp)            f32   -- b_ih + b_hh, per-gate padded
    whh_ref  : (hp, 4*hp)           bf16  -- resident recurrent weight
    out_ref  : (t_blk, b_blk, hp)   bf16  -- hidden states for this time block
    h_ref/c_ref : (b_blk, hp)       f32   -- persistent state across time blocks
    pre_ref  : (t_blk, b_blk, 4*hp) f32   -- per-block pregates (VMEM scratch)
    """
    t_idx = pl.program_id(1)
    hp = whh_ref.shape[0]
    t_blk, b_blk, in_p = x_ref.shape

    @pl.when(t_idx == 0)
    def _():
        # Zero initial hidden state. Time is the innermost grid axis, so every batch
        # block sees t_idx == 0 first; keep it that way if the grid is reordered.
        h_ref[...] = jnp.zeros_like(h_ref)
        c_ref[...] = jnp.zeros_like(c_ref)

    # Input projection for the whole time block in one MXU-friendly matmul
    # (M = t_blk * b_blk rows), bias folded in, f32 accumulation.
    x2 = x_ref[...].reshape(t_blk * b_blk, in_p)
    pre_ref[...] = (
        jnp.dot(x2, wih_ref[...], preferred_element_type=jnp.float32)
        + bias_ref[...]
    ).reshape(t_blk, b_blk, 4 * hp)

    def step(i, carry):
        h, c = carry
        gates = pre_ref[i] + jnp.dot(
            h.astype(whh_ref.dtype), whh_ref[...],
            preferred_element_type=jnp.float32,
        )  # (b_blk, 4*hp) f32, PyTorch gate order [i, f, g, o]
        i_g = jax.nn.sigmoid(gates[:, 0 * hp:1 * hp])
        f_g = jax.nn.sigmoid(gates[:, 1 * hp:2 * hp])
        g_g = jnp.tanh(gates[:, 2 * hp:3 * hp])
        o_g = jax.nn.sigmoid(gates[:, 3 * hp:4 * hp])
        c_new = f_g * c + i_g * g_g
        h_new = o_g * jnp.tanh(c_new)
        out_ref[i] = h_new.astype(out_ref.dtype)
        return (h_new, c_new)

    h, c = lax.fori_loop(0, t_blk, step, (h_ref[...], c_ref[...]), unroll=unroll)
    h_ref[...] = h
    c_ref[...] = c
    # TODO(synk): for very large H on v7x (bf16 weights > ~24 MiB), K/N-tile the
    # resident weights with an accumulator instead of keeping them whole, and/or drive
    # the MXU weight-stationary (pltpu.matmul_push_rhs / matmul_acc_lhs) at small batch.


def _lstm_layer_call(x_pad, p, *, t_blk, b_blk, vmem_limit, single_buffer_weights):
    s_p, b_p, in_p = x_pad.shape
    hp = p["hp"]
    g4 = 4 * hp
    # Bound the unroll at large Hp: full unroll keeps too many (b_blk, 4hp) f32
    # temporaries live and flips the kernel into a spill-bound regime.
    unroll = True if hp <= 512 else 2

    def weight_spec(shape):
        if single_buffer_weights:
            # Constant-index resident weight: single-buffer it.  Default double
            # buffering only duplicates it in VMEM (fatal for large H on v7x).
            return pl.BlockSpec(shape, lambda b, t: (0, 0),
                                pipeline_mode=pl.Buffered(1))
        return pl.BlockSpec(shape, lambda b, t: (0, 0))

    grid = (b_p // b_blk, s_p // t_blk)
    return pl.pallas_call(
        functools.partial(_lstm_fused_kernel, unroll=unroll),
        out_shape=jax.ShapeDtypeStruct((s_p, b_p, hp), jnp.bfloat16),
        grid_spec=pltpu.PrefetchScalarGridSpec(
            num_scalar_prefetch=0,
            grid=grid,
            in_specs=[
                pl.BlockSpec((t_blk, b_blk, in_p), lambda b, t: (t, b, 0)),
                weight_spec((in_p, g4)),
                pl.BlockSpec((1, g4), lambda b, t: (0, 0)),
                weight_spec((hp, g4)),
            ],
            out_specs=pl.BlockSpec((t_blk, b_blk, hp), lambda b, t: (t, b, 0)),
            scratch_shapes=[
                pltpu.VMEM((b_blk, hp), jnp.float32),          # h carry
                pltpu.VMEM((b_blk, hp), jnp.float32),          # c carry
                pltpu.VMEM((t_blk, b_blk, g4), jnp.float32),   # time-block pregates
            ],
        ),
        compiler_params=pltpu.CompilerParams(
            # Batch blocks independent -> parallel (megacore sharding on v7x);
            # time is the true recurrence -> arbitrary, kept innermost so the
            # persistent (h, c) scratch reset/carry per batch block stays correct.
            dimension_semantics=("parallel", "arbitrary"),
            vmem_limit_bytes=vmem_limit,
        ),
    )(x_pad, p["wih_t"], p["bias"], p["whh_t"])


_SINGLE_BUFFER_WEIGHTS = [True]  # flipped once if the runtime rejects pl.Buffered(1)


def lstm_layer_pallas(x_pad, p, *, t_blk, b_blk, vmem_limit):
    """x_pad: (S_p, B_p, in_p) bf16 padded slab -> (S_p, B_p, hp) bf16 padded slab."""
    assert x_pad.shape[-1] == p["in_p"], (x_pad.shape, p["in_p"])
    if _SINGLE_BUFFER_WEIGHTS[0]:
        try:
            return _lstm_layer_call(x_pad, p, t_blk=t_blk, b_blk=b_blk,
                                    vmem_limit=vmem_limit,
                                    single_buffer_weights=True)
        except Exception:
            # Older runtimes may not support single-buffered pipeline_mode; fall back
            # to default (double-buffered) weights once and remember the decision.
            _SINGLE_BUFFER_WEIGHTS[0] = False
    return _lstm_layer_call(x_pad, p, t_blk=t_blk, b_blk=b_blk,
                            vmem_limit=vmem_limit, single_buffer_weights=False)


# ----------------------------------------------------------------------------
# Tile-size selection (VMEM-budget driven, no magic row caps).
# ----------------------------------------------------------------------------
def _choose_t_blk(seq_len, in_p, hp, b_blk, vmem_limit, max_t_blk=32):
    weight_bytes = (in_p + hp) * 4 * hp * 2            # bf16 wih_t + whh_t (single copy)
    state_bytes = 2 * b_blk * hp * 4                   # f32 (h, c) scratch
    budget = int(vmem_limit * 0.7) - weight_bytes - state_bytes
    per_step = b_blk * (2 * in_p * 2                   # x block, double-buffered bf16
                        + 2 * hp * 2                   # out block, double-buffered bf16
                        + 4 * hp * 4)                  # f32 pregate scratch
    t_blk = min(max_t_blk, max(8, _round_up(seq_len, 8)))
    while t_blk > 8 and t_blk * per_step > budget:
        t_blk //= 2
    return max(t_blk, 8)


def _choose_b_blk(b_p, gen):
    # On v7x (2 TensorCores) split the batch so the "parallel" grid axis has
    # extent >= 2; keep each block a multiple of 16 (bf16 sublane packing).
    if gen >= 7 and b_p % 32 == 0:
        return b_p // 2
    return b_p


# ----------------------------------------------------------------------------
# Parameter construction / one-time preparation.
# ----------------------------------------------------------------------------
def _layer_sizes(embed_sz, n_hidden, n_layers):
    sizes = []
    for l in range(n_layers):
        if l == 0:
            sizes.append((embed_sz, n_hidden))
        elif l == n_layers - 1:
            sizes.append((n_hidden, embed_sz))
        else:
            sizes.append((n_hidden, n_hidden))
    return sizes


def init_rnn_core_params(key, vocab_sz, embed_sz, n_hidden, n_layers, pad_idx):
    init_range = 0.1
    keys = jax.random.split(key, 1 + 4 * n_layers)
    # RNNCore._init overwrites the whole embedding weight (incl. pad row) with U(-0.1, 0.1).
    emb = jax.random.uniform(
        keys[0], (vocab_sz, embed_sz), jnp.float32, -init_range, init_range)
    layers = []
    for l, (in_sz, hid) in enumerate(_layer_sizes(embed_sz, n_hidden, n_layers)):
        k = 1.0 / np.sqrt(hid)  # PyTorch default LSTM init: U(-1/sqrt(H), 1/sqrt(H))
        kw = keys[1 + 4 * l: 1 + 4 * (l + 1)]
        layers.append(dict(
            w_ih=jax.random.uniform(kw[0], (4 * hid, in_sz), jnp.float32, -k, k),
            w_hh=jax.random.uniform(kw[1], (4 * hid, hid), jnp.float32, -k, k),
            b_ih=jax.random.uniform(kw[2], (4 * hid,), jnp.float32, -k, k),
            b_hh=jax.random.uniform(kw[3], (4 * hid,), jnp.float32, -k, k),
        ))
    return emb, layers


def _pad_gate_blocks(w, hidden, hp):
    """w: (4*hidden, cols) -> (4*hp, cols), each gate block padded separately."""
    cols = w.shape[1]
    w4 = w.reshape(4, hidden, cols)
    w4 = jnp.pad(w4, ((0, 0), (0, hp - hidden), (0, 0)))
    return w4.reshape(4 * hp, cols)


def prepare_layer_params(w_ih, w_hh, b_ih, b_hh, *, k_round=LANE,
                         compute_dtype=jnp.bfloat16):
    """One-time prep: transpose, per-gate pad to lane/MXU geometry, cast to bf16."""
    hidden = w_hh.shape[1]
    in_sz = w_ih.shape[1]
    hp = _round_up(hidden, k_round)
    in_p = _round_up(in_sz, k_round)

    wih = _pad_gate_blocks(w_ih.astype(jnp.float32), hidden, hp)       # (4hp, in_sz)
    wih = jnp.pad(wih, ((0, 0), (0, in_p - in_sz)))                     # (4hp, in_p)
    whh = _pad_gate_blocks(w_hh.astype(jnp.float32), hidden, hp)       # (4hp, hidden)
    whh = jnp.pad(whh, ((0, 0), (0, hp - hidden)))                      # (4hp, hp)
    bias = (b_ih + b_hh).astype(jnp.float32).reshape(4, hidden)
    bias = jnp.pad(bias, ((0, 0), (0, hp - hidden))).reshape(1, 4 * hp)

    return dict(
        hidden=hidden, in_sz=in_sz, hp=hp, in_p=in_p,
        wih_t=jnp.transpose(wih).astype(compute_dtype),  # (in_p, 4hp) bf16
        whh_t=jnp.transpose(whh).astype(compute_dtype),  # (hp,  4hp) bf16
        bias=bias,                                       # (1,   4hp) f32
    )


def prepare_embedding(emb, in_p0, compute_dtype=jnp.bfloat16):
    """Pad the embedding feature dim once and store bf16: gathered activations are
    kernel-ready with no per-layer f32 pad+cast HBM pass."""
    vocab, embed_sz = emb.shape
    return jnp.pad(emb.astype(jnp.float32),
                   ((0, 0), (0, in_p0 - embed_sz))).astype(compute_dtype)


# ----------------------------------------------------------------------------
# Full-module forward.
# ----------------------------------------------------------------------------
def rnn_core_forward(tokens, emb_padded, prepared_layers, *, max_t_blk=32,
                     out_dtype=jnp.float32):
    """tokens: (seq_len, bs) int32 -> list of per-layer outputs [(S, B, H_l)],
    matching RNNCore.forward with zero-initialized hidden state."""
    gen, vmem_limit, _ = _gen_config()
    seq_len, bs = tokens.shape

    # Embedding lookup: gather straight into the padded bf16 activation layout.
    # TODO(synk): a DMA-gather Pallas kernel could fuse this into layer 0; kept as
    # XLA glue since a gather has no clean rectangular BlockSpec.
    x = jnp.take(emb_padded, tokens, axis=0)            # (S, B, in_p0) bf16

    b_p = _round_up(bs, BF16_SUBLANE)
    b_blk = _choose_b_blk(b_p, gen)
    t_blk = min(
        _choose_t_blk(seq_len, p["in_p"], p["hp"], b_blk, vmem_limit,
                      max_t_blk=max_t_blk)
        for p in prepared_layers
    )
    s_p = _round_up(seq_len, t_blk)

    # Pad seq/batch once (bf16, cheap); the feature dim is already padded.
    x = jnp.pad(x, ((0, s_p - seq_len), (0, b_p - bs), (0, 0)))

    raw_outputs = []
    for p in prepared_layers:
        # The padded bf16 slab flows layer-to-layer unchanged; only the user-facing
        # per-layer outputs are sliced / cast.
        x = lstm_layer_pallas(x, p, t_blk=t_blk, b_blk=b_blk, vmem_limit=vmem_limit)
        raw_outputs.append(x[:seq_len, :bs, :p["hidden"]].astype(out_dtype))
    return raw_outputs


# ----------------------------------------------------------------------------
# Pure-JAX reference mirroring the kernel recipe (bf16 activations/weights, f32
# accumulation & gate math, f32 (h, c) carry, bf16 layer outputs).
# ----------------------------------------------------------------------------
def _lstm_layer_ref(x_bf16, w_ih, w_hh, b_ih, b_hh, compute_dtype=jnp.bfloat16):
    hidden = w_hh.shape[1]
    bs = x_bf16.shape[1]
    bias = (b_ih + b_hh).astype(jnp.float32)
    wih_t = w_ih.T.astype(compute_dtype)
    whh_t = w_hh.T.astype(compute_dtype)

    pre = jnp.dot(x_bf16, wih_t, preferred_element_type=jnp.float32) + bias

    def step(carry, g_x):
        h, c = carry
        g = g_x + jnp.dot(h.astype(compute_dtype), whh_t,
                          preferred_element_type=jnp.float32)
        i = jax.nn.sigmoid(g[:, 0 * hidden:1 * hidden])
        f = jax.nn.sigmoid(g[:, 1 * hidden:2 * hidden])
        gg = jnp.tanh(g[:, 2 * hidden:3 * hidden])
        o = jax.nn.sigmoid(g[:, 3 * hidden:4 * hidden])
        c = f * c + i * gg
        h = o * jnp.tanh(c)
        return (h, c), h.astype(compute_dtype)

    h0 = jnp.zeros((bs, hidden), jnp.float32)
    c0 = jnp.zeros((bs, hidden), jnp.float32)
    _, ys = lax.scan(step, (h0, c0), pre)
    return ys  # (S, B, H) bf16


def rnn_core_forward_ref(tokens, emb, raw_layers, out_dtype=jnp.float32):
    x = jnp.take(emb, tokens, axis=0).astype(jnp.bfloat16)
    outs = []
    for p in raw_layers:
        x = _lstm_layer_ref(x, p["w_ih"], p["w_hh"], p["b_ih"], p["b_hh"])
        outs.append(x.astype(out_dtype))
    return outs


if __name__ == "__main__":
    vocab_sz, embed_sz, n_hidden, n_layers, pad_idx = 50, 16, 32, 3, 0
    seq_len, bs = 16, 2

    key = jax.random.PRNGKey(0)
    k_tok, k_par = jax.random.split(key)
    tokens = jax.random.randint(k_tok, (seq_len, bs), 0, vocab_sz, dtype=jnp.int32)

    emb, raw_layers = init_rnn_core_params(
        k_par, vocab_sz, embed_sz, n_hidden, n_layers, pad_idx)

    _, _, k_round = _gen_config()
    prepared_layers = [prepare_layer_params(**p, k_round=k_round) for p in raw_layers]
    emb_padded = prepare_embedding(emb, prepared_layers[0]["in_p"])

    # max_t_blk=8 -> two time blocks at seq_len=16: exercises the (h, c) carry and
    # the pl.when reset across grid steps at these small test shapes.
    outs = rnn_core_forward(tokens, emb_padded, prepared_layers, max_t_blk=8)
    outs = [jax.block_until_ready(o) for o in outs]

    # Sanity check against a pure-JAX reference using the same bf16/f32 recipe
    # (tolerance accounts for bf16 inter-layer activations).
    refs = rnn_core_forward_ref(tokens, emb, raw_layers)
    for o, r in zip(outs, refs):
        np.testing.assert_allclose(np.asarray(o), np.asarray(r), rtol=2e-2, atol=2e-2)

    print("KERNEL_OK")
</pallas_src>

<mosaic_0001>
module attributes {stable_mosaic.version = 11 : i64} {
  func.func @_lstm_fused_kernel(%arg0: i32, %arg1: i32, %arg2: memref<8x16x128xbf16, #tpu.memory_space<vmem>>, %arg3: memref<128x512xbf16, #tpu.memory_space<vmem>>, %arg4: memref<1x512xf32, #tpu.memory_space<vmem>>, %arg5: memref<128x512xbf16, #tpu.memory_space<vmem>>, %arg6: memref<8x16x128xbf16, #tpu.memory_space<vmem>>, %arg7: memref<16x128xf32, #tpu.memory_space<vmem>>, %arg8: memref<16x128xf32, #tpu.memory_space<vmem>>, %arg9: memref<8x16x512xf32, #tpu.memory_space<vmem>>) attributes {dimension_semantics = [#tpu.dimension_semantics<parallel>, #tpu.dimension_semantics<arbitrary>], iteration_bounds = array<i64: 1, 2>, scalar_prefetch = 0 : i64, scratch_operands = 3 : i64, tpu.core_type = #tpu.core_type<tc>, window_params = [{transform_indices = @transform_0, window_bounds = array<i64: 8, 16, 128>}, {pipeline_mode = #tpu.pipeline_mode<synchronous>, transform_indices = @transform_1, window_bounds = array<i64: 128, 512>}, {pipeline_mode = #tpu.pipeline_mode<synchronous>, transform_indices = @transform_2, window_bounds = array<i64: 1, 512>}, {pipeline_mode = #tpu.pipeline_mode<synchronous>, transform_indices = @transform_3, window_bounds = array<i64: 128, 512>}, {transform_indices = @transform_4, window_bounds = array<i64: 8, 16, 128>}]} {
    %c0_i32 = arith.constant 0 : i32
    %0 = arith.cmpi eq, %arg1, %c0_i32 : i32
    %1 = arith.extui %0 : i1 to i32
    %c0_i32_0 = arith.constant 0 : i32
    %2 = arith.cmpi ne, %1, %c0_i32_0 : i32
    scf.if %2 {
      %cst_99 = arith.constant 0.000000e+00 : f32
      %312 = vector.broadcast %cst_99 : f32 to vector<16x128xf32>
      %c0_100 = arith.constant 0 : index
      %c0_101 = arith.constant 0 : index
      %313 = vector.load %arg7[%c0_100, %c0_101] : memref<16x128xf32, #tpu.memory_space<vmem>>, vector<16x128xf32>
      tpu.vector_store %arg7[%c0_100, %c0_101], %312 {strides = array<i32>} : memref<16x128xf32, #tpu.memory_space<vmem>>, vector<16x128xf32>,
      %cst_102 = arith.constant 0.000000e+00 : f32
      %314 = vector.broadcast %cst_102 : f32 to vector<16x128xf32>
      %c0_103 = arith.constant 0 : index
      %c0_104 = arith.constant 0 : index
      %315 = vector.load %arg8[%c0_103, %c0_104] : memref<16x128xf32, #tpu.memory_space<vmem>>, vector<16x128xf32>
      tpu.vector_store %arg8[%c0_103, %c0_104], %314 {strides = array<i32>} : memref<16x128xf32, #tpu.memory_space<vmem>>, vector<16x128xf32>,
    } else {
    }
    %c0 = arith.constant 0 : index
    %c0_1 = arith.constant 0 : index
    %c0_2 = arith.constant 0 : index
    %3 = vector.load %arg2[%c0, %c0_1, %c0_2] : memref<8x16x128xbf16, #tpu.memory_space<vmem>>, vector<8x16x128xbf16>
    %4 = vector.shape_cast %3 : vector<8x16x128xbf16> to vector<128x128xbf16>
    %c0_3 = arith.constant 0 : index
    %c0_4 = arith.constant 0 : index
    %5 = vector.load %arg3[%c0_3, %c0_4] : memref<128x512xbf16, #tpu.memory_space<vmem>>, vector<128x512xbf16>
    %cst = arith.constant dense<0.000000e+00> : vector<128x512xf32>
    %6 = tpu.matmul %4, %5, %cst {dimension_numbers = #tpu.dot_dimension_numbers<[1], [0], [0], [1], [0, 0, 1, 1], [], []>} : vector<128x128xbf16>, vector<128x512xbf16>, vector<128x512xf32> -> vector<128x512xf32>
    %c0_5 = arith.constant 0 : index
    %c0_6 = arith.constant 0 : index
    %7 = vector.load %arg4[%c0_5, %c0_6] : memref<1x512xf32, #tpu.memory_space<vmem>>, vector<1x512xf32>
    %8 = vector.broadcast %7 : vector<1x512xf32> to vector<128x512xf32>
    %9 = arith.addf %6, %8 : vector<128x512xf32>
    %10 = vector.shape_cast %9 : vector<128x512xf32> to vector<8x16x512xf32>
    %c0_7 = arith.constant 0 : index
    %c0_8 = arith.constant 0 : index
    %c0_9 = arith.constant 0 : index
    %11 = vector.load %arg9[%c0_7, %c0_8, %c0_9] : memref<8x16x512xf32, #tpu.memory_space<vmem>>, vector<8x16x512xf32>
    tpu.vector_store %arg9[%c0_7, %c0_8, %c0_9], %10 {strides = array<i32>} : memref<8x16x512xf32, #tpu.memory_space<vmem>>, vector<8x16x512xf32>,
    %c0_10 = arith.constant 0 : index
    %c0_11 = arith.constant 0 : index
    %12 = vector.load %arg7[%c0_10, %c0_11] : memref<16x128xf32, #tpu.memory_space<vmem>>, vector<16x128xf32>
    %c0_12 = arith.constant 0 : index
    %c0_13 = arith.constant 0 : index
    %13 = vector.load %arg8[%c0_12, %c0_13] : memref<16x128xf32, #tpu.memory_space<vmem>>, vector<16x128xf32>
    %c0_i32_14 = arith.constant 0 : i32
    %14 = arith.index_cast %c0_i32_14 : i32 to index
    %c0_15 = arith.constant 0 : index
    %c0_16 = arith.constant 0 : index
    %15 = vector.load %arg9[%14, %c0_15, %c0_16] : memref<8x16x512xf32, #tpu.memory_space<vmem>>, vector<1x16x512xf32>
    %16 = vector.shape_cast %15 : vector<1x16x512xf32> to vector<16x512xf32>
    %17 = arith.truncf %12 : vector<16x128xf32> to vector<16x128xbf16>
    %c0_17 = arith.constant 0 : index
    %c0_18 = arith.constant 0 : index
    %18 = vector.load %arg5[%c0_17, %c0_18] : memref<128x512xbf16, #tpu.memory_space<vmem>>, vector<128x512xbf16>
    %cst_19 = arith.constant dense<0.000000e+00> : vector<16x512xf32>
    %19 = tpu.matmul %17, %18, %cst_19 {dimension_numbers = #tpu.dot_dimension_numbers<[1], [0], [0], [1], [0, 0, 1, 1], [], []>} : vector<16x128xbf16>, vector<128x512xbf16>, vector<16x512xf32> -> vector<16x512xf32>
    %20 = arith.addf %16, %19 : vector<16x512xf32>
    %21 = vector.extract_strided_slice %20 {offsets = [0, 0], sizes = [16, 128], strides = [1, 1]} : vector<16x512xf32> to vector<16x128xf32>
    %22 = arith.negf %21 : vector<16x128xf32>
    %23 = math.exp %22 : vector<16x128xf32>
    %cst_20 = arith.constant 1.000000e+00 : f32
    %24 = vector.broadcast %cst_20 : f32 to vector<16x128xf32>
    %25 = arith.addf %24, %23 : vector<16x128xf32>
    %26 = arith.divf %24, %25 : vector<16x128xf32>
    %27 = vector.extract_strided_slice %20 {offsets = [0, 128], sizes = [16, 128], strides = [1, 1]} : vector<16x512xf32> to vector<16x128xf32>
    %28 = arith.negf %27 : vector<16x128xf32>
    %29 = math.exp %28 : vector<16x128xf32>
    %cst_21 = arith.constant 1.000000e+00 : f32
    %30 = vector.broadcast %cst_21 : f32 to vector<16x128xf32>
    %31 = arith.addf %30, %29 : vector<16x128xf32>
    %32 = arith.divf %30, %31 : vector<16x128xf32>
    %33 = vector.extract_strided_slice %20 {offsets = [0, 256], sizes = [16, 128], strides = [1, 1]} : vector<16x512xf32> to vector<16x128xf32>
    %34 = math.tanh %33 : vector<16x128xf32>
    %35 = vector.extract_strided_slice %20 {offsets = [0, 384], sizes = [16, 128], strides = [1, 1]} : vector<16x512xf32> to vector<16x128xf32>
    %36 = arith.negf %35 : vector<16x128xf32>
    %37 = math.exp %36 : vector<16x128xf32>
    %cst_22 = arith.constant 1.000000e+00 : f32
    %38 = vector.broadcast %cst_22 : f32 to vector<16x128xf32>
    %39 = arith.addf %38, %37 : vector<16x128xf32>
    %40 = arith.divf %38, %39 : vector<16x128xf32>
    %41 = arith.mulf %32, %13 : vector<16x128xf32>
    %42 = arith.mulf %26, %34 : vector<16x128xf32>
    %43 = arith.addf %41, %42 : vector<16x128xf32>
    %44 = math.tanh %43 : vector<16x128xf32>
    %45 = arith.mulf %40, %44 : vector<16x128xf32>
    %46 = arith.truncf %45 : vector<16x128xf32> to vector<16x128xbf16>
    %47 = arith.index_cast %c0_i32_14 : i32 to index
    %c0_23 = arith.constant 0 : index
    %c0_24 = arith.constant 0 : index
    %48 = vector.load %arg6[%47, %c0_23, %c0_24] : memref<8x16x128xbf16, #tpu.memory_space<vmem>>, vector<1x16x128xbf16>
    %49 = vector.shape_cast %48 : vector<1x16x128xbf16> to vector<16x128xbf16>
    %50 = vector.shape_cast %46 : vector<16x128xbf16> to vector<1x16x128xbf16>
    tpu.vector_store %arg6[%47, %c0_23, %c0_24], %50 {strides = array<i32>} : memref<8x16x128xbf16, #tpu.memory_space<vmem>>, vector<1x16x128xbf16>,
    %c1_i32 = arith.constant 1 : i32
    %51 = arith.index_cast %c1_i32 : i32 to index
    %c0_25 = arith.constant 0 : index
    %c0_26 = arith.constant 0 : index
    %52 = vector.load %arg9[%51, %c0_25, %c0_26] : memref<8x16x512xf32, #tpu.memory_space<vmem>>, vector<1x16x512xf32>
    %53 = vector.shape_cast %52 : vector<1x16x512xf32> to vector<16x512xf32>
    %54 = arith.truncf %45 : vector<16x128xf32> to vector<16x128xbf16>
    %c0_27 = arith.constant 0 : index
    %c0_28 = arith.constant 0 : index
    %55 = vector.load %arg5[%c0_27, %c0_28] : memref<128x512xbf16, #tpu.memory_space<vmem>>, vector<128x512xbf16>
    %cst_29 = arith.constant dense<0.000000e+00> : vector<16x512xf32>
    %56 = tpu.matmul %54, %55, %cst_29 {dimension_numbers = #tpu.dot_dimension_numbers<[1], [0], [0], [1], [0, 0, 1, 1], [], []>} : vector<16x128xbf16>, vector<128x512xbf16>, vector<16x512xf32> -> vector<16x512xf32>
    %57 = arith.addf %53, %56 : vector<16x512xf32>
    %58 = vector.extract_strided_slice %57 {offsets = [0, 0], sizes = [16, 128], strides = [1, 1]} : vector<16x512xf32> to vector<16x128xf32>
    %59 = arith.negf %58 : vector<16x128xf32>
    %60 = math.exp %59 : vector<16x128xf32>
    %cst_30 = arith.constant 1.000000e+00 : f32
    %61 = vector.broadcast %cst_30 : f32 to vector<16x128xf32>
    %62 = arith.addf %61, %60 : vector<16x128xf32>
    %63 = arith.divf %61, %62 : vector<16x128xf32>
    %64 = vector.extract_strided_slice %57 {offsets = [0, 128], sizes = [16, 128], strides = [1, 1]} : vector<16x512xf32> to vector<16x128xf32>
    %65 = arith.negf %64 : vector<16x128xf32>
    %66 = math.exp %65 : vector<16x128xf32>
    %cst_31 = arith.constant 1.000000e+00 : f32
    %67 = vector.broadcast %cst_31 : f32 to vector<16x128xf32>
    %68 = arith.addf %67, %66 : vector<16x128xf32>
    %69 = arith.divf %67, %68 : vector<16x128xf32>
    %70 = vector.extract_strided_slice %57 {offsets = [0, 256], sizes = [16, 128], strides = [1, 1]} : vector<16x512xf32> to vector<16x128xf32>
    %71 = math.tanh %70 : vector<16x128xf32>
    %72 = vector.extract_strided_slice %57 {offsets = [0, 384], sizes = [16, 128], strides = [1, 1]} : vector<16x512xf32> to vector<16x128xf32>
    %73 = arith.negf %72 : vector<16x128xf32>
    %74 = math.exp %73 : vector<16x128xf32>
    %cst_32 = arith.constant 1.000000e+00 : f32
    %75 = vector.broadcast %cst_32 : f32 to vector<16x128xf32>
    %76 = arith.addf %75, %74 : vector<16x128xf32>
    %77 = arith.divf %75, %76 : vector<16x128xf32>
    %78 = arith.mulf %69, %43 : vector<16x128xf32>
    %79 = arith.mulf %63, %71 : vector<16x128xf32>
    %80 = arith.addf %78, %79 : vector<16x128xf32>
    %81 = math.tanh %80 : vector<16x128xf32>
    %82 = arith.mulf %77, %81 : vector<16x128xf32>
    %83 = arith.truncf %82 : vector<16x128xf32> to vector<16x128xbf16>
    %84 = arith.index_cast %c1_i32 : i32 to index
    %c0_33 = arith.constant 0 : index
    %c0_34 = arith.constant 0 : index
    %85 = vector.load %arg6[%84, %c0_33, %c0_34] : memref<8x16x128xbf16, #tpu.memory_space<vmem>>, vector<1x16x128xbf16>
    %86 = vector.shape_cast %85 : vector<1x16x128xbf16> to vector<16x128xbf16>
    %87 = vector.shape_cast %83 : vector<16x128xbf16> to vector<1x16x128xbf16>
    tpu.vector_store %arg6[%84, %c0_33, %c0_34], %87 {strides = array<i32>} : memref<8x16x128xbf16, #tpu.memory_space<vmem>>, vector<1x16x128xbf16>,
    %c2_i32 = arith.constant 2 : i32
    %88 = arith.index_cast %c2_i32 : i32 to index
    %c0_35 = arith.constant 0 : index
    %c0_36 = arith.constant 0 : index
    %89 = vector.load %arg9[%88, %c0_35, %c0_36] : memref<8x16x512xf32, #tpu.memory_space<vmem>>, vector<1x16x512xf32>
    %90 = vector.shape_cast %89 : vector<1x16x512xf32> to vector<16x512xf32>
    %91 = arith.truncf %82 : vector<16x128xf32> to vector<16x128xbf16>
    %c0_37 = arith.constant 0 : index
    %c0_38 = arith.constant 0 : index
    %92 = vector.load %arg5[%c0_37, %c0_38] : memref<128x512xbf16, #tpu.memory_space<vmem>>, vector<128x512xbf16>
    %cst_39 = arith.constant dense<0.000000e+00> : vector<16x512xf32>
    %93 = tpu.matmul %91, %92, %cst_39 {dimension_numbers = #tpu.dot_dimension_numbers<[1], [0], [0], [1], [0, 0, 1, 1], [], []>} : vector<16x128xbf16>, vector<128x512xbf16>, vector<16x512xf32> -> vector<16x512xf32>
    %94 = arith.addf %90, %93 : vector<16x512xf32>
    %95 = vector.extract_strided_slice %94 {offsets = [0, 0], sizes = [16, 128], strides = [1, 1]} : vector<16x512xf32> to vector<16x128xf32>
    %96 = arith.negf %95 : vector<16x128xf32>
    %97 = math.exp %96 : vector<16x128xf32>
    %cst_40 = arith.constant 1.000000e+00 : f32
    %98 = vector.broadcast %cst_40 : f32 to vector<16x128xf32>
    %99 = arith.addf %98, %97 : vector<16x128xf32>
    %100 = arith.divf %98, %99 : vector<16x128xf32>
    %101 = vector.extract_strided_slice %94 {offsets = [0, 128], sizes = [16, 128], strides = [1, 1]} : vector<16x512xf32> to vector<16x128xf32>
    %102 = arith.negf %101 : vector<16x128xf32>
    %103 = math.exp %102 : vector<16x128xf32>
    %cst_41 = arith.constant 1.000000e+00 : f32
    %104 = vector.broadcast %cst_41 : f32 to vector<16x128xf32>
    %105 = arith.addf %104, %103 : vector<16x128xf32>
    %106 = arith.divf %104, %105 : vector<16x128xf32>
    %107 = vector.extract_strided_slice %94 {offsets = [0, 256], sizes = [16, 128], strides = [1, 1]} : vector<16x512xf32> to vector<16x128xf32>
    %108 = math.tanh %107 : vector<16x128xf32>
    %109 = vector.extract_strided_slice %94 {offsets = [0, 384], sizes = [16, 128], strides = [1, 1]} : vector<16x512xf32> to vector<16x128xf32>
    %110 = arith.negf %109 : vector<16x128xf32>
    %111 = math.exp %110 : vector<16x128xf32>
    %cst_42 = arith.constant 1.000000e+00 : f32
    %112 = vector.broadcast %cst_42 : f32 to vector<16x128xf32>
    %113 = arith.addf %112, %111 : vector<16x128xf32>
    %114 = arith.divf %112, %113 : vector<16x128xf32>
    %115 = arith.mulf %106, %80 : vector<16x128xf32>
    %116 = arith.mulf %100, %108 : vector<16x128xf32>
    %117 = arith.addf %115, %116 : vector<16x128xf32>
    %118 = math.tanh %117 : vector<16x128xf32>
    %119 = arith.mulf %114, %118 : vector<16x128xf32>
    %120 = arith.truncf %119 : vector<16x128xf32> to vector<16x128xbf16>
    %121 = arith.index_cast %c2_i32 : i32 to index
    %c0_43 = arith.constant 0 : index
    %c0_44 = arith.constant 0 : index
    %122 = vector.load %arg6[%121, %c0_43, %c0_44] : memref<8x16x128xbf16, #tpu.memory_space<vmem>>, vector<1x16x128xbf16>
    %123 = vector.shape_cast %122 : vector<1x16x128xbf16> to vector<16x128xbf16>
    %124 = vector.shape_cast %120 : vector<16x128xbf16> to vector<1x16x128xbf16>
    tpu.vector_store %arg6[%121, %c0_43, %c0_44], %124 {strides = array<i32>} : memref<8x16x128xbf16, #tpu.memory_space<vmem>>, vector<1x16x128xbf16>,
    %c3_i32 = arith.constant 3 : i32
    %125 = arith.index_cast %c3_i32 : i32 to index
    %c0_45 = arith.constant 0 : index
    %c0_46 = arith.constant 0 : index
    %126 = vector.load %arg9[%125, %c0_45, %c0_46] : memref<8x16x512xf32, #tpu.memory_space<vmem>>, vector<1x16x512xf32>
    %127 = vector.shape_cast %126 : vector<1x16x512xf32> to vector<16x512xf32>
    %128 = arith.truncf %119 : vector<16x128xf32> to vector<16x128xbf16>
    %c0_47 = arith.constant 0 : index
    %c0_48 = arith.constant 0 : index
    %129 = vector.load %arg5[%c0_47, %c0_48] : memref<128x512xbf16, #tpu.memory_space<vmem>>, vector<128x512xbf16>
    %cst_49 = arith.constant dense<0.000000e+00> : vector<16x512xf32>
    %130 = tpu.matmul %128, %129, %cst_49 {dimension_numbers = #tpu.dot_dimension_numbers<[1], [0], [0], [1], [0, 0, 1, 1], [], []>} : vector<16x128xbf16>, vector<128x512xbf16>, vector<16x512xf32> -> vector<16x512xf32>
    %131 = arith.addf %127, %130 : vector<16x512xf32>
    %132 = vector.extract_strided_slice %131 {offsets = [0, 0], sizes = [16, 128], strides = [1, 1]} : vector<16x512xf32> to vector<16x128xf32>
    %133 = arith.negf %132 : vector<16x128xf32>
    %134 = math.exp %133 : vector<16x128xf32>
    %cst_50 = arith.constant 1.000000e+00 : f32
    %135 = vector.broadcast %cst_50 : f32 to vector<16x128xf32>
    %136 = arith.addf %135, %134 : vector<16x128xf32>
    %137 = arith.divf %135, %136 : vector<16x128xf32>
    %138 = vector.extract_strided_slice %131 {offsets = [0, 128], sizes = [16, 128], strides = [1, 1]} : vector<16x512xf32> to vector<16x128xf32>
    %139 = arith.negf %138 : vector<16x128xf32>
    %140 = math.exp %139 : vector<16x128xf32>
    %cst_51 = arith.constant 1.000000e+00 : f32
    %141 = vector.broadcast %cst_51 : f32 to vector<16x128xf32>
    %142 = arith.addf %141, %140 : vector<16x128xf32>
    %143 = arith.divf %141, %142 : vector<16x128xf32>
    %144 = vector.extract_strided_slice %131 {offsets = [0, 256], sizes = [16, 128], strides = [1, 1]} : vector<16x512xf32> to vector<16x128xf32>
    %145 = math.tanh %144 : vector<16x128xf32>
    %146 = vector.extract_strided_slice %131 {offsets = [0, 384], sizes = [16, 128], strides = [1, 1]} : vector<16x512xf32> to vector<16x128xf32>
    %147 = arith.negf %146 : vector<16x128xf32>
    %148 = math.exp %147 : vector<16x128xf32>
    %cst_52 = arith.constant 1.000000e+00 : f32
    %149 = vector.broadcast %cst_52 : f32 to vector<16x128xf32>
    %150 = arith.addf %149, %148 : vector<16x128xf32>
    %151 = arith.divf %149, %150 : vector<16x128xf32>
    %152 = arith.mulf %143, %117 : vector<16x128xf32>
    %153 = arith.mulf %137, %145 : vector<16x128xf32>
    %154 = arith.addf %152, %153 : vector<16x128xf32>
    %155 = math.tanh %154 : vector<16x128xf32>
    %156 = arith.mulf %151, %155 : vector<16x128xf32>
    %157 = arith.truncf %156 : vector<16x128xf32> to vector<16x128xbf16>
    %158 = arith.index_cast %c3_i32 : i32 to index
    %c0_53 = arith.constant 0 : index
    %c0_54 = arith.constant 0 : index
    %159 = vector.load %arg6[%158, %c0_53, %c0_54] : memref<8x16x128xbf16, #tpu.memory_space<vmem>>, vector<1x16x128xbf16>
    %160 = vector.shape_cast %159 : vector<1x16x128xbf16> to vector<16x128xbf16>
    %161 = vector.shape_cast %157 : vector<16x128xbf16> to vector<1x16x128xbf16>
    tpu.vector_store %arg6[%158, %c0_53, %c0_54], %161 {strides = array<i32>} : memref<8x16x128xbf16, #tpu.memory_space<vmem>>, vector<1x16x128xbf16>,
    %c4_i32 = arith.constant 4 : i32
    %162 = arith.index_cast %c4_i32 : i32 to index
    %c0_55 = arith.constant 0 : index
    %c0_56 = arith.constant 0 : index
    %163 = vector.load %arg9[%162, %c0_55, %c0_56] : memref<8x16x512xf32, #tpu.memory_space<vmem>>, vector<1x16x512xf32>
    %164 = vector.shape_cast %163 : vector<1x16x512xf32> to vector<16x512xf32>
    %165 = arith.truncf %156 : vector<16x128xf32> to vector<16x128xbf16>
    %c0_57 = arith.constant 0 : index
    %c0_58 = arith.constant 0 : index
    %166 = vector.load %arg5[%c0_57, %c0_58] : memref<128x512xbf16, #tpu.memory_space<vmem>>, vector<128x512xbf16>
    %cst_59 = arith.constant dense<0.000000e+00> : vector<16x512xf32>
    %167 = tpu.matmul %165, %166, %cst_59 {dimension_numbers = #tpu.dot_dimension_numbers<[1], [0], [0], [1], [0, 0, 1, 1], [], []>} : vector<16x128xbf16>, vector<128x512xbf16>, vector<16x512xf32> -> vector<16x512xf32>
    %168 = arith.addf %164, %167 : vector<16x512xf32>
    %169 = vector.extract_strided_slice %168 {offsets = [0, 0], sizes = [16, 128], strides = [1, 1]} : vector<16x512xf32> to vector<16x128xf32>
    %170 = arith.negf %169 : vector<16x128xf32>
    %171 = math.exp %170 : vector<16x128xf32>
    %cst_60 = arith.constant 1.000000e+00 : f32
    %172 = vector.broadcast %cst_60 : f32 to vector<16x128xf32>
    %173 = arith.addf %172, %171 : vector<16x128xf32>
    %174 = arith.divf %172, %173 : vector<16x128xf32>
    %175 = vector.extract_strided_slice %168 {offsets = [0, 128], sizes = [16, 128], strides = [1, 1]} : vector<16x512xf32> to vector<16x128xf32>
    %176 = arith.negf %175 : vector<16x128xf32>
    %177 = math.exp %176 : vector<16x128xf32>
    %cst_61 = arith.constant 1.000000e+00 : f32
    %178 = vector.broadcast %cst_61 : f32 to vector<16x128xf32>
    %179 = arith.addf %178, %177 : vector<16x128xf32>
    %180 = arith.divf %178, %179 : vector<16x128xf32>
    %181 = vector.extract_strided_slice %168 {offsets = [0, 256], sizes = [16, 128], strides = [1, 1]} : vector<16x512xf32> to vector<16x128xf32>
    %182 = math.tanh %181 : vector<16x128xf32>
    %183 = vector.extract_strided_slice %168 {offsets = [0, 384], sizes = [16, 128], strides = [1, 1]} : vector<16x512xf32> to vector<16x128xf32>
    %184 = arith.negf %183 : vector<16x128xf32>
    %185 = math.exp %184 : vector<16x128xf32>
    %cst_62 = arith.constant 1.000000e+00 : f32
    %186 = vector.broadcast %cst_62 : f32 to vector<16x128xf32>
    %187 = arith.addf %186, %185 : vector<16x128xf32>
    %188 = arith.divf %186, %187 : vector<16x128xf32>
    %189 = arith.mulf %180, %154 : vector<16x128xf32>
    %190 = arith.mulf %174, %182 : vector<16x128xf32>
    %191 = arith.addf %189, %190 : vector<16x128xf32>
    %192 = math.tanh %191 : vector<16x128xf32>
    %193 = arith.mulf %188, %192 : vector<16x128xf32>
    %194 = arith.truncf %193 : vector<16x128xf32> to vector<16x128xbf16>
    %195 = arith.index_cast %c4_i32 : i32 to index
    %c0_63 = arith.constant 0 : index
    %c0_64 = arith.constant 0 : index
    %196 = vector.load %arg6[%195, %c0_63, %c0_64] : memref<8x16x128xbf16, #tpu.memory_space<vmem>>, vector<1x16x128xbf16>
    %197 = vector.shape_cast %196 : vector<1x16x128xbf16> to vector<16x128xbf16>
    %198 = vector.shape_cast %194 : vector<16x128xbf16> to vector<1x16x128xbf16>
    tpu.vector_store %arg6[%195, %c0_63, %c0_64], %198 {strides = array<i32>} : memref<8x16x128xbf16, #tpu.memory_space<vmem>>, vector<1x16x128xbf16>,
    %c5_i32 = arith.constant 5 : i32
    %199 = arith.index_cast %c5_i32 : i32 to index
    %c0_65 = arith.constant 0 : index
    %c0_66 = arith.constant 0 : index
    %200 = vector.load %arg9[%199, %c0_65, %c0_66] : memref<8x16x512xf32, #tpu.memory_space<vmem>>, vector<1x16x512xf32>
    %201 = vector.shape_cast %200 : vector<1x16x512xf32> to vector<16x512xf32>
    %202 = arith.truncf %193 : vector<16x128xf32> to vector<16x128xbf16>
    %c0_67 = arith.constant 0 : index
    %c0_68 = arith.constant 0 : index
    %203 = vector.load %arg5[%c0_67, %c0_68] : memref<128x512xbf16, #tpu.memory_space<vmem>>, vector<128x512xbf16>
    %cst_69 = arith.constant dense<0.000000e+00> : vector<16x512xf32>
    %204 = tpu.matmul %202, %203, %cst_69 {dimension_numbers = #tpu.dot_dimension_numbers<[1], [0], [0], [1], [0, 0, 1, 1], [], []>} : vector<16x128xbf16>, vector<128x512xbf16>, vector<16x512xf32> -> vector<16x512xf32>
    %205 = arith.addf %201, %204 : vector<16x512xf32>
    %206 = vector.extract_strided_slice %205 {offsets = [0, 0], sizes = [16, 128], strides = [1, 1]} : vector<16x512xf32> to vector<16x128xf32>
    %207 = arith.negf %206 : vector<16x128xf32>
    %208 = math.exp %207 : vector<16x128xf32>
    %cst_70 = arith.constant 1.000000e+00 : f32
    %209 = vector.broadcast %cst_70 : f32 to vector<16x128xf32>
    %210 = arith.addf %209, %208 : vector<16x128xf32>
    %211 = arith.divf %209, %210 : vector<16x128xf32>
    %212 = vector.extract_strided_slice %205 {offsets = [0, 128], sizes = [16, 128], strides = [1, 1]} : vector<16x512xf32> to vector<16x128xf32>
    %213 = arith.negf %212 : vector<16x128xf32>
    %214 = math.exp %213 : vector<16x128xf32>
    %cst_71 = arith.constant 1.000000e+00 : f32
    %215 = vector.broadcast %cst_71 : f32 to vector<16x128xf32>
    %216 = arith.addf %215, %214 : vector<16x128xf32>
    %217 = arith.divf %215, %216 : vector<16x128xf32>
    %218 = vector.extract_strided_slice %205 {offsets = [0, 256], sizes = [16, 128], strides = [1, 1]} : vector<16x512xf32> to vector<16x128xf32>
    %219 = math.tanh %218 : vector<16x128xf32>
    %220 = vector.extract_strided_slice %205 {offsets = [0, 384], sizes = [16, 128], strides = [1, 1]} : vector<16x512xf32> to vector<16x128xf32>
    %221 = arith.negf %220 : vector<16x128xf32>
    %222 = math.exp %221 : vector<16x128xf32>
    %cst_72 = arith.constant 1.000000e+00 : f32
    %223 = vector.broadcast %cst_72 : f32 to vector<16x128xf32>
    %224 = arith.addf %223, %222 : vector<16x128xf32>
    %225 = arith.divf %223, %224 : vector<16x128xf32>
    %226 = arith.mulf %217, %191 : vector<16x128xf32>
    %227 = arith.mulf %211, %219 : vector<16x128xf32>
    %228 = arith.addf %226, %227 : vector<16x128xf32>
    %229 = math.tanh %228 : vector<16x128xf32>
    %230 = arith.mulf %225, %229 : vector<16x128xf32>
    %231 = arith.truncf %230 : vector<16x128xf32> to vector<16x128xbf16>
    %232 = arith.index_cast %c5_i32 : i32 to index
    %c0_73 = arith.constant 0 : index
    %c0_74 = arith.constant 0 : index
    %233 = vector.load %arg6[%232, %c0_73, %c0_74] : memref<8x16x128xbf16, #tpu.memory_space<vmem>>, vector<1x16x128xbf16>
    %234 = vector.shape_cast %233 : vector<1x16x128xbf16> to vector<16x128xbf16>
    %235 = vector.shape_cast %231 : vector<16x128xbf16> to vector<1x16x128xbf16>
    tpu.vector_store %arg6[%232, %c0_73, %c0_74], %235 {strides = array<i32>} : memref<8x16x128xbf16, #tpu.memory_space<vmem>>, vector<1x16x128xbf16>,
    %c6_i32 = arith.constant 6 : i32
    %236 = arith.index_cast %c6_i32 : i32 to index
    %c0_75 = arith.constant 0 : index
    %c0_76 = arith.constant 0 : index
    %237 = vector.load %arg9[%236, %c0_75, %c0_76] : memref<8x16x512xf32, #tpu.memory_space<vmem>>, vector<1x16x512xf32>
    %238 = vector.shape_cast %237 : vector<1x16x512xf32> to vector<16x512xf32>
    %239 = arith.truncf %230 : vector<16x128xf32> to vector<16x128xbf16>
    %c0_77 = arith.constant 0 : index
    %c0_78 = arith.constant 0 : index
    %240 = vector.load %arg5[%c0_77, %c0_78] : memref<128x512xbf16, #tpu.memory_space<vmem>>, vector<128x512xbf16>
    %cst_79 = arith.constant dense<0.000000e+00> : vector<16x512xf32>
    %241 = tpu.matmul %239, %240, %cst_79 {dimension_numbers = #tpu.dot_dimension_numbers<[1], [0], [0], [1], [0, 0, 1, 1], [], []>} : vector<16x128xbf16>, vector<128x512xbf16>, vector<16x512xf32> -> vector<16x512xf32>
    %242 = arith.addf %238, %241 : vector<16x512xf32>
    %243 = vector.extract_strided_slice %242 {offsets = [0, 0], sizes = [16, 128], strides = [1, 1]} : vector<16x512xf32> to vector<16x128xf32>
    %244 = arith.negf %243 : vector<16x128xf32>
    %245 = math.exp %244 : vector<16x128xf32>
    %cst_80 = arith.constant 1.000000e+00 : f32
    %246 = vector.broadcast %cst_80 : f32 to vector<16x128xf32>
    %247 = arith.addf %246, %245 : vector<16x128xf32>
    %248 = arith.divf %246, %247 : vector<16x128xf32>
    %249 = vector.extract_strided_slice %242 {offsets = [0, 128], sizes = [16, 128], strides = [1, 1]} : vector<16x512xf32> to vector<16x128xf32>
    %250 = arith.negf %249 : vector<16x128xf32>
    %251 = math.exp %250 : vector<16x128xf32>
    %cst_81 = arith.constant 1.000000e+00 : f32
    %252 = vector.broadcast %cst_81 : f32 to vector<16x128xf32>
    %253 = arith.addf %252, %251 : vector<16x128xf32>
    %254 = arith.divf %252, %253 : vector<16x128xf32>
    %255 = vector.extract_strided_slice %242 {offsets = [0, 256], sizes = [16, 128], strides = [1, 1]} : vector<16x512xf32> to vector<16x128xf32>
    %256 = math.tanh %255 : vector<16x128xf32>
    %257 = vector.extract_strided_slice %242 {offsets = [0, 384], sizes = [16, 128], strides = [1, 1]} : vector<16x512xf32> to vector<16x128xf32>
    %258 = arith.negf %257 : vector<16x128xf32>
    %259 = math.exp %258 : vector<16x128xf32>
    %cst_82 = arith.constant 1.000000e+00 : f32
    %260 = vector.broadcast %cst_82 : f32 to vector<16x128xf32>
    %261 = arith.addf %260, %259 : vector<16x128xf32>
    %262 = arith.divf %260, %261 : vector<16x128xf32>
    %263 = arith.mulf %254, %228 : vector<16x128xf32>
    %264 = arith.mulf %248, %256 : vector<16x128xf32>
    %265 = arith.addf %263, %264 : vector<16x128xf32>
    %266 = math.tanh %265 : vector<16x128xf32>
    %267 = arith.mulf %262, %266 : vector<16x128xf32>
    %268 = arith.truncf %267 : vector<16x128xf32> to vector<16x128xbf16>
    %269 = arith.index_cast %c6_i32 : i32 to index
    %c0_83 = arith.constant 0 : index
    %c0_84 = arith.constant 0 : index
    %270 = vector.load %arg6[%269, %c0_83, %c0_84] : memref<8x16x128xbf16, #tpu.memory_space<vmem>>, vector<1x16x128xbf16>
    %271 = vector.shape_cast %270 : vector<1x16x128xbf16> to vector<16x128xbf16>
    %272 = vector.shape_cast %268 : vector<16x128xbf16> to vector<1x16x128xbf16>
    tpu.vector_store %arg6[%269, %c0_83, %c0_84], %272 {strides = array<i32>} : memref<8x16x128xbf16, #tpu.memory_space<vmem>>, vector<1x16x128xbf16>,
    %c7_i32 = arith.constant 7 : i32
    %273 = arith.index_cast %c7_i32 : i32 to index
    %c0_85 = arith.constant 0 : index
    %c0_86 = arith.constant 0 : index
    %274 = vector.load %arg9[%273, %c0_85, %c0_86] : memref<8x16x512xf32, #tpu.memory_space<vmem>>, vector<1x16x512xf32>
    %275 = vector.shape_cast %274 : vector<1x16x512xf32> to vector<16x512xf32>
    %276 = arith.truncf %267 : vector<16x128xf32> to vector<16x128xbf16>
    %c0_87 = arith.constant 0 : index
    %c0_88 = arith.constant 0 : index
    %277 = vector.load %arg5[%c0_87, %c0_88] : memref<128x512xbf16, #tpu.memory_space<vmem>>, vector<128x512xbf16>
    %cst_89 = arith.constant dense<0.000000e+00> : vector<16x512xf32>
    %278 = tpu.matmul %276, %277, %cst_89 {dimension_numbers = #tpu.dot_dimension_numbers<[1], [0], [0], [1], [0, 0, 1, 1], [], []>} : vector<16x128xbf16>, vector<128x512xbf16>, vector<16x512xf32> -> vector<16x512xf32>
    %279 = arith.addf %275, %278 : vector<16x512xf32>
    %280 = vector.extract_strided_slice %279 {offsets = [0, 0], sizes = [16, 128], strides = [1, 1]} : vector<16x512xf32> to vector<16x128xf32>
    %281 = arith.negf %280 : vector<16x128xf32>
    %282 = math.exp %281 : vector<16x128xf32>
    %cst_90 = arith.constant 1.000000e+00 : f32
    %283 = vector.broadcast %cst_90 : f32 to vector<16x128xf32>
    %284 = arith.addf %283, %282 : vector<16x128xf32>
    %285 = arith.divf %283, %284 : vector<16x128xf32>
    %286 = vector.extract_strided_slice %279 {offsets = [0, 128], sizes = [16, 128], strides = [1, 1]} : vector<16x512xf32> to vector<16x128xf32>
    %287 = arith.negf %286 : vector<16x128xf32>
    %288 = math.exp %287 : vector<16x128xf32>
    %cst_91 = arith.constant 1.000000e+00 : f32
    %289 = vector.broadcast %cst_91 : f32 to vector<16x128xf32>
    %290 = arith.addf %289, %288 : vector<16x128xf32>
    %291 = arith.divf %289, %290 : vector<16x128xf32>
    %292 = vector.extract_strided_slice %279 {offsets = [0, 256], sizes = [16, 128], strides = [1, 1]} : vector<16x512xf32> to vector<16x128xf32>
    %293 = math.tanh %292 : vector<16x128xf32>
    %294 = vector.extract_strided_slice %279 {offsets = [0, 384], sizes = [16, 128], strides = [1, 1]} : vector<16x512xf32> to vector<16x128xf32>
    %295 = arith.negf %294 : vector<16x128xf32>
    %296 = math.exp %295 : vector<16x128xf32>
    %cst_92 = arith.constant 1.000000e+00 : f32
    %297 = vector.broadcast %cst_92 : f32 to vector<16x128xf32>
    %298 = arith.addf %297, %296 : vector<16x128xf32>
    %299 = arith.divf %297, %298 : vector<16x128xf32>
    %300 = arith.mulf %291, %265 : vector<16x128xf32>
    %301 = arith.mulf %285, %293 : vector<16x128xf32>
    %302 = arith.addf %300, %301 : vector<16x128xf32>
    %303 = math.tanh %302 : vector<16x128xf32>
    %304 = arith.mulf %299, %303 : vector<16x128xf32>
    %305 = arith.truncf %304 : vector<16x128xf32> to vector<16x128xbf16>
    %306 = arith.index_cast %c7_i32 : i32 to index
    %c0_93 = arith.constant 0 : index
    %c0_94 = arith.constant 0 : index
    %307 = vector.load %arg6[%306, %c0_93, %c0_94] : memref<8x16x128xbf16, #tpu.memory_space<vmem>>, vector<1x16x128xbf16>
    %308 = vector.shape_cast %307 : vector<1x16x128xbf16> to vector<16x128xbf16>
    %309 = vector.shape_cast %305 : vector<16x128xbf16> to vector<1x16x128xbf16>
    tpu.vector_store %arg6[%306, %c0_93, %c0_94], %309 {strides = array<i32>} : memref<8x16x128xbf16, #tpu.memory_space<vmem>>, vector<1x16x128xbf16>,
    %c8_i32 = arith.constant 8 : i32
    %c0_95 = arith.constant 0 : index
    %c0_96 = arith.constant 0 : index
    %310 = vector.load %arg7[%c0_95, %c0_96] : memref<16x128xf32, #tpu.memory_space<vmem>>, vector<16x128xf32>
    tpu.vector_store %arg7[%c0_95, %c0_96], %304 {strides = array<i32>} : memref<16x128xf32, #tpu.memory_space<vmem>>, vector<16x128xf32>,
    %c0_97 = arith.constant 0 : index
    %c0_98 = arith.constant 0 : index
    %311 = vector.load %arg8[%c0_97, %c0_98] : memref<16x128xf32, #tpu.memory_space<vmem>>, vector<16x128xf32>
    tpu.vector_store %arg8[%c0_97, %c0_98], %302 {strides = array<i32>} : memref<16x128xf32, #tpu.memory_space<vmem>>, vector<16x128xf32>,
    return
  }
  func.func @transform_0(%arg0: i32, %arg1: i32) -> (i32, i32, i32) {
    %c0_i32 = arith.constant 0 : i32
    %c0_i32_0 = arith.constant 0 : i32
    return %arg1, %arg0, %c0_i32 : i32, i32, i32
  }
  func.func @transform_1(%arg0: i32, %arg1: i32) -> (i32, i32) {
    %c0_i32 = arith.constant 0 : i32
    %c0_i32_0 = arith.constant 0 : i32
    %c0_i32_1 = arith.constant 0 : i32
    return %c0_i32, %c0_i32_0 : i32, i32
  }
  func.func @transform_2(%arg0: i32, %arg1: i32) -> (i32, i32) {
    %c0_i32 = arith.constant 0 : i32
    %c0_i32_0 = arith.constant 0 : i32
    %c0_i32_1 = arith.constant 0 : i32
    return %c0_i32, %c0_i32_0 : i32, i32
  }
  func.func @transform_3(%arg0: i32, %arg1: i32) -> (i32, i32) {
    %c0_i32 = arith.constant 0 : i32
    %c0_i32_0 = arith.constant 0 : i32
    %c0_i32_1 = arith.constant 0 : i32
    return %c0_i32, %c0_i32_0 : i32, i32
  }
  func.func @transform_4(%arg0: i32, %arg1: i32) -> (i32, i32, i32) {
    %c0_i32 = arith.constant 0 : i32
    %c0_i32_0 = arith.constant 0 : i32
    return %arg1, %arg0, %c0_i32 : i32, i32, i32
  }
}

module attributes {stable_mosaic.version = 11 : i64} {
  func.func @_lstm_fused_kernel(%arg0: i32, %arg1: i32, %arg2: memref<8x16x128xbf16, #tpu.memory_space<vmem>>, %arg3: memref<128x512xbf16, #tpu.memory_space<vmem>>, %arg4: memref<1x512xf32, #tpu.memory_space<vmem>>, %arg5: memref<128x512xbf16, #tpu.memory_space<vmem>>, %arg6: memref<8x16x128xbf16, #tpu.memory_space<vmem>>, %arg7: memref<16x128xf32, #tpu.memory_space<vmem>>, %arg8: memref<16x128xf32, #tpu.memory_space<vmem>>, %arg9: memref<8x16x512xf32, #tpu.memory_space<vmem>>) attributes {dimension_semantics = [#tpu.dimension_semantics<parallel>, #tpu.dimension_semantics<arbitrary>], iteration_bounds = array<i64: 1, 2>, scalar_prefetch = 0 : i64, scratch_operands = 3 : i64, tpu.core_type = #tpu.core_type<tc>, window_params = [{transform_indices = @transform_0, window_bounds = array<i64: 8, 16, 128>}, {pipeline_mode = #tpu.pipeline_mode<synchronous>, transform_indices = @transform_1, window_bounds = array<i64: 128, 512>}, {pipeline_mode = #tpu.pipeline_mode<synchronous>, transform_indices = @transform_2, window_bounds = array<i64: 1, 512>}, {pipeline_mode = #tpu.pipeline_mode<synchronous>, transform_indices = @transform_3, window_bounds = array<i64: 128, 512>}, {transform_indices = @transform_4, window_bounds = array<i64: 8, 16, 128>}]} {
    %c0_i32 = arith.constant 0 : i32
    %0 = arith.cmpi eq, %arg1, %c0_i32 : i32
    %1 = arith.extui %0 : i1 to i32
    %c0_i32_0 = arith.constant 0 : i32
    %2 = arith.cmpi ne, %1, %c0_i32_0 : i32
    scf.if %2 {
      %cst_99 = arith.constant 0.000000e+00 : f32
      %312 = vector.broadcast %cst_99 : f32 to vector<16x128xf32>
      %c0_100 = arith.constant 0 : index
      %c0_101 = arith.constant 0 : index
      %313 = vector.load %arg7[%c0_100, %c0_101] : memref<16x128xf32, #tpu.memory_space<vmem>>, vector<16x128xf32>
      tpu.vector_store %arg7[%c0_100, %c0_101], %312 {strides = array<i32>} : memref<16x128xf32, #tpu.memory_space<vmem>>, vector<16x128xf32>,
      %cst_102 = arith.constant 0.000000e+00 : f32
      %314 = vector.broadcast %cst_102 : f32 to vector<16x128xf32>
      %c0_103 = arith.constant 0 : index
      %c0_104 = arith.constant 0 : index
      %315 = vector.load %arg8[%c0_103, %c0_104] : memref<16x128xf32, #tpu.memory_space<vmem>>, vector<16x128xf32>
      tpu.vector_store %arg8[%c0_103, %c0_104], %314 {strides = array<i32>} : memref<16x128xf32, #tpu.memory_space<vmem>>, vector<16x128xf32>,
    } else {
    }
    %c0 = arith.constant 0 : index
    %c0_1 = arith.constant 0 : index
    %c0_2 = arith.constant 0 : index
    %3 = vector.load %arg2[%c0, %c0_1, %c0_2] : memref<8x16x128xbf16, #tpu.memory_space<vmem>>, vector<8x16x128xbf16>
    %4 = vector.shape_cast %3 : vector<8x16x128xbf16> to vector<128x128xbf16>
    %c0_3 = arith.constant 0 : index
    %c0_4 = arith.constant 0 : index
    %5 = vector.load %arg3[%c0_3, %c0_4] : memref<128x512xbf16, #tpu.memory_space<vmem>>, vector<128x512xbf16>
    %cst = arith.constant dense<0.000000e+00> : vector<128x512xf32>
    %6 = tpu.matmul %4, %5, %cst {dimension_numbers = #tpu.dot_dimension_numbers<[1], [0], [0], [1], [0, 0, 1, 1], [], []>} : vector<128x128xbf16>, vector<128x512xbf16>, vector<128x512xf32> -> vector<128x512xf32>
    %c0_5 = arith.constant 0 : index
    %c0_6 = arith.constant 0 : index
    %7 = vector.load %arg4[%c0_5, %c0_6] : memref<1x512xf32, #tpu.memory_space<vmem>>, vector<1x512xf32>
    %8 = vector.broadcast %7 : vector<1x512xf32> to vector<128x512xf32>
    %9 = arith.addf %6, %8 : vector<128x512xf32>
    %10 = vector.shape_cast %9 : vector<128x512xf32> to vector<8x16x512xf32>
    %c0_7 = arith.constant 0 : index
    %c0_8 = arith.constant 0 : index
    %c0_9 = arith.constant 0 : index
    %11 = vector.load %arg9[%c0_7, %c0_8, %c0_9] : memref<8x16x512xf32, #tpu.memory_space<vmem>>, vector<8x16x512xf32>
    tpu.vector_store %arg9[%c0_7, %c0_8, %c0_9], %10 {strides = array<i32>} : memref<8x16x512xf32, #tpu.memory_space<vmem>>, vector<8x16x512xf32>,
    %c0_10 = arith.constant 0 : index
    %c0_11 = arith.constant 0 : index
    %12 = vector.load %arg7[%c0_10, %c0_11] : memref<16x128xf32, #tpu.memory_space<vmem>>, vector<16x128xf32>
    %c0_12 = arith.constant 0 : index
    %c0_13 = arith.constant 0 : index
    %13 = vector.load %arg8[%c0_12, %c0_13] : memref<16x128xf32, #tpu.memory_space<vmem>>, vector<16x128xf32>
    %c0_i32_14 = arith.constant 0 : i32
    %14 = arith.index_cast %c0_i32_14 : i32 to index
    %c0_15 = arith.constant 0 : index
    %c0_16 = arith.constant 0 : index
    %15 = vector.load %arg9[%14, %c0_15, %c0_16] : memref<8x16x512xf32, #tpu.memory_space<vmem>>, vector<1x16x512xf32>
    %16 = vector.shape_cast %15 : vector<1x16x512xf32> to vector<16x512xf32>
    %17 = arith.truncf %12 : vector<16x128xf32> to vector<16x128xbf16>
    %c0_17 = arith.constant 0 : index
    %c0_18 = arith.constant 0 : index
    %18 = vector.load %arg5[%c0_17, %c0_18] : memref<128x512xbf16, #tpu.memory_space<vmem>>, vector<128x512xbf16>
    %cst_19 = arith.constant dense<0.000000e+00> : vector<16x512xf32>
    %19 = tpu.matmul %17, %18, %cst_19 {dimension_numbers = #tpu.dot_dimension_numbers<[1], [0], [0], [1], [0, 0, 1, 1], [], []>} : vector<16x128xbf16>, vector<128x512xbf16>, vector<16x512xf32> -> vector<16x512xf32>
    %20 = arith.addf %16, %19 : vector<16x512xf32>
    %21 = vector.extract_strided_slice %20 {offsets = [0, 0], sizes = [16, 128], strides = [1, 1]} : vector<16x512xf32> to vector<16x128xf32>
    %22 = arith.negf %21 : vector<16x128xf32>
    %23 = math.exp %22 : vector<16x128xf32>
    %cst_20 = arith.constant 1.000000e+00 : f32
    %24 = vector.broadcast %cst_20 : f32 to vector<16x128xf32>
    %25 = arith.addf %24, %23 : vector<16x128xf32>
    %26 = arith.divf %24, %25 : vector<16x128xf32>
    %27 = vector.extract_strided_slice %20 {offsets = [0, 128], sizes = [16, 128], strides = [1, 1]} : vector<16x512xf32> to vector<16x128xf32>
    %28 = arith.negf %27 : vector<16x128xf32>
    %29 = math.exp %28 : vector<16x128xf32>
    %cst_21 = arith.constant 1.000000e+00 : f32
    %30 = vector.broadcast %cst_21 : f32 to vector<16x128xf32>
    %31 = arith.addf %30, %29 : vector<16x128xf32>
    %32 = arith.divf %30, %31 : vector<16x128xf32>
    %33 = vector.extract_strided_slice %20 {offsets = [0, 256], sizes = [16, 128], strides = [1, 1]} : vector<16x512xf32> to vector<16x128xf32>
    %34 = math.tanh %33 : vector<16x128xf32>
    %35 = vector.extract_strided_slice %20 {offsets = [0, 384], sizes = [16, 128], strides = [1, 1]} : vector<16x512xf32> to vector<16x128xf32>
    %36 = arith.negf %35 : vector<16x128xf32>
    %37 = math.exp %36 : vector<16x128xf32>
    %cst_22 = arith.constant 1.000000e+00 : f32
    %38 = vector.broadcast %cst_22 : f32 to vector<16x128xf32>
    %39 = arith.addf %38, %37 : vector<16x128xf32>
    %40 = arith.divf %38, %39 : vector<16x128xf32>
    %41 = arith.mulf %32, %13 : vector<16x128xf32>
    %42 = arith.mulf %26, %34 : vector<16x128xf32>
    %43 = arith.addf %41, %42 : vector<16x128xf32>
    %44 = math.tanh %43 : vector<16x128xf32>
    %45 = arith.mulf %40, %44 : vector<16x128xf32>
    %46 = arith.truncf %45 : vector<16x128xf32> to vector<16x128xbf16>
    %47 = arith.index_cast %c0_i32_14 : i32 to index
    %c0_23 = arith.constant 0 : index
    %c0_24 = arith.constant 0 : index
    %48 = vector.load %arg6[%47, %c0_23, %c0_24] : memref<8x16x128xbf16, #tpu.memory_space<vmem>>, vector<1x16x128xbf16>
    %49 = vector.shape_cast %48 : vector<1x16x128xbf16> to vector<16x128xbf16>
    %50 = vector.shape_cast %46 : vector<16x128xbf16> to vector<1x16x128xbf16>
    tpu.vector_store %arg6[%47, %c0_23, %c0_24], %50 {strides = array<i32>} : memref<8x16x128xbf16, #tpu.memory_space<vmem>>, vector<1x16x128xbf16>,
    %c1_i32 = arith.constant 1 : i32
    %51 = arith.index_cast %c1_i32 : i32 to index
    %c0_25 = arith.constant 0 : index
    %c0_26 = arith.constant 0 : index
    %52 = vector.load %arg9[%51, %c0_25, %c0_26] : memref<8x16x512xf32, #tpu.memory_space<vmem>>, vector<1x16x512xf32>
    %53 = vector.shape_cast %52 : vector<1x16x512xf32> to vector<16x512xf32>
    %54 = arith.truncf %45 : vector<16x128xf32> to vector<16x128xbf16>
    %c0_27 = arith.constant 0 : index
    %c0_28 = arith.constant 0 : index
    %55 = vector.load %arg5[%c0_27, %c0_28] : memref<128x512xbf16, #tpu.memory_space<vmem>>, vector<128x512xbf16>
    %cst_29 = arith.constant dense<0.000000e+00> : vector<16x512xf32>
    %56 = tpu.matmul %54, %55, %cst_29 {dimension_numbers = #tpu.dot_dimension_numbers<[1], [0], [0], [1], [0, 0, 1, 1], [], []>} : vector<16x128xbf16>, vector<128x512xbf16>, vector<16x512xf32> -> vector<16x512xf32>
    %57 = arith.addf %53, %56 : vector<16x512xf32>
    %58 = vector.extract_strided_slice %57 {offsets = [0, 0], sizes = [16, 128], strides = [1, 1]} : vector<16x512xf32> to vector<16x128xf32>
    %59 = arith.negf %58 : vector<16x128xf32>
    %60 = math.exp %59 : vector<16x128xf32>
    %cst_30 = arith.constant 1.000000e+00 : f32
    %61 = vector.broadcast %cst_30 : f32 to vector<16x128xf32>
    %62 = arith.addf %61, %60 : vector<16x128xf32>
    %63 = arith.divf %61, %62 : vector<16x128xf32>
    %64 = vector.extract_strided_slice %57 {offsets = [0, 128], sizes = [16, 128], strides = [1, 1]} : vector<16x512xf32> to vector<16x128xf32>
    %65 = arith.negf %64 : vector<16x128xf32>
    %66 = math.exp %65 : vector<16x128xf32>
    %cst_31 = arith.constant 1.000000e+00 : f32
    %67 = vector.broadcast %cst_31 : f32 to vector<16x128xf32>
    %68 = arith.addf %67, %66 : vector<16x128xf32>
    %69 = arith.divf %67, %68 : vector<16x128xf32>
    %70 = vector.extract_strided_slice %57 {offsets = [0, 256], sizes = [16, 128], strides = [1, 1]} : vector<16x512xf32> to vector<16x128xf32>
    %71 = math.tanh %70 : vector<16x128xf32>
    %72 = vector.extract_strided_slice %57 {offsets = [0, 384], sizes = [16, 128], strides = [1, 1]} : vector<16x512xf32> to vector<16x128xf32>
    %73 = arith.negf %72 : vector<16x128xf32>
    %74 = math.exp %73 : vector<16x128xf32>
    %cst_32 = arith.constant 1.000000e+00 : f32
    %75 = vector.broadcast %cst_32 : f32 to vector<16x128xf32>
    %76 = arith.addf %75, %74 : vector<16x128xf32>
    %77 = arith.divf %75, %76 : vector<16x128xf32>
    %78 = arith.mulf %69, %43 : vector<16x128xf32>
    %79 = arith.mulf %63, %71 : vector<16x128xf32>
    %80 = arith.addf %78, %79 : vector<16x128xf32>
    %81 = math.tanh %80 : vector<16x128xf32>
    %82 = arith.mulf %77, %81 : vector<16x128xf32>
    %83 = arith.truncf %82 : vector<16x128xf32> to vector<16x128xbf16>
    %84 = arith.index_cast %c1_i32 : i32 to index
    %c0_33 = arith.constant 0 : index
    %c0_34 = arith.constant 0 : index
    %85 = vector.load %arg6[%84, %c0_33, %c0_34] : memref<8x16x128xbf16, #tpu.memory_space<vmem>>, vector<1x16x128xbf16>
    %86 = vector.shape_cast %85 : vector<1x16x128xbf16> to vector<16x128xbf16>
    %87 = vector.shape_cast %83 : vector<16x128xbf16> to vector<1x16x128xbf16>
    tpu.vector_store %arg6[%84, %c0_33, %c0_34], %87 {strides = array<i32>} : memref<8x16x128xbf16, #tpu.memory_space<vmem>>, vector<1x16x128xbf16>,
    %c2_i32 = arith.constant 2 : i32
    %88 = arith.index_cast %c2_i32 : i32 to index
    %c0_35 = arith.constant 0 : index
    %c0_36 = arith.constant 0 : index
    %89 = vector.load %arg9[%88, %c0_35, %c0_36] : memref<8x16x512xf32, #tpu.memory_space<vmem>>, vector<1x16x512xf32>
    %90 = vector.shape_cast %89 : vector<1x16x512xf32> to vector<16x512xf32>
    %91 = arith.truncf %82 : vector<16x128xf32> to vector<16x128xbf16>
    %c0_37 = arith.constant 0 : index
    %c0_38 = arith.constant 0 : index
    %92 = vector.load %arg5[%c0_37, %c0_38] : memref<128x512xbf16, #tpu.memory_space<vmem>>, vector<128x512xbf16>
    %cst_39 = arith.constant dense<0.000000e+00> : vector<16x512xf32>
    %93 = tpu.matmul %91, %92, %cst_39 {dimension_numbers = #tpu.dot_dimension_numbers<[1], [0], [0], [1], [0, 0, 1, 1], [], []>} : vector<16x128xbf16>, vector<128x512xbf16>, vector<16x512xf32> -> vector<16x512xf32>
    %94 = arith.addf %90, %93 : vector<16x512xf32>
    %95 = vector.extract_strided_slice %94 {offsets = [0, 0], sizes = [16, 128], strides = [1, 1]} : vector<16x512xf32> to vector<16x128xf32>
    %96 = arith.negf %95 : vector<16x128xf32>
    %97 = math.exp %96 : vector<16x128xf32>
    %cst_40 = arith.constant 1.000000e+00 : f32
    %98 = vector.broadcast %cst_40 : f32 to vector<16x128xf32>
    %99 = arith.addf %98, %97 : vector<16x128xf32>
    %100 = arith.divf %98, %99 : vector<16x128xf32>
    %101 = vector.extract_strided_slice %94 {offsets = [0, 128], sizes = [16, 128], strides = [1, 1]} : vector<16x512xf32> to vector<16x128xf32>
    %102 = arith.negf %101 : vector<16x128xf32>
    %103 = math.exp %102 : vector<16x128xf32>
    %cst_41 = arith.constant 1.000000e+00 : f32
    %104 = vector.broadcast %cst_41 : f32 to vector<16x128xf32>
    %105 = arith.addf %104, %103 : vector<16x128xf32>
    %106 = arith.divf %104, %105 : vector<16x128xf32>
    %107 = vector.extract_strided_slice %94 {offsets = [0, 256], sizes = [16, 128], strides = [1, 1]} : vector<16x512xf32> to vector<16x128xf32>
    %108 = math.tanh %107 : vector<16x128xf32>
    %109 = vector.extract_strided_slice %94 {offsets = [0, 384], sizes = [16, 128], strides = [1, 1]} : vector<16x512xf32> to vector<16x128xf32>
    %110 = arith.negf %109 : vector<16x128xf32>
    %111 = math.exp %110 : vector<16x128xf32>
    %cst_42 = arith.constant 1.000000e+00 : f32
    %112 = vector.broadcast %cst_42 : f32 to vector<16x128xf32>
    %113 = arith.addf %112, %111 : vector<16x128xf32>
    %114 = arith.divf %112, %113 : vector<16x128xf32>
    %115 = arith.mulf %106, %80 : vector<16x128xf32>
    %116 = arith.mulf %100, %108 : vector<16x128xf32>
    %117 = arith.addf %115, %116 : vector<16x128xf32>
    %118 = math.tanh %117 : vector<16x128xf32>
    %119 = arith.mulf %114, %118 : vector<16x128xf32>
    %120 = arith.truncf %119 : vector<16x128xf32> to vector<16x128xbf16>
    %121 = arith.index_cast %c2_i32 : i32 to index
    %c0_43 = arith.constant 0 : index
    %c0_44 = arith.constant 0 : index
    %122 = vector.load %arg6[%121, %c0_43, %c0_44] : memref<8x16x128xbf16, #tpu.memory_space<vmem>>, vector<1x16x128xbf16>
    %123 = vector.shape_cast %122 : vector<1x16x128xbf16> to vector<16x128xbf16>
    %124 = vector.shape_cast %120 : vector<16x128xbf16> to vector<1x16x128xbf16>
    tpu.vector_store %arg6[%121, %c0_43, %c0_44], %124 {strides = array<i32>} : memref<8x16x128xbf16, #tpu.memory_space<vmem>>, vector<1x16x128xbf16>,
    %c3_i32 = arith.constant 3 : i32
    %125 = arith.index_cast %c3_i32 : i32 to index
    %c0_45 = arith.constant 0 : index
    %c0_46 = arith.constant 0 : index
    %126 = vector.load %arg9[%125, %c0_45, %c0_46] : memref<8x16x512xf32, #tpu.memory_space<vmem>>, vector<1x16x512xf32>
    %127 = vector.shape_cast %126 : vector<1x16x512xf32> to vector<16x512xf32>
    %128 = arith.truncf %119 : vector<16x128xf32> to vector<16x128xbf16>
    %c0_47 = arith.constant 0 : index
    %c0_48 = arith.constant 0 : index
    %129 = vector.load %arg5[%c0_47, %c0_48] : memref<128x512xbf16, #tpu.memory_space<vmem>>, vector<128x512xbf16>
    %cst_49 = arith.constant dense<0.000000e+00> : vector<16x512xf32>
    %130 = tpu.matmul %128, %129, %cst_49 {dimension_numbers = #tpu.dot_dimension_numbers<[1], [0], [0], [1], [0, 0, 1, 1], [], []>} : vector<16x128xbf16>, vector<128x512xbf16>, vector<16x512xf32> -> vector<16x512xf32>
    %131 = arith.addf %127, %130 : vector<16x512xf32>
    %132 = vector.extract_strided_slice %131 {offsets = [0, 0], sizes = [16, 128], strides = [1, 1]} : vector<16x512xf32> to vector<16x128xf32>
    %133 = arith.negf %132 : vector<16x128xf32>
    %134 = math.exp %133 : vector<16x128xf32>
    %cst_50 = arith.constant 1.000000e+00 : f32
    %135 = vector.broadcast %cst_50 : f32 to vector<16x128xf32>
    %136 = arith.addf %135, %134 : vector<16x128xf32>
    %137 = arith.divf %135, %136 : vector<16x128xf32>
    %138 = vector.extract_strided_slice %131 {offsets = [0, 128], sizes = [16, 128], strides = [1, 1]} : vector<16x512xf32> to vector<16x128xf32>
    %139 = arith.negf %138 : vector<16x128xf32>
    %140 = math.exp %139 : vector<16x128xf32>
    %cst_51 = arith.constant 1.000000e+00 : f32
    %141 = vector.broadcast %cst_51 : f32 to vector<16x128xf32>
    %142 = arith.addf %141, %140 : vector<16x128xf32>
    %143 = arith.divf %141, %142 : vector<16x128xf32>
    %144 = vector.extract_strided_slice %131 {offsets = [0, 256], sizes = [16, 128], strides = [1, 1]} : vector<16x512xf32> to vector<16x128xf32>
    %145 = math.tanh %144 : vector<16x128xf32>
    %146 = vector.extract_strided_slice %131 {offsets = [0, 384], sizes = [16, 128], strides = [1, 1]} : vector<16x512xf32> to vector<16x128xf32>
    %147 = arith.negf %146 : vector<16x128xf32>
    %148 = math.exp %147 : vector<16x128xf32>
    %cst_52 = arith.constant 1.000000e+00 : f32
    %149 = vector.broadcast %cst_52 : f32 to vector<16x128xf32>
    %150 = arith.addf %149, %148 : vector<16x128xf32>
    %151 = arith.divf %149, %150 : vector<16x128xf32>
    %152 = arith.mulf %143, %117 : vector<16x128xf32>
    %153 = arith.mulf %137, %145 : vector<16x128xf32>
    %154 = arith.addf %152, %153 : vector<16x128xf32>
    %155 = math.tanh %154 : vector<16x128xf32>
    %156 = arith.mulf %151, %155 : vector<16x128xf32>
    %157 = arith.truncf %156 : vector<16x128xf32> to vector<16x128xbf16>
    %158 = arith.index_cast %c3_i32 : i32 to index
    %c0_53 = arith.constant 0 : index
    %c0_54 = arith.constant 0 : index
    %159 = vector.load %arg6[%158, %c0_53, %c0_54] : memref<8x16x128xbf16, #tpu.memory_space<vmem>>, vector<1x16x128xbf16>
    %160 = vector.shape_cast %159 : vector<1x16x128xbf16> to vector<16x128xbf16>
    %161 = vector.shape_cast %157 : vector<16x128xbf16> to vector<1x16x128xbf16>
    tpu.vector_store %arg6[%158, %c0_53, %c0_54], %161 {strides = array<i32>} : memref<8x16x128xbf16, #tpu.memory_space<vmem>>, vector<1x16x128xbf16>,
    %c4_i32 = arith.constant 4 : i32
    %162 = arith.index_cast %c4_i32 : i32 to index
    %c0_55 = arith.constant 0 : index
    %c0_56 = arith.constant 0 : index
    %163 = vector.load %arg9[%162, %c0_55, %c0_56] : memref<8x16x512xf32, #tpu.memory_space<vmem>>, vector<1x16x512xf32>
    %164 = vector.shape_cast %163 : vector<1x16x512xf32> to vector<16x512xf32>
    %165 = arith.truncf %156 : vector<16x128xf32> to vector<16x128xbf16>
    %c0_57 = arith.constant 0 : index
    %c0_58 = arith.constant 0 : index
    %166 = vector.load %arg5[%c0_57, %c0_58] : memref<128x512xbf16, #tpu.memory_space<vmem>>, vector<128x512xbf16>
    %cst_59 = arith.constant dense<0.000000e+00> : vector<16x512xf32>
    %167 = tpu.matmul %165, %166, %cst_59 {dimension_numbers = #tpu.dot_dimension_numbers<[1], [0], [0], [1], [0, 0, 1, 1], [], []>} : vector<16x128xbf16>, vector<128x512xbf16>, vector<16x512xf32> -> vector<16x512xf32>
    %168 = arith.addf %164, %167 : vector<16x512xf32>
    %169 = vector.extract_strided_slice %168 {offsets = [0, 0], sizes = [16, 128], strides = [1, 1]} : vector<16x512xf32> to vector<16x128xf32>
    %170 = arith.negf %169 : vector<16x128xf32>
    %171 = math.exp %170 : vector<16x128xf32>
    %cst_60 = arith.constant 1.000000e+00 : f32
    %172 = vector.broadcast %cst_60 : f32 to vector<16x128xf32>
    %173 = arith.addf %172, %171 : vector<16x128xf32>
    %174 = arith.divf %172, %173 : vector<16x128xf32>
    %175 = vector.extract_strided_slice %168 {offsets = [0, 128], sizes = [16, 128], strides = [1, 1]} : vector<16x512xf32> to vector<16x128xf32>
    %176 = arith.negf %175 : vector<16x128xf32>
    %177 = math.exp %176 : vector<16x128xf32>
    %cst_61 = arith.constant 1.000000e+00 : f32
    %178 = vector.broadcast %cst_61 : f32 to vector<16x128xf32>
    %179 = arith.addf %178, %177 : vector<16x128xf32>
    %180 = arith.divf %178, %179 : vector<16x128xf32>
    %181 = vector.extract_strided_slice %168 {offsets = [0, 256], sizes = [16, 128], strides = [1, 1]} : vector<16x512xf32> to vector<16x128xf32>
    %182 = math.tanh %181 : vector<16x128xf32>
    %183 = vector.extract_strided_slice %168 {offsets = [0, 384], sizes = [16, 128], strides = [1, 1]} : vector<16x512xf32> to vector<16x128xf32>
    %184 = arith.negf %183 : vector<16x128xf32>
    %185 = math.exp %184 : vector<16x128xf32>
    %cst_62 = arith.constant 1.000000e+00 : f32
    %186 = vector.broadcast %cst_62 : f32 to vector<16x128xf32>
    %187 = arith.addf %186, %185 : vector<16x128xf32>
    %188 = arith.divf %186, %187 : vector<16x128xf32>
    %189 = arith.mulf %180, %154 : vector<16x128xf32>
    %190 = arith.mulf %174, %182 : vector<16x128xf32>
    %191 = arith.addf %189, %190 : vector<16x128xf32>
    %192 = math.tanh %191 : vector<16x128xf32>
    %193 = arith.mulf %188, %192 : vector<16x128xf32>
    %194 = arith.truncf %193 : vector<16x128xf32> to vector<16x128xbf16>
    %195 = arith.index_cast %c4_i32 : i32 to index
    %c0_63 = arith.constant 0 : index
    %c0_64 = arith.constant 0 : index
    %196 = vector.load %arg6[%195, %c0_63, %c0_64] : memref<8x16x128xbf16, #tpu.memory_space<vmem>>, vector<1x16x128xbf16>
    %197 = vector.shape_cast %196 : vector<1x16x128xbf16> to vector<16x128xbf16>
    %198 = vector.shape_cast %194 : vector<16x128xbf16> to vector<1x16x128xbf16>
    tpu.vector_store %arg6[%195, %c0_63, %c0_64], %198 {strides = array<i32>} : memref<8x16x128xbf16, #tpu.memory_space<vmem>>, vector<1x16x128xbf16>,
    %c5_i32 = arith.constant 5 : i32
    %199 = arith.index_cast %c5_i32 : i32 to index
    %c0_65 = arith.constant 0 : index
    %c0_66 = arith.constant 0 : index
    %200 = vector.load %arg9[%199, %c0_65, %c0_66] : memref<8x16x512xf32, #tpu.memory_space<vmem>>, vector<1x16x512xf32>
    %201 = vector.shape_cast %200 : vector<1x16x512xf32> to vector<16x512xf32>
    %202 = arith.truncf %193 : vector<16x128xf32> to vector<16x128xbf16>
    %c0_67 = arith.constant 0 : index
    %c0_68 = arith.constant 0 : index
    %203 = vector.load %arg5[%c0_67, %c0_68] : memref<128x512xbf16, #tpu.memory_space<vmem>>, vector<128x512xbf16>
    %cst_69 = arith.constant dense<0.000000e+00> : vector<16x512xf32>
    %204 = tpu.matmul %202, %203, %cst_69 {dimension_numbers = #tpu.dot_dimension_numbers<[1], [0], [0], [1], [0, 0, 1, 1], [], []>} : vector<16x128xbf16>, vector<128x512xbf16>, vector<16x512xf32> -> vector<16x512xf32>
    %205 = arith.addf %201, %204 : vector<16x512xf32>
    %206 = vector.extract_strided_slice %205 {offsets = [0, 0], sizes = [16, 128], strides = [1, 1]} : vector<16x512xf32> to vector<16x128xf32>
    %207 = arith.negf %206 : vector<16x128xf32>
    %208 = math.exp %207 : vector<16x128xf32>
    %cst_70 = arith.constant 1.000000e+00 : f32
    %209 = vector.broadcast %cst_70 : f32 to vector<16x128xf32>
    %210 = arith.addf %209, %208 : vector<16x128xf32>
    %211 = arith.divf %209, %210 : vector<16x128xf32>
    %212 = vector.extract_strided_slice %205 {offsets = [0, 128], sizes = [16, 128], strides = [1, 1]} : vector<16x512xf32> to vector<16x128xf32>
    %213 = arith.negf %212 : vector<16x128xf32>
    %214 = math.exp %213 : vector<16x128xf32>
    %cst_71 = arith.constant 1.000000e+00 : f32
    %215 = vector.broadcast %cst_71 : f32 to vector<16x128xf32>
    %216 = arith.addf %215, %214 : vector<16x128xf32>
    %217 = arith.divf %215, %216 : vector<16x128xf32>
    %218 = vector.extract_strided_slice %205 {offsets = [0, 256], sizes = [16, 128], strides = [1, 1]} : vector<16x512xf32> to vector<16x128xf32>
    %219 = math.tanh %218 : vector<16x128xf32>
    %220 = vector.extract_strided_slice %205 {offsets = [0, 384], sizes = [16, 128], strides = [1, 1]} : vector<16x512xf32> to vector<16x128xf32>
    %221 = arith.negf %220 : vector<16x128xf32>
    %222 = math.exp %221 : vector<16x128xf32>
    %cst_72 = arith.constant 1.000000e+00 : f32
    %223 = vector.broadcast %cst_72 : f32 to vector<16x128xf32>
    %224 = arith.addf %223, %222 : vector<16x128xf32>
    %225 = arith.divf %223, %224 : vector<16x128xf32>
    %226 = arith.mulf %217, %191 : vector<16x128xf32>
    %227 = arith.mulf %211, %219 : vector<16x128xf32>
    %228 = arith.addf %226, %227 : vector<16x128xf32>
    %229 = math.tanh %228 : vector<16x128xf32>
    %230 = arith.mulf %225, %229 : vector<16x128xf32>
    %231 = arith.truncf %230 : vector<16x128xf32> to vector<16x128xbf16>
    %232 = arith.index_cast %c5_i32 : i32 to index
    %c0_73 = arith.constant 0 : index
    %c0_74 = arith.constant 0 : index
    %233 = vector.load %arg6[%232, %c0_73, %c0_74] : memref<8x16x128xbf16, #tpu.memory_space<vmem>>, vector<1x16x128xbf16>
    %234 = vector.shape_cast %233 : vector<1x16x128xbf16> to vector<16x128xbf16>
    %235 = vector.shape_cast %231 : vector<16x128xbf16> to vector<1x16x128xbf16>
    tpu.vector_store %arg6[%232, %c0_73, %c0_74], %235 {strides = array<i32>} : memref<8x16x128xbf16, #tpu.memory_space<vmem>>, vector<1x16x128xbf16>,
    %c6_i32 = arith.constant 6 : i32
    %236 = arith.index_cast %c6_i32 : i32 to index
    %c0_75 = arith.constant 0 : index
    %c0_76 = arith.constant 0 : index
    %237 = vector.load %arg9[%236, %c0_75, %c0_76] : memref<8x16x512xf32, #tpu.memory_space<vmem>>, vector<1x16x512xf32>
    %238 = vector.shape_cast %237 : vector<1x16x512xf32> to vector<16x512xf32>
    %239 = arith.truncf %230 : vector<16x128xf32> to vector<16x128xbf16>
    %c0_77 = arith.constant 0 : index
    %c0_78 = arith.constant 0 : index
    %240 = vector.load %arg5[%c0_77, %c0_78] : memref<128x512xbf16, #tpu.memory_space<vmem>>, vector<128x512xbf16>
    %cst_79 = arith.constant dense<0.000000e+00> : vector<16x512xf32>
    %241 = tpu.matmul %239, %240, %cst_79 {dimension_numbers = #tpu.dot_dimension_numbers<[1], [0], [0], [1], [0, 0, 1, 1], [], []>} : vector<16x128xbf16>, vector<128x512xbf16>, vector<16x512xf32> -> vector<16x512xf32>
    %242 = arith.addf %238, %241 : vector<16x512xf32>
    %243 = vector.extract_strided_slice %242 {offsets = [0, 0], sizes = [16, 128], strides = [1, 1]} : vector<16x512xf32> to vector<16x128xf32>
    %244 = arith.negf %243 : vector<16x128xf32>
    %245 = math.exp %244 : vector<16x128xf32>
    %cst_80 = arith.constant 1.000000e+00 : f32
    %246 = vector.broadcast %cst_80 : f32 to vector<16x128xf32>
    %247 = arith.addf %246, %245 : vector<16x128xf32>
    %248 = arith.divf %246, %247 : vector<16x128xf32>
    %249 = vector.extract_strided_slice %242 {offsets = [0, 128], sizes = [16, 128], strides = [1, 1]} : vector<16x512xf32> to vector<16x128xf32>
    %250 = arith.negf %249 : vector<16x128xf32>
    %251 = math.exp %250 : vector<16x128xf32>
    %cst_81 = arith.constant 1.000000e+00 : f32
    %252 = vector.broadcast %cst_81 : f32 to vector<16x128xf32>
    %253 = arith.addf %252, %251 : vector<16x128xf32>
    %254 = arith.divf %252, %253 : vector<16x128xf32>
    %255 = vector.extract_strided_slice %242 {offsets = [0, 256], sizes = [16, 128], strides = [1, 1]} : vector<16x512xf32> to vector<16x128xf32>
    %256 = math.tanh %255 : vector<16x128xf32>
    %257 = vector.extract_strided_slice %242 {offsets = [0, 384], sizes = [16, 128], strides = [1, 1]} : vector<16x512xf32> to vector<16x128xf32>
    %258 = arith.negf %257 : vector<16x128xf32>
    %259 = math.exp %258 : vector<16x128xf32>
    %cst_82 = arith.constant 1.000000e+00 : f32
    %260 = vector.broadcast %cst_82 : f32 to vector<16x128xf32>
    %261 = arith.addf %260, %259 : vector<16x128xf32>
    %262 = arith.divf %260, %261 : vector<16x128xf32>
    %263 = arith.mulf %254, %228 : vector<16x128xf32>
    %264 = arith.mulf %248, %256 : vector<16x128xf32>
    %265 = arith.addf %263, %264 : vector<16x128xf32>
    %266 = math.tanh %265 : vector<16x128xf32>
    %267 = arith.mulf %262, %266 : vector<16x128xf32>
    %268 = arith.truncf %267 : vector<16x128xf32> to vector<16x128xbf16>
    %269 = arith.index_cast %c6_i32 : i32 to index
    %c0_83 = arith.constant 0 : index
    %c0_84 = arith.constant 0 : index
    %270 = vector.load %arg6[%269, %c0_83, %c0_84] : memref<8x16x128xbf16, #tpu.memory_space<vmem>>, vector<1x16x128xbf16>
    %271 = vector.shape_cast %270 : vector<1x16x128xbf16> to vector<16x128xbf16>
    %272 = vector.shape_cast %268 : vector<16x128xbf16> to vector<1x16x128xbf16>
    tpu.vector_store %arg6[%269, %c0_83, %c0_84], %272 {strides = array<i32>} : memref<8x16x128xbf16, #tpu.memory_space<vmem>>, vector<1x16x128xbf16>,
    %c7_i32 = arith.constant 7 : i32
    %273 = arith.index_cast %c7_i32 : i32 to index
    %c0_85 = arith.constant 0 : index
    %c0_86 = arith.constant 0 : index
    %274 = vector.load %arg9[%273, %c0_85, %c0_86] : memref<8x16x512xf32, #tpu.memory_space<vmem>>, vector<1x16x512xf32>
    %275 = vector.shape_cast %274 : vector<1x16x512xf32> to vector<16x512xf32>
    %276 = arith.truncf %267 : vector<16x128xf32> to vector<16x128xbf16>
    %c0_87 = arith.constant 0 : index
    %c0_88 = arith.constant 0 : index
    %277 = vector.load %arg5[%c0_87, %c0_88] : memref<128x512xbf16, #tpu.memory_space<vmem>>, vector<128x512xbf16>
    %cst_89 = arith.constant dense<0.000000e+00> : vector<16x512xf32>
    %278 = tpu.matmul %276, %277, %cst_89 {dimension_numbers = #tpu.dot_dimension_numbers<[1], [0], [0], [1], [0, 0, 1, 1], [], []>} : vector<16x128xbf16>, vector<128x512xbf16>, vector<16x512xf32> -> vector<16x512xf32>
    %279 = arith.addf %275, %278 : vector<16x512xf32>
    %280 = vector.extract_strided_slice %279 {offsets = [0, 0], sizes = [16, 128], strides = [1, 1]} : vector<16x512xf32> to vector<16x128xf32>
    %281 = arith.negf %280 : vector<16x128xf32>
    %282 = math.exp %281 : vector<16x128xf32>
    %cst_90 = arith.constant 1.000000e+00 : f32
    %283 = vector.broadcast %cst_90 : f32 to vector<16x128xf32>
    %284 = arith.addf %283, %282 : vector<16x128xf32>
    %285 = arith.divf %283, %284 : vector<16x128xf32>
    %286 = vector.extract_strided_slice %279 {offsets = [0, 128], sizes = [16, 128], strides = [1, 1]} : vector<16x512xf32> to vector<16x128xf32>
    %287 = arith.negf %286 : vector<16x128xf32>
    %288 = math.exp %287 : vector<16x128xf32>
    %cst_91 = arith.constant 1.000000e+00 : f32
    %289 = vector.broadcast %cst_91 : f32 to vector<16x128xf32>
    %290 = arith.addf %289, %288 : vector<16x128xf32>
    %291 = arith.divf %289, %290 : vector<16x128xf32>
    %292 = vector.extract_strided_slice %279 {offsets = [0, 256], sizes = [16, 128], strides = [1, 1]} : vector<16x512xf32> to vector<16x128xf32>
    %293 = math.tanh %292 : vector<16x128xf32>
    %294 = vector.extract_strided_slice %279 {offsets = [0, 384], sizes = [16, 128], strides = [1, 1]} : vector<16x512xf32> to vector<16x128xf32>
    %295 = arith.negf %294 : vector<16x128xf32>
    %296 = math.exp %295 : vector<16x128xf32>
    %cst_92 = arith.constant 1.000000e+00 : f32
    %297 = vector.broadcast %cst_92 : f32 to vector<16x128xf32>
    %298 = arith.addf %297, %296 : vector<16x128xf32>
    %299 = arith.divf %297, %298 : vector<16x128xf32>
    %300 = arith.mulf %291, %265 : vector<16x128xf32>
    %301 = arith.mulf %285, %293 : vector<16x128xf32>
    %302 = arith.addf %300, %301 : vector<16x128xf32>
    %303 = math.tanh %302 : vector<16x128xf32>
    %304 = arith.mulf %299, %303 : vector<16x128xf32>
    %305 = arith.truncf %304 : vector<16x128xf32> to vector<16x128xbf16>
    %306 = arith.index_cast %c7_i32 : i32 to index
    %c0_93 = arith.constant 0 : index
    %c0_94 = arith.constant 0 : index
    %307 = vector.load %arg6[%306, %c0_93, %c0_94] : memref<8x16x128xbf16, #tpu.memory_space<vmem>>, vector<1x16x128xbf16>
    %308 = vector.shape_cast %307 : vector<1x16x128xbf16> to vector<16x128xbf16>
    %309 = vector.shape_cast %305 : vector<16x128xbf16> to vector<1x16x128xbf16>
    tpu.vector_store %arg6[%306, %c0_93, %c0_94], %309 {strides = array<i32>} : memref<8x16x128xbf16, #tpu.memory_space<vmem>>, vector<1x16x128xbf16>,
    %c8_i32 = arith.constant 8 : i32
    %c0_95 = arith.constant 0 : index
    %c0_96 = arith.constant 0 : index
    %310 = vector.load %arg7[%c0_95, %c0_96] : memref<16x128xf32, #tpu.memory_space<vmem>>, vector<16x128xf32>
    tpu.vector_store %arg7[%c0_95, %c0_96], %304 {strides = array<i32>} : memref<16x128xf32, #tpu.memory_space<vmem>>, vector<16x128xf32>,
    %c0_97 = arith.constant 0 : index
    %c0_98 = arith.constant 0 : index
    %311 = vector.load %arg8[%c0_97, %c0_98] : memref<16x128xf32, #tpu.memory_space<vmem>>, vector<16x128xf32>
    tpu.vector_store %arg8[%c0_97, %c0_98], %302 {strides = array<i32>} : memref<16x128xf32, #tpu.memory_space<vmem>>, vector<16x128xf32>,
    return
  }
  func.func @transform_0(%arg0: i32, %arg1: i32) -> (i32, i32, i32) {
    %c0_i32 = arith.constant 0 : i32
    %c0_i32_0 = arith.constant 0 : i32
    return %arg1, %arg0, %c0_i32 : i32, i32, i32
  }
  func.func @transform_1(%arg0: i32, %arg1: i32) -> (i32, i32) {
    %c0_i32 = arith.constant 0 : i32
    %c0_i32_0 = arith.constant 0 : i32
    %c0_i32_1 = arith.constant 0 : i32
    return %c0_i32, %c0_i32_0 : i32, i32
  }
  func.func @transform_2(%arg0: i32, %arg1: i32) -> (i32, i32) {
    %c0_i32 = arith.constant 0 : i32
    %c0_i32_0 = arith.constant 0 : i32
    %c0_i32_1 = arith.constant 0 : i32
    return %c0_i32, %c0_i32_0 : i32, i32
  }
  func.func @transform_3(%arg0: i32, %arg1: i32) -> (i32, i32) {
    %c0_i32 = arith.constant 0 : i32
    %c0_i32_0 = arith.constant 0 : i32
    %c0_i32_1 = arith.constant 0 : i32
    return %c0_i32, %c0_i32_0 : i32, i32
  }
  func.func @transform_4(%arg0: i32, %arg1: i32) -> (i32, i32, i32) {
    %c0_i32 = arith.constant 0 : i32
    %c0_i32_0 = arith.constant 0 : i32
    return %arg1, %arg0, %c0_i32 : i32, i32, i32
  }
}

</mosaic_0001>

<llo_original>
// kernel: tpu_custom_call.1
$region0: #{tpu_custom_call.1}
  #allocation0 [shape = 'u32[]', space=smem, size = 0x4, offset = 0x4, fixed_abs, tag = 'smem constant byte address 0x4 - core index']
  #allocation1 [shape = 'u32[72,128]{1,0:T(1,128)}', space=vmem, size = 0x9000, scoped, tag = 'internal scratch']
  #allocation2 [shape = 'f32[16,128]{1,0:T(8,128)}', space=vmem, size = 0x2000, scoped, tag = 'scratch operand']
  #allocation3 [shape = 'f32[16,128]{1,0:T(8,128)}', space=vmem, size = 0x2000, scoped, tag = 'scratch operand']
  #allocation4 [shape = 'f32[8,16,512]{2,1,0:T(8,128)}', space=vmem, size = 0x40000, scoped, tag = 'scratch operand']
  %s0 = inlined_call_operand.hbm [shape: bf16[16,16,128], index: 0, kind: input, shape index: {}]
  %s1 = inlined_call_operand.hbm [shape: bf16[128,512], index: 1, kind: input, shape index: {}]
  %s2 = inlined_call_operand.hbm [shape: f32[1,512], index: 2, kind: input, shape index: {}]
  %s3 = inlined_call_operand.hbm [shape: bf16[128,512], index: 3, kind: input, shape index: {}]
  %s4 = inlined_call_operand.hbm [shape: bf16[16,16,128], index: 4, kind: output, shape index: {}]
  %s5 = sld [smem:[#allocation0]]
  $region69: #{tpu_custom_call.1} parent=0
    _
  %s7 = ssub.s32 1, %s5
  %s8 = scalar_select 0, %s7, %s5
  $region1: #{tpu_custom_call.1} parent=0
    #allocation5 [shape = 'u8[65536]{0}', space=vmem, size = 0x10000, scoped, tag = 'input window, operand 0']
    #allocation6 [shape = 's32[2]{0}', space=sflag, size = 0x8, scoped, tag = 'scoped memory for tpu_custom_call.1']
    #allocation7 [shape = 's32[2]{0}', space=sflag, size = 0x8, scoped, tag = 'scoped memory for tpu_custom_call.1']
    #allocation8 [shape = 'u8[131072]{0}', space=vmem, size = 0x20000, scoped, tag = 'input window, operand 1, single buffered']
    #allocation9 [shape = 's32[1]{0}', space=sflag, size = 0x4, scoped, tag = 'scoped memory for tpu_custom_call.1']
    #allocation10 [shape = 'u8[2048]{0}', space=vmem, size = 0x800, scoped, tag = 'input window, operand 2, single buffered']
    #allocation11 [shape = 'u8[131072]{0}', space=vmem, size = 0x20000, scoped, tag = 'input window, operand 3, single buffered']
    #allocation12 [shape = 's32[1]{0}', space=sflag, size = 0x4, scoped, tag = 'scoped memory for tpu_custom_call.1']
    #allocation13 [shape = 'u8[65536]{0}', space=vmem, size = 0x10000, scoped, tag = 'output window, operand 0']
    %9 = vsyncpa [#allocation6], 0
    %s10 = scalar_lea.sflag [#allocation6], 1
    %11 = vsyncpa %s10, 0
    %12 = vsyncpa [#allocation9], 0
    %13 = vsyncpa [#allocation12], 0
    %14 = vsyncpa [#allocation7], 0
    %s15 = scalar_lea.sflag [#allocation7], 1
    %16 = vsyncpa %s15, 0
    loop: start=0, step=1, limit=4
    $region2: #{tpu_custom_call.1} parent=1 // loop_pre_header
      _
    $region3: #{tpu_custom_call.1} parent=1 // loop_header
      %s18 = sphi 0, %s22
      %p19 = scmp.ge.s32.totalorder %s18, 4
      %s25 = sphi 0, %s37
      %s26 = sphi 0, %s33
      %s27 = sphi 0, %s25
      %s28 = sphi 0, %s26
      %s29 = sphi 0, %s27
      %s30 = sphi 0, %s28
      %s42 = sphi 0, %s44
      %s45 = sphi 0, %s42
      %s46 = sphi 0, %s45
      %s62 = sphi 0, %s46
      %s66 = sphi 0, %s66
      %s68 = sphi 0, %s66
      %s69 = sphi 0, %s68
      %s83 = sphi 0, %s69
      %s87 = sphi 0, %s87
      %s89 = sphi 0, %s87
      %s90 = sphi 0, %s89
      %s104 = sphi 0, %s90
      %s108 = sphi 0, %s108
      %s110 = sphi 0, %s108
      %s111 = sphi 0, %s110
      %s125 = sphi 0, %s111
      %s133 = sphi 0, %s135
      %s136 = sphi 0, %s133
      %s137 = sphi 0, %s136
      %s153 = sphi 0, %s137
    $region4: #{tpu_custom_call.1} parent=1 // loop_header_branch
      %21 = sbr.rel (%p19) target = $region8
    $region5: #{tpu_custom_call.1} parent=1 // loop_body
      %s23 = ssub.s32 %s18, 1
      %s24 = ssub.s32 %s18, 2
      %s31 = sadd.s32 1, %s26
      %p32 = scmp.ge.s32.totalorder %s31, 2
      %s33 = scalar_select %p32, 0, %s31
      %s34 = sadd.s32 1, %s25
      %s35 = scalar_select %p32, %s34, %s25
      %p36 = scmp.ge.s32.totalorder %s35, 1
      %s37 = scalar_select %p36, 0, %s35
      %s38 = ssub.s32 %s26, %s33
      %s39 = ssub.s32 %s25, %s37
      %s40 = sor.u32 %s38, %s39
      %p41 = scmp.eq.s32.totalorder %s40, 0
      %s43 = sadd.s32 %s42, 1
      %s44 = scalar_select %p41, %s42, %s43
      %p47 = pneg %p41
      %p48 = scmp.eq.s32.totalorder %s18, 1
      %p49 = por %p47, %p48
      %p50 = scmp.ne.s32.totalorder %s42, %s45
      %p51 = scmp.eq.s32.totalorder %s18, 0
      %p52 = por %p50, %p51
      %p53 = scmp.ne.s32.totalorder %s42, %s45
      %p54 = scmp.eq.s32.totalorder %s23, 1
      %p55 = por %p53, %p54
      %p56 = scmp.ne.s32.totalorder %s45, %s46
      %p57 = scmp.eq.s32.totalorder %s23, 0
      %p58 = por %p56, %p57
      %p59 = scmp.ne.s32.totalorder %s45, %s46
      %p60 = scmp.eq.s32.totalorder %s24, 1
      %p61 = por %p59, %p60
      %p63 = scmp.ne.s32.totalorder %s46, %s62
      %p64 = scmp.eq.s32.totalorder %s24, 0
      %p65 = por %p63, %p64
      %s67 = sadd.s32 %s66, 1
      %p70 = scmp.eq.s32.totalorder %s18, 1
      %p71 = scmp.ne.s32.totalorder %s66, %s68
      %p72 = scmp.eq.s32.totalorder %s18, 0
      %p73 = por %p71, %p72
      %p74 = scmp.ne.s32.totalorder %s66, %s68
      %p75 = scmp.eq.s32.totalorder %s23, 1
      %p76 = por %p74, %p75
      %p77 = scmp.ne.s32.totalorder %s68, %s69
      %p78 = scmp.eq.s32.totalorder %s23, 0
      %p79 = por %p77, %p78
      %p80 = scmp.ne.s32.totalorder %s68, %s69
      %p81 = scmp.eq.s32.totalorder %s24, 1
      %p82 = por %p80, %p81
      %p84 = scmp.ne.s32.totalorder %s69, %s83
      %p85 = scmp.eq.s32.totalorder %s24, 0
      %p86 = por %p84, %p85
      %s88 = sadd.s32 %s87, 1
      %p91 = scmp.eq.s32.totalorder %s18, 1
      %p92 = scmp.ne.s32.totalorder %s87, %s89
      %p93 = scmp.eq.s32.totalorder %s18, 0
      %p94 = por %p92, %p93
      %p95 = scmp.ne.s32.totalorder %s87, %s89
      %p96 = scmp.eq.s32.totalorder %s23, 1
      %p97 = por %p95, %p96
      %p98 = scmp.ne.s32.totalorder %s89, %s90
      %p99 = scmp.eq.s32.totalorder %s23, 0
      %p100 = por %p98, %p99
      %p101 = scmp.ne.s32.totalorder %s89, %s90
      %p102 = scmp.eq.s32.totalorder %s24, 1
      %p103 = por %p101, %p102
      %p105 = scmp.ne.s32.totalorder %s90, %s104
      %p106 = scmp.eq.s32.totalorder %s24, 0
      %p107 = por %p105, %p106
      %s109 = sadd.s32 %s108, 1
      %p112 = scmp.eq.s32.totalorder %s18, 1
      %p113 = scmp.ne.s32.totalorder %s108, %s110
      %p114 = scmp.eq.s32.totalorder %s18, 0
      %p115 = por %p113, %p114
      %p116 = scmp.ne.s32.totalorder %s108, %s110
      %p117 = scmp.eq.s32.totalorder %s23, 1
      %p118 = por %p116, %p117
      %p119 = scmp.ne.s32.totalorder %s110, %s111
      %p120 = scmp.eq.s32.totalorder %s23, 0
      %p121 = por %p119, %p120
      %p122 = scmp.ne.s32.totalorder %s110, %s111
      %p123 = scmp.eq.s32.totalorder %s24, 1
      %p124 = por %p122, %p123
      %p126 = scmp.ne.s32.totalorder %s111, %s125
      %p127 = scmp.eq.s32.totalorder %s24, 0
      %p128 = por %p126, %p127
      %s129 = ssub.s32 %s26, %s33
      %s130 = ssub.s32 %s25, %s37
      %s131 = sor.u32 %s129, %s130
      %p132 = scmp.eq.s32.totalorder %s131, 0
      %s134 = sadd.s32 %s133, 1
      %s135 = scalar_select %p132, %s133, %s134
      %p138 = pneg %p132
      %p139 = scmp.eq.s32.totalorder %s18, 1
      %p140 = por %p138, %p139
      %p141 = scmp.ne.s32.totalorder %s133, %s136
      %p142 = scmp.eq.s32.totalorder %s18, 0
      %p143 = por %p141, %p142
      %p144 = scmp.ne.s32.totalorder %s133, %s136
      %p145 = scmp.eq.s32.totalorder %s23, 1
      %p146 = por %p144, %p145
      %p147 = scmp.ne.s32.totalorder %s136, %s137
      %p148 = scmp.eq.s32.totalorder %s23, 0
      %p149 = por %p147, %p148
      %p150 = scmp.ne.s32.totalorder %s136, %s137
      %p151 = scmp.eq.s32.totalorder %s24, 1
      %p152 = por %p150, %p151
      %p154 = scmp.ne.s32.totalorder %s137, %s153
      %p155 = scmp.eq.s32.totalorder %s24, 0
      %p156 = por %p154, %p155
      %p157 = scmp.le.s32.totalorder 1, %s18
      %p158 = scmp.lt.s32.totalorder %s18, 3
      %p159 = pnand %p157, %p158
      %p160 = pneg %p159
      // Predicated region
      $region9: #{tpu_custom_call.1} parent=5 // pred_check
        _
      $region10: #{tpu_custom_call.1} parent=5 // pred_check_branch
        %162 = sbr.rel (%p159) target = $region12
      $region11: #{tpu_custom_call.1} parent=5 // pred_region
        %s163 = ssub.s32 %s18, 1
        // Predicated region
        $region13: #{tpu_custom_call.1} parent=11 // pred_check
          %p164 = pneg %p79
        $region14: #{tpu_custom_call.1} parent=11 // pred_check_branch
          %166 = sbr.rel (%p164) target = $region16
        $region15: #{tpu_custom_call.1} parent=11 // pred_region
          %168 = vsyncadd [#allocation9], 0
          %s169 = sshll.u32 %s1, 4
          %s170 = int_to_ptr.hbm [resolvable:$true] %s169
          %s171 = sshll.u32 [#allocation8], 4
          %s172 = int_to_ptr.vmem [resolvable:$true] %s171
          %177 = dma.hbm_to_vmem [thread:$0]  %s170, 4096, %s172, [#allocation9], 256, 256, 16
        $region16: #{tpu_custom_call.1} parent=11 // pred_fallthru
          _
        // Predicated region
        $region17: #{tpu_custom_call.1} parent=11 // pred_check
          %p178 = pneg %p100
        $region18: #{tpu_custom_call.1} parent=11 // pred_check_branch
          %180 = sbr.rel (%p178) target = $region20
        $region19: #{tpu_custom_call.1} parent=11 // pred_region
          %182 = vsyncadd [#allocation9], 0
          %s184 = sshll.u32 %s2, 4
          %s185 = int_to_ptr.hbm [resolvable:$true] %s184
          %s186 = sshll.u32 [#allocation10], 4
          %s187 = int_to_ptr.vmem [resolvable:$true] %s186
          %189 = dma.hbm_to_vmem [thread:$0]  %s185, 64, %s187, [#allocation9]
        $region20: #{tpu_custom_call.1} parent=11 // pred_fallthru
          _
        // Predicated region
        $region21: #{tpu_custom_call.1} parent=11 // pred_check
          %p190 = pneg %p121
        $region22: #{tpu_custom_call.1} parent=11 // pred_check_branch
          %192 = sbr.rel (%p190) target = $region24
        $region23: #{tpu_custom_call.1} parent=11 // pred_region
          %194 = vsyncadd [#allocation12], 0
          %s195 = sshll.u32 %s3, 4
          %s196 = int_to_ptr.hbm [resolvable:$true] %s195
          %s197 = sshll.u32 [#allocation11], 4
          %s198 = int_to_ptr.vmem [resolvable:$true] %s197
          %203 = dma.hbm_to_vmem [thread:$0]  %s196, 4096, %s198, [#allocation12], 256, 256, 16
        $region24: #{tpu_custom_call.1} parent=11 // pred_fallthru
          _
      $region12: #{tpu_custom_call.1} parent=5 // pred_fallthru
        _
      %p204 = scmp.lt.s32.totalorder %s18, 2
      // Predicated region
      $region25: #{tpu_custom_call.1} parent=5 // pred_check
        %p205 = pneg %p204
      $region26: #{tpu_custom_call.1} parent=5 // pred_check_branch
        %207 = sbr.rel (%p205) target = $region28
      $region27: #{tpu_custom_call.1} parent=5 // pred_region
        // Predicated region
        $region29: #{tpu_custom_call.1} parent=27 // pred_check
          %p208 = pneg %p52
        $region30: #{tpu_custom_call.1} parent=27 // pred_check_branch
          %210 = sbr.rel (%p208) target = $region32
        $region31: #{tpu_custom_call.1} parent=27 // pred_region
          %s211 = sand.u32 %s42, 1
          %s212 = scalar_lea.sflag [#allocation6], %s211
          %s213 = sand.u32 %s42, 1
          %s214 = smul.addr %s213, 64
          %s215 = scalar_lea.vmem [#allocation5], %s214
          %s216 = smul.u32 8, %s26
          %s217 = smul.u32 2, %s25
          %219 = vsyncadd %s212, 0
          %s220 = smul.addr %s216, 2
          %s221 = sadd.s32 %s217, %s220
          %s222 = smul.addr %s221, 4
          %s223 = scalar_lea.hbm %s0, %s222
          %s224 = sshll.u32 %s223, 4
          %s225 = int_to_ptr.hbm [resolvable:$true] %s224
          %s226 = sshll.u32 %s215, 4
          %s227 = int_to_ptr.vmem [resolvable:$true] %s226
          %232 = dma.hbm_to_vmem [thread:$0]  %s225, 1024, %s227, %s212, 64, 64, 4
        $region32: #{tpu_custom_call.1} parent=27 // pred_fallthru
          _
      $region28: #{tpu_custom_call.1} parent=5 // pred_fallthru
        _
      %p233 = scmp.le.s32.totalorder 1, %s18
      %p234 = scmp.lt.s32.totalorder %s18, 3
      %p235 = pnand %p233, %p234
      %p236 = pneg %p235
      // Predicated region
      $region33: #{tpu_custom_call.1} parent=5 // pred_check
        _
      $region34: #{tpu_custom_call.1} parent=5 // pred_check_branch
        %238 = sbr.rel (%p235) target = $region36
      $region35: #{tpu_custom_call.1} parent=5 // pred_region
        %s239 = ssub.s32 %s18, 1
        %s240 = sand.u32 %s45, 1
        %s241 = scalar_lea.sflag [#allocation6], %s240
        %s242 = sand.u32 %s45, 1
        %s243 = smul.addr %s242, 64
        %s244 = scalar_lea.vmem [#allocation5], %s243
        // Predicated region
        $region37: #{tpu_custom_call.1} parent=35 // pred_check
          %p245 = pneg %p58
        $region38: #{tpu_custom_call.1} parent=35 // pred_check_branch
          %247 = sbr.rel (%p245) target = $region40
        $region39: #{tpu_custom_call.1} parent=35 // pred_region
          %249 = dma.done %s241, 1024
        $region40: #{tpu_custom_call.1} parent=35 // pred_fallthru
          _
        // Predicated region
        $region41: #{tpu_custom_call.1} parent=35 // pred_check
          %p250 = pneg %p79
        $region42: #{tpu_custom_call.1} parent=35 // pred_check_branch
          %252 = sbr.rel (%p250) target = $region44
        $region43: #{tpu_custom_call.1} parent=35 // pred_region
          %254 = dma.done [#allocation9], 4096
        $region44: #{tpu_custom_call.1} parent=35 // pred_fallthru
          _
        // Predicated region
        $region45: #{tpu_custom_call.1} parent=35 // pred_check
          %p255 = pneg %p100
        $region46: #{tpu_custom_call.1} parent=35 // pred_check_branch
          %257 = sbr.rel (%p255) target = $region48
        $region47: #{tpu_custom_call.1} parent=35 // pred_region
          %259 = dma.done [#allocation9], 64
        $region48: #{tpu_custom_call.1} parent=35 // pred_fallthru
          _
        // Predicated region
        $region49: #{tpu_custom_call.1} parent=35 // pred_check
          %p260 = pneg %p121
        $region50: #{tpu_custom_call.1} parent=35 // pred_check_branch
          %262 = sbr.rel (%p260) target = $region52
        $region51: #{tpu_custom_call.1} parent=35 // pred_region
          %264 = dma.done [#allocation12], 4096
        $region52: #{tpu_custom_call.1} parent=35 // pred_fallthru
          _
        %s265 = sand.u32 %s45, 1
        %s266 = scalar_lea.sflag [#allocation6], %s265
        %s267 = sand.u32 %s45, 1
        %s268 = smul.addr %s267, 64
        %s269 = scalar_lea.vmem [#allocation5], %s268
        %p270 = pneg %p58
        %p271 = pneg %p55
        %p272 = pneg %p79
        %p273 = pneg %p76
        %p274 = pneg %p100
        %p275 = pneg %p97
        %p276 = pneg %p121
        %p277 = pneg %p118
        %p278 = pneg %p149
        %p279 = pneg %p146
        %s280 = sand.u32 %s136, 1
        %s281 = scalar_lea.sflag [#allocation7], %s280
        %s282 = sand.u32 %s136, 1
        %s283 = smul.addr %s282, 64
        %s284 = scalar_lea.vmem [#allocation13], %s283
        %s285 = smul.u32 8, %s28
        %s286 = smul.u32 2, %s27
        %s287 = smul.u32 8, %s28
        %s288 = smul.u32 2, %s27
        %p289 = scmp.eq.s32.totalorder %s28, 0
        // Predicated region
        $region53: #{tpu_custom_call.1} parent=35 // pred_check
          %p290 = pneg %p289
        $region54: #{tpu_custom_call.1} parent=35 // pred_check_branch
          %292 = sbr.rel (%p290) target = $region56
        $region55: #{tpu_custom_call.1} parent=35 // pred_region
          %293 = vst [vmem:[#allocation2] sm:$0xff] 0.0
          %294 = vst [vmem:[#allocation2 + $0x8] sm:$0xff] 0.0
          %295 = vst [vmem:[#allocation3] sm:$0xff] 0.0
          %296 = vst [vmem:[#allocation3 + $0x8] sm:$0xff] 0.0
        $region56: #{tpu_custom_call.1} parent=35 // pred_fallthru
          _
        %v297 = vld [vmem:[%s244] sm:$0xf]
        %v298 = vld [vmem:[%s244 + $0x4] sm:$0xf]
        %v299 = vld [vmem:[%s244 + $0x8] sm:$0xf]
        %v300 = vld [vmem:[%s244 + $0xc] sm:$0xf]
        %v301 = vld [vmem:[%s244 + $0x10] sm:$0xf]
        %v302 = vld [vmem:[%s244 + $0x14] sm:$0xf]
        %v303 = vld [vmem:[%s244 + $0x18] sm:$0xf]
        %v304 = vld [vmem:[%s244 + $0x1c] sm:$0xf]
        %v305 = vld [vmem:[%s244 + $0x20] sm:$0xf]
        %v306 = vld [vmem:[%s244 + $0x24] sm:$0xf]
        %v307 = vld [vmem:[%s244 + $0x28] sm:$0xf]
        %v308 = vld [vmem:[%s244 + $0x2c] sm:$0xf]
        %v309 = vld [vmem:[%s244 + $0x30] sm:$0xf]
        %v310 = vld [vmem:[%s244 + $0x34] sm:$0xf]
        %v311 = vld [vmem:[%s244 + $0x38] sm:$0xf]
        %v312 = vld [vmem:[%s244 + $0x3c] sm:$0xf]
        %v313 = vld [vmem:[#allocation8] sm:$0xff]
        %v314 = vld [vmem:[#allocation8 + $0x8] sm:$0xff]
        %v315 = vld [vmem:[#allocation8 + $0x10] sm:$0xff]
        %v316 = vld [vmem:[#allocation8 + $0x18] sm:$0xff]
        %v317 = vld [vmem:[#allocation8 + $0x20] sm:$0xff]
        %v318 = vld [vmem:[#allocation8 + $0x28] sm:$0xff]
        %v319 = vld [vmem:[#allocation8 + $0x30] sm:$0xff]
        %v320 = vld [vmem:[#allocation8 + $0x38] sm:$0xff]
        %v321 = vld [vmem:[#allocation8 + $0x40] sm:$0xff]
        %v322 = vld [vmem:[#allocation8 + $0x48] sm:$0xff]
        %v323 = vld [vmem:[#allocation8 + $0x50] sm:$0xff]
        %v324 = vld [vmem:[#allocation8 + $0x58] sm:$0xff]
        %v325 = vld [vmem:[#allocation8 + $0x60] sm:$0xff]
        %v326 = vld [vmem:[#allocation8 + $0x68] sm:$0xff]
        %v327 = vld [vmem:[#allocation8 + $0x70] sm:$0xff]
        %v328 = vld [vmem:[#allocation8 + $0x78] sm:$0xff]
        %v329 = vld [vmem:[#allocation8 + $0x80] sm:$0xff]
        %v330 = vld [vmem:[#allocation8 + $0x88] sm:$0xff]
        %v331 = vld [vmem:[#allocation8 + $0x90] sm:$0xff]
        %v332 = vld [vmem:[#allocation8 + $0x98] sm:$0xff]
        %v333 = vld [vmem:[#allocation8 + $0xa0] sm:$0xff]
        %v334 = vld [vmem:[#allocation8 + $0xa8] sm:$0xff]
        %v335 = vld [vmem:[#allocation8 + $0xb0] sm:$0xff]
        %v336 = vld [vmem:[#allocation8 + $0xb8] sm:$0xff]
        %v337 = vld [vmem:[#allocation8 + $0xc0] sm:$0xff]
        %v338 = vld [vmem:[#allocation8 + $0xc8] sm:$0xff]
        %v339 = vld [vmem:[#allocation8 + $0xd0] sm:$0xff]
        %v340 = vld [vmem:[#allocation8 + $0xd8] sm:$0xff]
        %v341 = vld [vmem:[#allocation8 + $0xe0] sm:$0xff]
        %v342 = vld [vmem:[#allocation8 + $0xe8] sm:$0xff]
        %v343 = vld [vmem:[#allocation8 + $0xf0] sm:$0xff]
        %v344 = vld [vmem:[#allocation8 + $0xf8] sm:$0xff]
        %v345 = vld [vmem:[#allocation10] sm:$0xf]
        %v347 = vperm.slane %v345, 0
        %v348 = vperm.slane %v345, 1
        %v349 = vperm.slane %v345, 2
        %v350 = vperm.slane %v345, 3
        %v371 = vunpack.c.l.b16 %v297
        %v372 = vunpack.c.l.b16 %v298
        %v373 = vunpack.c.l.b16 %v299
        %v374 = vunpack.c.l.b16 %v300
        %v375 = vunpack.c.l.b16 %v301
        %v376 = vunpack.c.l.b16 %v302
        %v377 = vunpack.c.l.b16 %v303
        %v378 = vunpack.c.l.b16 %v304
        %v379 = vunpack.c.l.b16 %v305
        %v380 = vunpack.c.l.b16 %v306
        %v381 = vunpack.c.l.b16 %v307
        %v382 = vunpack.c.l.b16 %v308
        %v383 = vunpack.c.l.b16 %v309
        %v384 = vunpack.c.l.b16 %v310
        %v385 = vunpack.c.l.b16 %v311
        %v386 = vunpack.c.l.b16 %v312
        %v387 = vpack.c.b16 %v372, %v371
        %v388 = vpack.c.b16 %v374, %v373
        %v389 = vpack.c.b16 %v376, %v375
        %v390 = vpack.c.b16 %v378, %v377
        %v391 = vpack.c.b16 %v380, %v379
        %v392 = vpack.c.b16 %v382, %v381
        %v393 = vpack.c.b16 %v384, %v383
        %v394 = vpack.c.b16 %v386, %v385
        %v435 = vunpack.c.l.b16 %v313
        %v436 = vunpack.c.h.b16 %v313
        %v437 = vunpack.c.l.b16 %v314
        %v438 = vunpack.c.h.b16 %v314
        %v439 = vunpack.c.l.b16 %v315
        %v440 = vunpack.c.h.b16 %v315
        %v441 = vunpack.c.l.b16 %v316
        %v442 = vunpack.c.h.b16 %v316
        %v443 = vunpack.c.l.b16 %v317
        %v444 = vunpack.c.h.b16 %v317
        %v445 = vunpack.c.l.b16 %v318
        %v446 = vunpack.c.h.b16 %v318
        %v447 = vunpack.c.l.b16 %v319
        %v448 = vunpack.c.h.b16 %v319
        %v449 = vunpack.c.l.b16 %v320
        %v450 = vunpack.c.h.b16 %v320
        %v451 = vunpack.c.l.b16 %v321
        %v452 = vunpack.c.h.b16 %v321
        %v453 = vunpack.c.l.b16 %v322
        %v454 = vunpack.c.h.b16 %v322
        %v455 = vunpack.c.l.b16 %v323
        %v456 = vunpack.c.h.b16 %v323
        %v457 = vunpack.c.l.b16 %v324
        %v458 = vunpack.c.h.b16 %v324
        %v459 = vunpack.c.l.b16 %v325
        %v460 = vunpack.c.h.b16 %v325
        %v461 = vunpack.c.l.b16 %v326
        %v462 = vunpack.c.h.b16 %v326
        %v463 = vunpack.c.l.b16 %v327
        %v464 = vunpack.c.h.b16 %v327
        %v465 = vunpack.c.l.b16 %v328
        %v466 = vunpack.c.h.b16 %v328
        %v467 = vunpack.c.l.b16 %v329
        %v468 = vunpack.c.h.b16 %v329
        %v469 = vunpack.c.l.b16 %v330
        %v470 = vunpack.c.h.b16 %v330
        %v471 = vunpack.c.l.b16 %v331
        %v472 = vunpack.c.h.b16 %v331
        %v473 = vunpack.c.l.b16 %v332
        %v474 = vunpack.c.h.b16 %v332
        %v475 = vunpack.c.l.b16 %v333
        %v476 = vunpack.c.h.b16 %v333
        %v477 = vunpack.c.l.b16 %v334
        %v478 = vunpack.c.h.b16 %v334
        %v479 = vunpack.c.l.b16 %v335
        %v480 = vunpack.c.h.b16 %v335
        %v481 = vunpack.c.l.b16 %v336
        %v482 = vunpack.c.h.b16 %v336
        %v483 = vunpack.c.l.b16 %v337
        %v484 = vunpack.c.h.b16 %v337
        %v485 = vunpack.c.l.b16 %v338
        %v486 = vunpack.c.h.b16 %v338
        %v487 = vunpack.c.l.b16 %v339
        %v488 = vunpack.c.h.b16 %v339
        %v489 = vunpack.c.l.b16 %v340
        %v490 = vunpack.c.h.b16 %v340
        %v491 = vunpack.c.l.b16 %v341
        %v492 = vunpack.c.h.b16 %v341
        %v493 = vunpack.c.l.b16 %v342
        %v494 = vunpack.c.h.b16 %v342
        %v495 = vunpack.c.l.b16 %v343
        %v496 = vunpack.c.h.b16 %v343
        %v497 = vunpack.c.l.b16 %v344
        %v498 = vunpack.c.h.b16 %v344
        %v499 = vpack.c.b16 %v439, %v435
        %v500 = vpack.c.b16 %v440, %v436
        %v501 = vpack.c.b16 %v441, %v437
        %v502 = vpack.c.b16 %v442, %v438
        %v503 = vpack.c.b16 %v447, %v443
        %v504 = vpack.c.b16 %v448, %v444
        %v505 = vpack.c.b16 %v449, %v445
        %v506 = vpack.c.b16 %v450, %v446
        %v507 = vpack.c.b16 %v455, %v451
        %v508 = vpack.c.b16 %v456, %v452
        %v509 = vpack.c.b16 %v457, %v453
        %v510 = vpack.c.b16 %v458, %v454
        %v511 = vpack.c.b16 %v463, %v459
        %v512 = vpack.c.b16 %v464, %v460
        %v513 = vpack.c.b16 %v465, %v461
        %v514 = vpack.c.b16 %v466, %v462
        %v515 = vpack.c.b16 %v471, %v467
        %v516 = vpack.c.b16 %v472, %v468
        %v517 = vpack.c.b16 %v473, %v469
        %v518 = vpack.c.b16 %v474, %v470
        %v519 = vpack.c.b16 %v479, %v475
        %v520 = vpack.c.b16 %v480, %v476
        %v521 = vpack.c.b16 %v481, %v477
        %v522 = vpack.c.b16 %v482, %v478
        %v523 = vpack.c.b16 %v487, %v483
        %v524 = vpack.c.b16 %v488, %v484
        %v525 = vpack.c.b16 %v489, %v485
        %v526 = vpack.c.b16 %v490, %v486
        %v527 = vpack.c.b16 %v495, %v491
        %v528 = vpack.c.b16 %v496, %v492
        %v529 = vpack.c.b16 %v497, %v493
        %v530 = vpack.c.b16 %v498, %v494
        %563 = vmatpush.bf16.msra.mxu0 %v527
        %564 = vmatpush.bf16.msra.mxu0 %v523
        %565 = vmatpush.bf16.msra.mxu0 %v519
        %566 = vmatpush.bf16.msra.mxu0 %v515
        %567 = vmatpush.bf16.msra.mxu0 %v511
        %568 = vmatpush.bf16.msra.mxu0 %v507
        %569 = vmatpush.bf16.msra.mxu0 %v503
        %570 = vmatpush.bf16.msra.mxu0 %v499
        %571 = vmatmul.bf16.gmra.mxu0 %v387
        %v572 = vpop.f32.mrf.mxu0
        %v573 = vadd.f32 %v347, %v572
        %v574 = vpop.f32.mrf.mxu0
        %v575 = vadd.f32 %v347, %v574
        %576 = vmatmul.bf16.gmra.mxu0 %v388
        %v577 = vpop.f32.mrf.mxu0
        %v578 = vadd.f32 %v347, %v577
        %v579 = vpop.f32.mrf.mxu0
        %v580 = vadd.f32 %v347, %v579
        %581 = vmatmul.bf16.gmra.mxu0 %v389
        %v582 = vpop.f32.mrf.mxu0
        %v583 = vadd.f32 %v347, %v582
        %v584 = vpop.f32.mrf.mxu0
        %v585 = vadd.f32 %v347, %v584
        %586 = vmatmul.bf16.gmra.mxu0 %v390
        %v587 = vpop.f32.mrf.mxu0
        %v588 = vadd.f32 %v347, %v587
        %v589 = vpop.f32.mrf.mxu0
        %v590 = vadd.f32 %v347, %v589
        %591 = vmatmul.bf16.gmra.mxu0 %v391
        %v592 = vpop.f32.mrf.mxu0
        %v593 = vadd.f32 %v347, %v592
        %v594 = vpop.f32.mrf.mxu0
        %v595 = vadd.f32 %v347, %v594
        %596 = vmatmul.bf16.gmra.mxu0 %v392
        %v597 = vpop.f32.mrf.mxu0
        %v598 = vadd.f32 %v347, %v597
        %v599 = vpop.f32.mrf.mxu0
        %v600 = vadd.f32 %v347, %v599
        %601 = vmatmul.bf16.gmra.mxu0 %v393
        %v602 = vpop.f32.mrf.mxu0
        %v603 = vadd.f32 %v347, %v602
        %v604 = vpop.f32.mrf.mxu0
        %v605 = vadd.f32 %v347, %v604
        %606 = vmatmul.bf16.gmra.mxu0 %v394
        %v607 = vpop.f32.mrf.mxu0
        %v608 = vadd.f32 %v347, %v607
        %v609 = vpop.f32.mrf.mxu0
        %v610 = vadd.f32 %v347, %v609
        %611 = vdwg.mxu0
        %612 = vmatpush.bf16.msra.mxu0 %v528
        %613 = vmatpush.bf16.msra.mxu0 %v524
        %614 = vmatpush.bf16.msra.mxu0 %v520
        %615 = vmatpush.bf16.msra.mxu0 %v516
        %616 = vmatpush.bf16.msra.mxu0 %v512
        %617 = vmatpush.bf16.msra.mxu0 %v508
        %618 = vmatpush.bf16.msra.mxu0 %v504
        %619 = vmatpush.bf16.msra.mxu0 %v500
        %620 = vmatmul.bf16.gmra.mxu0 %v387
        %v621 = vpop.f32.mrf.mxu0
        %v622 = vadd.f32 %v348, %v621
        %v623 = vpop.f32.mrf.mxu0
        %v624 = vadd.f32 %v348, %v623
        %625 = vmatmul.bf16.gmra.mxu0 %v388
        %v626 = vpop.f32.mrf.mxu0
        %v627 = vadd.f32 %v348, %v626
        %v628 = vpop.f32.mrf.mxu0
        %v629 = vadd.f32 %v348, %v628
        %630 = vmatmul.bf16.gmra.mxu0 %v389
        %v631 = vpop.f32.mrf.mxu0
        %v632 = vadd.f32 %v348, %v631
        %v633 = vpop.f32.mrf.mxu0
        %v634 = vadd.f32 %v348, %v633
        %635 = vmatmul.bf16.gmra.mxu0 %v390
        %v636 = vpop.f32.mrf.mxu0
        %v637 = vadd.f32 %v348, %v636
        %v638 = vpop.f32.mrf.mxu0
        %v639 = vadd.f32 %v348, %v638
        %640 = vmatmul.bf16.gmra.mxu0 %v391
        %v641 = vpop.f32.mrf.mxu0
        %v642 = vadd.f32 %v348, %v641
        %v643 = vpop.f32.mrf.mxu0
        %v644 = vadd.f32 %v348, %v643
        %645 = vmatmul.bf16.gmra.mxu0 %v392
        %v646 = vpop.f32.mrf.mxu0
        %v647 = vadd.f32 %v348, %v646
        %v648 = vpop.f32.mrf.mxu0
        %v649 = vadd.f32 %v348, %v648
        %650 = vmatmul.bf16.gmra.mxu0 %v393
        %v651 = vpop.f32.mrf.mxu0
        %v652 = vadd.f32 %v348, %v651
        %v653 = vpop.f32.mrf.mxu0
        %v654 = vadd.f32 %v348, %v653
        %655 = vmatmul.bf16.gmra.mxu0 %v394
        %v656 = vpop.f32.mrf.mxu0
        %v657 = vadd.f32 %v348, %v656
        %v658 = vpop.f32.mrf.mxu0
        %v659 = vadd.f32 %v348, %v658
        %660 = vdwg.mxu0
        %661 = vmatpush.bf16.msra.mxu0 %v529
        %662 = vmatpush.bf16.msra.mxu0 %v525
        %663 = vmatpush.bf16.msra.mxu0 %v521
        %664 = vmatpush.bf16.msra.mxu0 %v517
        %665 = vmatpush.bf16.msra.mxu0 %v513
        %666 = vmatpush.bf16.msra.mxu0 %v509
        %667 = vmatpush.bf16.msra.mxu0 %v505
        %668 = vmatpush.bf16.msra.mxu0 %v501
        %669 = vmatmul.bf16.gmra.mxu0 %v387
        %v670 = vpop.f32.mrf.mxu0
        %v671 = vadd.f32 %v349, %v670
        %v672 = vpop.f32.mrf.mxu0
        %v673 = vadd.f32 %v349, %v672
        %674 = vmatmul.bf16.gmra.mxu0 %v388
        %v675 = vpop.f32.mrf.mxu0
        %v676 = vadd.f32 %v349, %v675
        %v677 = vpop.f32.mrf.mxu0
        %v678 = vadd.f32 %v349, %v677
        %679 = vmatmul.bf16.gmra.mxu0 %v389
        %v680 = vpop.f32.mrf.mxu0
        %v681 = vadd.f32 %v349, %v680
        %v682 = vpop.f32.mrf.mxu0
        %v683 = vadd.f32 %v349, %v682
        %684 = vmatmul.bf16.gmra.mxu0 %v390
        %v685 = vpop.f32.mrf.mxu0
        %v686 = vadd.f32 %v349, %v685
        %v687 = vpop.f32.mrf.mxu0
        %v688 = vadd.f32 %v349, %v687
        %689 = vmatmul.bf16.gmra.mxu0 %v391
        %v690 = vpop.f32.mrf.mxu0
        %v691 = vadd.f32 %v349, %v690
        %v692 = vpop.f32.mrf.mxu0
        %v693 = vadd.f32 %v349, %v692
        %694 = vmatmul.bf16.gmra.mxu0 %v392
        %v695 = vpop.f32.mrf.mxu0
        %v696 = vadd.f32 %v349, %v695
        %v697 = vpop.f32.mrf.mxu0
        %v698 = vadd.f32 %v349, %v697
        %699 = vmatmul.bf16.gmra.mxu0 %v393
        %v700 = vpop.f32.mrf.mxu0
        %v701 = vadd.f32 %v349, %v700
        %v702 = vpop.f32.mrf.mxu0
        %v703 = vadd.f32 %v349, %v702
        %704 = vmatmul.bf16.gmra.mxu0 %v394
        %v705 = vpop.f32.mrf.mxu0
        %v706 = vadd.f32 %v349, %v705
        %v707 = vpop.f32.mrf.mxu0
        %v708 = vadd.f32 %v349, %v707
        %709 = vdwg.mxu0
        %710 = vmatpush.bf16.msra.mxu0 %v530
        %711 = vmatpush.bf16.msra.mxu0 %v526
        %712 = vmatpush.bf16.msra.mxu0 %v522
        %713 = vmatpush.bf16.msra.mxu0 %v518
        %714 = vmatpush.bf16.msra.mxu0 %v514
        %715 = vmatpush.bf16.msra.mxu0 %v510
        %716 = vmatpush.bf16.msra.mxu0 %v506
        %717 = vmatpush.bf16.msra.mxu0 %v502
        %718 = vmatmul.bf16.gmra.mxu0 %v387
        %v719 = vpop.f32.mrf.mxu0
        %v720 = vadd.f32 %v350, %v719
        %v721 = vpop.f32.mrf.mxu0
        %v722 = vadd.f32 %v350, %v721
        %723 = vmatmul.bf16.gmra.mxu0 %v388
        %v724 = vpop.f32.mrf.mxu0
        %v725 = vadd.f32 %v350, %v724
        %v726 = vpop.f32.mrf.mxu0
        %v727 = vadd.f32 %v350, %v726
        %728 = vmatmul.bf16.gmra.mxu0 %v389
        %v729 = vpop.f32.mrf.mxu0
        %v730 = vadd.f32 %v350, %v729
        %v731 = vpop.f32.mrf.mxu0
        %v732 = vadd.f32 %v350, %v731
        %733 = vmatmul.bf16.gmra.mxu0 %v390
        %v734 = vpop.f32.mrf.mxu0
        %v735 = vadd.f32 %v350, %v734
        %v736 = vpop.f32.mrf.mxu0
        %v737 = vadd.f32 %v350, %v736
        %738 = vmatmul.bf16.gmra.mxu0 %v391
        %v739 = vpop.f32.mrf.mxu0
        %v740 = vadd.f32 %v350, %v739
        %v741 = vpop.f32.mrf.mxu0
        %v742 = vadd.f32 %v350, %v741
        %743 = vmatmul.bf16.gmra.mxu0 %v392
        %v744 = vpop.f32.mrf.mxu0
        %v745 = vadd.f32 %v350, %v744
        %v746 = vpop.f32.mrf.mxu0
        %v747 = vadd.f32 %v350, %v746
        %748 = vmatmul.bf16.gmra.mxu0 %v393
        %v749 = vpop.f32.mrf.mxu0
        %v750 = vadd.f32 %v350, %v749
        %v751 = vpop.f32.mrf.mxu0
        %v752 = vadd.f32 %v350, %v751
        %753 = vmatmul.bf16.gmra.mxu0 %v394
        %v754 = vpop.f32.mrf.mxu0
        %v755 = vadd.f32 %v350, %v754
        %v756 = vpop.f32.mrf.mxu0
        %v757 = vadd.f32 %v350, %v756
        %758 = vdwg.mxu0
        %759 = vst [vmem:[#allocation4] sm:$0xff] %v573
        %760 = vst [vmem:[#allocation4 + $0x8] sm:$0xff] %v622
        %761 = vst [vmem:[#allocation4 + $0x10] sm:$0xff] %v671
        %762 = vst [vmem:[#allocation4 + $0x18] sm:$0xff] %v720
        %763 = vst [vmem:[#allocation4 + $0x20] sm:$0xff] %v575
        %764 = vst [vmem:[#allocation4 + $0x28] sm:$0xff] %v624
        %765 = vst [vmem:[#allocation4 + $0x30] sm:$0xff] %v673
        %766 = vst [vmem:[#allocation4 + $0x38] sm:$0xff] %v722
        %767 = vst [vmem:[#allocation4 + $0x40] sm:$0xff] %v578
        %768 = vst [vmem:[#allocation4 + $0x48] sm:$0xff] %v627
        %769 = vst [vmem:[#allocation4 + $0x50] sm:$0xff] %v676
        %770 = vst [vmem:[#allocation4 + $0x58] sm:$0xff] %v725
        %771 = vst [vmem:[#allocation4 + $0x60] sm:$0xff] %v580
        %772 = vst [vmem:[#allocation4 + $0x68] sm:$0xff] %v629
        %773 = vst [vmem:[#allocation4 + $0x70] sm:$0xff] %v678
        %774 = vst [vmem:[#allocation4 + $0x78] sm:$0xff] %v727
        %775 = vst [vmem:[#allocation4 + $0x80] sm:$0xff] %v583
        %776 = vst [vmem:[#allocation4 + $0x88] sm:$0xff] %v632
        %777 = vst [vmem:[#allocation4 + $0x90] sm:$0xff] %v681
        %778 = vst [vmem:[#allocation4 + $0x98] sm:$0xff] %v730
        %779 = vst [vmem:[#allocation4 + $0xa0] sm:$0xff] %v585
        %780 = vst [vmem:[#allocation4 + $0xa8] sm:$0xff] %v634
        %781 = vst [vmem:[#allocation4 + $0xb0] sm:$0xff] %v683
        %782 = vst [vmem:[#allocation4 + $0xb8] sm:$0xff] %v732
        %783 = vst [vmem:[#allocation4 + $0xc0] sm:$0xff] %v588
        %784 = vst [vmem:[#allocation4 + $0xc8] sm:$0xff] %v637
        %785 = vst [vmem:[#allocation4 + $0xd0] sm:$0xff] %v686
        %786 = vst [vmem:[#allocation4 + $0xd8] sm:$0xff] %v735
        %787 = vst [vmem:[#allocation4 + $0xe0] sm:$0xff] %v590
        %788 = vst [vmem:[#allocation4 + $0xe8] sm:$0xff] %v639
        %789 = vst [vmem:[#allocation4 + $0xf0] sm:$0xff] %v688
        %790 = vst [vmem:[#allocation4 + $0xf8] sm:$0xff] %v737
        %791 = vst [vmem:[#allocation4 + $0x100] sm:$0xff] %v593
        %792 = vst [vmem:[#allocation4 + $0x108] sm:$0xff] %v642
        %793 = vst [vmem:[#allocation4 + $0x110] sm:$0xff] %v691
        %794 = vst [vmem:[#allocation4 + $0x118] sm:$0xff] %v740
        %795 = vst [vmem:[#allocation4 + $0x120] sm:$0xff] %v595
        %796 = vst [vmem:[#allocation4 + $0x128] sm:$0xff] %v644
        %797 = vst [vmem:[#allocation4 + $0x130] sm:$0xff] %v693
        %798 = vst [vmem:[#allocation4 + $0x138] sm:$0xff] %v742
        %799 = vst [vmem:[#allocation4 + $0x140] sm:$0xff] %v598
        %800 = vst [vmem:[#allocation4 + $0x148] sm:$0xff] %v647
        %801 = vst [vmem:[#allocation4 + $0x150] sm:$0xff] %v696
        %802 = vst [vmem:[#allocation4 + $0x158] sm:$0xff] %v745
        %803 = vst [vmem:[#allocation4 + $0x160] sm:$0xff] %v600
        %804 = vst [vmem:[#allocation4 + $0x168] sm:$0xff] %v649
        %805 = vst [vmem:[#allocation4 + $0x170] sm:$0xff] %v698
        %806 = vst [vmem:[#allocation4 + $0x178] sm:$0xff] %v747
        %807 = vst [vmem:[#allocation4 + $0x180] sm:$0xff] %v603
        %808 = vst [vmem:[#allocation4 + $0x188] sm:$0xff] %v652
        %809 = vst [vmem:[#allocation4 + $0x190] sm:$0xff] %v701
        %810 = vst [vmem:[#allocation4 + $0x198] sm:$0xff] %v750
        %811 = vst [vmem:[#allocation4 + $0x1a0] sm:$0xff] %v605
        %812 = vst [vmem:[#allocation4 + $0x1a8] sm:$0xff] %v654
        %813 = vst [vmem:[#allocation4 + $0x1b0] sm:$0xff] %v703
        %814 = vst [vmem:[#allocation4 + $0x1b8] sm:$0xff] %v752
        %815 = vst [vmem:[#allocation4 + $0x1c0] sm:$0xff] %v608
        %816 = vst [vmem:[#allocation4 + $0x1c8] sm:$0xff] %v657
        %817 = vst [vmem:[#allocation4 + $0x1d0] sm:$0xff] %v706
        %818 = vst [vmem:[#allocation4 + $0x1d8] sm:$0xff] %v755
        %819 = vst [vmem:[#allocation4 + $0x1e0] sm:$0xff] %v610
        %820 = vst [vmem:[#allocation4 + $0x1e8] sm:$0xff] %v659
        %821 = vst [vmem:[#allocation4 + $0x1f0] sm:$0xff] %v708
        %822 = vst [vmem:[#allocation4 + $0x1f8] sm:$0xff] %v757
        %v823 = vld [vmem:[#allocation2] sm:$0xff]
        %v824 = vld [vmem:[#allocation2 + $0x8] sm:$0xff]
        %v825 = vld [vmem:[#allocation3] sm:$0xff]
        %v826 = vld [vmem:[#allocation3 + $0x8] sm:$0xff]
        %v827 = vld [vmem:[#allocation4] sm:$0xff]
        %v828 = vld [vmem:[#allocation4 + $0x8] sm:$0xff]
        %v829 = vld [vmem:[#allocation4 + $0x10] sm:$0xff]
        %v830 = vld [vmem:[#allocation4 + $0x18] sm:$0xff]
        %v831 = vld [vmem:[#allocation4 + $0x20] sm:$0xff]
        %v832 = vld [vmem:[#allocation4 + $0x28] sm:$0xff]
        %v833 = vld [vmem:[#allocation4 + $0x30] sm:$0xff]
        %v834 = vld [vmem:[#allocation4 + $0x38] sm:$0xff]
        %v835 = vpack.c.bf16 %v824, %v823
        %v836 = vld [vmem:[#allocation11] sm:$0xff]
        %v837 = vld [vmem:[#allocation11 + $0x8] sm:$0xff]
        %v838 = vld [vmem:[#allocation11 + $0x10] sm:$0xff]
        %v839 = vld [vmem:[#allocation11 + $0x18] sm:$0xff]
        %v840 = vld [vmem:[#allocation11 + $0x20] sm:$0xff]
        %v841 = vld [vmem:[#allocation11 + $0x28] sm:$0xff]
        %v842 = vld [vmem:[#allocation11 + $0x30] sm:$0xff]
        %v843 = vld [vmem:[#allocation11 + $0x38] sm:$0xff]
        %v844 = vld [vmem:[#allocation11 + $0x40] sm:$0xff]
        %v845 = vld [vmem:[#allocation11 + $0x48] sm:$0xff]
        %v846 = vld [vmem:[#allocation11 + $0x50] sm:$0xff]
        %v847 = vld [vmem:[#allocation11 + $0x58] sm:$0xff]
        %v848 = vld [vmem:[#allocation11 + $0x60] sm:$0xff]
        %v849 = vld [vmem:[#allocation11 + $0x68] sm:$0xff]
        %v850 = vld [vmem:[#allocation11 + $0x70] sm:$0xff]
        %v851 = vld [vmem:[#allocation11 + $0x78] sm:$0xff]
        %v852 = vld [vmem:[#allocation11 + $0x80] sm:$0xff]
        %v853 = vld [vmem:[#allocation11 + $0x88] sm:$0xff]
        %v854 = vld [vmem:[#allocation11 + $0x90] sm:$0xff]
        %v855 = vld [vmem:[#allocation11 + $0x98] sm:$0xff]
        %v856 = vld [vmem:[#allocation11 + $0xa0] sm:$0xff]
        %v857 = vld [vmem:[#allocation11 + $0xa8] sm:$0xff]
        %v858 = vld [vmem:[#allocation11 + $0xb0] sm:$0xff]
        %v859 = vld [vmem:[#allocation11 + $0xb8] sm:$0xff]
        %v860 = vld [vmem:[#allocation11 + $0xc0] sm:$0xff]
        %v861 = vld [vmem:[#allocation11 + $0xc8] sm:$0xff]
        %v862 = vld [vmem:[#allocation11 + $0xd0] sm:$0xff]
        %v863 = vld [vmem:[#allocation11 + $0xd8] sm:$0xff]
        %v864 = vld [vmem:[#allocation11 + $0xe0] sm:$0xff]
        %v865 = vld [vmem:[#allocation11 + $0xe8] sm:$0xff]
        %v866 = vld [vmem:[#allocation11 + $0xf0] sm:$0xff]
        %v867 = vld [vmem:[#allocation11 + $0xf8] sm:$0xff]
        %v900 = vunpack.c.l.b16 %v836
        %v901 = vunpack.c.h.b16 %v836
        %v902 = vunpack.c.l.b16 %v837
        %v903 = vunpack.c.h.b16 %v837
        %v904 = vunpack.c.l.b16 %v838
        %v905 = vunpack.c.h.b16 %v838
        %v906 = vunpack.c.l.b16 %v839
        %v907 = vunpack.c.h.b16 %v839
        %v908 = vunpack.c.l.b16 %v840
        %v909 = vunpack.c.h.b16 %v840
        %v910 = vunpack.c.l.b16 %v841
        %v911 = vunpack.c.h.b16 %v841
        %v912 = vunpack.c.l.b16 %v842
        %v913 = vunpack.c.h.b16 %v842
        %v914 = vunpack.c.l.b16 %v843
        %v915 = vunpack.c.h.b16 %v843
        %v916 = vunpack.c.l.b16 %v844
        %v917 = vunpack.c.h.b16 %v844
        %v918 = vunpack.c.l.b16 %v845
        %v919 = vunpack.c.h.b16 %v845
        %v920 = vunpack.c.l.b16 %v846
        %v921 = vunpack.c.h.b16 %v846
        %v922 = vunpack.c.l.b16 %v847
        %v923 = vunpack.c.h.b16 %v847
        %v924 = vunpack.c.l.b16 %v848
        %v925 = vunpack.c.h.b16 %v848
        %v926 = vunpack.c.l.b16 %v849
        %v927 = vunpack.c.h.b16 %v849
        %v928 = vunpack.c.l.b16 %v850
        %v929 = vunpack.c.h.b16 %v850
        %v930 = vunpack.c.l.b16 %v851
        %v931 = vunpack.c.h.b16 %v851
        %v932 = vunpack.c.l.b16 %v852
        %v933 = vunpack.c.h.b16 %v852
        %v934 = vunpack.c.l.b16 %v853
        %v935 = vunpack.c.h.b16 %v853
        %v936 = vunpack.c.l.b16 %v854
        %v937 = vunpack.c.h.b16 %v854
        %v938 = vunpack.c.l.b16 %v855
        %v939 = vunpack.c.h.b16 %v855
        %v940 = vunpack.c.l.b16 %v856
        %v941 = vunpack.c.h.b16 %v856
        %v942 = vunpack.c.l.b16 %v857
        %v943 = vunpack.c.h.b16 %v857
        %v944 = vunpack.c.l.b16 %v858
        %v945 = vunpack.c.h.b16 %v858
        %v946 = vunpack.c.l.b16 %v859
        %v947 = vunpack.c.h.b16 %v859
        %v948 = vunpack.c.l.b16 %v860
        %v949 = vunpack.c.h.b16 %v860
        %v950 = vunpack.c.l.b16 %v861
        %v951 = vunpack.c.h.b16 %v861
        %v952 = vunpack.c.l.b16 %v862
        %v953 = vunpack.c.h.b16 %v862
        %v954 = vunpack.c.l.b16 %v863
        %v955 = vunpack.c.h.b16 %v863
        %v956 = vunpack.c.l.b16 %v864
        %v957 = vunpack.c.h.b16 %v864
        %v958 = vunpack.c.l.b16 %v865
        %v959 = vunpack.c.h.b16 %v865
        %v960 = vunpack.c.l.b16 %v866
        %v961 = vunpack.c.h.b16 %v866
        %v962 = vunpack.c.l.b16 %v867
        %v963 = vunpack.c.h.b16 %v867
        %v964 = vpack.c.b16 %v904, %v900
        %v965 = vpack.c.b16 %v905, %v901
        %v966 = vpack.c.b16 %v906, %v902
        %v967 = vpack.c.b16 %v907, %v903
        %v968 = vpack.c.b16 %v912, %v908
        %v969 = vpack.c.b16 %v913, %v909
        %v970 = vpack.c.b16 %v914, %v910
        %v971 = vpack.c.b16 %v915, %v911
        %v972 = vpack.c.b16 %v920, %v916
        %v973 = vpack.c.b16 %v921, %v917
        %v974 = vpack.c.b16 %v922, %v918
        %v975 = vpack.c.b16 %v923, %v919
        %v976 = vpack.c.b16 %v928, %v924
        %v977 = vpack.c.b16 %v929, %v925
        %v978 = vpack.c.b16 %v930, %v926
        %v979 = vpack.c.b16 %v931, %v927
        %v980 = vpack.c.b16 %v936, %v932
        %v981 = vpack.c.b16 %v937, %v933
        %v982 = vpack.c.b16 %v938, %v934
        %v983 = vpack.c.b16 %v939, %v935
        %v984 = vpack.c.b16 %v944, %v940
        %v985 = vpack.c.b16 %v945, %v941
        %v986 = vpack.c.b16 %v946, %v942
        %v987 = vpack.c.b16 %v947, %v943
        %v988 = vpack.c.b16 %v952, %v948
        %v989 = vpack.c.b16 %v953, %v949
        %v990 = vpack.c.b16 %v954, %v950
        %v991 = vpack.c.b16 %v955, %v951
        %v992 = vpack.c.b16 %v960, %v956
        %v993 = vpack.c.b16 %v961, %v957
        %v994 = vpack.c.b16 %v962, %v958
        %v995 = vpack.c.b16 %v963, %v959
        %1028 = vmatpush.bf16.msra.mxu0 %v992
        %1029 = vmatpush.bf16.msra.mxu0 %v988
        %1030 = vmatpush.bf16.msra.mxu0 %v984
        %1031 = vmatpush.bf16.msra.mxu0 %v980
        %1032 = vmatpush.bf16.msra.mxu0 %v976
        %1033 = vmatpush.bf16.msra.mxu0 %v972
        %1034 = vmatpush.bf16.msra.mxu0 %v968
        %1035 = vmatpush.bf16.msra.mxu0 %v964
        %1036 = vmatmul.bf16.gmra.mxu0 %v835
        %v1037 = vpop.f32.mrf.mxu0
        %v1038 = vadd.f32 0.0, %v1037
        %v1039 = vpop.f32.mrf.mxu0
        %v1040 = vadd.f32 0.0, %v1039
        %1041 = vdwg.mxu0
        %1042 = vmatpush.bf16.msra.mxu0 %v993
        %1043 = vmatpush.bf16.msra.mxu0 %v989
        %1044 = vmatpush.bf16.msra.mxu0 %v985
        %1045 = vmatpush.bf16.msra.mxu0 %v981
        %1046 = vmatpush.bf16.msra.mxu0 %v977
        %1047 = vmatpush.bf16.msra.mxu0 %v973
        %1048 = vmatpush.bf16.msra.mxu0 %v969
        %1049 = vmatpush.bf16.msra.mxu0 %v965
        %1050 = vmatmul.bf16.gmra.mxu0 %v835
        %v1051 = vpop.f32.mrf.mxu0
        %v1052 = vadd.f32 0.0, %v1051
        %v1053 = vpop.f32.mrf.mxu0
        %v1054 = vadd.f32 0.0, %v1053
        %1055 = vdwg.mxu0
        %1056 = vmatpush.bf16.msra.mxu0 %v994
        %1057 = vmatpush.bf16.msra.mxu0 %v990
        %1058 = vmatpush.bf16.msra.mxu0 %v986
        %1059 = vmatpush.bf16.msra.mxu0 %v982
        %1060 = vmatpush.bf16.msra.mxu0 %v978
        %1061 = vmatpush.bf16.msra.mxu0 %v974
        %1062 = vmatpush.bf16.msra.mxu0 %v970
        %1063 = vmatpush.bf16.msra.mxu0 %v966
        %1064 = vmatmul.bf16.gmra.mxu0 %v835
        %v1065 = vpop.f32.mrf.mxu0
        %v1066 = vadd.f32 0.0, %v1065
        %v1067 = vpop.f32.mrf.mxu0
        %v1068 = vadd.f32 0.0, %v1067
        %1069 = vdwg.mxu0
        %1070 = vmatpush.bf16.msra.mxu0 %v995
        %1071 = vmatpush.bf16.msra.mxu0 %v991
        %1072 = vmatpush.bf16.msra.mxu0 %v987
        %1073 = vmatpush.bf16.msra.mxu0 %v983
        %1074 = vmatpush.bf16.msra.mxu0 %v979
        %1075 = vmatpush.bf16.msra.mxu0 %v975
        %1076 = vmatpush.bf16.msra.mxu0 %v971
        %1077 = vmatpush.bf16.msra.mxu0 %v967
        %1078 = vmatmul.bf16.gmra.mxu0 %v835
        %v1079 = vpop.f32.mrf.mxu0
        %v1080 = vadd.f32 0.0, %v1079
        %v1081 = vpop.f32.mrf.mxu0
        %v1082 = vadd.f32 0.0, %v1081
        %1083 = vdwg.mxu0
        %v1084 = vadd.f32 %v827, %v1038
        %v1085 = vadd.f32 %v828, %v1052
        %v1086 = vadd.f32 %v829, %v1066
        %v1087 = vadd.f32 %v830, %v1080
        %v1088 = vadd.f32 %v831, %v1040
        %v1089 = vadd.f32 %v832, %v1054
        %v1090 = vadd.f32 %v833, %v1068
        %v1091 = vadd.f32 %v834, %v1082
        %v1092 = vxor.u32 %v1084, 2147483648
        %v1093 = vxor.u32 %v1088, 2147483648
        %v1094 = vmul.f32 %v1092, 1.442695
        %v1095 = vpow.pop %v1094
        %v1096 = vmul.f32 %v1093, 1.442695
        %v1097 = vpow.pop %v1096
        %v1098 = vadd.f32 %v1095, 1.0
        %v1099 = vadd.f32 %v1097, 1.0
        %v1100 = vrcp.pop %v1098
        %v1101 = vmul.f32 %v1098, %v1100
        %v1102 = vsub.f32 1.0, %v1101
        %v1103 = vmul.f32 %v1100, %v1102
        %v1104 = vadd.f32 %v1100, %v1103
        %vm1105 = vweird.f32 %v1098
        %vm1106 = vweird.f32 %v1100
        %vm1107 = vmor %vm1105, %vm1106
        %v1108 = vsel %vm1107, %v1100, %v1104
        %v1109 = vand.u32 2147483647, %v1098
        %vm1110 = vcmp.eq.f32.partialorder %v1109, 8.507059e+37
        %v1111 = vand.u32 %v1098, 2147483648
        %v1112 = vor.u32 1.1754944e-38, %v1111
        %v1113 = vsel %vm1110, %v1112, %v1108
        %v1114 = vmul.f32 1.0, %v1113
        %v1115 = vrcp.pop %v1099
        %v1116 = vmul.f32 %v1099, %v1115
        %v1117 = vsub.f32 1.0, %v1116
        %v1118 = vmul.f32 %v1115, %v1117
        %v1119 = vadd.f32 %v1115, %v1118
        %vm1120 = vweird.f32 %v1099
        %vm1121 = vweird.f32 %v1115
        %vm1122 = vmor %vm1120, %vm1121
        %v1123 = vsel %vm1122, %v1115, %v1119
        %v1124 = vand.u32 2147483647, %v1099
        %vm1125 = vcmp.eq.f32.partialorder %v1124, 8.507059e+37
        %v1126 = vand.u32 %v1099, 2147483648
        %v1127 = vor.u32 1.1754944e-38, %v1126
        %v1128 = vsel %vm1125, %v1127, %v1123
        %v1129 = vmul.f32 1.0, %v1128
        %v1130 = vxor.u32 %v1085, 2147483648
        %v1131 = vxor.u32 %v1089, 2147483648
        %v1132 = vmul.f32 %v1130, 1.442695
        %v1133 = vpow.pop %v1132
        %v1134 = vmul.f32 %v1131, 1.442695
        %v1135 = vpow.pop %v1134
        %v1136 = vadd.f32 %v1133, 1.0
        %v1137 = vadd.f32 %v1135, 1.0
        %v1138 = vrcp.pop %v1136
        %v1139 = vmul.f32 %v1136, %v1138
        %v1140 = vsub.f32 1.0, %v1139
        %v1141 = vmul.f32 %v1138, %v1140
        %v1142 = vadd.f32 %v1138, %v1141
        %vm1143 = vweird.f32 %v1136
        %vm1144 = vweird.f32 %v1138
        %vm1145 = vmor %vm1143, %vm1144
        %v1146 = vsel %vm1145, %v1138, %v1142
        %v1147 = vand.u32 2147483647, %v1136
        %vm1148 = vcmp.eq.f32.partialorder %v1147, 8.507059e+37
        %v1149 = vand.u32 %v1136, 2147483648
        %v1150 = vor.u32 1.1754944e-38, %v1149
        %v1151 = vsel %vm1148, %v1150, %v1146
        %v1152 = vmul.f32 1.0, %v1151
        %v1153 = vrcp.pop %v1137
        %v1154 = vmul.f32 %v1137, %v1153
        %v1155 = vsub.f32 1.0, %v1154
        %v1156 = vmul.f32 %v1153, %v1155
        %v1157 = vadd.f32 %v1153, %v1156
        %vm1158 = vweird.f32 %v1137
        %vm1159 = vweird.f32 %v1153
        %vm1160 = vmor %vm1158, %vm1159
        %v1161 = vsel %vm1160, %v1153, %v1157
        %v1162 = vand.u32 2147483647, %v1137
        %vm1163 = vcmp.eq.f32.partialorder %v1162, 8.507059e+37
        %v1164 = vand.u32 %v1137, 2147483648
        %v1165 = vor.u32 1.1754944e-38, %v1164
        %v1166 = vsel %vm1163, %v1165, %v1161
        %v1167 = vmul.f32 1.0, %v1166
        %v1168 = vtanh.pop %v1086
        %v1169 = vtanh.pop %v1090
        %v1170 = vxor.u32 %v1087, 2147483648
        %v1171 = vxor.u32 %v1091, 2147483648
        %v1172 = vmul.f32 %v1170, 1.442695
        %v1173 = vpow.pop %v1172
        %v1174 = vmul.f32 %v1171, 1.442695
        %v1175 = vpow.pop %v1174
        %v1176 = vadd.f32 %v1173, 1.0
        %v1177 = vadd.f32 %v1175, 1.0
        %v1178 = vrcp.pop %v1176
        %v1179 = vmul.f32 %v1176, %v1178
        %v1180 = vsub.f32 1.0, %v1179
        %v1181 = vmul.f32 %v1178, %v1180
        %v1182 = vadd.f32 %v1178, %v1181
        %vm1183 = vweird.f32 %v1176
        %vm1184 = vweird.f32 %v1178
        %vm1185 = vmor %vm1183, %vm1184
        %v1186 = vsel %vm1185, %v1178, %v1182
        %v1187 = vand.u32 2147483647, %v1176
        %vm1188 = vcmp.eq.f32.partialorder %v1187, 8.507059e+37
        %v1189 = vand.u32 %v1176, 2147483648
        %v1190 = vor.u32 1.1754944e-38, %v1189
        %v1191 = vsel %vm1188, %v1190, %v1186
        %v1192 = vmul.f32 1.0, %v1191
        %v1193 = vrcp.pop %v1177
        %v1194 = vmul.f32 %v1177, %v1193
        %v1195 = vsub.f32 1.0, %v1194
        %v1196 = vmul.f32 %v1193, %v1195
        %v1197 = vadd.f32 %v1193, %v1196
        %vm1198 = vweird.f32 %v1177
        %vm1199 = vweird.f32 %v1193
        %vm1200 = vmor %vm1198, %vm1199
        %v1201 = vsel %vm1200, %v1193, %v1197
        %v1202 = vand.u32 2147483647, %v1177
        %vm1203 = vcmp.eq.f32.partialorder %v1202, 8.507059e+37
        %v1204 = vand.u32 %v1177, 2147483648
        %v1205 = vor.u32 1.1754944e-38, %v1204
        %v1206 = vsel %vm1203, %v1205, %v1201
        %v1207 = vmul.f32 1.0, %v1206
        %v1208 = vmul.f32 %v1152, %v825
        %v1209 = vmul.f32 %v1167, %v826
        %v1210 = vmul.f32 %v1114, %v1168
        %v1211 = vmul.f32 %v1129, %v1169
        %v1212 = vadd.f32 %v1208, %v1210
        %v1213 = vadd.f32 %v1209, %v1211
        %v1214 = vtanh.pop %v1212
        %v1215 = vtanh.pop %v1213
        %v1216 = vmul.f32 %v1192, %v1214
        %v1217 = vmul.f32 %v1207, %v1215
        %v1218 = vpack.c.bf16 %v1216, %v1216
        %v1219 = vpack.c.bf16 %v1217, %v1217
        %1220 = vst [vmem:[%s284] sm:$0xf] %v1218
        %1221 = vst [vmem:[%s284 + $0x4] sm:$0xf] %v1219
        %s1222 = scalar_lea.vmem [#allocation4], 64
        %v1223 = vld [vmem:[%s1222] sm:$0xff]
        %v1224 = vld [vmem:[%s1222 + $0x8] sm:$0xff]
        %v1225 = vld [vmem:[%s1222 + $0x10] sm:$0xff]
        %v1226 = vld [vmem:[%s1222 + $0x18] sm:$0xff]
        %v1227 = vld [vmem:[%s1222 + $0x20] sm:$0xff]
        %v1228 = vld [vmem:[%s1222 + $0x28] sm:$0xff]
        %v1229 = vld [vmem:[%s1222 + $0x30] sm:$0xff]
        %v1230 = vld [vmem:[%s1222 + $0x38] sm:$0xff]
        %v1231 = vld [vmem:[#allocation11] sm:$0xff]
        %v1232 = vld [vmem:[#allocation11 + $0x8] sm:$0xff]
        %v1233 = vld [vmem:[#allocation11 + $0x10] sm:$0xff]
        %v1234 = vld [vmem:[#allocation11 + $0x18] sm:$0xff]
        %v1235 = vld [vmem:[#allocation11 + $0x20] sm:$0xff]
        %v1236 = vld [vmem:[#allocation11 + $0x28] sm:$0xff]
        %v1237 = vld [vmem:[#allocation11 + $0x30] sm:$0xff]
        %v1238 = vld [vmem:[#allocation11 + $0x38] sm:$0xff]
        %v1239 = vld [vmem:[#allocation11 + $0x40] sm:$0xff]
        %v1240 = vld [vmem:[#allocation11 + $0x48] sm:$0xff]
        %v1241 = vld [vmem:[#allocation11 + $0x50] sm:$0xff]
        %v1242 = vld [vmem:[#allocation11 + $0x58] sm:$0xff]
        %v1243 = vld [vmem:[#allocation11 + $0x60] sm:$0xff]
        %v1244 = vld [vmem:[#allocation11 + $0x68] sm:$0xff]
        %v1245 = vld [vmem:[#allocation11 + $0x70] sm:$0xff]
        %v1246 = vld [vmem:[#allocation11 + $0x78] sm:$0xff]
        %v1247 = vld [vmem:[#allocation11 + $0x80] sm:$0xff]
        %v1248 = vld [vmem:[#allocation11 + $0x88] sm:$0xff]
        %v1249 = vld [vmem:[#allocation11 + $0x90] sm:$0xff]
        %v1250 = vld [vmem:[#allocation11 + $0x98] sm:$0xff]
        %v1251 = vld [vmem:[#allocation11 + $0xa0] sm:$0xff]
        %v1252 = vld [vmem:[#allocation11 + $0xa8] sm:$0xff]
        %v1253 = vld [vmem:[#allocation11 + $0xb0] sm:$0xff]
        %v1254 = vld [vmem:[#allocation11 + $0xb8] sm:$0xff]
        %v1255 = vld [vmem:[#allocation11 + $0xc0] sm:$0xff]
        %v1256 = vld [vmem:[#allocation11 + $0xc8] sm:$0xff]
        %v1257 = vld [vmem:[#allocation11 + $0xd0] sm:$0xff]
        %v1258 = vld [vmem:[#allocation11 + $0xd8] sm:$0xff]
        %v1259 = vld [vmem:[#allocation11 + $0xe0] sm:$0xff]
        %v1260 = vld [vmem:[#allocation11 + $0xe8] sm:$0xff]
        %v1261 = vld [vmem:[#allocation11 + $0xf0] sm:$0xff]
        %v1262 = vld [vmem:[#allocation11 + $0xf8] sm:$0xff]
        %v1265 = vunpack.c.l.b16 %v1218
        %v1266 = vunpack.c.l.b16 %v1219
        %v1267 = vpack.c.b16 %v1266, %v1265
        %v1301 = vunpack.c.l.b16 %v1231
        %v1302 = vunpack.c.h.b16 %v1231
        %v1303 = vunpack.c.l.b16 %v1232
        %v1304 = vunpack.c.h.b16 %v1232
        %v1305 = vunpack.c.l.b16 %v1233
        %v1306 = vunpack.c.h.b16 %v1233
        %v1307 = vunpack.c.l.b16 %v1234
        %v1308 = vunpack.c.h.b16 %v1234
        %v1309 = vunpack.c.l.b16 %v1235
        %v1310 = vunpack.c.h.b16 %v1235
        %v1311 = vunpack.c.l.b16 %v1236
        %v1312 = vunpack.c.h.b16 %v1236
        %v1313 = vunpack.c.l.b16 %v1237
        %v1314 = vunpack.c.h.b16 %v1237
        %v1315 = vunpack.c.l.b16 %v1238
        %v1316 = vunpack.c.h.b16 %v1238
        %v1317 = vunpack.c.l.b16 %v1239
        %v1318 = vunpack.c.h.b16 %v1239
        %v1319 = vunpack.c.l.b16 %v1240
        %v1320 = vunpack.c.h.b16 %v1240
        %v1321 = vunpack.c.l.b16 %v1241
        %v1322 = vunpack.c.h.b16 %v1241
        %v1323 = vunpack.c.l.b16 %v1242
        %v1324 = vunpack.c.h.b16 %v1242
        %v1325 = vunpack.c.l.b16 %v1243
        %v1326 = vunpack.c.h.b16 %v1243
        %v1327 = vunpack.c.l.b16 %v1244
        %v1328 = vunpack.c.h.b16 %v1244
        %v1329 = vunpack.c.l.b16 %v1245
        %v1330 = vunpack.c.h.b16 %v1245
        %v1331 = vunpack.c.l.b16 %v1246
        %v1332 = vunpack.c.h.b16 %v1246
        %v1333 = vunpack.c.l.b16 %v1247
        %v1334 = vunpack.c.h.b16 %v1247
        %v1335 = vunpack.c.l.b16 %v1248
        %v1336 = vunpack.c.h.b16 %v1248
        %v1337 = vunpack.c.l.b16 %v1249
        %v1338 = vunpack.c.h.b16 %v1249
        %v1339 = vunpack.c.l.b16 %v1250
        %v1340 = vunpack.c.h.b16 %v1250
        %v1341 = vunpack.c.l.b16 %v1251
        %v1342 = vunpack.c.h.b16 %v1251
        %v1343 = vunpack.c.l.b16 %v1252
        %v1344 = vunpack.c.h.b16 %v1252
        %v1345 = vunpack.c.l.b16 %v1253
        %v1346 = vunpack.c.h.b16 %v1253
        %v1347 = vunpack.c.l.b16 %v1254
        %v1348 = vunpack.c.h.b16 %v1254
        %v1349 = vunpack.c.l.b16 %v1255
        %v1350 = vunpack.c.h.b16 %v1255
        %v1351 = vunpack.c.l.b16 %v1256
        %v1352 = vunpack.c.h.b16 %v1256
        %v1353 = vunpack.c.l.b16 %v1257
        %v1354 = vunpack.c.h.b16 %v1257
        %v1355 = vunpack.c.l.b16 %v1258
        %v1356 = vunpack.c.h.b16 %v1258
        %v1357 = vunpack.c.l.b16 %v1259
        %v1358 = vunpack.c.h.b16 %v1259
        %v1359 = vunpack.c.l.b16 %v1260
        %v1360 = vunpack.c.h.b16 %v1260
        %v1361 = vunpack.c.l.b16 %v1261
        %v1362 = vunpack.c.h.b16 %v1261
        %v1363 = vunpack.c.l.b16 %v1262
        %v1364 = vunpack.c.h.b16 %v1262
        %v1365 = vpack.c.b16 %v1305, %v1301
        %v1366 = vpack.c.b16 %v1306, %v1302
        %v1367 = vpack.c.b16 %v1307, %v1303
        %v1368 = vpack.c.b16 %v1308, %v1304
        %v1369 = vpack.c.b16 %v1313, %v1309
        %v1370 = vpack.c.b16 %v1314, %v1310
        %v1371 = vpack.c.b16 %v1315, %v1311
        %v1372 = vpack.c.b16 %v1316, %v1312
        %v1373 = vpack.c.b16 %v1321, %v1317
        %v1374 = vpack.c.b16 %v1322, %v1318
        %v1375 = vpack.c.b16 %v1323, %v1319
        %v1376 = vpack.c.b16 %v1324, %v1320
        %v1377 = vpack.c.b16 %v1329, %v1325
        %v1378 = vpack.c.b16 %v1330, %v1326
        %v1379 = vpack.c.b16 %v1331, %v1327
        %v1380 = vpack.c.b16 %v1332, %v1328
        %v1381 = vpack.c.b16 %v1337, %v1333
        %v1382 = vpack.c.b16 %v1338, %v1334
        %v1383 = vpack.c.b16 %v1339, %v1335
        %v1384 = vpack.c.b16 %v1340, %v1336
        %v1385 = vpack.c.b16 %v1345, %v1341
        %v1386 = vpack.c.b16 %v1346, %v1342
        %v1387 = vpack.c.b16 %v1347, %v1343
        %v1388 = vpack.c.b16 %v1348, %v1344
        %v1389 = vpack.c.b16 %v1353, %v1349
        %v1390 = vpack.c.b16 %v1354, %v1350
        %v1391 = vpack.c.b16 %v1355, %v1351
        %v1392 = vpack.c.b16 %v1356, %v1352
        %v1393 = vpack.c.b16 %v1361, %v1357
        %v1394 = vpack.c.b16 %v1362, %v1358
        %v1395 = vpack.c.b16 %v1363, %v1359
        %v1396 = vpack.c.b16 %v1364, %v1360
        %1429 = vmatpush.bf16.msra.mxu0 %v1393
        %1430 = vmatpush.bf16.msra.mxu0 %v1389
        %1431 = vmatpush.bf16.msra.mxu0 %v1385
        %1432 = vmatpush.bf16.msra.mxu0 %v1381
        %1433 = vmatpush.bf16.msra.mxu0 %v1377
        %1434 = vmatpush.bf16.msra.mxu0 %v1373
        %1435 = vmatpush.bf16.msra.mxu0 %v1369
        %1436 = vmatpush.bf16.msra.mxu0 %v1365
        %1437 = vmatmul.bf16.gmra.mxu0 %v1267
        %v1438 = vpop.f32.mrf.mxu0
        %v1439 = vadd.f32 0.0, %v1438
        %v1440 = vpop.f32.mrf.mxu0
        %v1441 = vadd.f32 0.0, %v1440
        %1442 = vdwg.mxu0
        %1443 = vmatpush.bf16.msra.mxu0 %v1394
        %1444 = vmatpush.bf16.msra.mxu0 %v1390
        %1445 = vmatpush.bf16.msra.mxu0 %v1386
        %1446 = vmatpush.bf16.msra.mxu0 %v1382
        %1447 = vmatpush.bf16.msra.mxu0 %v1378
        %1448 = vmatpush.bf16.msra.mxu0 %v1374
        %1449 = vmatpush.bf16.msra.mxu0 %v1370
        %1450 = vmatpush.bf16.msra.mxu0 %v1366
        %1451 = vmatmul.bf16.gmra.mxu0 %v1267
        %v1452 = vpop.f32.mrf.mxu0
        %v1453 = vadd.f32 0.0, %v1452
        %v1454 = vpop.f32.mrf.mxu0
        %v1455 = vadd.f32 0.0, %v1454
        %1456 = vdwg.mxu0
        %1457 = vmatpush.bf16.msra.mxu0 %v1395
        %1458 = vmatpush.bf16.msra.mxu0 %v1391
        %1459 = vmatpush.bf16.msra.mxu0 %v1387
        %1460 = vmatpush.bf16.msra.mxu0 %v1383
        %1461 = vmatpush.bf16.msra.mxu0 %v1379
        %1462 = vmatpush.bf16.msra.mxu0 %v1375
        %1463 = vmatpush.bf16.msra.mxu0 %v1371
        %1464 = vmatpush.bf16.msra.mxu0 %v1367
        %1465 = vmatmul.bf16.gmra.mxu0 %v1267
        %v1466 = vpop.f32.mrf.mxu0
        %v1467 = vadd.f32 0.0, %v1466
        %v1468 = vpop.f32.mrf.mxu0
        %v1469 = vadd.f32 0.0, %v1468
        %1470 = vdwg.mxu0
        %1471 = vmatpush.bf16.msra.mxu0 %v1396
        %1472 = vmatpush.bf16.msra.mxu0 %v1392
        %1473 = vmatpush.bf16.msra.mxu0 %v1388
        %1474 = vmatpush.bf16.msra.mxu0 %v1384
        %1475 = vmatpush.bf16.msra.mxu0 %v1380
        %1476 = vmatpush.bf16.msra.mxu0 %v1376
        %1477 = vmatpush.bf16.msra.mxu0 %v1372
        %1478 = vmatpush.bf16.msra.mxu0 %v1368
        %1479 = vmatmul.bf16.gmra.mxu0 %v1267
        %v1480 = vpop.f32.mrf.mxu0
        %v1481 = vadd.f32 0.0, %v1480
        %v1482 = vpop.f32.mrf.mxu0
        %v1483 = vadd.f32 0.0, %v1482
        %1484 = vdwg.mxu0
        %v1485 = vadd.f32 %v1223, %v1439
        %v1486 = vadd.f32 %v1224, %v1453
        %v1487 = vadd.f32 %v1225, %v1467
        %v1488 = vadd.f32 %v1226, %v1481
        %v1489 = vadd.f32 %v1227, %v1441
        %v1490 = vadd.f32 %v1228, %v1455
        %v1491 = vadd.f32 %v1229, %v1469
        %v1492 = vadd.f32 %v1230, %v1483
        %v1493 = vxor.u32 %v1485, 2147483648
        %v1494 = vxor.u32 %v1489, 2147483648
        %v1495 = vmul.f32 %v1493, 1.442695
        %v1496 = vpow.pop %v1495
        %v1497 = vmul.f32 %v1494, 1.442695
        %v1498 = vpow.pop %v1497
        %v1499 = vadd.f32 %v1496, 1.0
        %v1500 = vadd.f32 %v1498, 1.0
        %v1501 = vrcp.pop %v1499
        %v1502 = vmul.f32 %v1499, %v1501
        %v1503 = vsub.f32 1.0, %v1502
        %v1504 = vmul.f32 %v1501, %v1503
        %v1505 = vadd.f32 %v1501, %v1504
        %vm1506 = vweird.f32 %v1499
        %vm1507 = vweird.f32 %v1501
        %vm1508 = vmor %vm1506, %vm1507
        %v1509 = vsel %vm1508, %v1501, %v1505
        %v1510 = vand.u32 2147483647, %v1499
        %vm1511 = vcmp.eq.f32.partialorder %v1510, 8.507059e+37
        %v1512 = vand.u32 %v1499, 2147483648
        %v1513 = vor.u32 1.1754944e-38, %v1512
        %v1514 = vsel %vm1511, %v1513, %v1509
        %v1515 = vmul.f32 1.0, %v1514
        %v1516 = vrcp.pop %v1500
        %v1517 = vmul.f32 %v1500, %v1516
        %v1518 = vsub.f32 1.0, %v1517
        %v1519 = vmul.f32 %v1516, %v1518
        %v1520 = vadd.f32 %v1516, %v1519
        %vm1521 = vweird.f32 %v1500
        %vm1522 = vweird.f32 %v1516
        %vm1523 = vmor %vm1521, %vm1522
        %v1524 = vsel %vm1523, %v1516, %v1520
        %v1525 = vand.u32 2147483647, %v1500
        %vm1526 = vcmp.eq.f32.partialorder %v1525, 8.507059e+37
        %v1527 = vand.u32 %v1500, 2147483648
        %v1528 = vor.u32 1.1754944e-38, %v1527
        %v1529 = vsel %vm1526, %v1528, %v1524
        %v1530 = vmul.f32 1.0, %v1529
        %v1531 = vxor.u32 %v1486, 2147483648
        %v1532 = vxor.u32 %v1490, 2147483648
        %v1533 = vmul.f32 %v1531, 1.442695
        %v1534 = vpow.pop %v1533
        %v1535 = vmul.f32 %v1532, 1.442695
        %v1536 = vpow.pop %v1535
        %v1537 = vadd.f32 %v1534, 1.0
        %v1538 = vadd.f32 %v1536, 1.0
        %v1539 = vrcp.pop %v1537
        %v1540 = vmul.f32 %v1537, %v1539
        %v1541 = vsub.f32 1.0, %v1540
        %v1542 = vmul.f32 %v1539, %v1541
        %v1543 = vadd.f32 %v1539, %v1542
        %vm1544 = vweird.f32 %v1537
        %vm1545 = vweird.f32 %v1539
        %vm1546 = vmor %vm1544, %vm1545
        %v1547 = vsel %vm1546, %v1539, %v1543
        %v1548 = vand.u32 2147483647, %v1537
        %vm1549 = vcmp.eq.f32.partialorder %v1548, 8.507059e+37
        %v1550 = vand.u32 %v1537, 2147483648
        %v1551 = vor.u32 1.1754944e-38, %v1550
        %v1552 = vsel %vm1549, %v1551, %v1547
        %v1553 = vmul.f32 1.0, %v1552
        %v1554 = vrcp.pop %v1538
        %v1555 = vmul.f32 %v1538, %v1554
        %v1556 = vsub.f32 1.0, %v1555
        %v1557 = vmul.f32 %v1554, %v1556
        %v1558 = vadd.f32 %v1554, %v1557
        %vm1559 = vweird.f32 %v1538
        %vm1560 = vweird.f32 %v1554
        %vm1561 = vmor %vm1559, %vm1560
        %v1562 = vsel %vm1561, %v1554, %v1558
        %v1563 = vand.u32 2147483647, %v1538
        %vm1564 = vcmp.eq.f32.partialorder %v1563, 8.507059e+37
        %v1565 = vand.u32 %v1538, 2147483648
        %v1566 = vor.u32 1.1754944e-38, %v1565
        %v1567 = vsel %vm1564, %v1566, %v1562
        %v1568 = vmul.f32 1.0, %v1567
        %v1569 = vtanh.pop %v1487
        %v1570 = vtanh.pop %v1491
        %v1571 = vxor.u32 %v1488, 2147483648
        %v1572 = vxor.u32 %v1492, 2147483648
        %v1573 = vmul.f32 %v1571, 1.442695
        %v1574 = vpow.pop %v1573
        %v1575 = vmul.f32 %v1572, 1.442695
        %v1576 = vpow.pop %v1575
        %v1577 = vadd.f32 %v1574, 1.0
        %v1578 = vadd.f32 %v1576, 1.0
        %v1579 = vrcp.pop %v1577
        %v1580 = vmul.f32 %v1577, %v1579
        %v1581 = vsub.f32 1.0, %v1580
        %v1582 = vmul.f32 %v1579, %v1581
        %v1583 = vadd.f32 %v1579, %v1582
        %vm1584 = vweird.f32 %v1577
        %vm1585 = vweird.f32 %v1579
        %vm1586 = vmor %vm1584, %vm1585
        %v1587 = vsel %vm1586, %v1579, %v1583
        %v1588 = vand.u32 2147483647, %v1577
        %vm1589 = vcmp.eq.f32.partialorder %v1588, 8.507059e+37
        %v1590 = vand.u32 %v1577, 2147483648
        %v1591 = vor.u32 1.1754944e-38, %v1590
        %v1592 = vsel %vm1589, %v1591, %v1587
        %v1593 = vmul.f32 1.0, %v1592
        %v1594 = vrcp.pop %v1578
        %v1595 = vmul.f32 %v1578, %v1594
        %v1596 = vsub.f32 1.0, %v1595
        %v1597 = vmul.f32 %v1594, %v1596
        %v1598 = vadd.f32 %v1594, %v1597
        %vm1599 = vweird.f32 %v1578
        %vm1600 = vweird.f32 %v1594
        %vm1601 = vmor %vm1599, %vm1600
        %v1602 = vsel %vm1601, %v1594, %v1598
        %v1603 = vand.u32 2147483647, %v1578
        %vm1604 = vcmp.eq.f32.partialorder %v1603, 8.507059e+37
        %v1605 = vand.u32 %v1578, 2147483648
        %v1606 = vor.u32 1.1754944e-38, %v1605
        %v1607 = vsel %vm1604, %v1606, %v1602
        %v1608 = vmul.f32 1.0, %v1607
        %v1609 = vmul.f32 %v1553, %v1212
        %v1610 = vmul.f32 %v1568, %v1213
        %v1611 = vmul.f32 %v1515, %v1569
        %v1612 = vmul.f32 %v1530, %v1570
        %v1613 = vadd.f32 %v1609, %v1611
        %v1614 = vadd.f32 %v1610, %v1612
        %v1615 = vtanh.pop %v1613
        %v1616 = vtanh.pop %v1614
        %v1617 = vmul.f32 %v1593, %v1615
        %v1618 = vmul.f32 %v1608, %v1616
        %v1619 = vpack.c.bf16 %v1617, %v1617
        %v1620 = vpack.c.bf16 %v1618, %v1618
        %s1621 = scalar_lea.vmem %s284, 8 [#allocation13]
        %1622 = vst [vmem:[%s1621] sm:$0xf] %v1619
        %1623 = vst [vmem:[%s1621 + $0x4] sm:$0xf] %v1620
        %s1624 = scalar_lea.vmem [#allocation4], 128
        %v1625 = vld [vmem:[%s1624] sm:$0xff]
        %v1626 = vld [vmem:[%s1624 + $0x8] sm:$0xff]
        %v1627 = vld [vmem:[%s1624 + $0x10] sm:$0xff]
        %v1628 = vld [vmem:[%s1624 + $0x18] sm:$0xff]
        %v1629 = vld [vmem:[%s1624 + $0x20] sm:$0xff]
        %v1630 = vld [vmem:[%s1624 + $0x28] sm:$0xff]
        %v1631 = vld [vmem:[%s1624 + $0x30] sm:$0xff]
        %v1632 = vld [vmem:[%s1624 + $0x38] sm:$0xff]
        %v1633 = vld [vmem:[#allocation11] sm:$0xff]
        %v1634 = vld [vmem:[#allocation11 + $0x8] sm:$0xff]
        %v1635 = vld [vmem:[#allocation11 + $0x10] sm:$0xff]
        %v1636 = vld [vmem:[#allocation11 + $0x18] sm:$0xff]
        %v1637 = vld [vmem:[#allocation11 + $0x20] sm:$0xff]
        %v1638 = vld [vmem:[#allocation11 + $0x28] sm:$0xff]
        %v1639 = vld [vmem:[#allocation11 + $0x30] sm:$0xff]
        %v1640 = vld [vmem:[#allocation11 + $0x38] sm:$0xff]
        %v1641 = vld [vmem:[#allocation11 + $0x40] sm:$0xff]
        %v1642 = vld [vmem:[#allocation11 + $0x48] sm:$0xff]
        %v1643 = vld [vmem:[#allocation11 + $0x50] sm:$0xff]
        %v1644 = vld [vmem:[#allocation11 + $0x58] sm:$0xff]
        %v1645 = vld [vmem:[#allocation11 + $0x60] sm:$0xff]
        %v1646 = vld [vmem:[#allocation11 + $0x68] sm:$0xff]
        %v1647 = vld [vmem:[#allocation11 + $0x70] sm:$0xff]
        %v1648 = vld [vmem:[#allocation11 + $0x78] sm:$0xff]
        %v1649 = vld [vmem:[#allocation11 + $0x80] sm:$0xff]
        %v1650 = vld [vmem:[#allocation11 + $0x88] sm:$0xff]
        %v1651 = vld [vmem:[#allocation11 + $0x90] sm:$0xff]
        %v1652 = vld [vmem:[#allocation11 + $0x98] sm:$0xff]
        %v1653 = vld [vmem:[#allocation11 + $0xa0] sm:$0xff]
        %v1654 = vld [vmem:[#allocation11 + $0xa8] sm:$0xff]
        %v1655 = vld [vmem:[#allocation11 + $0xb0] sm:$0xff]
        %v1656 = vld [vmem:[#allocation11 + $0xb8] sm:$0xff]
        %v1657 = vld [vmem:[#allocation11 + $0xc0] sm:$0xff]
        %v1658 = vld [vmem:[#allocation11 + $0xc8] sm:$0xff]
        %v1659 = vld [vmem:[#allocation11 + $0xd0] sm:$0xff]
        %v1660 = vld [vmem:[#allocation11 + $0xd8] sm:$0xff]
        %v1661 = vld [vmem:[#allocation11 + $0xe0] sm:$0xff]
        %v1662 = vld [vmem:[#allocation11 + $0xe8] sm:$0xff]
        %v1663 = vld [vmem:[#allocation11 + $0xf0] sm:$0xff]
        %v1664 = vld [vmem:[#allocation11 + $0xf8] sm:$0xff]
        %v1667 = vunpack.c.l.b16 %v1619
        %v1668 = vunpack.c.l.b16 %v1620
        %v1669 = vpack.c.b16 %v1668, %v1667
        %v1703 = vunpack.c.l.b16 %v1633
        %v1704 = vunpack.c.h.b16 %v1633
        %v1705 = vunpack.c.l.b16 %v1634
        %v1706 = vunpack.c.h.b16 %v1634
        %v1707 = vunpack.c.l.b16 %v1635
        %v1708 = vunpack.c.h.b16 %v1635
        %v1709 = vunpack.c.l.b16 %v1636
        %v1710 = vunpack.c.h.b16 %v1636
        %v1711 = vunpack.c.l.b16 %v1637
        %v1712 = vunpack.c.h.b16 %v1637
        %v1713 = vunpack.c.l.b16 %v1638
        %v1714 = vunpack.c.h.b16 %v1638
        %v1715 = vunpack.c.l.b16 %v1639
        %v1716 = vunpack.c.h.b16 %v1639
        %v1717 = vunpack.c.l.b16 %v1640
        %v1718 = vunpack.c.h.b16 %v1640
        %v1719 = vunpack.c.l.b16 %v1641
        %v1720 = vunpack.c.h.b16 %v1641
        %v1721 = vunpack.c.l.b16 %v1642
        %v1722 = vunpack.c.h.b16 %v1642
        %v1723 = vunpack.c.l.b16 %v1643
        %v1724 = vunpack.c.h.b16 %v1643
        %v1725 = vunpack.c.l.b16 %v1644
        %v1726 = vunpack.c.h.b16 %v1644
        %v1727 = vunpack.c.l.b16 %v1645
        %v1728 = vunpack.c.h.b16 %v1645
        %v1729 = vunpack.c.l.b16 %v1646
        %v1730 = vunpack.c.h.b16 %v1646
        %v1731 = vunpack.c.l.b16 %v1647
        %v1732 = vunpack.c.h.b16 %v1647
        %v1733 = vunpack.c.l.b16 %v1648
        %v1734 = vunpack.c.h.b16 %v1648
        %v1735 = vunpack.c.l.b16 %v1649
        %v1736 = vunpack.c.h.b16 %v1649
        %v1737 = vunpack.c.l.b16 %v1650
        %v1738 = vunpack.c.h.b16 %v1650
        %v1739 = vunpack.c.l.b16 %v1651
        %v1740 = vunpack.c.h.b16 %v1651
        %v1741 = vunpack.c.l.b16 %v1652
        %v1742 = vunpack.c.h.b16 %v1652
        %v1743 = vunpack.c.l.b16 %v1653
        %v1744 = vunpack.c.h.b16 %v1653
        %v1745 = vunpack.c.l.b16 %v1654
        %v1746 = vunpack.c.h.b16 %v1654
        %v1747 = vunpack.c.l.b16 %v1655
        %v1748 = vunpack.c.h.b16 %v1655
        %v1749 = vunpack.c.l.b16 %v1656
        %v1750 = vunpack.c.h.b16 %v1656
        %v1751 = vunpack.c.l.b16 %v1657
        %v1752 = vunpack.c.h.b16 %v1657
        %v1753 = vunpack.c.l.b16 %v1658
        %v1754 = vunpack.c.h.b16 %v1658
        %v1755 = vunpack.c.l.b16 %v1659
        %v1756 = vunpack.c.h.b16 %v1659
        %v1757 = vunpack.c.l.b16 %v1660
        %v1758 = vunpack.c.h.b16 %v1660
        %v1759 = vunpack.c.l.b16 %v1661
        %v1760 = vunpack.c.h.b16 %v1661
        %v1761 = vunpack.c.l.b16 %v1662
        %v1762 = vunpack.c.h.b16 %v1662
        %v1763 = vunpack.c.l.b16 %v1663
        %v1764 = vunpack.c.h.b16 %v1663
        %v1765 = vunpack.c.l.b16 %v1664
        %v1766 = vunpack.c.h.b16 %v1664
        %v1767 = vpack.c.b16 %v1707, %v1703
        %v1768 = vpack.c.b16 %v1708, %v1704
        %v1769 = vpack.c.b16 %v1709, %v1705
        %v1770 = vpack.c.b16 %v1710, %v1706
        %v1771 = vpack.c.b16 %v1715, %v1711
        %v1772 = vpack.c.b16 %v1716, %v1712
        %v1773 = vpack.c.b16 %v1717, %v1713
        %v1774 = vpack.c.b16 %v1718, %v1714
        %v1775 = vpack.c.b16 %v1723, %v1719
        %v1776 = vpack.c.b16 %v1724, %v1720
        %v1777 = vpack.c.b16 %v1725, %v1721
        %v1778 = vpack.c.b16 %v1726, %v1722
        %v1779 = vpack.c.b16 %v1731, %v1727
        %v1780 = vpack.c.b16 %v1732, %v1728
        %v1781 = vpack.c.b16 %v1733, %v1729
        %v1782 = vpack.c.b16 %v1734, %v1730
        %v1783 = vpack.c.b16 %v1739, %v1735
        %v1784 = vpack.c.b16 %v1740, %v1736
        %v1785 = vpack.c.b16 %v1741, %v1737
        %v1786 = vpack.c.b16 %v1742, %v1738
        %v1787 = vpack.c.b16 %v1747, %v1743
        %v1788 = vpack.c.b16 %v1748, %v1744
        %v1789 = vpack.c.b16 %v1749, %v1745
        %v1790 = vpack.c.b16 %v1750, %v1746
        %v1791 = vpack.c.b16 %v1755, %v1751
        %v1792 = vpack.c.b16 %v1756, %v1752
        %v1793 = vpack.c.b16 %v1757, %v1753
        %v1794 = vpack.c.b16 %v1758, %v1754
        %v1795 = vpack.c.b16 %v1763, %v1759
        %v1796 = vpack.c.b16 %v1764, %v1760
        %v1797 = vpack.c.b16 %v1765, %v1761
        %v1798 = vpack.c.b16 %v1766, %v1762
        %1831 = vmatpush.bf16.msra.mxu0 %v1795
        %1832 = vmatpush.bf16.msra.mxu0 %v1791
        %1833 = vmatpush.bf16.msra.mxu0 %v1787
        %1834 = vmatpush.bf16.msra.mxu0 %v1783
        %1835 = vmatpush.bf16.msra.mxu0 %v1779
        %1836 = vmatpush.bf16.msra.mxu0 %v1775
        %1837 = vmatpush.bf16.msra.mxu0 %v1771
        %1838 = vmatpush.bf16.msra.mxu0 %v1767
        %1839 = vmatmul.bf16.gmra.mxu0 %v1669
        %v1840 = vpop.f32.mrf.mxu0
        %v1841 = vadd.f32 0.0, %v1840
        %v1842 = vpop.f32.mrf.mxu0
        %v1843 = vadd.f32 0.0, %v1842
        %1844 = vdwg.mxu0
        %1845 = vmatpush.bf16.msra.mxu0 %v1796
        %1846 = vmatpush.bf16.msra.mxu0 %v1792
        %1847 = vmatpush.bf16.msra.mxu0 %v1788
        %1848 = vmatpush.bf16.msra.mxu0 %v1784
        %1849 = vmatpush.bf16.msra.mxu0 %v1780
        %1850 = vmatpush.bf16.msra.mxu0 %v1776
        %1851 = vmatpush.bf16.msra.mxu0 %v1772
        %1852 = vmatpush.bf16.msra.mxu0 %v1768
        %1853 = vmatmul.bf16.gmra.mxu0 %v1669
        %v1854 = vpop.f32.mrf.mxu0
        %v1855 = vadd.f32 0.0, %v1854
        %v1856 = vpop.f32.mrf.mxu0
        %v1857 = vadd.f32 0.0, %v1856
        %1858 = vdwg.mxu0
        %1859 = vmatpush.bf16.msra.mxu0 %v1797
        %1860 = vmatpush.bf16.msra.mxu0 %v1793
        %1861 = vmatpush.bf16.msra.mxu0 %v1789
        %1862 = vmatpush.bf16.msra.mxu0 %v1785
        %1863 = vmatpush.bf16.msra.mxu0 %v1781
        %1864 = vmatpush.bf16.msra.mxu0 %v1777
        %1865 = vmatpush.bf16.msra.mxu0 %v1773
        %1866 = vmatpush.bf16.msra.mxu0 %v1769
        %1867 = vmatmul.bf16.gmra.mxu0 %v1669
        %v1868 = vpop.f32.mrf.mxu0
        %v1869 = vadd.f32 0.0, %v1868
        %v1870 = vpop.f32.mrf.mxu0
        %v1871 = vadd.f32 0.0, %v1870
        %1872 = vdwg.mxu0
        %1873 = vmatpush.bf16.msra.mxu0 %v1798
        %1874 = vmatpush.bf16.msra.mxu0 %v1794
        %1875 = vmatpush.bf16.msra.mxu0 %v1790
        %1876 = vmatpush.bf16.msra.mxu0 %v1786
        %1877 = vmatpush.bf16.msra.mxu0 %v1782
        %1878 = vmatpush.bf16.msra.mxu0 %v1778
        %1879 = vmatpush.bf16.msra.mxu0 %v1774
        %1880 = vmatpush.bf16.msra.mxu0 %v1770
        %1881 = vmatmul.bf16.gmra.mxu0 %v1669
        %v1882 = vpop.f32.mrf.mxu0
        %v1883 = vadd.f32 0.0, %v1882
        %v1884 = vpop.f32.mrf.mxu0
        %v1885 = vadd.f32 0.0, %v1884
        %1886 = vdwg.mxu0
        %v1887 = vadd.f32 %v1625, %v1841
        %v1888 = vadd.f32 %v1626, %v1855
        %v1889 = vadd.f32 %v1627, %v1869
        %v1890 = vadd.f32 %v1628, %v1883
        %v1891 = vadd.f32 %v1629, %v1843
        %v1892 = vadd.f32 %v1630, %v1857
        %v1893 = vadd.f32 %v1631, %v1871
        %v1894 = vadd.f32 %v1632, %v1885
        %v1895 = vxor.u32 %v1887, 2147483648
        %v1896 = vxor.u32 %v1891, 2147483648
        %v1897 = vmul.f32 %v1895, 1.442695
        %v1898 = vpow.pop %v1897
        %v1899 = vmul.f32 %v1896, 1.442695
        %v1900 = vpow.pop %v1899
        %v1901 = vadd.f32 %v1898, 1.0
        %v1902 = vadd.f32 %v1900, 1.0
        %v1903 = vrcp.pop %v1901
        %v1904 = vmul.f32 %v1901, %v1903
        %v1905 = vsub.f32 1.0, %v1904
        %v1906 = vmul.f32 %v1903, %v1905
        %v1907 = vadd.f32 %v1903, %v1906
        %vm1908 = vweird.f32 %v1901
        %vm1909 = vweird.f32 %v1903
        %vm1910 = vmor %vm1908, %vm1909
        %v1911 = vsel %vm1910, %v1903, %v1907
        %v1912 = vand.u32 2147483647, %v1901
        %vm1913 = vcmp.eq.f32.partialorder %v1912, 8.507059e+37
        %v1914 = vand.u32 %v1901, 2147483648
        %v1915 = vor.u32 1.1754944e-38, %v1914
        %v1916 = vsel %vm1913, %v1915, %v1911
        %v1917 = vmul.f32 1.0, %v1916
        %v1918 = vrcp.pop %v1902
        %v1919 = vmul.f32 %v1902, %v1918
        %v1920 = vsub.f32 1.0, %v1919
        %v1921 = vmul.f32 %v1918, %v1920
        %v1922 = vadd.f32 %v1918, %v1921
        %vm1923 = vweird.f32 %v1902
        %vm1924 = vweird.f32 %v1918
        %vm1925 = vmor %vm1923, %vm1924
        %v1926 = vsel %vm1925, %v1918, %v1922
        %v1927 = vand.u32 2147483647, %v1902
        %vm1928 = vcmp.eq.f32.partialorder %v1927, 8.507059e+37
        %v1929 = vand.u32 %v1902, 2147483648
        %v1930 = vor.u32 1.1754944e-38, %v1929
        %v1931 = vsel %vm1928, %v1930, %v1926
        %v1932 = vmul.f32 1.0, %v1931
        %v1933 = vxor.u32 %v1888, 2147483648
        %v1934 = vxor.u32 %v1892, 2147483648
        %v1935 = vmul.f32 %v1933, 1.442695
        %v1936 = vpow.pop %v1935
        %v1937 = vmul.f32 %v1934, 1.442695
        %v1938 = vpow.pop %v1937
        %v1939 = vadd.f32 %v1936, 1.0
        %v1940 = vadd.f32 %v1938, 1.0
        %v1941 = vrcp.pop %v1939
        %v1942 = vmul.f32 %v1939, %v1941
        %v1943 = vsub.f32 1.0, %v1942
        %v1944 = vmul.f32 %v1941, %v1943
        %v1945 = vadd.f32 %v1941, %v1944
        %vm1946 = vweird.f32 %v1939
        %vm1947 = vweird.f32 %v1941
        %vm1948 = vmor %vm1946, %vm1947
        %v1949 = vsel %vm1948, %v1941, %v1945
        %v1950 = vand.u32 2147483647, %v1939
        %vm1951 = vcmp.eq.f32.partialorder %v1950, 8.507059e+37
        %v1952 = vand.u32 %v1939, 2147483648
        %v1953 = vor.u32 1.1754944e-38, %v1952
        %v1954 = vsel %vm1951, %v1953, %v1949
        %v1955 = vmul.f32 1.0, %v1954
        %v1956 = vrcp.pop %v1940
        %v1957 = vmul.f32 %v1940, %v1956
        %v1958 = vsub.f32 1.0, %v1957
        %v1959 = vmul.f32 %v1956, %v1958
        %v1960 = vadd.f32 %v1956, %v1959
        %vm1961 = vweird.f32 %v1940
        %vm1962 = vweird.f32 %v1956
        %vm1963 = vmor %vm1961, %vm1962
        %v1964 = vsel %vm1963, %v1956, %v1960
        %v1965 = vand.u32 2147483647, %v1940
        %vm1966 = vcmp.eq.f32.partialorder %v1965, 8.507059e+37
        %v1967 = vand.u32 %v1940, 2147483648
        %v1968 = vor.u32 1.1754944e-38, %v1967
        %v1969 = vsel %vm1966, %v1968, %v1964
        %v1970 = vmul.f32 1.0, %v1969
        %v1971 = vtanh.pop %v1889
        %v1972 = vtanh.pop %v1893
        %v1973 = vxor.u32 %v1890, 2147483648
        %v1974 = vxor.u32 %v1894, 2147483648
        %v1975 = vmul.f32 %v1973, 1.442695
        %v1976 = vpow.pop %v1975
        %v1977 = vmul.f32 %v1974, 1.442695
        %v1978 = vpow.pop %v1977
        %v1979 = vadd.f32 %v1976, 1.0
        %v1980 = vadd.f32 %v1978, 1.0
        %v1981 = vrcp.pop %v1979
        %v1982 = vmul.f32 %v1979, %v1981
        %v1983 = vsub.f32 1.0, %v1982
        %v1984 = vmul.f32 %v1981, %v1983
        %v1985 = vadd.f32 %v1981, %v1984
        %vm1986 = vweird.f32 %v1979
        %vm1987 = vweird.f32 %v1981
        %vm1988 = vmor %vm1986, %vm1987
        %v1989 = vsel %vm1988, %v1981, %v1985
        %v1990 = vand.u32 2147483647, %v1979
        %vm1991 = vcmp.eq.f32.partialorder %v1990, 8.507059e+37
        %v1992 = vand.u32 %v1979, 2147483648
        %v1993 = vor.u32 1.1754944e-38, %v1992
        %v1994 = vsel %vm1991, %v1993, %v1989
        %v1995 = vmul.f32 1.0, %v1994
        %v1996 = vrcp.pop %v1980
        %v1997 = vmul.f32 %v1980, %v1996
        %v1998 = vsub.f32 1.0, %v1997
        %v1999 = vmul.f32 %v1996, %v1998
        %v2000 = vadd.f32 %v1996, %v1999
        %vm2001 = vweird.f32 %v1980
        %vm2002 = vweird.f32 %v1996
        %vm2003 = vmor %vm2001, %vm2002
        %v2004 = vsel %vm2003, %v1996, %v2000
        %v2005 = vand.u32 2147483647, %v1980
        %vm2006 = vcmp.eq.f32.partialorder %v2005, 8.507059e+37
        %v2007 = vand.u32 %v1980, 2147483648
        %v2008 = vor.u32 1.1754944e-38, %v2007
        %v2009 = vsel %vm2006, %v2008, %v2004
        %v2010 = vmul.f32 1.0, %v2009
        %v2011 = vmul.f32 %v1955, %v1613
        %v2012 = vmul.f32 %v1970, %v1614
        %v2013 = vmul.f32 %v1917, %v1971
        %v2014 = vmul.f32 %v1932, %v1972
        %v2015 = vadd.f32 %v2011, %v2013
        %v2016 = vadd.f32 %v2012, %v2014
        %v2017 = vtanh.pop %v2015
        %v2018 = vtanh.pop %v2016
        %v2019 = vmul.f32 %v1995, %v2017
        %v2020 = vmul.f32 %v2010, %v2018
        %v2021 = vpack.c.bf16 %v2019, %v2019
        %v2022 = vpack.c.bf16 %v2020, %v2020
        %s2023 = scalar_lea.vmem %s284, 16 [#allocation13]
        %2024 = vst [vmem:[%s2023] sm:$0xf] %v2021
        %2025 = vst [vmem:[%s2023 + $0x4] sm:$0xf] %v2022
        %s2026 = scalar_lea.vmem [#allocation4], 192
        %v2027 = vld [vmem:[%s2026] sm:$0xff]
        %v2028 = vld [vmem:[%s2026 + $0x8] sm:$0xff]
        %v2029 = vld [vmem:[%s2026 + $0x10] sm:$0xff]
        %v2030 = vld [vmem:[%s2026 + $0x18] sm:$0xff]
        %v2031 = vld [vmem:[%s2026 + $0x20] sm:$0xff]
        %v2032 = vld [vmem:[%s2026 + $0x28] sm:$0xff]
        %v2033 = vld [vmem:[%s2026 + $0x30] sm:$0xff]
        %v2034 = vld [vmem:[%s2026 + $0x38] sm:$0xff]
        %v2035 = vld [vmem:[#allocation11] sm:$0xff]
        %v2036 = vld [vmem:[#allocation11 + $0x8] sm:$0xff]
        %v2037 = vld [vmem:[#allocation11 + $0x10] sm:$0xff]
        %v2038 = vld [vmem:[#allocation11 + $0x18] sm:$0xff]
        %v2039 = vld [vmem:[#allocation11 + $0x20] sm:$0xff]
        %v2040 = vld [vmem:[#allocation11 + $0x28] sm:$0xff]
        %v2041 = vld [vmem:[#allocation11 + $0x30] sm:$0xff]
        %v2042 = vld [vmem:[#allocation11 + $0x38] sm:$0xff]
        %v2043 = vld [vmem:[#allocation11 + $0x40] sm:$0xff]
        %v2044 = vld [vmem:[#allocation11 + $0x48] sm:$0xff]
        %v2045 = vld [vmem:[#allocation11 + $0x50] sm:$0xff]
        %v2046 = vld [vmem:[#allocation11 + $0x58] sm:$0xff]
        %v2047 = vld [vmem:[#allocation11 + $0x60] sm:$0xff]
        %v2048 = vld [vmem:[#allocation11 + $0x68] sm:$0xff]
        %v2049 = vld [vmem:[#allocation11 + $0x70] sm:$0xff]
        %v2050 = vld [vmem:[#allocation11 + $0x78] sm:$0xff]
        %v2051 = vld [vmem:[#allocation11 + $0x80] sm:$0xff]
        %v2052 = vld [vmem:[#allocation11 + $0x88] sm:$0xff]
        %v2053 = vld [vmem:[#allocation11 + $0x90] sm:$0xff]
        %v2054 = vld [vmem:[#allocation11 + $0x98] sm:$0xff]
        %v2055 = vld [vmem:[#allocation11 + $0xa0] sm:$0xff]
        %v2056 = vld [vmem:[#allocation11 + $0xa8] sm:$0xff]
        %v2057 = vld [vmem:[#allocation11 + $0xb0] sm:$0xff]
        %v2058 = vld [vmem:[#allocation11 + $0xb8] sm:$0xff]
        %v2059 = vld [vmem:[#allocation11 + $0xc0] sm:$0xff]
        %v2060 = vld [vmem:[#allocation11 + $0xc8] sm:$0xff]
        %v2061 = vld [vmem:[#allocation11 + $0xd0] sm:$0xff]
        %v2062 = vld [vmem:[#allocation11 + $0xd8] sm:$0xff]
        %v2063 = vld [vmem:[#allocation11 + $0xe0] sm:$0xff]
        %v2064 = vld [vmem:[#allocation11 + $0xe8] sm:$0xff]
        %v2065 = vld [vmem:[#allocation11 + $0xf0] sm:$0xff]
        %v2066 = vld [vmem:[#allocation11 + $0xf8] sm:$0xff]
        %v2069 = vunpack.c.l.b16 %v2021
        %v2070 = vunpack.c.l.b16 %v2022
        %v2071 = vpack.c.b16 %v2070, %v2069
        %v2105 = vunpack.c.l.b16 %v2035
        %v2106 = vunpack.c.h.b16 %v2035
        %v2107 = vunpack.c.l.b16 %v2036
        %v2108 = vunpack.c.h.b16 %v2036
        %v2109 = vunpack.c.l.b16 %v2037
        %v2110 = vunpack.c.h.b16 %v2037
        %v2111 = vunpack.c.l.b16 %v2038
        %v2112 = vunpack.c.h.b16 %v2038
        %v2113 = vunpack.c.l.b16 %v2039
        %v2114 = vunpack.c.h.b16 %v2039
        %v2115 = vunpack.c.l.b16 %v2040
        %v2116 = vunpack.c.h.b16 %v2040
        %v2117 = vunpack.c.l.b16 %v2041
        %v2118 = vunpack.c.h.b16 %v2041
        %v2119 = vunpack.c.l.b16 %v2042
        %v2120 = vunpack.c.h.b16 %v2042
        %v2121 = vunpack.c.l.b16 %v2043
        %v2122 = vunpack.c.h.b16 %v2043
        %v2123 = vunpack.c.l.b16 %v2044
        %v2124 = vunpack.c.h.b16 %v2044
        %v2125 = vunpack.c.l.b16 %v2045
        %v2126 = vunpack.c.h.b16 %v2045
        %v2127 = vunpack.c.l.b16 %v2046
        %v2128 = vunpack.c.h.b16 %v2046
        %v2129 = vunpack.c.l.b16 %v2047
        %v2130 = vunpack.c.h.b16 %v2047
        %v2131 = vunpack.c.l.b16 %v2048
        %v2132 = vunpack.c.h.b16 %v2048
        %v2133 = vunpack.c.l.b16 %v2049
        %v2134 = vunpack.c.h.b16 %v2049
        %v2135 = vunpack.c.l.b16 %v2050
        %v2136 = vunpack.c.h.b16 %v2050
        %v2137 = vunpack.c.l.b16 %v2051
        %v2138 = vunpack.c.h.b16 %v2051
        %v2139 = vunpack.c.l.b16 %v2052
        %v2140 = vunpack.c.h.b16 %v2052
        %v2141 = vunpack.c.l.b16 %v2053
        %v2142 = vunpack.c.h.b16 %v2053
        %v2143 = vunpack.c.l.b16 %v2054
        %v2144 = vunpack.c.h.b16 %v2054
        %v2145 = vunpack.c.l.b16 %v2055
        %v2146 = vunpack.c.h.b16 %v2055
        %v2147 = vunpack.c.l.b16 %v2056
        %v2148 = vunpack.c.h.b16 %v2056
        %v2149 = vunpack.c.l.b16 %v2057
        %v2150 = vunpack.c.h.b16 %v2057
        %v2151 = vunpack.c.l.b16 %v2058
        %v2152 = vunpack.c.h.b16 %v2058
        %v2153 = vunpack.c.l.b16 %v2059
        %v2154 = vunpack.c.h.b16 %v2059
        %v2155 = vunpack.c.l.b16 %v2060
        %v2156 = vunpack.c.h.b16 %v2060
        %v2157 = vunpack.c.l.b16 %v2061
        %v2158 = vunpack.c.h.b16 %v2061
        %v2159 = vunpack.c.l.b16 %v2062
        %v2160 = vunpack.c.h.b16 %v2062
        %v2161 = vunpack.c.l.b16 %v2063
        %v2162 = vunpack.c.h.b16 %v2063
        %v2163 = vunpack.c.l.b16 %v2064
        %v2164 = vunpack.c.h.b16 %v2064
        %v2165 = vunpack.c.l.b16 %v2065
        %v2166 = vunpack.c.h.b16 %v2065
        %v2167 = vunpack.c.l.b16 %v2066
        %v2168 = vunpack.c.h.b16 %v2066
        %v2169 = vpack.c.b16 %v2109, %v2105
        %v2170 = vpack.c.b16 %v2110, %v2106
        %v2171 = vpack.c.b16 %v2111, %v2107
        %v2172 = vpack.c.b16 %v2112, %v2108
        %v2173 = vpack.c.b16 %v2117, %v2113
        %v2174 = vpack.c.b16 %v2118, %v2114
        %v2175 = vpack.c.b16 %v2119, %v2115
        %v2176 = vpack.c.b16 %v2120, %v2116
        %v2177 = vpack.c.b16 %v2125, %v2121
        %v2178 = vpack.c.b16 %v2126, %v2122
        %v2179 = vpack.c.b16 %v2127, %v2123
        %v2180 = vpack.c.b16 %v2128, %v2124
        %v2181 = vpack.c.b16 %v2133, %v2129
        %v2182 = vpack.c.b16 %v2134, %v2130
        %v2183 = vpack.c.b16 %v2135, %v2131
        %v2184 = vpack.c.b16 %v2136, %v2132
        %v2185 = vpack.c.b16 %v2141, %v2137
        %v2186 = vpack.c.b16 %v2142, %v2138
        %v2187 = vpack.c.b16 %v2143, %v2139
        %v2188 = vpack.c.b16 %v2144, %v2140
        %v2189 = vpack.c.b16 %v2149, %v2145
        %v2190 = vpack.c.b16 %v2150, %v2146
        %v2191 = vpack.c.b16 %v2151, %v2147
        %v2192 = vpack.c.b16 %v2152, %v2148
        %v2193 = vpack.c.b16 %v2157, %v2153
        %v2194 = vpack.c.b16 %v2158, %v2154
        %v2195 = vpack.c.b16 %v2159, %v2155
        %v2196 = vpack.c.b16 %v2160, %v2156
        %v2197 = vpack.c.b16 %v2165, %v2161
        %v2198 = vpack.c.b16 %v2166, %v2162
        %v2199 = vpack.c.b16 %v2167, %v2163
        %v2200 = vpack.c.b16 %v2168, %v2164
        %2233 = vmatpush.bf16.msra.mxu0 %v2197
        %2234 = vmatpush.bf16.msra.mxu0 %v2193
        %2235 = vmatpush.bf16.msra.mxu0 %v2189
        %2236 = vmatpush.bf16.msra.mxu0 %v2185
        %2237 = vmatpush.bf16.msra.mxu0 %v2181
        %2238 = vmatpush.bf16.msra.mxu0 %v2177
        %2239 = vmatpush.bf16.msra.mxu0 %v2173
        %2240 = vmatpush.bf16.msra.mxu0 %v2169
        %2241 = vmatmul.bf16.gmra.mxu0 %v2071
        %v2242 = vpop.f32.mrf.mxu0
        %v2243 = vadd.f32 0.0, %v2242
        %v2244 = vpop.f32.mrf.mxu0
        %v2245 = vadd.f32 0.0, %v2244
        %2246 = vdwg.mxu0
        %2247 = vmatpush.bf16.msra.mxu0 %v2198
        %2248 = vmatpush.bf16.msra.mxu0 %v2194
        %2249 = vmatpush.bf16.msra.mxu0 %v2190
        %2250 = vmatpush.bf16.msra.mxu0 %v2186
        %2251 = vmatpush.bf16.msra.mxu0 %v2182
        %2252 = vmatpush.bf16.msra.mxu0 %v2178
        %2253 = vmatpush.bf16.msra.mxu0 %v2174
        %2254 = vmatpush.bf16.msra.mxu0 %v2170
        %2255 = vmatmul.bf16.gmra.mxu0 %v2071
        %v2256 = vpop.f32.mrf.mxu0
        %v2257 = vadd.f32 0.0, %v2256
        %v2258 = vpop.f32.mrf.mxu0
        %v2259 = vadd.f32 0.0, %v2258
        %2260 = vdwg.mxu0
        %2261 = vmatpush.bf16.msra.mxu0 %v2199
        %2262 = vmatpush.bf16.msra.mxu0 %v2195
        %2263 = vmatpush.bf16.msra.mxu0 %v2191
        %2264 = vmatpush.bf16.msra.mxu0 %v2187
        %2265 = vmatpush.bf16.msra.mxu0 %v2183
        %2266 = vmatpush.bf16.msra.mxu0 %v2179
        %2267 = vmatpush.bf16.msra.mxu0 %v2175
        %2268 = vmatpush.bf16.msra.mxu0 %v2171
        %2269 = vmatmul.bf16.gmra.mxu0 %v2071
        %v2270 = vpop.f32.mrf.mxu0
        %v2271 = vadd.f32 0.0, %v2270
        %v2272 = vpop.f32.mrf.mxu0
        %v2273 = vadd.f32 0.0, %v2272
        %2274 = vdwg.mxu0
        %2275 = vmatpush.bf16.msra.mxu0 %v2200
        %2276 = vmatpush.bf16.msra.mxu0 %v2196
        %2277 = vmatpush.bf16.msra.mxu0 %v2192
        %2278 = vmatpush.bf16.msra.mxu0 %v2188
        %2279 = vmatpush.bf16.msra.mxu0 %v2184
        %2280 = vmatpush.bf16.msra.mxu0 %v2180
        %2281 = vmatpush.bf16.msra.mxu0 %v2176
        %2282 = vmatpush.bf16.msra.mxu0 %v2172
        %2283 = vmatmul.bf16.gmra.mxu0 %v2071
        %v2284 = vpop.f32.mrf.mxu0
        %v2285 = vadd.f32 0.0, %v2284
        %v2286 = vpop.f32.mrf.mxu0
        %v2287 = vadd.f32 0.0, %v2286
        %2288 = vdwg.mxu0
        %v2289 = vadd.f32 %v2027, %v2243
        %v2290 = vadd.f32 %v2028, %v2257
        %v2291 = vadd.f32 %v2029, %v2271
        %v2292 = vadd.f32 %v2030, %v2285
        %v2293 = vadd.f32 %v2031, %v2245
        %v2294 = vadd.f32 %v2032, %v2259
        %v2295 = vadd.f32 %v2033, %v2273
        %v2296 = vadd.f32 %v2034, %v2287
        %v2297 = vxor.u32 %v2289, 2147483648
        %v2298 = vxor.u32 %v2293, 2147483648
        %v2299 = vmul.f32 %v2297, 1.442695
        %v2300 = vpow.pop %v2299
        %v2301 = vmul.f32 %v2298, 1.442695
        %v2302 = vpow.pop %v2301
        %v2303 = vadd.f32 %v2300, 1.0
        %v2304 = vadd.f32 %v2302, 1.0
        %v2305 = vrcp.pop %v2303
        %v2306 = vmul.f32 %v2303, %v2305
        %v2307 = vsub.f32 1.0, %v2306
        %v2308 = vmul.f32 %v2305, %v2307
        %v2309 = vadd.f32 %v2305, %v2308
        %vm2310 = vweird.f32 %v2303
        %vm2311 = vweird.f32 %v2305
        %vm2312 = vmor %vm2310, %vm2311
        %v2313 = vsel %vm2312, %v2305, %v2309
        %v2314 = vand.u32 2147483647, %v2303
        %vm2315 = vcmp.eq.f32.partialorder %v2314, 8.507059e+37
        %v2316 = vand.u32 %v2303, 2147483648
        %v2317 = vor.u32 1.1754944e-38, %v2316
        %v2318 = vsel %vm2315, %v2317, %v2313
        %v2319 = vmul.f32 1.0, %v2318
        %v2320 = vrcp.pop %v2304
        %v2321 = vmul.f32 %v2304, %v2320
        %v2322 = vsub.f32 1.0, %v2321
        %v2323 = vmul.f32 %v2320, %v2322
        %v2324 = vadd.f32 %v2320, %v2323
        %vm2325 = vweird.f32 %v2304
        %vm2326 = vweird.f32 %v2320
        %vm2327 = vmor %vm2325, %vm2326
        %v2328 = vsel %vm2327, %v2320, %v2324
        %v2329 = vand.u32 2147483647, %v2304
        %vm2330 = vcmp.eq.f32.partialorder %v2329, 8.507059e+37
        %v2331 = vand.u32 %v2304, 2147483648
        %v2332 = vor.u32 1.1754944e-38, %v2331
        %v2333 = vsel %vm2330, %v2332, %v2328
        %v2334 = vmul.f32 1.0, %v2333
        %v2335 = vxor.u32 %v2290, 2147483648
        %v2336 = vxor.u32 %v2294, 2147483648
        %v2337 = vmul.f32 %v2335, 1.442695
        %v2338 = vpow.pop %v2337
        %v2339 = vmul.f32 %v2336, 1.442695
        %v2340 = vpow.pop %v2339
        %v2341 = vadd.f32 %v2338, 1.0
        %v2342 = vadd.f32 %v2340, 1.0
        %v2343 = vrcp.pop %v2341
        %v2344 = vmul.f32 %v2341, %v2343
        %v2345 = vsub.f32 1.0, %v2344
        %v2346 = vmul.f32 %v2343, %v2345
        %v2347 = vadd.f32 %v2343, %v2346
        %vm2348 = vweird.f32 %v2341
        %vm2349 = vweird.f32 %v2343
        %vm2350 = vmor %vm2348, %vm2349
        %v2351 = vsel %vm2350, %v2343, %v2347
        %v2352 = vand.u32 2147483647, %v2341
        %vm2353 = vcmp.eq.f32.partialorder %v2352, 8.507059e+37
        %v2354 = vand.u32 %v2341, 2147483648
        %v2355 = vor.u32 1.1754944e-38, %v2354
        %v2356 = vsel %vm2353, %v2355, %v2351
        %v2357 = vmul.f32 1.0, %v2356
        %v2358 = vrcp.pop %v2342
        %v2359 = vmul.f32 %v2342, %v2358
        %v2360 = vsub.f32 1.0, %v2359
        %v2361 = vmul.f32 %v2358, %v2360
        %v2362 = vadd.f32 %v2358, %v2361
        %vm2363 = vweird.f32 %v2342
        %vm2364 = vweird.f32 %v2358
        %vm2365 = vmor %vm2363, %vm2364
        %v2366 = vsel %vm2365, %v2358, %v2362
        %v2367 = vand.u32 2147483647, %v2342
        %vm2368 = vcmp.eq.f32.partialorder %v2367, 8.507059e+37
        %v2369 = vand.u32 %v2342, 2147483648
        %v2370 = vor.u32 1.1754944e-38, %v2369
        %v2371 = vsel %vm2368, %v2370, %v2366
        %v2372 = vmul.f32 1.0, %v2371
        %v2373 = vtanh.pop %v2291
        %v2374 = vtanh.pop %v2295
        %v2375 = vxor.u32 %v2292, 2147483648
        %v2376 = vxor.u32 %v2296, 2147483648
        %v2377 = vmul.f32 %v2375, 1.442695
        %v2378 = vpow.pop %v2377
        %v2379 = vmul.f32 %v2376, 1.442695
        %v2380 = vpow.pop %v2379
        %v2381 = vadd.f32 %v2378, 1.0
        %v2382 = vadd.f32 %v2380, 1.0
        %v2383 = vrcp.pop %v2381
        %v2384 = vmul.f32 %v2381, %v2383
        %v2385 = vsub.f32 1.0, %v2384
        %v2386 = vmul.f32 %v2383, %v2385
        %v2387 = vadd.f32 %v2383, %v2386
        %vm2388 = vweird.f32 %v2381
        %vm2389 = vweird.f32 %v2383
        %vm2390 = vmor %vm2388, %vm2389
        %v2391 = vsel %vm2390, %v2383, %v2387
        %v2392 = vand.u32 2147483647, %v2381
        %vm2393 = vcmp.eq.f32.partialorder %v2392, 8.507059e+37
        %v2394 = vand.u32 %v2381, 2147483648
        %v2395 = vor.u32 1.1754944e-38, %v2394
        %v2396 = vsel %vm2393, %v2395, %v2391
        %v2397 = vmul.f32 1.0, %v2396
        %v2398 = vrcp.pop %v2382
        %v2399 = vmul.f32 %v2382, %v2398
        %v2400 = vsub.f32 1.0, %v2399
        %v2401 = vmul.f32 %v2398, %v2400
        %v2402 = vadd.f32 %v2398, %v2401
        %vm2403 = vweird.f32 %v2382
        %vm2404 = vweird.f32 %v2398
        %vm2405 = vmor %vm2403, %vm2404
        %v2406 = vsel %vm2405, %v2398, %v2402
        %v2407 = vand.u32 2147483647, %v2382
        %vm2408 = vcmp.eq.f32.partialorder %v2407, 8.507059e+37
        %v2409 = vand.u32 %v2382, 2147483648
        %v2410 = vor.u32 1.1754944e-38, %v2409
        %v2411 = vsel %vm2408, %v2410, %v2406
        %v2412 = vmul.f32 1.0, %v2411
        %v2413 = vmul.f32 %v2357, %v2015
        %v2414 = vmul.f32 %v2372, %v2016
        %v2415 = vmul.f32 %v2319, %v2373
        %v2416 = vmul.f32 %v2334, %v2374
        %v2417 = vadd.f32 %v2413, %v2415
        %v2418 = vadd.f32 %v2414, %v2416
        %v2419 = vtanh.pop %v2417
        %v2420 = vtanh.pop %v2418
        %v2421 = vmul.f32 %v2397, %v2419
        %v2422 = vmul.f32 %v2412, %v2420
        %v2423 = vpack.c.bf16 %v2421, %v2421
        %v2424 = vpack.c.bf16 %v2422, %v2422
        %s2425 = scalar_lea.vmem %s284, 24 [#allocation13]
        %2426 = vst [vmem:[%s2425] sm:$0xf] %v2423
        %2427 = vst [vmem:[%s2425 + $0x4] sm:$0xf] %v2424
        %s2428 = scalar_lea.vmem [#allocation4], 256
        %v2429 = vld [vmem:[%s2428] sm:$0xff]
        %v2430 = vld [vmem:[%s2428 + $0x8] sm:$0xff]
        %v2431 = vld [vmem:[%s2428 + $0x10] sm:$0xff]
        %v2432 = vld [vmem:[%s2428 + $0x18] sm:$0xff]
        %v2433 = vld [vmem:[%s2428 + $0x20] sm:$0xff]
        %v2434 = vld [vmem:[%s2428 + $0x28] sm:$0xff]
        %v2435 = vld [vmem:[%s2428 + $0x30] sm:$0xff]
        %v2436 = vld [vmem:[%s2428 + $0x38] sm:$0xff]
        %v2437 = vld [vmem:[#allocation11] sm:$0xff]
        %v2438 = vld [vmem:[#allocation11 + $0x8] sm:$0xff]
        %v2439 = vld [vmem:[#allocation11 + $0x10] sm:$0xff]
        %v2440 = vld [vmem:[#allocation11 + $0x18] sm:$0xff]
        %v2441 = vld [vmem:[#allocation11 + $0x20] sm:$0xff]
        %v2442 = vld [vmem:[#allocation11 + $0x28] sm:$0xff]
        %v2443 = vld [vmem:[#allocation11 + $0x30] sm:$0xff]
        %v2444 = vld [vmem:[#allocation11 + $0x38] sm:$0xff]
        %v2445 = vld [vmem:[#allocation11 + $0x40] sm:$0xff]
        %v2446 = vld [vmem:[#allocation11 + $0x48] sm:$0xff]
        %v2447 = vld [vmem:[#allocation11 + $0x50] sm:$0xff]
        %v2448 = vld [vmem:[#allocation11 + $0x58] sm:$0xff]
        %v2449 = vld [vmem:[#allocation11 + $0x60] sm:$0xff]
        %v2450 = vld [vmem:[#allocation11 + $0x68] sm:$0xff]
        %v2451 = vld [vmem:[#allocation11 + $0x70] sm:$0xff]
        %v2452 = vld [vmem:[#allocation11 + $0x78] sm:$0xff]
        %v2453 = vld [vmem:[#allocation11 + $0x80] sm:$0xff]
        %v2454 = vld [vmem:[#allocation11 + $0x88] sm:$0xff]
        %v2455 = vld [vmem:[#allocation11 + $0x90] sm:$0xff]
        %v2456 = vld [vmem:[#allocation11 + $0x98] sm:$0xff]
        %v2457 = vld [vmem:[#allocation11 + $0xa0] sm:$0xff]
        %v2458 = vld [vmem:[#allocation11 + $0xa8] sm:$0xff]
        %v2459 = vld [vmem:[#allocation11 + $0xb0] sm:$0xff]
        %v2460 = vld [vmem:[#allocation11 + $0xb8] sm:$0xff]
        %v2461 = vld [vmem:[#allocation11 + $0xc0] sm:$0xff]
        %v2462 = vld [vmem:[#allocation11 + $0xc8] sm:$0xff]
        %v2463 = vld [vmem:[#allocation11 + $0xd0] sm:$0xff]
        %v2464 = vld [vmem:[#allocation11 + $0xd8] sm:$0xff]
        %v2465 = vld [vmem:[#allocation11 + $0xe0] sm:$0xff]
        %v2466 = vld [vmem:[#allocation11 + $0xe8] sm:$0xff]
        %v2467 = vld [vmem:[#allocation11 + $0xf0] sm:$0xff]
        %v2468 = vld [vmem:[#allocation11 + $0xf8] sm:$0xff]
        %v2471 = vunpack.c.l.b16 %v2423
        %v2472 = vunpack.c.l.b16 %v2424
        %v2473 = vpack.c.b16 %v2472, %v2471
        %v2507 = vunpack.c.l.b16 %v2437
        %v2508 = vunpack.c.h.b16 %v2437
        %v2509 = vunpack.c.l.b16 %v2438
        %v2510 = vunpack.c.h.b16 %v2438
        %v2511 = vunpack.c.l.b16 %v2439
        %v2512 = vunpack.c.h.b16 %v2439
        %v2513 = vunpack.c.l.b16 %v2440
        %v2514 = vunpack.c.h.b16 %v2440
        %v2515 = vunpack.c.l.b16 %v2441
        %v2516 = vunpack.c.h.b16 %v2441
        %v2517 = vunpack.c.l.b16 %v2442
        %v2518 = vunpack.c.h.b16 %v2442
        %v2519 = vunpack.c.l.b16 %v2443
        %v2520 = vunpack.c.h.b16 %v2443
        %v2521 = vunpack.c.l.b16 %v2444
        %v2522 = vunpack.c.h.b16 %v2444
        %v2523 = vunpack.c.l.b16 %v2445
        %v2524 = vunpack.c.h.b16 %v2445
        %v2525 = vunpack.c.l.b16 %v2446
        %v2526 = vunpack.c.h.b16 %v2446
        %v2527 = vunpack.c.l.b16 %v2447
        %v2528 = vunpack.c.h.b16 %v2447
        %v2529 = vunpack.c.l.b16 %v2448
        %v2530 = vunpack.c.h.b16 %v2448
        %v2531 = vunpack.c.l.b16 %v2449
        %v2532 = vunpack.c.h.b16 %v2449
        %v2533 = vunpack.c.l.b16 %v2450
        %v2534 = vunpack.c.h.b16 %v2450
        %v2535 = vunpack.c.l.b16 %v2451
        %v2536 = vunpack.c.h.b16 %v2451
        %v2537 = vunpack.c.l.b16 %v2452
        %v2538 = vunpack.c.h.b16 %v2452
        %v2539 = vunpack.c.l.b16 %v2453
        %v2540 = vunpack.c.h.b16 %v2453
        %v2541 = vunpack.c.l.b16 %v2454
        %v2542 = vunpack.c.h.b16 %v2454
        %v2543 = vunpack.c.l.b16 %v2455
        %v2544 = vunpack.c.h.b16 %v2455
        %v2545 = vunpack.c.l.b16 %v2456
        %v2546 = vunpack.c.h.b16 %v2456
        %v2547 = vunpack.c.l.b16 %v2457
        %v2548 = vunpack.c.h.b16 %v2457
        %v2549 = vunpack.c.l.b16 %v2458
        %v2550 = vunpack.c.h.b16 %v2458
        %v2551 = vunpack.c.l.b16 %v2459
        %v2552 = vunpack.c.h.b16 %v2459
        %v2553 = vunpack.c.l.b16 %v2460
        %v2554 = vunpack.c.h.b16 %v2460
        %v2555 = vunpack.c.l.b16 %v2461
        %v2556 = vunpack.c.h.b16 %v2461
        %v2557 = vunpack.c.l.b16 %v2462
        %v2558 = vunpack.c.h.b16 %v2462
        %v2559 = vunpack.c.l.b16 %v2463
        %v2560 = vunpack.c.h.b16 %v2463
        %v2561 = vunpack.c.l.b16 %v2464
        %v2562 = vunpack.c.h.b16 %v2464
        %v2563 = vunpack.c.l.b16 %v2465
        %v2564 = vunpack.c.h.b16 %v2465
        %v2565 = vunpack.c.l.b16 %v2466
        %v2566 = vunpack.c.h.b16 %v2466
        %v2567 = vunpack.c.l.b16 %v2467
        %v2568 = vunpack.c.h.b16 %v2467
        %v2569 = vunpack.c.l.b16 %v2468
        %v2570 = vunpack.c.h.b16 %v2468
        %v2571 = vpack.c.b16 %v2511, %v2507
        %v2572 = vpack.c.b16 %v2512, %v2508
        %v2573 = vpack.c.b16 %v2513, %v2509
        %v2574 = vpack.c.b16 %v2514, %v2510
        %v2575 = vpack.c.b16 %v2519, %v2515
        %v2576 = vpack.c.b16 %v2520, %v2516
        %v2577 = vpack.c.b16 %v2521, %v2517
        %v2578 = vpack.c.b16 %v2522, %v2518
        %v2579 = vpack.c.b16 %v2527, %v2523
        %v2580 = vpack.c.b16 %v2528, %v2524
        %v2581 = vpack.c.b16 %v2529, %v2525
        %v2582 = vpack.c.b16 %v2530, %v2526
        %v2583 = vpack.c.b16 %v2535, %v2531
        %v2584 = vpack.c.b16 %v2536, %v2532
        %v2585 = vpack.c.b16 %v2537, %v2533
        %v2586 = vpack.c.b16 %v2538, %v2534
        %v2587 = vpack.c.b16 %v2543, %v2539
        %v2588 = vpack.c.b16 %v2544, %v2540
        %v2589 = vpack.c.b16 %v2545, %v2541
        %v2590 = vpack.c.b16 %v2546, %v2542
        %v2591 = vpack.c.b16 %v2551, %v2547
        %v2592 = vpack.c.b16 %v2552, %v2548
        %v2593 = vpack.c.b16 %v2553, %v2549
        %v2594 = vpack.c.b16 %v2554, %v2550
        %v2595 = vpack.c.b16 %v2559, %v2555
        %v2596 = vpack.c.b16 %v2560, %v2556
        %v2597 = vpack.c.b16 %v2561, %v2557
        %v2598 = vpack.c.b16 %v2562, %v2558
        %v2599 = vpack.c.b16 %v2567, %v2563
        %v2600 = vpack.c.b16 %v2568, %v2564
        %v2601 = vpack.c.b16 %v2569, %v2565
        %v2602 = vpack.c.b16 %v2570, %v2566
        %2635 = vmatpush.bf16.msra.mxu0 %v2599
        %2636 = vmatpush.bf16.msra.mxu0 %v2595
        %2637 = vmatpush.bf16.msra.mxu0 %v2591
        %2638 = vmatpush.bf16.msra.mxu0 %v2587
        %2639 = vmatpush.bf16.msra.mxu0 %v2583
        %2640 = vmatpush.bf16.msra.mxu0 %v2579
        %2641 = vmatpush.bf16.msra.mxu0 %v2575
        %2642 = vmatpush.bf16.msra.mxu0 %v2571
        %2643 = vmatmul.bf16.gmra.mxu0 %v2473
        %v2644 = vpop.f32.mrf.mxu0
        %v2645 = vadd.f32 0.0, %v2644
        %v2646 = vpop.f32.mrf.mxu0
        %v2647 = vadd.f32 0.0, %v2646
        %2648 = vdwg.mxu0
        %2649 = vmatpush.bf16.msra.mxu0 %v2600
        %2650 = vmatpush.bf16.msra.mxu0 %v2596
        %2651 = vmatpush.bf16.msra.mxu0 %v2592
        %2652 = vmatpush.bf16.msra.mxu0 %v2588
        %2653 = vmatpush.bf16.msra.mxu0 %v2584
        %2654 = vmatpush.bf16.msra.mxu0 %v2580
        %2655 = vmatpush.bf16.msra.mxu0 %v2576
        %2656 = vmatpush.bf16.msra.mxu0 %v2572
        %2657 = vmatmul.bf16.gmra.mxu0 %v2473
        %v2658 = vpop.f32.mrf.mxu0
        %v2659 = vadd.f32 0.0, %v2658
        %v2660 = vpop.f32.mrf.mxu0
        %v2661 = vadd.f32 0.0, %v2660
        %2662 = vdwg.mxu0
        %2663 = vmatpush.bf16.msra.mxu0 %v2601
        %2664 = vmatpush.bf16.msra.mxu0 %v2597
        %2665 = vmatpush.bf16.msra.mxu0 %v2593
        %2666 = vmatpush.bf16.msra.mxu0 %v2589
        %2667 = vmatpush.bf16.msra.mxu0 %v2585
        %2668 = vmatpush.bf16.msra.mxu0 %v2581
        %2669 = vmatpush.bf16.msra.mxu0 %v2577
        %2670 = vmatpush.bf16.msra.mxu0 %v2573
        %2671 = vmatmul.bf16.gmra.mxu0 %v2473
        %v2672 = vpop.f32.mrf.mxu0
        %v2673 = vadd.f32 0.0, %v2672
        %v2674 = vpop.f32.mrf.mxu0
        %v2675 = vadd.f32 0.0, %v2674
        %2676 = vdwg.mxu0
        %2677 = vmatpush.bf16.msra.mxu0 %v2602
        %2678 = vmatpush.bf16.msra.mxu0 %v2598
        %2679 = vmatpush.bf16.msra.mxu0 %v2594
        %2680 = vmatpush.bf16.msra.mxu0 %v2590
        %2681 = vmatpush.bf16.msra.mxu0 %v2586
        %2682 = vmatpush.bf16.msra.mxu0 %v2582
        %2683 = vmatpush.bf16.msra.mxu0 %v2578
        %2684 = vmatpush.bf16.msra.mxu0 %v2574
        %2685 = vmatmul.bf16.gmra.mxu0 %v2473
        %v2686 = vpop.f32.mrf.mxu0
        %v2687 = vadd.f32 0.0, %v2686
        %v2688 = vpop.f32.mrf.mxu0
        %v2689 = vadd.f32 0.0, %v2688
        %2690 = vdwg.mxu0
        %v2691 = vadd.f32 %v2429, %v2645
        %v2692 = vadd.f32 %v2430, %v2659
        %v2693 = vadd.f32 %v2431, %v2673
        %v2694 = vadd.f32 %v2432, %v2687
        %v2695 = vadd.f32 %v2433, %v2647
        %v2696 = vadd.f32 %v2434, %v2661
        %v2697 = vadd.f32 %v2435, %v2675
        %v2698 = vadd.f32 %v2436, %v2689
        %v2699 = vxor.u32 %v2691, 2147483648
        %v2700 = vxor.u32 %v2695, 2147483648
        %v2701 = vmul.f32 %v2699, 1.442695
        %v2702 = vpow.pop %v2701
        %v2703 = vmul.f32 %v2700, 1.442695
        %v2704 = vpow.pop %v2703
        %v2705 = vadd.f32 %v2702, 1.0
        %v2706 = vadd.f32 %v2704, 1.0
        %v2707 = vrcp.pop %v2705
        %v2708 = vmul.f32 %v2705, %v2707
        %v2709 = vsub.f32 1.0, %v2708
        %v2710 = vmul.f32 %v2707, %v2709
        %v2711 = vadd.f32 %v2707, %v2710
        %vm2712 = vweird.f32 %v2705
        %vm2713 = vweird.f32 %v2707
        %vm2714 = vmor %vm2712, %vm2713
        %v2715 = vsel %vm2714, %v2707, %v2711
        %v2716 = vand.u32 2147483647, %v2705
        %vm2717 = vcmp.eq.f32.partialorder %v2716, 8.507059e+37
        %v2718 = vand.u32 %v2705, 2147483648
        %v2719 = vor.u32 1.1754944e-38, %v2718
        %v2720 = vsel %vm2717, %v2719, %v2715
        %v2721 = vmul.f32 1.0, %v2720
        %v2722 = vrcp.pop %v2706
        %v2723 = vmul.f32 %v2706, %v2722
        %v2724 = vsub.f32 1.0, %v2723
        %v2725 = vmul.f32 %v2722, %v2724
        %v2726 = vadd.f32 %v2722, %v2725
        %vm2727 = vweird.f32 %v2706
        %vm2728 = vweird.f32 %v2722
        %vm2729 = vmor %vm2727, %vm2728
        %v2730 = vsel %vm2729, %v2722, %v2726
        %v2731 = vand.u32 2147483647, %v2706
        %vm2732 = vcmp.eq.f32.partialorder %v2731, 8.507059e+37
        %v2733 = vand.u32 %v2706, 2147483648
        %v2734 = vor.u32 1.1754944e-38, %v2733
        %v2735 = vsel %vm2732, %v2734, %v2730
        %v2736 = vmul.f32 1.0, %v2735
        %v2737 = vxor.u32 %v2692, 2147483648
        %v2738 = vxor.u32 %v2696, 2147483648
        %v2739 = vmul.f32 %v2737, 1.442695
        %v2740 = vpow.pop %v2739
        %v2741 = vmul.f32 %v2738, 1.442695
        %v2742 = vpow.pop %v2741
        %v2743 = vadd.f32 %v2740, 1.0
        %v2744 = vadd.f32 %v2742, 1.0
        %v2745 = vrcp.pop %v2743
        %v2746 = vmul.f32 %v2743, %v2745
        %v2747 = vsub.f32 1.0, %v2746
        %v2748 = vmul.f32 %v2745, %v2747
        %v2749 = vadd.f32 %v2745, %v2748
        %vm2750 = vweird.f32 %v2743
        %vm2751 = vweird.f32 %v2745
        %vm2752 = vmor %vm2750, %vm2751
        %v2753 = vsel %vm2752, %v2745, %v2749
        %v2754 = vand.u32 2147483647, %v2743
        %vm2755 = vcmp.eq.f32.partialorder %v2754, 8.507059e+37
        %v2756 = vand.u32 %v2743, 2147483648
        %v2757 = vor.u32 1.1754944e-38, %v2756
        %v2758 = vsel %vm2755, %v2757, %v2753
        %v2759 = vmul.f32 1.0, %v2758
        %v2760 = vrcp.pop %v2744
        %v2761 = vmul.f32 %v2744, %v2760
        %v2762 = vsub.f32 1.0, %v2761
        %v2763 = vmul.f32 %v2760, %v2762
        %v2764 = vadd.f32 %v2760, %v2763
        %vm2765 = vweird.f32 %v2744
        %vm2766 = vweird.f32 %v2760
        %vm2767 = vmor %vm2765, %vm2766
        %v2768 = vsel %vm2767, %v2760, %v2764
        %v2769 = vand.u32 2147483647, %v2744
        %vm2770 = vcmp.eq.f32.partialorder %v2769, 8.507059e+37
        %v2771 = vand.u32 %v2744, 2147483648
        %v2772 = vor.u32 1.1754944e-38, %v2771
        %v2773 = vsel %vm2770, %v2772, %v2768
        %v2774 = vmul.f32 1.0, %v2773
        %v2775 = vtanh.pop %v2693
        %v2776 = vtanh.pop %v2697
        %v2777 = vxor.u32 %v2694, 2147483648
        %v2778 = vxor.u32 %v2698, 2147483648
        %v2779 = vmul.f32 %v2777, 1.442695
        %v2780 = vpow.pop %v2779
        %v2781 = vmul.f32 %v2778, 1.442695
        %v2782 = vpow.pop %v2781
        %v2783 = vadd.f32 %v2780, 1.0
        %v2784 = vadd.f32 %v2782, 1.0
        %v2785 = vrcp.pop %v2783
        %v2786 = vmul.f32 %v2783, %v2785
        %v2787 = vsub.f32 1.0, %v2786
        %v2788 = vmul.f32 %v2785, %v2787
        %v2789 = vadd.f32 %v2785, %v2788
        %vm2790 = vweird.f32 %v2783
        %vm2791 = vweird.f32 %v2785
        %vm2792 = vmor %vm2790, %vm2791
        %v2793 = vsel %vm2792, %v2785, %v2789
        %v2794 = vand.u32 2147483647, %v2783
        %vm2795 = vcmp.eq.f32.partialorder %v2794, 8.507059e+37
        %v2796 = vand.u32 %v2783, 2147483648
        %v2797 = vor.u32 1.1754944e-38, %v2796
        %v2798 = vsel %vm2795, %v2797, %v2793
        %v2799 = vmul.f32 1.0, %v2798
        %v2800 = vrcp.pop %v2784
        %v2801 = vmul.f32 %v2784, %v2800
        %v2802 = vsub.f32 1.0, %v2801
        %v2803 = vmul.f32 %v2800, %v2802
        %v2804 = vadd.f32 %v2800, %v2803
        %vm2805 = vweird.f32 %v2784
        %vm2806 = vweird.f32 %v2800
        %vm2807 = vmor %vm2805, %vm2806
        %v2808 = vsel %vm2807, %v2800, %v2804
        %v2809 = vand.u32 2147483647, %v2784
        %vm2810 = vcmp.eq.f32.partialorder %v2809, 8.507059e+37
        %v2811 = vand.u32 %v2784, 2147483648
        %v2812 = vor.u32 1.1754944e-38, %v2811
        %v2813 = vsel %vm2810, %v2812, %v2808
        %v2814 = vmul.f32 1.0, %v2813
        %v2815 = vmul.f32 %v2759, %v2417
        %v2816 = vmul.f32 %v2774, %v2418
        %v2817 = vmul.f32 %v2721, %v2775
        %v2818 = vmul.f32 %v2736, %v2776
        %v2819 = vadd.f32 %v2815, %v2817
        %v2820 = vadd.f32 %v2816, %v2818
        %v2821 = vtanh.pop %v2819
        %v2822 = vtanh.pop %v2820
        %v2823 = vmul.f32 %v2799, %v2821
        %v2824 = vmul.f32 %v2814, %v2822
        %v2825 = vpack.c.bf16 %v2823, %v2823
        %v2826 = vpack.c.bf16 %v2824, %v2824
        %s2827 = scalar_lea.vmem %s284, 32 [#allocation13]
        %2828 = vst [vmem:[%s2827] sm:$0xf] %v2825
        %2829 = vst [vmem:[%s2827 + $0x4] sm:$0xf] %v2826
        %s2830 = scalar_lea.vmem [#allocation4], 320
        %v2831 = vld [vmem:[%s2830] sm:$0xff]
        %v2832 = vld [vmem:[%s2830 + $0x8] sm:$0xff]
        %v2833 = vld [vmem:[%s2830 + $0x10] sm:$0xff]
        %v2834 = vld [vmem:[%s2830 + $0x18] sm:$0xff]
        %v2835 = vld [vmem:[%s2830 + $0x20] sm:$0xff]
        %v2836 = vld [vmem:[%s2830 + $0x28] sm:$0xff]
        %v2837 = vld [vmem:[%s2830 + $0x30] sm:$0xff]
        %v2838 = vld [vmem:[%s2830 + $0x38] sm:$0xff]
        %v2839 = vld [vmem:[#allocation11] sm:$0xff]
        %v2840 = vld [vmem:[#allocation11 + $0x8] sm:$0xff]
        %v2841 = vld [vmem:[#allocation11 + $0x10] sm:$0xff]
        %v2842 = vld [vmem:[#allocation11 + $0x18] sm:$0xff]
        %v2843 = vld [vmem:[#allocation11 + $0x20] sm:$0xff]
        %v2844 = vld [vmem:[#allocation11 + $0x28] sm:$0xff]
        %v2845 = vld [vmem:[#allocation11 + $0x30] sm:$0xff]
        %v2846 = vld [vmem:[#allocation11 + $0x38] sm:$0xff]
        %v2847 = vld [vmem:[#allocation11 + $0x40] sm:$0xff]
        %v2848 = vld [vmem:[#allocation11 + $0x48] sm:$0xff]
        %v2849 = vld [vmem:[#allocation11 + $0x50] sm:$0xff]
        %v2850 = vld [vmem:[#allocation11 + $0x58] sm:$0xff]
        %v2851 = vld [vmem:[#allocation11 + $0x60] sm:$0xff]
        %v2852 = vld [vmem:[#allocation11 + $0x68] sm:$0xff]
        %v2853 = vld [vmem:[#allocation11 + $0x70] sm:$0xff]
        %v2854 = vld [vmem:[#allocation11 + $0x78] sm:$0xff]
        %v2855 = vld [vmem:[#allocation11 + $0x80] sm:$0xff]
        %v2856 = vld [vmem:[#allocation11 + $0x88] sm:$0xff]
        %v2857 = vld [vmem:[#allocation11 + $0x90] sm:$0xff]
        %v2858 = vld [vmem:[#allocation11 + $0x98] sm:$0xff]
        %v2859 = vld [vmem:[#allocation11 + $0xa0] sm:$0xff]
        %v2860 = vld [vmem:[#allocation11 + $0xa8] sm:$0xff]
        %v2861 = vld [vmem:[#allocation11 + $0xb0] sm:$0xff]
        %v2862 = vld [vmem:[#allocation11 + $0xb8] sm:$0xff]
        %v2863 = vld [vmem:[#allocation11 + $0xc0] sm:$0xff]
        %v2864 = vld [vmem:[#allocation11 + $0xc8] sm:$0xff]
        %v2865 = vld [vmem:[#allocation11 + $0xd0] sm:$0xff]
        %v2866 = vld [vmem:[#allocation11 + $0xd8] sm:$0xff]
        %v2867 = vld [vmem:[#allocation11 + $0xe0] sm:$0xff]
        %v2868 = vld [vmem:[#allocation11 + $0xe8] sm:$0xff]
        %v2869 = vld [vmem:[#allocation11 + $0xf0] sm:$0xff]
        %v2870 = vld [vmem:[#allocation11 + $0xf8] sm:$0xff]
        %v2873 = vunpack.c.l.b16 %v2825
        %v2874 = vunpack.c.l.b16 %v2826
        %v2875 = vpack.c.b16 %v2874, %v2873
        %v2909 = vunpack.c.l.b16 %v2839
        %v2910 = vunpack.c.h.b16 %v2839
        %v2911 = vunpack.c.l.b16 %v2840
        %v2912 = vunpack.c.h.b16 %v2840
        %v2913 = vunpack.c.l.b16 %v2841
        %v2914 = vunpack.c.h.b16 %v2841
        %v2915 = vunpack.c.l.b16 %v2842
        %v2916 = vunpack.c.h.b16 %v2842
        %v2917 = vunpack.c.l.b16 %v2843
        %v2918 = vunpack.c.h.b16 %v2843
        %v2919 = vunpack.c.l.b16 %v2844
        %v2920 = vunpack.c.h.b16 %v2844
        %v2921 = vunpack.c.l.b16 %v2845
        %v2922 = vunpack.c.h.b16 %v2845
        %v2923 = vunpack.c.l.b16 %v2846
        %v2924 = vunpack.c.h.b16 %v2846
        %v2925 = vunpack.c.l.b16 %v2847
        %v2926 = vunpack.c.h.b16 %v2847
        %v2927 = vunpack.c.l.b16 %v2848
        %v2928 = vunpack.c.h.b16 %v2848
        %v2929 = vunpack.c.l.b16 %v2849
        %v2930 = vunpack.c.h.b16 %v2849
        %v2931 = vunpack.c.l.b16 %v2850
        %v2932 = vunpack.c.h.b16 %v2850
        %v2933 = vunpack.c.l.b16 %v2851
        %v2934 = vunpack.c.h.b16 %v2851
        %v2935 = vunpack.c.l.b16 %v2852
        %v2936 = vunpack.c.h.b16 %v2852
        %v2937 = vunpack.c.l.b16 %v2853
        %v2938 = vunpack.c.h.b16 %v2853
        %v2939 = vunpack.c.l.b16 %v2854
        %v2940 = vunpack.c.h.b16 %v2854
        %v2941 = vunpack.c.l.b16 %v2855
        %v2942 = vunpack.c.h.b16 %v2855
        %v2943 = vunpack.c.l.b16 %v2856
        %v2944 = vunpack.c.h.b16 %v2856
        %v2945 = vunpack.c.l.b16 %v2857
        %v2946 = vunpack.c.h.b16 %v2857
        %v2947 = vunpack.c.l.b16 %v2858
        %v2948 = vunpack.c.h.b16 %v2858
        %v2949 = vunpack.c.l.b16 %v2859
        %v2950 = vunpack.c.h.b16 %v2859
        %v2951 = vunpack.c.l.b16 %v2860
        %v2952 = vunpack.c.h.b16 %v2860
        %v2953 = vunpack.c.l.b16 %v2861
        %v2954 = vunpack.c.h.b16 %v2861
        %v2955 = vunpack.c.l.b16 %v2862
        %v2956 = vunpack.c.h.b16 %v2862
        %v2957 = vunpack.c.l.b16 %v2863
        %v2958 = vunpack.c.h.b16 %v2863
        %v2959 = vunpack.c.l.b16 %v2864
        %v2960 = vunpack.c.h.b16 %v2864
        %v2961 = vunpack.c.l.b16 %v2865
        %v2962 = vunpack.c.h.b16 %v2865
        %v2963 = vunpack.c.l.b16 %v2866
        %v2964 = vunpack.c.h.b16 %v2866
        %v2965 = vunpack.c.l.b16 %v2867
        %v2966 = vunpack.c.h.b16 %v2867
        %v2967 = vunpack.c.l.b16 %v2868
        %v2968 = vunpack.c.h.b16 %v2868
        %v2969 = vunpack.c.l.b16 %v2869
        %v2970 = vunpack.c.h.b16 %v2869
        %v2971 = vunpack.c.l.b16 %v2870
        %v2972 = vunpack.c.h.b16 %v2870
        %v2973 = vpack.c.b16 %v2913, %v2909
        %v2974 = vpack.c.b16 %v2914, %v2910
        %v2975 = vpack.c.b16 %v2915, %v2911
        %v2976 = vpack.c.b16 %v2916, %v2912
        %v2977 = vpack.c.b16 %v2921, %v2917
        %v2978 = vpack.c.b16 %v2922, %v2918
        %v2979 = vpack.c.b16 %v2923, %v2919
        %v2980 = vpack.c.b16 %v2924, %v2920
        %v2981 = vpack.c.b16 %v2929, %v2925
        %v2982 = vpack.c.b16 %v2930, %v2926
        %v2983 = vpack.c.b16 %v2931, %v2927
        %v2984 = vpack.c.b16 %v2932, %v2928
        %v2985 = vpack.c.b16 %v2937, %v2933
        %v2986 = vpack.c.b16 %v2938, %v2934
        %v2987 = vpack.c.b16 %v2939, %v2935
        %v2988 = vpack.c.b16 %v2940, %v2936
        %v2989 = vpack.c.b16 %v2945, %v2941
        %v2990 = vpack.c.b16 %v2946, %v2942
        %v2991 = vpack.c.b16 %v2947, %v2943
        %v2992 = vpack.c.b16 %v2948, %v2944
        %v2993 = vpack.c.b16 %v2953, %v2949
        %v2994 = vpack.c.b16 %v2954, %v2950
        %v2995 = vpack.c.b16 %v2955, %v2951
        %v2996 = vpack.c.b16 %v2956, %v2952
        %v2997 = vpack.c.b16 %v2961, %v2957
        %v2998 = vpack.c.b16 %v2962, %v2958
        %v2999 = vpack.c.b16 %v2963, %v2959
        %v3000 = vpack.c.b16 %v2964, %v2960
        %v3001 = vpack.c.b16 %v2969, %v2965
        %v3002 = vpack.c.b16 %v2970, %v2966
        %v3003 = vpack.c.b16 %v2971, %v2967
        %v3004 = vpack.c.b16 %v2972, %v2968
        %3037 = vmatpush.bf16.msra.mxu0 %v3001
        %3038 = vmatpush.bf16.msra.mxu0 %v2997
        %3039 = vmatpush.bf16.msra.mxu0 %v2993
        %3040 = vmatpush.bf16.msra.mxu0 %v2989
        %3041 = vmatpush.bf16.msra.mxu0 %v2985
        %3042 = vmatpush.bf16.msra.mxu0 %v2981
        %3043 = vmatpush.bf16.msra.mxu0 %v2977
        %3044 = vmatpush.bf16.msra.mxu0 %v2973
        %3045 = vmatmul.bf16.gmra.mxu0 %v2875
        %v3046 = vpop.f32.mrf.mxu0
        %v3047 = vadd.f32 0.0, %v3046
        %v3048 = vpop.f32.mrf.mxu0
        %v3049 = vadd.f32 0.0, %v3048
        %3050 = vdwg.mxu0
        %3051 = vmatpush.bf16.msra.mxu0 %v3002
        %3052 = vmatpush.bf16.msra.mxu0 %v2998
        %3053 = vmatpush.bf16.msra.mxu0 %v2994
        %3054 = vmatpush.bf16.msra.mxu0 %v2990
        %3055 = vmatpush.bf16.msra.mxu0 %v2986
        %3056 = vmatpush.bf16.msra.mxu0 %v2982
        %3057 = vmatpush.bf16.msra.mxu0 %v2978
        %3058 = vmatpush.bf16.msra.mxu0 %v2974
        %3059 = vmatmul.bf16.gmra.mxu0 %v2875
        %v3060 = vpop.f32.mrf.mxu0
        %v3061 = vadd.f32 0.0, %v3060
        %v3062 = vpop.f32.mrf.mxu0
        %v3063 = vadd.f32 0.0, %v3062
        %3064 = vdwg.mxu0
        %3065 = vmatpush.bf16.msra.mxu0 %v3003
        %3066 = vmatpush.bf16.msra.mxu0 %v2999
        %3067 = vmatpush.bf16.msra.mxu0 %v2995
        %3068 = vmatpush.bf16.msra.mxu0 %v2991
        %3069 = vmatpush.bf16.msra.mxu0 %v2987
        %3070 = vmatpush.bf16.msra.mxu0 %v2983
        %3071 = vmatpush.bf16.msra.mxu0 %v2979
        %3072 = vmatpush.bf16.msra.mxu0 %v2975
        %3073 = vmatmul.bf16.gmra.mxu0 %v2875
        %v3074 = vpop.f32.mrf.mxu0
        %v3075 = vadd.f32 0.0, %v3074
        %v3076 = vpop.f32.mrf.mxu0
        %v3077 = vadd.f32 0.0, %v3076
        %3078 = vdwg.mxu0
        %3079 = vmatpush.bf16.msra.mxu0 %v3004
        %3080 = vmatpush.bf16.msra.mxu0 %v3000
        %3081 = vmatpush.bf16.msra.mxu0 %v2996
        %3082 = vmatpush.bf16.msra.mxu0 %v2992
        %3083 = vmatpush.bf16.msra.mxu0 %v2988
        %3084 = vmatpush.bf16.msra.mxu0 %v2984
        %3085 = vmatpush.bf16.msra.mxu0 %v2980
        %3086 = vmatpush.bf16.msra.mxu0 %v2976
        %3087 = vmatmul.bf16.gmra.mxu0 %v2875
        %v3088 = vpop.f32.mrf.mxu0
        %v3089 = vadd.f32 0.0, %v3088
        %v3090 = vpop.f32.mrf.mxu0
        %v3091 = vadd.f32 0.0, %v3090
        %3092 = vdwg.mxu0
        %v3093 = vadd.f32 %v2831, %v3047
        %v3094 = vadd.f32 %v2832, %v3061
        %v3095 = vadd.f32 %v2833, %v3075
        %v3096 = vadd.f32 %v2834, %v3089
        %v3097 = vadd.f32 %v2835, %v3049
        %v3098 = vadd.f32 %v2836, %v3063
        %v3099 = vadd.f32 %v2837, %v3077
        %v3100 = vadd.f32 %v2838, %v3091
        %v3101 = vxor.u32 %v3093, 2147483648
        %v3102 = vxor.u32 %v3097, 2147483648
        %v3103 = vmul.f32 %v3101, 1.442695
        %v3104 = vpow.pop %v3103
        %v3105 = vmul.f32 %v3102, 1.442695
        %v3106 = vpow.pop %v3105
        %v3107 = vadd.f32 %v3104, 1.0
        %v3108 = vadd.f32 %v3106, 1.0
        %v3109 = vrcp.pop %v3107
        %v3110 = vmul.f32 %v3107, %v3109
        %v3111 = vsub.f32 1.0, %v3110
        %v3112 = vmul.f32 %v3109, %v3111
        %v3113 = vadd.f32 %v3109, %v3112
        %vm3114 = vweird.f32 %v3107
        %vm3115 = vweird.f32 %v3109
        %vm3116 = vmor %vm3114, %vm3115
        %v3117 = vsel %vm3116, %v3109, %v3113
        %v3118 = vand.u32 2147483647, %v3107
        %vm3119 = vcmp.eq.f32.partialorder %v3118, 8.507059e+37
        %v3120 = vand.u32 %v3107, 2147483648
        %v3121 = vor.u32 1.1754944e-38, %v3120
        %v3122 = vsel %vm3119, %v3121, %v3117
        %v3123 = vmul.f32 1.0, %v3122
        %v3124 = vrcp.pop %v3108
        %v3125 = vmul.f32 %v3108, %v3124
        %v3126 = vsub.f32 1.0, %v3125
        %v3127 = vmul.f32 %v3124, %v3126
        %v3128 = vadd.f32 %v3124, %v3127
        %vm3129 = vweird.f32 %v3108
        %vm3130 = vweird.f32 %v3124
        %vm3131 = vmor %vm3129, %vm3130
        %v3132 = vsel %vm3131, %v3124, %v3128
        %v3133 = vand.u32 2147483647, %v3108
        %vm3134 = vcmp.eq.f32.partialorder %v3133, 8.507059e+37
        %v3135 = vand.u32 %v3108, 2147483648
        %v3136 = vor.u32 1.1754944e-38, %v3135
        %v3137 = vsel %vm3134, %v3136, %v3132
        %v3138 = vmul.f32 1.0, %v3137
        %v3139 = vxor.u32 %v3094, 2147483648
        %v3140 = vxor.u32 %v3098, 2147483648
        %v3141 = vmul.f32 %v3139, 1.442695
        %v3142 = vpow.pop %v3141
        %v3143 = vmul.f32 %v3140, 1.442695
        %v3144 = vpow.pop %v3143
        %v3145 = vadd.f32 %v3142, 1.0
        %v3146 = vadd.f32 %v3144, 1.0
        %v3147 = vrcp.pop %v3145
        %v3148 = vmul.f32 %v3145, %v3147
        %v3149 = vsub.f32 1.0, %v3148
        %v3150 = vmul.f32 %v3147, %v3149
        %v3151 = vadd.f32 %v3147, %v3150
        %vm3152 = vweird.f32 %v3145
        %vm3153 = vweird.f32 %v3147
        %vm3154 = vmor %vm3152, %vm3153
        %v3155 = vsel %vm3154, %v3147, %v3151
        %v3156 = vand.u32 2147483647, %v3145
        %vm3157 = vcmp.eq.f32.partialorder %v3156, 8.507059e+37
        %v3158 = vand.u32 %v3145, 2147483648
        %v3159 = vor.u32 1.1754944e-38, %v3158
        %v3160 = vsel %vm3157, %v3159, %v3155
        %v3161 = vmul.f32 1.0, %v3160
        %v3162 = vrcp.pop %v3146
        %v3163 = vmul.f32 %v3146, %v3162
        %v3164 = vsub.f32 1.0, %v3163
        %v3165 = vmul.f32 %v3162, %v3164
        %v3166 = vadd.f32 %v3162, %v3165
        %vm3167 = vweird.f32 %v3146
        %vm3168 = vweird.f32 %v3162
        %vm3169 = vmor %vm3167, %vm3168
        %v3170 = vsel %vm3169, %v3162, %v3166
        %v3171 = vand.u32 2147483647, %v3146
        %vm3172 = vcmp.eq.f32.partialorder %v3171, 8.507059e+37
        %v3173 = vand.u32 %v3146, 2147483648
        %v3174 = vor.u32 1.1754944e-38, %v3173
        %v3175 = vsel %vm3172, %v3174, %v3170
        %v3176 = vmul.f32 1.0, %v3175
        %v3177 = vtanh.pop %v3095
        %v3178 = vtanh.pop %v3099
        %v3179 = vxor.u32 %v3096, 2147483648
        %v3180 = vxor.u32 %v3100, 2147483648
        %v3181 = vmul.f32 %v3179, 1.442695
        %v3182 = vpow.pop %v3181
        %v3183 = vmul.f32 %v3180, 1.442695
        %v3184 = vpow.pop %v3183
        %v3185 = vadd.f32 %v3182, 1.0
        %v3186 = vadd.f32 %v3184, 1.0
        %v3187 = vrcp.pop %v3185
        %v3188 = vmul.f32 %v3185, %v3187
        %v3189 = vsub.f32 1.0, %v3188
        %v3190 = vmul.f32 %v3187, %v3189
        %v3191 = vadd.f32 %v3187, %v3190
        %vm3192 = vweird.f32 %v3185
        %vm3193 = vweird.f32 %v3187
        %vm3194 = vmor %vm3192, %vm3193
        %v3195 = vsel %vm3194, %v3187, %v3191
        %v3196 = vand.u32 2147483647, %v3185
        %vm3197 = vcmp.eq.f32.partialorder %v3196, 8.507059e+37
        %v3198 = vand.u32 %v3185, 2147483648
        %v3199 = vor.u32 1.1754944e-38, %v3198
        %v3200 = vsel %vm3197, %v3199, %v3195
        %v3201 = vmul.f32 1.0, %v3200
        %v3202 = vrcp.pop %v3186
        %v3203 = vmul.f32 %v3186, %v3202
        %v3204 = vsub.f32 1.0, %v3203
        %v3205 = vmul.f32 %v3202, %v3204
        %v3206 = vadd.f32 %v3202, %v3205
        %vm3207 = vweird.f32 %v3186
        %vm3208 = vweird.f32 %v3202
        %vm3209 = vmor %vm3207, %vm3208
        %v3210 = vsel %vm3209, %v3202, %v3206
        %v3211 = vand.u32 2147483647, %v3186
        %vm3212 = vcmp.eq.f32.partialorder %v3211, 8.507059e+37
        %v3213 = vand.u32 %v3186, 2147483648
        %v3214 = vor.u32 1.1754944e-38, %v3213
        %v3215 = vsel %vm3212, %v3214, %v3210
        %v3216 = vmul.f32 1.0, %v3215
        %v3217 = vmul.f32 %v3161, %v2819
        %v3218 = vmul.f32 %v3176, %v2820
        %v3219 = vmul.f32 %v3123, %v3177
        %v3220 = vmul.f32 %v3138, %v3178
        %v3221 = vadd.f32 %v3217, %v3219
        %v3222 = vadd.f32 %v3218, %v3220
        %v3223 = vtanh.pop %v3221
        %v3224 = vtanh.pop %v3222
        %v3225 = vmul.f32 %v3201, %v3223
        %v3226 = vmul.f32 %v3216, %v3224
        %v3227 = vpack.c.bf16 %v3225, %v3225
        %v3228 = vpack.c.bf16 %v3226, %v3226
        %s3229 = scalar_lea.vmem %s284, 40 [#allocation13]
        %3230 = vst [vmem:[%s3229] sm:$0xf] %v3227
        %3231 = vst [vmem:[%s3229 + $0x4] sm:$0xf] %v3228
        %s3232 = scalar_lea.vmem [#allocation4], 384
        %v3233 = vld [vmem:[%s3232] sm:$0xff]
        %v3234 = vld [vmem:[%s3232 + $0x8] sm:$0xff]
        %v3235 = vld [vmem:[%s3232 + $0x10] sm:$0xff]
        %v3236 = vld [vmem:[%s3232 + $0x18] sm:$0xff]
        %v3237 = vld [vmem:[%s3232 + $0x20] sm:$0xff]
        %v3238 = vld [vmem:[%s3232 + $0x28] sm:$0xff]
        %v3239 = vld [vmem:[%s3232 + $0x30] sm:$0xff]
        %v3240 = vld [vmem:[%s3232 + $0x38] sm:$0xff]
        %v3241 = vld [vmem:[#allocation11] sm:$0xff]
        %v3242 = vld [vmem:[#allocation11 + $0x8] sm:$0xff]
        %v3243 = vld [vmem:[#allocation11 + $0x10] sm:$0xff]
        %v3244 = vld [vmem:[#allocation11 + $0x18] sm:$0xff]
        %v3245 = vld [vmem:[#allocation11 + $0x20] sm:$0xff]
        %v3246 = vld [vmem:[#allocation11 + $0x28] sm:$0xff]
        %v3247 = vld [vmem:[#allocation11 + $0x30] sm:$0xff]
        %v3248 = vld [vmem:[#allocation11 + $0x38] sm:$0xff]
        %v3249 = vld [vmem:[#allocation11 + $0x40] sm:$0xff]
        %v3250 = vld [vmem:[#allocation11 + $0x48] sm:$0xff]
        %v3251 = vld [vmem:[#allocation11 + $0x50] sm:$0xff]
        %v3252 = vld [vmem:[#allocation11 + $0x58] sm:$0xff]
        %v3253 = vld [vmem:[#allocation11 + $0x60] sm:$0xff]
        %v3254 = vld [vmem:[#allocation11 + $0x68] sm:$0xff]
        %v3255 = vld [vmem:[#allocation11 + $0x70] sm:$0xff]
        %v3256 = vld [vmem:[#allocation11 + $0x78] sm:$0xff]
        %v3257 = vld [vmem:[#allocation11 + $0x80] sm:$0xff]
        %v3258 = vld [vmem:[#allocation11 + $0x88] sm:$0xff]
        %v3259 = vld [vmem:[#allocation11 + $0x90] sm:$0xff]
        %v3260 = vld [vmem:[#allocation11 + $0x98] sm:$0xff]
        %v3261 = vld [vmem:[#allocation11 + $0xa0] sm:$0xff]
        %v3262 = vld [vmem:[#allocation11 + $0xa8] sm:$0xff]
        %v3263 = vld [vmem:[#allocation11 + $0xb0] sm:$0xff]
        %v3264 = vld [vmem:[#allocation11 + $0xb8] sm:$0xff]
        %v3265 = vld [vmem:[#allocation11 + $0xc0] sm:$0xff]
        %v3266 = vld [vmem:[#allocation11 + $0xc8] sm:$0xff]
        %v3267 = vld [vmem:[#allocation11 + $0xd0] sm:$0xff]
        %v3268 = vld [vmem:[#allocation11 + $0xd8] sm:$0xff]
        %v3269 = vld [vmem:[#allocation11 + $0xe0] sm:$0xff]
        %v3270 = vld [vmem:[#allocation11 + $0xe8] sm:$0xff]
        %v3271 = vld [vmem:[#allocation11 + $0xf0] sm:$0xff]
        %v3272 = vld [vmem:[#allocation11 + $0xf8] sm:$0xff]
        %v3275 = vunpack.c.l.b16 %v3227
        %v3276 = vunpack.c.l.b16 %v3228
        %v3277 = vpack.c.b16 %v3276, %v3275
        %v3311 = vunpack.c.l.b16 %v3241
        %v3312 = vunpack.c.h.b16 %v3241
        %v3313 = vunpack.c.l.b16 %v3242
        %v3314 = vunpack.c.h.b16 %v3242
        %v3315 = vunpack.c.l.b16 %v3243
        %v3316 = vunpack.c.h.b16 %v3243
        %v3317 = vunpack.c.l.b16 %v3244
        %v3318 = vunpack.c.h.b16 %v3244
        %v3319 = vunpack.c.l.b16 %v3245
        %v3320 = vunpack.c.h.b16 %v3245
        %v3321 = vunpack.c.l.b16 %v3246
        %v3322 = vunpack.c.h.b16 %v3246
        %v3323 = vunpack.c.l.b16 %v3247
        %v3324 = vunpack.c.h.b16 %v3247
        %v3325 = vunpack.c.l.b16 %v3248
        %v3326 = vunpack.c.h.b16 %v3248
        %v3327 = vunpack.c.l.b16 %v3249
        %v3328 = vunpack.c.h.b16 %v3249
        %v3329 = vunpack.c.l.b16 %v3250
        %v3330 = vunpack.c.h.b16 %v3250
        %v3331 = vunpack.c.l.b16 %v3251
        %v3332 = vunpack.c.h.b16 %v3251
        %v3333 = vunpack.c.l.b16 %v3252
        %v3334 = vunpack.c.h.b16 %v3252
        %v3335 = vunpack.c.l.b16 %v3253
        %v3336 = vunpack.c.h.b16 %v3253
        %v3337 = vunpack.c.l.b16 %v3254
        %v3338 = vunpack.c.h.b16 %v3254
        %v3339 = vunpack.c.l.b16 %v3255
        %v3340 = vunpack.c.h.b16 %v3255
        %v3341 = vunpack.c.l.b16 %v3256
        %v3342 = vunpack.c.h.b16 %v3256
        %v3343 = vunpack.c.l.b16 %v3257
        %v3344 = vunpack.c.h.b16 %v3257
        %v3345 = vunpack.c.l.b16 %v3258
        %v3346 = vunpack.c.h.b16 %v3258
        %v3347 = vunpack.c.l.b16 %v3259
        %v3348 = vunpack.c.h.b16 %v3259
        %v3349 = vunpack.c.l.b16 %v3260
        %v3350 = vunpack.c.h.b16 %v3260
        %v3351 = vunpack.c.l.b16 %v3261
        %v3352 = vunpack.c.h.b16 %v3261
        %v3353 = vunpack.c.l.b16 %v3262
        %v3354 = vunpack.c.h.b16 %v3262
        %v3355 = vunpack.c.l.b16 %v3263
        %v3356 = vunpack.c.h.b16 %v3263
        %v3357 = vunpack.c.l.b16 %v3264
        %v3358 = vunpack.c.h.b16 %v3264
        %v3359 = vunpack.c.l.b16 %v3265
        %v3360 = vunpack.c.h.b16 %v3265
        %v3361 = vunpack.c.l.b16 %v3266
        %v3362 = vunpack.c.h.b16 %v3266
        %v3363 = vunpack.c.l.b16 %v3267
        %v3364 = vunpack.c.h.b16 %v3267
        %v3365 = vunpack.c.l.b16 %v3268
        %v3366 = vunpack.c.h.b16 %v3268
        %v3367 = vunpack.c.l.b16 %v3269
        %v3368 = vunpack.c.h.b16 %v3269
        %v3369 = vunpack.c.l.b16 %v3270
        %v3370 = vunpack.c.h.b16 %v3270
        %v3371 = vunpack.c.l.b16 %v3271
        %v3372 = vunpack.c.h.b16 %v3271
        %v3373 = vunpack.c.l.b16 %v3272
        %v3374 = vunpack.c.h.b16 %v3272
        %v3375 = vpack.c.b16 %v3315, %v3311
        %v3376 = vpack.c.b16 %v3316, %v3312
        %v3377 = vpack.c.b16 %v3317, %v3313
        %v3378 = vpack.c.b16 %v3318, %v3314
        %v3379 = vpack.c.b16 %v3323, %v3319
        %v3380 = vpack.c.b16 %v3324, %v3320
        %v3381 = vpack.c.b16 %v3325, %v3321
        %v3382 = vpack.c.b16 %v3326, %v3322
        %v3383 = vpack.c.b16 %v3331, %v3327
        %v3384 = vpack.c.b16 %v3332, %v3328
        %v3385 = vpack.c.b16 %v3333, %v3329
        %v3386 = vpack.c.b16 %v3334, %v3330
        %v3387 = vpack.c.b16 %v3339, %v3335
        %v3388 = vpack.c.b16 %v3340, %v3336
        %v3389 = vpack.c.b16 %v3341, %v3337
        %v3390 = vpack.c.b16 %v3342, %v3338
        %v3391 = vpack.c.b16 %v3347, %v3343
        %v3392 = vpack.c.b16 %v3348, %v3344
        %v3393 = vpack.c.b16 %v3349, %v3345
        %v3394 = vpack.c.b16 %v3350, %v3346
        %v3395 = vpack.c.b16 %v3355, %v3351
        %v3396 = vpack.c.b16 %v3356, %v3352
        %v3397 = vpack.c.b16 %v3357, %v3353
        %v3398 = vpack.c.b16 %v3358, %v3354
        %v3399 = vpack.c.b16 %v3363, %v3359
        %v3400 = vpack.c.b16 %v3364, %v3360
        %v3401 = vpack.c.b16 %v3365, %v3361
        %v3402 = vpack.c.b16 %v3366, %v3362
        %v3403 = vpack.c.b16 %v3371, %v3367
        %v3404 = vpack.c.b16 %v3372, %v3368
        %v3405 = vpack.c.b16 %v3373, %v3369
        %v3406 = vpack.c.b16 %v3374, %v3370
        %3439 = vmatpush.bf16.msra.mxu0 %v3403
        %3440 = vmatpush.bf16.msra.mxu0 %v3399
        %3441 = vmatpush.bf16.msra.mxu0 %v3395
        %3442 = vmatpush.bf16.msra.mxu0 %v3391
        %3443 = vmatpush.bf16.msra.mxu0 %v3387
        %3444 = vmatpush.bf16.msra.mxu0 %v3383
        %3445 = vmatpush.bf16.msra.mxu0 %v3379
        %3446 = vmatpush.bf16.msra.mxu0 %v3375
        %3447 = vmatmul.bf16.gmra.mxu0 %v3277
        %v3448 = vpop.f32.mrf.mxu0
        %v3449 = vadd.f32 0.0, %v3448
        %v3450 = vpop.f32.mrf.mxu0
        %v3451 = vadd.f32 0.0, %v3450
        %3452 = vdwg.mxu0
        %3453 = vmatpush.bf16.msra.mxu0 %v3404
        %3454 = vmatpush.bf16.msra.mxu0 %v3400
        %3455 = vmatpush.bf16.msra.mxu0 %v3396
        %3456 = vmatpush.bf16.msra.mxu0 %v3392
        %3457 = vmatpush.bf16.msra.mxu0 %v3388
        %3458 = vmatpush.bf16.msra.mxu0 %v3384
        %3459 = vmatpush.bf16.msra.mxu0 %v3380
        %3460 = vmatpush.bf16.msra.mxu0 %v3376
        %3461 = vmatmul.bf16.gmra.mxu0 %v3277
        %v3462 = vpop.f32.mrf.mxu0
        %v3463 = vadd.f32 0.0, %v3462
        %v3464 = vpop.f32.mrf.mxu0
        %v3465 = vadd.f32 0.0, %v3464
        %3466 = vdwg.mxu0
        %3467 = vmatpush.bf16.msra.mxu0 %v3405
        %3468 = vmatpush.bf16.msra.mxu0 %v3401
        %3469 = vmatpush.bf16.msra.mxu0 %v3397
        %3470 = vmatpush.bf16.msra.mxu0 %v3393
        %3471 = vmatpush.bf16.msra.mxu0 %v3389
        %3472 = vmatpush.bf16.msra.mxu0 %v3385
        %3473 = vmatpush.bf16.msra.mxu0 %v3381
        %3474 = vmatpush.bf16.msra.mxu0 %v3377
        %3475 = vmatmul.bf16.gmra.mxu0 %v3277
        %v3476 = vpop.f32.mrf.mxu0
        %v3477 = vadd.f32 0.0, %v3476
        %v3478 = vpop.f32.mrf.mxu0
        %v3479 = vadd.f32 0.0, %v3478
        %3480 = vdwg.mxu0
        %3481 = vmatpush.bf16.msra.mxu0 %v3406
        %3482 = vmatpush.bf16.msra.mxu0 %v3402
        %3483 = vmatpush.bf16.msra.mxu0 %v3398
        %3484 = vmatpush.bf16.msra.mxu0 %v3394
        %3485 = vmatpush.bf16.msra.mxu0 %v3390
        %3486 = vmatpush.bf16.msra.mxu0 %v3386
        %3487 = vmatpush.bf16.msra.mxu0 %v3382
        %3488 = vmatpush.bf16.msra.mxu0 %v3378
        %3489 = vmatmul.bf16.gmra.mxu0 %v3277
        %v3490 = vpop.f32.mrf.mxu0
        %v3491 = vadd.f32 0.0, %v3490
        %v3492 = vpop.f32.mrf.mxu0
        %v3493 = vadd.f32 0.0, %v3492
        %3494 = vdwg.mxu0
        %v3495 = vadd.f32 %v3233, %v3449
        %v3496 = vadd.f32 %v3234, %v3463
        %v3497 = vadd.f32 %v3235, %v3477
        %v3498 = vadd.f32 %v3236, %v3491
        %v3499 = vadd.f32 %v3237, %v3451
        %v3500 = vadd.f32 %v3238, %v3465
        %v3501 = vadd.f32 %v3239, %v3479
        %v3502 = vadd.f32 %v3240, %v3493
        %v3503 = vxor.u32 %v3495, 2147483648
        %v3504 = vxor.u32 %v3499, 2147483648
        %v3505 = vmul.f32 %v3503, 1.442695
        %v3506 = vpow.pop %v3505
        %v3507 = vmul.f32 %v3504, 1.442695
        %v3508 = vpow.pop %v3507
        %v3509 = vadd.f32 %v3506, 1.0
        %v3510 = vadd.f32 %v3508, 1.0
        %v3511 = vrcp.pop %v3509
        %v3512 = vmul.f32 %v3509, %v3511
        %v3513 = vsub.f32 1.0, %v3512
        %v3514 = vmul.f32 %v3511, %v3513
        %v3515 = vadd.f32 %v3511, %v3514
        %vm3516 = vweird.f32 %v3509
        %vm3517 = vweird.f32 %v3511
        %vm3518 = vmor %vm3516, %vm3517
        %v3519 = vsel %vm3518, %v3511, %v3515
        %v3520 = vand.u32 2147483647, %v3509
        %vm3521 = vcmp.eq.f32.partialorder %v3520, 8.507059e+37
        %v3522 = vand.u32 %v3509, 2147483648
        %v3523 = vor.u32 1.1754944e-38, %v3522
        %v3524 = vsel %vm3521, %v3523, %v3519
        %v3525 = vmul.f32 1.0, %v3524
        %v3526 = vrcp.pop %v3510
        %v3527 = vmul.f32 %v3510, %v3526
        %v3528 = vsub.f32 1.0, %v3527
        %v3529 = vmul.f32 %v3526, %v3528
        %v3530 = vadd.f32 %v3526, %v3529
        %vm3531 = vweird.f32 %v3510
        %vm3532 = vweird.f32 %v3526
        %vm3533 = vmor %vm3531, %vm3532
        %v3534 = vsel %vm3533, %v3526, %v3530
        %v3535 = vand.u32 2147483647, %v3510
        %vm3536 = vcmp.eq.f32.partialorder %v3535, 8.507059e+37
        %v3537 = vand.u32 %v3510, 2147483648
        %v3538 = vor.u32 1.1754944e-38, %v3537
        %v3539 = vsel %vm3536, %v3538, %v3534
        %v3540 = vmul.f32 1.0, %v3539
        %v3541 = vxor.u32 %v3496, 2147483648
        %v3542 = vxor.u32 %v3500, 2147483648
        %v3543 = vmul.f32 %v3541, 1.442695
        %v3544 = vpow.pop %v3543
        %v3545 = vmul.f32 %v3542, 1.442695
        %v3546 = vpow.pop %v3545
        %v3547 = vadd.f32 %v3544, 1.0
        %v3548 = vadd.f32 %v3546, 1.0
        %v3549 = vrcp.pop %v3547
        %v3550 = vmul.f32 %v3547, %v3549
        %v3551 = vsub.f32 1.0, %v3550
        %v3552 = vmul.f32 %v3549, %v3551
        %v3553 = vadd.f32 %v3549, %v3552
        %vm3554 = vweird.f32 %v3547
        %vm3555 = vweird.f32 %v3549
        %vm3556 = vmor %vm3554, %vm3555
        %v3557 = vsel %vm3556, %v3549, %v3553
        %v3558 = vand.u32 2147483647, %v3547
        %vm3559 = vcmp.eq.f32.partialorder %v3558, 8.507059e+37
        %v3560 = vand.u32 %v3547, 2147483648
        %v3561 = vor.u32 1.1754944e-38, %v3560
        %v3562 = vsel %vm3559, %v3561, %v3557
        %v3563 = vmul.f32 1.0, %v3562
        %v3564 = vrcp.pop %v3548
        %v3565 = vmul.f32 %v3548, %v3564
        %v3566 = vsub.f32 1.0, %v3565
        %v3567 = vmul.f32 %v3564, %v3566
        %v3568 = vadd.f32 %v3564, %v3567
        %vm3569 = vweird.f32 %v3548
        %vm3570 = vweird.f32 %v3564
        %vm3571 = vmor %vm3569, %vm3570
        %v3572 = vsel %vm3571, %v3564, %v3568
        %v3573 = vand.u32 2147483647, %v3548
        %vm3574 = vcmp.eq.f32.partialorder %v3573, 8.507059e+37
        %v3575 = vand.u32 %v3548, 2147483648
        %v3576 = vor.u32 1.1754944e-38, %v3575
        %v3577 = vsel %vm3574, %v3576, %v3572
        %v3578 = vmul.f32 1.0, %v3577
        %v3579 = vtanh.pop %v3497
        %v3580 = vtanh.pop %v3501
        %v3581 = vxor.u32 %v3498, 2147483648
        %v3582 = vxor.u32 %v3502, 2147483648
        %v3583 = vmul.f32 %v3581, 1.442695
        %v3584 = vpow.pop %v3583
        %v3585 = vmul.f32 %v3582, 1.442695
        %v3586 = vpow.pop %v3585
        %v3587 = vadd.f32 %v3584, 1.0
        %v3588 = vadd.f32 %v3586, 1.0
        %v3589 = vrcp.pop %v3587
        %v3590 = vmul.f32 %v3587, %v3589
        %v3591 = vsub.f32 1.0, %v3590
        %v3592 = vmul.f32 %v3589, %v3591
        %v3593 = vadd.f32 %v3589, %v3592
        %vm3594 = vweird.f32 %v3587
        %vm3595 = vweird.f32 %v3589
        %vm3596 = vmor %vm3594, %vm3595
        %v3597 = vsel %vm3596, %v3589, %v3593
        %v3598 = vand.u32 2147483647, %v3587
        %vm3599 = vcmp.eq.f32.partialorder %v3598, 8.507059e+37
        %v3600 = vand.u32 %v3587, 2147483648
        %v3601 = vor.u32 1.1754944e-38, %v3600
        %v3602 = vsel %vm3599, %v3601, %v3597
        %v3603 = vmul.f32 1.0, %v3602
        %v3604 = vrcp.pop %v3588
        %v3605 = vmul.f32 %v3588, %v3604
        %v3606 = vsub.f32 1.0, %v3605
        %v3607 = vmul.f32 %v3604, %v3606
        %v3608 = vadd.f32 %v3604, %v3607
        %vm3609 = vweird.f32 %v3588
        %vm3610 = vweird.f32 %v3604
        %vm3611 = vmor %vm3609, %vm3610
        %v3612 = vsel %vm3611, %v3604, %v3608
        %v3613 = vand.u32 2147483647, %v3588
        %vm3614 = vcmp.eq.f32.partialorder %v3613, 8.507059e+37
        %v3615 = vand.u32 %v3588, 2147483648
        %v3616 = vor.u32 1.1754944e-38, %v3615
        %v3617 = vsel %vm3614, %v3616, %v3612
        %v3618 = vmul.f32 1.0, %v3617
        %v3619 = vmul.f32 %v3563, %v3221
        %v3620 = vmul.f32 %v3578, %v3222
        %v3621 = vmul.f32 %v3525, %v3579
        %v3622 = vmul.f32 %v3540, %v3580
        %v3623 = vadd.f32 %v3619, %v3621
        %v3624 = vadd.f32 %v3620, %v3622
        %v3625 = vtanh.pop %v3623
        %v3626 = vtanh.pop %v3624
        %v3627 = vmul.f32 %v3603, %v3625
        %v3628 = vmul.f32 %v3618, %v3626
        %v3629 = vpack.c.bf16 %v3627, %v3627
        %v3630 = vpack.c.bf16 %v3628, %v3628
        %s3631 = scalar_lea.vmem %s284, 48 [#allocation13]
        %3632 = vst [vmem:[%s3631] sm:$0xf] %v3629
        %3633 = vst [vmem:[%s3631 + $0x4] sm:$0xf] %v3630
        %s3634 = scalar_lea.vmem [#allocation4], 448
        %v3635 = vld [vmem:[%s3634] sm:$0xff]
        %v3636 = vld [vmem:[%s3634 + $0x8] sm:$0xff]
        %v3637 = vld [vmem:[%s3634 + $0x10] sm:$0xff]
        %v3638 = vld [vmem:[%s3634 + $0x18] sm:$0xff]
        %v3639 = vld [vmem:[%s3634 + $0x20] sm:$0xff]
        %v3640 = vld [vmem:[%s3634 + $0x28] sm:$0xff]
        %v3641 = vld [vmem:[%s3634 + $0x30] sm:$0xff]
        %v3642 = vld [vmem:[%s3634 + $0x38] sm:$0xff]
        %v3643 = vld [vmem:[#allocation11] sm:$0xff]
        %v3644 = vld [vmem:[#allocation11 + $0x8] sm:$0xff]
        %v3645 = vld [vmem:[#allocation11 + $0x10] sm:$0xff]
        %v3646 = vld [vmem:[#allocation11 + $0x18] sm:$0xff]
        %v3647 = vld [vmem:[#allocation11 + $0x20] sm:$0xff]
        %v3648 = vld [vmem:[#allocation11 + $0x28] sm:$0xff]
        %v3649 = vld [vmem:[#allocation11 + $0x30] sm:$0xff]
        %v3650 = vld [vmem:[#allocation11 + $0x38] sm:$0xff]
        %v3651 = vld [vmem:[#allocation11 + $0x40] sm:$0xff]
        %v3652 = vld [vmem:[#allocation11 + $0x48] sm:$0xff]
        %v3653 = vld [vmem:[#allocation11 + $0x50] sm:$0xff]
        %v3654 = vld [vmem:[#allocation11 + $0x58] sm:$0xff]
        %v3655 = vld [vmem:[#allocation11 + $0x60] sm:$0xff]
        %v3656 = vld [vmem:[#allocation11 + $0x68] sm:$0xff]
        %v3657 = vld [vmem:[#allocation11 + $0x70] sm:$0xff]
        %v3658 = vld [vmem:[#allocation11 + $0x78] sm:$0xff]
        %v3659 = vld [vmem:[#allocation11 + $0x80] sm:$0xff]
        %v3660 = vld [vmem:[#allocation11 + $0x88] sm:$0xff]
        %v3661 = vld [vmem:[#allocation11 + $0x90] sm:$0xff]
        %v3662 = vld [vmem:[#allocation11 + $0x98] sm:$0xff]
        %v3663 = vld [vmem:[#allocation11 + $0xa0] sm:$0xff]
        %v3664 = vld [vmem:[#allocation11 + $0xa8] sm:$0xff]
        %v3665 = vld [vmem:[#allocation11 + $0xb0] sm:$0xff]
        %v3666 = vld [vmem:[#allocation11 + $0xb8] sm:$0xff]
        %v3667 = vld [vmem:[#allocation11 + $0xc0] sm:$0xff]
        %v3668 = vld [vmem:[#allocation11 + $0xc8] sm:$0xff]
        %v3669 = vld [vmem:[#allocation11 + $0xd0] sm:$0xff]
        %v3670 = vld [vmem:[#allocation11 + $0xd8] sm:$0xff]
        %v3671 = vld [vmem:[#allocation11 + $0xe0] sm:$0xff]
        %v3672 = vld [vmem:[#allocation11 + $0xe8] sm:$0xff]
        %v3673 = vld [vmem:[#allocation11 + $0xf0] sm:$0xff]
        %v3674 = vld [vmem:[#allocation11 + $0xf8] sm:$0xff]
        %v3677 = vunpack.c.l.b16 %v3629
        %v3678 = vunpack.c.l.b16 %v3630
        %v3679 = vpack.c.b16 %v3678, %v3677
        %v3713 = vunpack.c.l.b16 %v3643
        %v3714 = vunpack.c.h.b16 %v3643
        %v3715 = vunpack.c.l.b16 %v3644
        %v3716 = vunpack.c.h.b16 %v3644
        %v3717 = vunpack.c.l.b16 %v3645
        %v3718 = vunpack.c.h.b16 %v3645
        %v3719 = vunpack.c.l.b16 %v3646
        %v3720 = vunpack.c.h.b16 %v3646
        %v3721 = vunpack.c.l.b16 %v3647
        %v3722 = vunpack.c.h.b16 %v3647
        %v3723 = vunpack.c.l.b16 %v3648
        %v3724 = vunpack.c.h.b16 %v3648
        %v3725 = vunpack.c.l.b16 %v3649
        %v3726 = vunpack.c.h.b16 %v3649
        %v3727 = vunpack.c.l.b16 %v3650
        %v3728 = vunpack.c.h.b16 %v3650
        %v3729 = vunpack.c.l.b16 %v3651
        %v3730 = vunpack.c.h.b16 %v3651
        %v3731 = vunpack.c.l.b16 %v3652
        %v3732 = vunpack.c.h.b16 %v3652
        %v3733 = vunpack.c.l.b16 %v3653
        %v3734 = vunpack.c.h.b16 %v3653
        %v3735 = vunpack.c.l.b16 %v3654
        %v3736 = vunpack.c.h.b16 %v3654
        %v3737 = vunpack.c.l.b16 %v3655
        %v3738 = vunpack.c.h.b16 %v3655
        %v3739 = vunpack.c.l.b16 %v3656
        %v3740 = vunpack.c.h.b16 %v3656
        %v3741 = vunpack.c.l.b16 %v3657
        %v3742 = vunpack.c.h.b16 %v3657
        %v3743 = vunpack.c.l.b16 %v3658
        %v3744 = vunpack.c.h.b16 %v3658
        %v3745 = vunpack.c.l.b16 %v3659
        %v3746 = vunpack.c.h.b16 %v3659
        %v3747 = vunpack.c.l.b16 %v3660
        %v3748 = vunpack.c.h.b16 %v3660
        %v3749 = vunpack.c.l.b16 %v3661
        %v3750 = vunpack.c.h.b16 %v3661
        %v3751 = vunpack.c.l.b16 %v3662
        %v3752 = vunpack.c.h.b16 %v3662
        %v3753 = vunpack.c.l.b16 %v3663
        %v3754 = vunpack.c.h.b16 %v3663
        %v3755 = vunpack.c.l.b16 %v3664
        %v3756 = vunpack.c.h.b16 %v3664
        %v3757 = vunpack.c.l.b16 %v3665
        %v3758 = vunpack.c.h.b16 %v3665
        %v3759 = vunpack.c.l.b16 %v3666
        %v3760 = vunpack.c.h.b16 %v3666
        %v3761 = vunpack.c.l.b16 %v3667
        %v3762 = vunpack.c.h.b16 %v3667
        %v3763 = vunpack.c.l.b16 %v3668
        %v3764 = vunpack.c.h.b16 %v3668
        %v3765 = vunpack.c.l.b16 %v3669
        %v3766 = vunpack.c.h.b16 %v3669
        %v3767 = vunpack.c.l.b16 %v3670
        %v3768 = vunpack.c.h.b16 %v3670
        %v3769 = vunpack.c.l.b16 %v3671
        %v3770 = vunpack.c.h.b16 %v3671
        %v3771 = vunpack.c.l.b16 %v3672
        %v3772 = vunpack.c.h.b16 %v3672
        %v3773 = vunpack.c.l.b16 %v3673
        %v3774 = vunpack.c.h.b16 %v3673
        %v3775 = vunpack.c.l.b16 %v3674
        %v3776 = vunpack.c.h.b16 %v3674
        %v3777 = vpack.c.b16 %v3717, %v3713
        %v3778 = vpack.c.b16 %v3718, %v3714
        %v3779 = vpack.c.b16 %v3719, %v3715
        %v3780 = vpack.c.b16 %v3720, %v3716
        %v3781 = vpack.c.b16 %v3725, %v3721
        %v3782 = vpack.c.b16 %v3726, %v3722
        %v3783 = vpack.c.b16 %v3727, %v3723
        %v3784 = vpack.c.b16 %v3728, %v3724
        %v3785 = vpack.c.b16 %v3733, %v3729
        %v3786 = vpack.c.b16 %v3734, %v3730
        %v3787 = vpack.c.b16 %v3735, %v3731
        %v3788 = vpack.c.b16 %v3736, %v3732
        %v3789 = vpack.c.b16 %v3741, %v3737
        %v3790 = vpack.c.b16 %v3742, %v3738
        %v3791 = vpack.c.b16 %v3743, %v3739
        %v3792 = vpack.c.b16 %v3744, %v3740
        %v3793 = vpack.c.b16 %v3749, %v3745
        %v3794 = vpack.c.b16 %v3750, %v3746
        %v3795 = vpack.c.b16 %v3751, %v3747
        %v3796 = vpack.c.b16 %v3752, %v3748
        %v3797 = vpack.c.b16 %v3757, %v3753
        %v3798 = vpack.c.b16 %v3758, %v3754
        %v3799 = vpack.c.b16 %v3759, %v3755
        %v3800 = vpack.c.b16 %v3760, %v3756
        %v3801 = vpack.c.b16 %v3765, %v3761
        %v3802 = vpack.c.b16 %v3766, %v3762
        %v3803 = vpack.c.b16 %v3767, %v3763
        %v3804 = vpack.c.b16 %v3768, %v3764
        %v3805 = vpack.c.b16 %v3773, %v3769
        %v3806 = vpack.c.b16 %v3774, %v3770
        %v3807 = vpack.c.b16 %v3775, %v3771
        %v3808 = vpack.c.b16 %v3776, %v3772
        %3841 = vmatpush.bf16.msra.mxu0 %v3805
        %3842 = vmatpush.bf16.msra.mxu0 %v3801
        %3843 = vmatpush.bf16.msra.mxu0 %v3797
        %3844 = vmatpush.bf16.msra.mxu0 %v3793
        %3845 = vmatpush.bf16.msra.mxu0 %v3789
        %3846 = vmatpush.bf16.msra.mxu0 %v3785
        %3847 = vmatpush.bf16.msra.mxu0 %v3781
        %3848 = vmatpush.bf16.msra.mxu0 %v3777
        %3849 = vmatmul.bf16.gmra.mxu0 %v3679
        %v3850 = vpop.f32.mrf.mxu0
        %v3851 = vadd.f32 0.0, %v3850
        %v3852 = vpop.f32.mrf.mxu0
        %v3853 = vadd.f32 0.0, %v3852
        %3854 = vdwg.mxu0
        %3855 = vmatpush.bf16.msra.mxu0 %v3806
        %3856 = vmatpush.bf16.msra.mxu0 %v3802
        %3857 = vmatpush.bf16.msra.mxu0 %v3798
        %3858 = vmatpush.bf16.msra.mxu0 %v3794
        %3859 = vmatpush.bf16.msra.mxu0 %v3790
        %3860 = vmatpush.bf16.msra.mxu0 %v3786
        %3861 = vmatpush.bf16.msra.mxu0 %v3782
        %3862 = vmatpush.bf16.msra.mxu0 %v3778
        %3863 = vmatmul.bf16.gmra.mxu0 %v3679
        %v3864 = vpop.f32.mrf.mxu0
        %v3865 = vadd.f32 0.0, %v3864
        %v3866 = vpop.f32.mrf.mxu0
        %v3867 = vadd.f32 0.0, %v3866
        %3868 = vdwg.mxu0
        %3869 = vmatpush.bf16.msra.mxu0 %v3807
        %3870 = vmatpush.bf16.msra.mxu0 %v3803
        %3871 = vmatpush.bf16.msra.mxu0 %v3799
        %3872 = vmatpush.bf16.msra.mxu0 %v3795
        %3873 = vmatpush.bf16.msra.mxu0 %v3791
        %3874 = vmatpush.bf16.msra.mxu0 %v3787
        %3875 = vmatpush.bf16.msra.mxu0 %v3783
        %3876 = vmatpush.bf16.msra.mxu0 %v3779
        %3877 = vmatmul.bf16.gmra.mxu0 %v3679
        %v3878 = vpop.f32.mrf.mxu0
        %v3879 = vadd.f32 0.0, %v3878
        %v3880 = vpop.f32.mrf.mxu0
        %v3881 = vadd.f32 0.0, %v3880
        %3882 = vdwg.mxu0
        %3883 = vmatpush.bf16.msra.mxu0 %v3808
        %3884 = vmatpush.bf16.msra.mxu0 %v3804
        %3885 = vmatpush.bf16.msra.mxu0 %v3800
        %3886 = vmatpush.bf16.msra.mxu0 %v3796
        %3887 = vmatpush.bf16.msra.mxu0 %v3792
        %3888 = vmatpush.bf16.msra.mxu0 %v3788
        %3889 = vmatpush.bf16.msra.mxu0 %v3784
        %3890 = vmatpush.bf16.msra.mxu0 %v3780
        %3891 = vmatmul.bf16.gmra.mxu0 %v3679
        %v3892 = vpop.f32.mrf.mxu0
        %v3893 = vadd.f32 0.0, %v3892
        %v3894 = vpop.f32.mrf.mxu0
        %v3895 = vadd.f32 0.0, %v3894
        %3896 = vdwg.mxu0
        %v3897 = vadd.f32 %v3635, %v3851
        %v3898 = vadd.f32 %v3636, %v3865
        %v3899 = vadd.f32 %v3637, %v3879
        %v3900 = vadd.f32 %v3638, %v3893
        %v3901 = vadd.f32 %v3639, %v3853
        %v3902 = vadd.f32 %v3640, %v3867
        %v3903 = vadd.f32 %v3641, %v3881
        %v3904 = vadd.f32 %v3642, %v3895
        %v3905 = vxor.u32 %v3897, 2147483648
        %v3906 = vxor.u32 %v3901, 2147483648
        %v3907 = vmul.f32 %v3905, 1.442695
        %v3908 = vpow.pop %v3907
        %v3909 = vmul.f32 %v3906, 1.442695
        %v3910 = vpow.pop %v3909
        %v3911 = vadd.f32 %v3908, 1.0
        %v3912 = vadd.f32 %v3910, 1.0
        %v3913 = vrcp.pop %v3911
        %v3914 = vmul.f32 %v3911, %v3913
        %v3915 = vsub.f32 1.0, %v3914
        %v3916 = vmul.f32 %v3913, %v3915
        %v3917 = vadd.f32 %v3913, %v3916
        %vm3918 = vweird.f32 %v3911
        %vm3919 = vweird.f32 %v3913
        %vm3920 = vmor %vm3918, %vm3919
        %v3921 = vsel %vm3920, %v3913, %v3917
        %v3922 = vand.u32 2147483647, %v3911
        %vm3923 = vcmp.eq.f32.partialorder %v3922, 8.507059e+37
        %v3924 = vand.u32 %v3911, 2147483648
        %v3925 = vor.u32 1.1754944e-38, %v3924
        %v3926 = vsel %vm3923, %v3925, %v3921
        %v3927 = vmul.f32 1.0, %v3926
        %v3928 = vrcp.pop %v3912
        %v3929 = vmul.f32 %v3912, %v3928
        %v3930 = vsub.f32 1.0, %v3929
        %v3931 = vmul.f32 %v3928, %v3930
        %v3932 = vadd.f32 %v3928, %v3931
        %vm3933 = vweird.f32 %v3912
        %vm3934 = vweird.f32 %v3928
        %vm3935 = vmor %vm3933, %vm3934
        %v3936 = vsel %vm3935, %v3928, %v3932
        %v3937 = vand.u32 2147483647, %v3912
        %vm3938 = vcmp.eq.f32.partialorder %v3937, 8.507059e+37
        %v3939 = vand.u32 %v3912, 2147483648
        %v3940 = vor.u32 1.1754944e-38, %v3939
        %v3941 = vsel %vm3938, %v3940, %v3936
        %v3942 = vmul.f32 1.0, %v3941
        %v3943 = vxor.u32 %v3898, 2147483648
        %v3944 = vxor.u32 %v3902, 2147483648
        %v3945 = vmul.f32 %v3943, 1.442695
        %v3946 = vpow.pop %v3945
        %v3947 = vmul.f32 %v3944, 1.442695
        %v3948 = vpow.pop %v3947
        %v3949 = vadd.f32 %v3946, 1.0
        %v3950 = vadd.f32 %v3948, 1.0
        %v3951 = vrcp.pop %v3949
        %v3952 = vmul.f32 %v3949, %v3951
        %v3953 = vsub.f32 1.0, %v3952
        %v3954 = vmul.f32 %v3951, %v3953
        %v3955 = vadd.f32 %v3951, %v3954
        %vm3956 = vweird.f32 %v3949
        %vm3957 = vweird.f32 %v3951
        %vm3958 = vmor %vm3956, %vm3957
        %v3959 = vsel %vm3958, %v3951, %v3955
        %v3960 = vand.u32 2147483647, %v3949
        %vm3961 = vcmp.eq.f32.partialorder %v3960, 8.507059e+37
        %v3962 = vand.u32 %v3949, 2147483648
        %v3963 = vor.u32 1.1754944e-38, %v3962
        %v3964 = vsel %vm3961, %v3963, %v3959
        %v3965 = vmul.f32 1.0, %v3964
        %v3966 = vrcp.pop %v3950
        %v3967 = vmul.f32 %v3950, %v3966
        %v3968 = vsub.f32 1.0, %v3967
        %v3969 = vmul.f32 %v3966, %v3968
        %v3970 = vadd.f32 %v3966, %v3969
        %vm3971 = vweird.f32 %v3950
        %vm3972 = vweird.f32 %v3966
        %vm3973 = vmor %vm3971, %vm3972
        %v3974 = vsel %vm3973, %v3966, %v3970
        %v3975 = vand.u32 2147483647, %v3950
        %vm3976 = vcmp.eq.f32.partialorder %v3975, 8.507059e+37
        %v3977 = vand.u32 %v3950, 2147483648
        %v3978 = vor.u32 1.1754944e-38, %v3977
        %v3979 = vsel %vm3976, %v3978, %v3974
        %v3980 = vmul.f32 1.0, %v3979
        %v3981 = vtanh.pop %v3899
        %v3982 = vtanh.pop %v3903
        %v3983 = vxor.u32 %v3900, 2147483648
        %v3984 = vxor.u32 %v3904, 2147483648
        %v3985 = vmul.f32 %v3983, 1.442695
        %v3986 = vpow.pop %v3985
        %v3987 = vmul.f32 %v3984, 1.442695
        %v3988 = vpow.pop %v3987
        %v3989 = vadd.f32 %v3986, 1.0
        %v3990 = vadd.f32 %v3988, 1.0
        %v3991 = vrcp.pop %v3989
        %v3992 = vmul.f32 %v3989, %v3991
        %v3993 = vsub.f32 1.0, %v3992
        %v3994 = vmul.f32 %v3991, %v3993
        %v3995 = vadd.f32 %v3991, %v3994
        %vm3996 = vweird.f32 %v3989
        %vm3997 = vweird.f32 %v3991
        %vm3998 = vmor %vm3996, %vm3997
        %v3999 = vsel %vm3998, %v3991, %v3995
        %v4000 = vand.u32 2147483647, %v3989
        %vm4001 = vcmp.eq.f32.partialorder %v4000, 8.507059e+37
        %v4002 = vand.u32 %v3989, 2147483648
        %v4003 = vor.u32 1.1754944e-38, %v4002
        %v4004 = vsel %vm4001, %v4003, %v3999
        %v4005 = vmul.f32 1.0, %v4004
        %v4006 = vrcp.pop %v3990
        %v4007 = vmul.f32 %v3990, %v4006
        %v4008 = vsub.f32 1.0, %v4007
        %v4009 = vmul.f32 %v4006, %v4008
        %v4010 = vadd.f32 %v4006, %v4009
        %vm4011 = vweird.f32 %v3990
        %vm4012 = vweird.f32 %v4006
        %vm4013 = vmor %vm4011, %vm4012
        %v4014 = vsel %vm4013, %v4006, %v4010
        %v4015 = vand.u32 2147483647, %v3990
        %vm4016 = vcmp.eq.f32.partialorder %v4015, 8.507059e+37
        %v4017 = vand.u32 %v3990, 2147483648
        %v4018 = vor.u32 1.1754944e-38, %v4017
        %v4019 = vsel %vm4016, %v4018, %v4014
        %v4020 = vmul.f32 1.0, %v4019
        %v4021 = vmul.f32 %v3965, %v3623
        %v4022 = vmul.f32 %v3980, %v3624
        %v4023 = vmul.f32 %v3927, %v3981
        %v4024 = vmul.f32 %v3942, %v3982
        %v4025 = vadd.f32 %v4021, %v4023
        %v4026 = vadd.f32 %v4022, %v4024
        %v4027 = vtanh.pop %v4025
        %v4028 = vtanh.pop %v4026
        %v4029 = vmul.f32 %v4005, %v4027
        %v4030 = vmul.f32 %v4020, %v4028
        %v4031 = vpack.c.bf16 %v4029, %v4029
        %v4032 = vpack.c.bf16 %v4030, %v4030
        %s4033 = scalar_lea.vmem %s284, 56 [#allocation13]
        %4034 = vst [vmem:[%s4033] sm:$0xf] %v4031
        %4035 = vst [vmem:[%s4033 + $0x4] sm:$0xf] %v4032
        %4036 = vst [vmem:[#allocation2] sm:$0xff] %v4029
        %4037 = vst [vmem:[#allocation2 + $0x8] sm:$0xff] %v4030
        %4038 = vst [vmem:[#allocation3] sm:$0xff] %v4025
        %4039 = vst [vmem:[#allocation3 + $0x8] sm:$0xff] %v4026
        %s4040 = sand.u32 %s136, 1
        %s4041 = scalar_lea.sflag [#allocation7], %s4040
        %s4042 = sand.u32 %s136, 1
        %s4043 = smul.addr %s4042, 64
        %s4044 = scalar_lea.vmem [#allocation13], %s4043
        // Predicated region
        $region57: #{tpu_custom_call.1} parent=35 // pred_check
          %p4045 = pneg %p146
        $region58: #{tpu_custom_call.1} parent=35 // pred_check_branch
          %4047 = sbr.rel (%p4045) target = $region60
        $region59: #{tpu_custom_call.1} parent=35 // pred_region
          %s4048 = smul.u32 8, %s28
          %s4049 = smul.u32 2, %s27
          %4051 = vsyncadd %s4041, 0
          %s4052 = smul.addr %s4048, 2
          %s4053 = sadd.s32 %s4049, %s4052
          %s4054 = smul.addr %s4053, 4
          %s4055 = scalar_lea.hbm %s4, %s4054
          %s4056 = sshll.u32 %s4044, 4
          %s4057 = int_to_ptr.vmem [resolvable:$true] %s4056
          %s4058 = sshll.u32 %s4055, 4
          %s4059 = int_to_ptr.hbm [resolvable:$true] %s4058
          %4064 = dma.vmem_to_hbm [thread:$0]  %s4057, 1024, %s4059, %s4041, 64, 64, 4
        $region60: #{tpu_custom_call.1} parent=35 // pred_fallthru
          _
      $region36: #{tpu_custom_call.1} parent=5 // pred_fallthru
        _
      %p4065 = scmp.le.s32.totalorder 2, %s18
      // Predicated region
      $region61: #{tpu_custom_call.1} parent=5 // pred_check
        %p4066 = pneg %p4065
      $region62: #{tpu_custom_call.1} parent=5 // pred_check_branch
        %4068 = sbr.rel (%p4066) target = $region64
      $region63: #{tpu_custom_call.1} parent=5 // pred_region
        %s4069 = ssub.s32 %s18, 2
        // Predicated region
        $region65: #{tpu_custom_call.1} parent=63 // pred_check
          %p4070 = pneg %p152
        $region66: #{tpu_custom_call.1} parent=63 // pred_check_branch
          %4072 = sbr.rel (%p4070) target = $region68
        $region67: #{tpu_custom_call.1} parent=63 // pred_region
          %s4073 = sand.u32 %s137, 1
          %s4074 = scalar_lea.sflag [#allocation7], %s4073
          %s4075 = sand.u32 %s137, 1
          %s4076 = smul.addr %s4075, 64
          %s4077 = scalar_lea.vmem [#allocation13], %s4076
          %4079 = dma.done %s4074, 1024
        $region68: #{tpu_custom_call.1} parent=63 // pred_fallthru
          _
      $region64: #{tpu_custom_call.1} parent=5 // pred_fallthru
        _
    $region6: #{tpu_custom_call.1} parent=1 // loop_footer
      %s22 = sadd.s32 1, %s18
    $region7: #{tpu_custom_call.1} parent=1 // loop_footer_branch
      %17 = sbr.rel target = $region3
    $region8: #{tpu_custom_call.1} parent=1 // loop_exit
      _
    %4080 = vsyncpa [#allocation6], 1
    %s4081 = scalar_lea.sflag [#allocation6], 1
    %4082 = vsyncpa %s4081, 1
    %4083 = vsyncpa [#allocation9], 1
    %4084 = vsyncpa [#allocation12], 1
    %4085 = vsyncpa [#allocation7], 1
    %s4086 = scalar_lea.sflag [#allocation7], 1
    %4087 = vsyncpa %s4086, 1

// kernel: tpu_custom_call.1
$region0: #{tpu_custom_call.1}
  #allocation0 [shape = 'u32[]', space=smem, size = 0x4, offset = 0x4, fixed_abs, tag = 'smem constant byte address 0x4 - core index']
  #allocation1 [shape = 'u32[72,128]{1,0:T(1,128)}', space=vmem, size = 0x9000, scoped, tag = 'internal scratch']
  #allocation2 [shape = 'f32[16,128]{1,0:T(8,128)}', space=vmem, size = 0x2000, scoped, tag = 'scratch operand']
  #allocation3 [shape = 'f32[16,128]{1,0:T(8,128)}', space=vmem, size = 0x2000, scoped, tag = 'scratch operand']
  #allocation4 [shape = 'f32[8,16,512]{2,1,0:T(8,128)}', space=vmem, size = 0x40000, scoped, tag = 'scratch operand']
  %s0 = inlined_call_operand.hbm [shape: bf16[16,16,128], index: 0, kind: input, shape index: {}]
  %s1 = inlined_call_operand.hbm [shape: bf16[128,512], index: 1, kind: input, shape index: {}]
  %s2 = inlined_call_operand.hbm [shape: f32[1,512], index: 2, kind: input, shape index: {}]
  %s3 = inlined_call_operand.hbm [shape: bf16[128,512], index: 3, kind: input, shape index: {}]
  %s4 = inlined_call_operand.hbm [shape: bf16[16,16,128], index: 4, kind: output, shape index: {}]
  %s5 = sld [smem:[#allocation0]]
  $region69: #{tpu_custom_call.1} parent=0
    _
  %s7 = ssub.s32 1, %s5
  %s8 = scalar_select 0, %s7, %s5
  $region1: #{tpu_custom_call.1} parent=0
    #allocation5 [shape = 'u8[65536]{0}', space=vmem, size = 0x10000, scoped, tag = 'input window, operand 0']
    #allocation6 [shape = 's32[2]{0}', space=sflag, size = 0x8, scoped, tag = 'scoped memory for tpu_custom_call.1']
    #allocation7 [shape = 's32[2]{0}', space=sflag, size = 0x8, scoped, tag = 'scoped memory for tpu_custom_call.1']
    #allocation8 [shape = 'u8[131072]{0}', space=vmem, size = 0x20000, scoped, tag = 'input window, operand 1, single buffered']
    #allocation9 [shape = 's32[1]{0}', space=sflag, size = 0x4, scoped, tag = 'scoped memory for tpu_custom_call.1']
    #allocation10 [shape = 'u8[2048]{0}', space=vmem, size = 0x800, scoped, tag = 'input window, operand 2, single buffered']
    #allocation11 [shape = 'u8[131072]{0}', space=vmem, size = 0x20000, scoped, tag = 'input window, operand 3, single buffered']
    #allocation12 [shape = 's32[1]{0}', space=sflag, size = 0x4, scoped, tag = 'scoped memory for tpu_custom_call.1']
    #allocation13 [shape = 'u8[65536]{0}', space=vmem, size = 0x10000, scoped, tag = 'output window, operand 0']
    %9 = vsyncpa [#allocation6], 0
    %s10 = scalar_lea.sflag [#allocation6], 1
    %11 = vsyncpa %s10, 0
    %12 = vsyncpa [#allocation9], 0
    %13 = vsyncpa [#allocation12], 0
    %14 = vsyncpa [#allocation7], 0
    %s15 = scalar_lea.sflag [#allocation7], 1
    %16 = vsyncpa %s15, 0
    loop: start=0, step=1, limit=4
    $region2: #{tpu_custom_call.1} parent=1 // loop_pre_header
      _
    $region3: #{tpu_custom_call.1} parent=1 // loop_header
      %s18 = sphi 0, %s22
      %p19 = scmp.ge.s32.totalorder %s18, 4
      %s25 = sphi 0, %s37
      %s26 = sphi 0, %s33
      %s27 = sphi 0, %s25
      %s28 = sphi 0, %s26
      %s29 = sphi 0, %s27
      %s30 = sphi 0, %s28
      %s42 = sphi 0, %s44
      %s45 = sphi 0, %s42
      %s46 = sphi 0, %s45
      %s62 = sphi 0, %s46
      %s66 = sphi 0, %s66
      %s68 = sphi 0, %s66
      %s69 = sphi 0, %s68
      %s83 = sphi 0, %s69
      %s87 = sphi 0, %s87
      %s89 = sphi 0, %s87
      %s90 = sphi 0, %s89
      %s104 = sphi 0, %s90
      %s108 = sphi 0, %s108
      %s110 = sphi 0, %s108
      %s111 = sphi 0, %s110
      %s125 = sphi 0, %s111
      %s133 = sphi 0, %s135
      %s136 = sphi 0, %s133
      %s137 = sphi 0, %s136
      %s153 = sphi 0, %s137
    $region4: #{tpu_custom_call.1} parent=1 // loop_header_branch
      %21 = sbr.rel (%p19) target = $region8
    $region5: #{tpu_custom_call.1} parent=1 // loop_body
      %s23 = ssub.s32 %s18, 1
      %s24 = ssub.s32 %s18, 2
      %s31 = sadd.s32 1, %s26
      %p32 = scmp.ge.s32.totalorder %s31, 2
      %s33 = scalar_select %p32, 0, %s31
      %s34 = sadd.s32 1, %s25
      %s35 = scalar_select %p32, %s34, %s25
      %p36 = scmp.ge.s32.totalorder %s35, 1
      %s37 = scalar_select %p36, 0, %s35
      %s38 = ssub.s32 %s26, %s33
      %s39 = ssub.s32 %s25, %s37
      %s40 = sor.u32 %s38, %s39
      %p41 = scmp.eq.s32.totalorder %s40, 0
      %s43 = sadd.s32 %s42, 1
      %s44 = scalar_select %p41, %s42, %s43
      %p47 = pneg %p41
      %p48 = scmp.eq.s32.totalorder %s18, 1
      %p49 = por %p47, %p48
      %p50 = scmp.ne.s32.totalorder %s42, %s45
      %p51 = scmp.eq.s32.totalorder %s18, 0
      %p52 = por %p50, %p51
      %p53 = scmp.ne.s32.totalorder %s42, %s45
      %p54 = scmp.eq.s32.totalorder %s23, 1
      %p55 = por %p53, %p54
      %p56 = scmp.ne.s32.totalorder %s45, %s46
      %p57 = scmp.eq.s32.totalorder %s23, 0
      %p58 = por %p56, %p57
      %p59 = scmp.ne.s32.totalorder %s45, %s46
      %p60 = scmp.eq.s32.totalorder %s24, 1
      %p61 = por %p59, %p60
      %p63 = scmp.ne.s32.totalorder %s46, %s62
      %p64 = scmp.eq.s32.totalorder %s24, 0
      %p65 = por %p63, %p64
      %s67 = sadd.s32 %s66, 1
      %p70 = scmp.eq.s32.totalorder %s18, 1
      %p71 = scmp.ne.s32.totalorder %s66, %s68
      %p72 = scmp.eq.s32.totalorder %s18, 0
      %p73 = por %p71, %p72
      %p74 = scmp.ne.s32.totalorder %s66, %s68
      %p75 = scmp.eq.s32.totalorder %s23, 1
      %p76 = por %p74, %p75
      %p77 = scmp.ne.s32.totalorder %s68, %s69
      %p78 = scmp.eq.s32.totalorder %s23, 0
      %p79 = por %p77, %p78
      %p80 = scmp.ne.s32.totalorder %s68, %s69
      %p81 = scmp.eq.s32.totalorder %s24, 1
      %p82 = por %p80, %p81
      %p84 = scmp.ne.s32.totalorder %s69, %s83
      %p85 = scmp.eq.s32.totalorder %s24, 0
      %p86 = por %p84, %p85
      %s88 = sadd.s32 %s87, 1
      %p91 = scmp.eq.s32.totalorder %s18, 1
      %p92 = scmp.ne.s32.totalorder %s87, %s89
      %p93 = scmp.eq.s32.totalorder %s18, 0
      %p94 = por %p92, %p93
      %p95 = scmp.ne.s32.totalorder %s87, %s89
      %p96 = scmp.eq.s32.totalorder %s23, 1
      %p97 = por %p95, %p96
      %p98 = scmp.ne.s32.totalorder %s89, %s90
      %p99 = scmp.eq.s32.totalorder %s23, 0
      %p100 = por %p98, %p99
      %p101 = scmp.ne.s32.totalorder %s89, %s90
      %p102 = scmp.eq.s32.totalorder %s24, 1
      %p103 = por %p101, %p102
      %p105 = scmp.ne.s32.totalorder %s90, %s104
      %p106 = scmp.eq.s32.totalorder %s24, 0
      %p107 = por %p105, %p106
      %s109 = sadd.s32 %s108, 1
      %p112 = scmp.eq.s32.totalorder %s18, 1
      %p113 = scmp.ne.s32.totalorder %s108, %s110
      %p114 = scmp.eq.s32.totalorder %s18, 0
      %p115 = por %p113, %p114
      %p116 = scmp.ne.s32.totalorder %s108, %s110
      %p117 = scmp.eq.s32.totalorder %s23, 1
      %p118 = por %p116, %p117
      %p119 = scmp.ne.s32.totalorder %s110, %s111
      %p120 = scmp.eq.s32.totalorder %s23, 0
      %p121 = por %p119, %p120
      %p122 = scmp.ne.s32.totalorder %s110, %s111
      %p123 = scmp.eq.s32.totalorder %s24, 1
      %p124 = por %p122, %p123
      %p126 = scmp.ne.s32.totalorder %s111, %s125
      %p127 = scmp.eq.s32.totalorder %s24, 0
      %p128 = por %p126, %p127
      %s129 = ssub.s32 %s26, %s33
      %s130 = ssub.s32 %s25, %s37
      %s131 = sor.u32 %s129, %s130
      %p132 = scmp.eq.s32.totalorder %s131, 0
      %s134 = sadd.s32 %s133, 1
      %s135 = scalar_select %p132, %s133, %s134
      %p138 = pneg %p132
      %p139 = scmp.eq.s32.totalorder %s18, 1
      %p140 = por %p138, %p139
      %p141 = scmp.ne.s32.totalorder %s133, %s136
      %p142 = scmp.eq.s32.totalorder %s18, 0
      %p143 = por %p141, %p142
      %p144 = scmp.ne.s32.totalorder %s133, %s136
      %p145 = scmp.eq.s32.totalorder %s23, 1
      %p146 = por %p144, %p145
      %p147 = scmp.ne.s32.totalorder %s136, %s137
      %p148 = scmp.eq.s32.totalorder %s23, 0
      %p149 = por %p147, %p148
      %p150 = scmp.ne.s32.totalorder %s136, %s137
      %p151 = scmp.eq.s32.totalorder %s24, 1
      %p152 = por %p150, %p151
      %p154 = scmp.ne.s32.totalorder %s137, %s153
      %p155 = scmp.eq.s32.totalorder %s24, 0
      %p156 = por %p154, %p155
      %p157 = scmp.le.s32.totalorder 1, %s18
      %p158 = scmp.lt.s32.totalorder %s18, 3
      %p159 = pnand %p157, %p158
      %p160 = pneg %p159
      // Predicated region
      $region9: #{tpu_custom_call.1} parent=5 // pred_check
        _
      $region10: #{tpu_custom_call.1} parent=5 // pred_check_branch
        %162 = sbr.rel (%p159) target = $region12
      $region11: #{tpu_custom_call.1} parent=5 // pred_region
        %s163 = ssub.s32 %s18, 1
        // Predicated region
        $region13: #{tpu_custom_call.1} parent=11 // pred_check
          %p164 = pneg %p79
        $region14: #{tpu_custom_call.1} parent=11 // pred_check_branch
          %166 = sbr.rel (%p164) target = $region16
        $region15: #{tpu_custom_call.1} parent=11 // pred_region
          %168 = vsyncadd [#allocation9], 0
          %s169 = sshll.u32 %s1, 4
          %s170 = int_to_ptr.hbm [resolvable:$true] %s169
          %s171 = sshll.u32 [#allocation8], 4
          %s172 = int_to_ptr.vmem [resolvable:$true] %s171
          %177 = dma.hbm_to_vmem [thread:$0]  %s170, 4096, %s172, [#allocation9], 256, 256, 16
        $region16: #{tpu_custom_call.1} parent=11 // pred_fallthru
          _
        // Predicated region
        $region17: #{tpu_custom_call.1} parent=11 // pred_check
          %p178 = pneg %p100
        $region18: #{tpu_custom_call.1} parent=11 // pred_check_branch
          %180 = sbr.rel (%p178) target = $region20
        $region19: #{tpu_custom_call.1} parent=11 // pred_region
          %182 = vsyncadd [#allocation9], 0
          %s184 = sshll.u32 %s2, 4
          %s185 = int_to_ptr.hbm [resolvable:$true] %s184
          %s186 = sshll.u32 [#allocation10], 4
          %s187 = int_to_ptr.vmem [resolvable:$true] %s186
          %189 = dma.hbm_to_vmem [thread:$0]  %s185, 64, %s187, [#allocation9]
        $region20: #{tpu_custom_call.1} parent=11 // pred_fallthru
          _
        // Predicated region
        $region21: #{tpu_custom_call.1} parent=11 // pred_check
          %p190 = pneg %p121
        $region22: #{tpu_custom_call.1} parent=11 // pred_check_branch
          %192 = sbr.rel (%p190) target = $region24
        $region23: #{tpu_custom_call.1} parent=11 // pred_region
          %194 = vsyncadd [#allocation12], 0
          %s195 = sshll.u32 %s3, 4
          %s196 = int_to_ptr.hbm [resolvable:$true] %s195
          %s197 = sshll.u32 [#allocation11], 4
          %s198 = int_to_ptr.vmem [resolvable:$true] %s197
          %203 = dma.hbm_to_vmem [thread:$0]  %s196, 4096, %s198, [#allocation12], 256, 256, 16
        $region24: #{tpu_custom_call.1} parent=11 // pred_fallthru
          _
      $region12: #{tpu_custom_call.1} parent=5 // pred_fallthru
        _
      %p204 = scmp.lt.s32.totalorder %s18, 2
      // Predicated region
      $region25: #{tpu_custom_call.1} parent=5 // pred_check
        %p205 = pneg %p204
      $region26: #{tpu_custom_call.1} parent=5 // pred_check_branch
        %207 = sbr.rel (%p205) target = $region28
      $region27: #{tpu_custom_call.1} parent=5 // pred_region
        // Predicated region
        $region29: #{tpu_custom_call.1} parent=27 // pred_check
          %p208 = pneg %p52
        $region30: #{tpu_custom_call.1} parent=27 // pred_check_branch
          %210 = sbr.rel (%p208) target = $region32
        $region31: #{tpu_custom_call.1} parent=27 // pred_region
          %s211 = sand.u32 %s42, 1
          %s212 = scalar_lea.sflag [#allocation6], %s211
          %s213 = sand.u32 %s42, 1
          %s214 = smul.addr %s213, 64
          %s215 = scalar_lea.vmem [#allocation5], %s214
          %s216 = smul.u32 8, %s26
          %s217 = smul.u32 2, %s25
          %219 = vsyncadd %s212, 0
          %s220 = smul.addr %s216, 2
          %s221 = sadd.s32 %s217, %s220
          %s222 = smul.addr %s221, 4
          %s223 = scalar_lea.hbm %s0, %s222
          %s224 = sshll.u32 %s223, 4
          %s225 = int_to_ptr.hbm [resolvable:$true] %s224
          %s226 = sshll.u32 %s215, 4
          %s227 = int_to_ptr.vmem [resolvable:$true] %s226
          %232 = dma.hbm_to_vmem [thread:$0]  %s225, 1024, %s227, %s212, 64, 64, 4
        $region32: #{tpu_custom_call.1} parent=27 // pred_fallthru
          _
      $region28: #{tpu_custom_call.1} parent=5 // pred_fallthru
        _
      %p233 = scmp.le.s32.totalorder 1, %s18
      %p234 = scmp.lt.s32.totalorder %s18, 3
      %p235 = pnand %p233, %p234
      %p236 = pneg %p235
      // Predicated region
      $region33: #{tpu_custom_call.1} parent=5 // pred_check
        _
      $region34: #{tpu_custom_call.1} parent=5 // pred_check_branch
        %238 = sbr.rel (%p235) target = $region36
      $region35: #{tpu_custom_call.1} parent=5 // pred_region
        %s239 = ssub.s32 %s18, 1
        %s240 = sand.u32 %s45, 1
        %s241 = scalar_lea.sflag [#allocation6], %s240
        %s242 = sand.u32 %s45, 1
        %s243 = smul.addr %s242, 64
        %s244 = scalar_lea.vmem [#allocation5], %s243
        // Predicated region
        $region37: #{tpu_custom_call.1} parent=35 // pred_check
          %p245 = pneg %p58
        $region38: #{tpu_custom_call.1} parent=35 // pred_check_branch
          %247 = sbr.rel (%p245) target = $region40
        $region39: #{tpu_custom_call.1} parent=35 // pred_region
          %249 = dma.done %s241, 1024
        $region40: #{tpu_custom_call.1} parent=35 // pred_fallthru
          _
        // Predicated region
        $region41: #{tpu_custom_call.1} parent=35 // pred_check
          %p250 = pneg %p79
        $region42: #{tpu_custom_call.1} parent=35 // pred_check_branch
          %252 = sbr.rel (%p250) target = $region44
        $region43: #{tpu_custom_call.1} parent=35 // pred_region
          %254 = dma.done [#allocation9], 4096
        $region44: #{tpu_custom_call.1} parent=35 // pred_fallthru
          _
        // Predicated region
        $region45: #{tpu_custom_call.1} parent=35 // pred_check
          %p255 = pneg %p100
        $region46: #{tpu_custom_call.1} parent=35 // pred_check_branch
          %257 = sbr.rel (%p255) target = $region48
        $region47: #{tpu_custom_call.1} parent=35 // pred_region
          %259 = dma.done [#allocation9], 64
        $region48: #{tpu_custom_call.1} parent=35 // pred_fallthru
          _
        // Predicated region
        $region49: #{tpu_custom_call.1} parent=35 // pred_check
          %p260 = pneg %p121
        $region50: #{tpu_custom_call.1} parent=35 // pred_check_branch
          %262 = sbr.rel (%p260) target = $region52
        $region51: #{tpu_custom_call.1} parent=35 // pred_region
          %264 = dma.done [#allocation12], 4096
        $region52: #{tpu_custom_call.1} parent=35 // pred_fallthru
          _
        %s265 = sand.u32 %s45, 1
        %s266 = scalar_lea.sflag [#allocation6], %s265
        %s267 = sand.u32 %s45, 1
        %s268 = smul.addr %s267, 64
        %s269 = scalar_lea.vmem [#allocation5], %s268
        %p270 = pneg %p58
        %p271 = pneg %p55
        %p272 = pneg %p79
        %p273 = pneg %p76
        %p274 = pneg %p100
        %p275 = pneg %p97
        %p276 = pneg %p121
        %p277 = pneg %p118
        %p278 = pneg %p149
        %p279 = pneg %p146
        %s280 = sand.u32 %s136, 1
        %s281 = scalar_lea.sflag [#allocation7], %s280
        %s282 = sand.u32 %s136, 1
        %s283 = smul.addr %s282, 64
        %s284 = scalar_lea.vmem [#allocation13], %s283
        %s285 = smul.u32 8, %s28
        %s286 = smul.u32 2, %s27
        %s287 = smul.u32 8, %s28
        %s288 = smul.u32 2, %s27
        %p289 = scmp.eq.s32.totalorder %s28, 0
        // Predicated region
        $region53: #{tpu_custom_call.1} parent=35 // pred_check
          %p290 = pneg %p289
        $region54: #{tpu_custom_call.1} parent=35 // pred_check_branch
          %292 = sbr.rel (%p290) target = $region56
        $region55: #{tpu_custom_call.1} parent=35 // pred_region
          %293 = vst [vmem:[#allocation2] sm:$0xff] 0.0
          %294 = vst [vmem:[#allocation2 + $0x8] sm:$0xff] 0.0
          %295 = vst [vmem:[#allocation3] sm:$0xff] 0.0
          %296 = vst [vmem:[#allocation3 + $0x8] sm:$0xff] 0.0
        $region56: #{tpu_custom_call.1} parent=35 // pred_fallthru
          _
        %v297 = vld [vmem:[%s244] sm:$0xf]
        %v298 = vld [vmem:[%s244 + $0x4] sm:$0xf]
        %v299 = vld [vmem:[%s244 + $0x8] sm:$0xf]
        %v300 = vld [vmem:[%s244 + $0xc] sm:$0xf]
        %v301 = vld [vmem:[%s244 + $0x10] sm:$0xf]
        %v302 = vld [vmem:[%s244 + $0x14] sm:$0xf]
        %v303 = vld [vmem:[%s244 + $0x18] sm:$0xf]
        %v304 = vld [vmem:[%s244 + $0x1c] sm:$0xf]
        %v305 = vld [vmem:[%s244 + $0x20] sm:$0xf]
        %v306 = vld [vmem:[%s244 + $0x24] sm:$0xf]
        %v307 = vld [vmem:[%s244 + $0x28] sm:$0xf]
        %v308 = vld [vmem:[%s244 + $0x2c] sm:$0xf]
        %v309 = vld [vmem:[%s244 + $0x30] sm:$0xf]
        %v310 = vld [vmem:[%s244 + $0x34] sm:$0xf]
        %v311 = vld [vmem:[%s244 + $0x38] sm:$0xf]
        %v312 = vld [vmem:[%s244 + $0x3c] sm:$0xf]
        %v313 = vld [vmem:[#allocation8] sm:$0xff]
        %v314 = vld [vmem:[#allocation8 + $0x8] sm:$0xff]
        %v315 = vld [vmem:[#allocation8 + $0x10] sm:$0xff]
        %v316 = vld [vmem:[#allocation8 + $0x18] sm:$0xff]
        %v317 = vld [vmem:[#allocation8 + $0x20] sm:$0xff]
        %v318 = vld [vmem:[#allocation8 + $0x28] sm:$0xff]
        %v319 = vld [vmem:[#allocation8 + $0x30] sm:$0xff]
        %v320 = vld [vmem:[#allocation8 + $0x38] sm:$0xff]
        %v321 = vld [vmem:[#allocation8 + $0x40] sm:$0xff]
        %v322 = vld [vmem:[#allocation8 + $0x48] sm:$0xff]
        %v323 = vld [vmem:[#allocation8 + $0x50] sm:$0xff]
        %v324 = vld [vmem:[#allocation8 + $0x58] sm:$0xff]
        %v325 = vld [vmem:[#allocation8 + $0x60] sm:$0xff]
        %v326 = vld [vmem:[#allocation8 + $0x68] sm:$0xff]
        %v327 = vld [vmem:[#allocation8 + $0x70] sm:$0xff]
        %v328 = vld [vmem:[#allocation8 + $0x78] sm:$0xff]
        %v329 = vld [vmem:[#allocation8 + $0x80] sm:$0xff]
        %v330 = vld [vmem:[#allocation8 + $0x88] sm:$0xff]
        %v331 = vld [vmem:[#allocation8 + $0x90] sm:$0xff]
        %v332 = vld [vmem:[#allocation8 + $0x98] sm:$0xff]
        %v333 = vld [vmem:[#allocation8 + $0xa0] sm:$0xff]
        %v334 = vld [vmem:[#allocation8 + $0xa8] sm:$0xff]
        %v335 = vld [vmem:[#allocation8 + $0xb0] sm:$0xff]
        %v336 = vld [vmem:[#allocation8 + $0xb8] sm:$0xff]
        %v337 = vld [vmem:[#allocation8 + $0xc0] sm:$0xff]
        %v338 = vld [vmem:[#allocation8 + $0xc8] sm:$0xff]
        %v339 = vld [vmem:[#allocation8 + $0xd0] sm:$0xff]
        %v340 = vld [vmem:[#allocation8 + $0xd8] sm:$0xff]
        %v341 = vld [vmem:[#allocation8 + $0xe0] sm:$0xff]
        %v342 = vld [vmem:[#allocation8 + $0xe8] sm:$0xff]
        %v343 = vld [vmem:[#allocation8 + $0xf0] sm:$0xff]
        %v344 = vld [vmem:[#allocation8 + $0xf8] sm:$0xff]
        %v345 = vld [vmem:[#allocation10] sm:$0xf]
        %v347 = vperm.slane %v345, 0
        %v348 = vperm.slane %v345, 1
        %v349 = vperm.slane %v345, 2
        %v350 = vperm.slane %v345, 3
        %v371 = vunpack.c.l.b16 %v297
        %v372 = vunpack.c.l.b16 %v298
        %v373 = vunpack.c.l.b16 %v299
        %v374 = vunpack.c.l.b16 %v300
        %v375 = vunpack.c.l.b16 %v301
        %v376 = vunpack.c.l.b16 %v302
        %v377 = vunpack.c.l.b16 %v303
        %v378 = vunpack.c.l.b16 %v304
        %v379 = vunpack.c.l.b16 %v305
        %v380 = vunpack.c.l.b16 %v306
        %v381 = vunpack.c.l.b16 %v307
        %v382 = vunpack.c.l.b16 %v308
        %v383 = vunpack.c.l.b16 %v309
        %v384 = vunpack.c.l.b16 %v310
        %v385 = vunpack.c.l.b16 %v311
        %v386 = vunpack.c.l.b16 %v312
        %v387 = vpack.c.b16 %v372, %v371
        %v388 = vpack.c.b16 %v374, %v373
        %v389 = vpack.c.b16 %v376, %v375
        %v390 = vpack.c.b16 %v378, %v377
        %v391 = vpack.c.b16 %v380, %v379
        %v392 = vpack.c.b16 %v382, %v381
        %v393 = vpack.c.b16 %v384, %v383
        %v394 = vpack.c.b16 %v386, %v385
        %v435 = vunpack.c.l.b16 %v313
        %v436 = vunpack.c.h.b16 %v313
        %v437 = vunpack.c.l.b16 %v314
        %v438 = vunpack.c.h.b16 %v314
        %v439 = vunpack.c.l.b16 %v315
        %v440 = vunpack.c.h.b16 %v315
        %v441 = vunpack.c.l.b16 %v316
        %v442 = vunpack.c.h.b16 %v316
        %v443 = vunpack.c.l.b16 %v317
        %v444 = vunpack.c.h.b16 %v317
        %v445 = vunpack.c.l.b16 %v318
        %v446 = vunpack.c.h.b16 %v318
        %v447 = vunpack.c.l.b16 %v319
        %v448 = vunpack.c.h.b16 %v319
        %v449 = vunpack.c.l.b16 %v320
        %v450 = vunpack.c.h.b16 %v320
        %v451 = vunpack.c.l.b16 %v321
        %v452 = vunpack.c.h.b16 %v321
        %v453 = vunpack.c.l.b16 %v322
        %v454 = vunpack.c.h.b16 %v322
        %v455 = vunpack.c.l.b16 %v323
        %v456 = vunpack.c.h.b16 %v323
        %v457 = vunpack.c.l.b16 %v324
        %v458 = vunpack.c.h.b16 %v324
        %v459 = vunpack.c.l.b16 %v325
        %v460 = vunpack.c.h.b16 %v325
        %v461 = vunpack.c.l.b16 %v326
        %v462 = vunpack.c.h.b16 %v326
        %v463 = vunpack.c.l.b16 %v327
        %v464 = vunpack.c.h.b16 %v327
        %v465 = vunpack.c.l.b16 %v328
        %v466 = vunpack.c.h.b16 %v328
        %v467 = vunpack.c.l.b16 %v329
        %v468 = vunpack.c.h.b16 %v329
        %v469 = vunpack.c.l.b16 %v330
        %v470 = vunpack.c.h.b16 %v330
        %v471 = vunpack.c.l.b16 %v331
        %v472 = vunpack.c.h.b16 %v331
        %v473 = vunpack.c.l.b16 %v332
        %v474 = vunpack.c.h.b16 %v332
        %v475 = vunpack.c.l.b16 %v333
        %v476 = vunpack.c.h.b16 %v333
        %v477 = vunpack.c.l.b16 %v334
        %v478 = vunpack.c.h.b16 %v334
        %v479 = vunpack.c.l.b16 %v335
        %v480 = vunpack.c.h.b16 %v335
        %v481 = vunpack.c.l.b16 %v336
        %v482 = vunpack.c.h.b16 %v336
        %v483 = vunpack.c.l.b16 %v337
        %v484 = vunpack.c.h.b16 %v337
        %v485 = vunpack.c.l.b16 %v338
        %v486 = vunpack.c.h.b16 %v338
        %v487 = vunpack.c.l.b16 %v339
        %v488 = vunpack.c.h.b16 %v339
        %v489 = vunpack.c.l.b16 %v340
        %v490 = vunpack.c.h.b16 %v340
        %v491 = vunpack.c.l.b16 %v341
        %v492 = vunpack.c.h.b16 %v341
        %v493 = vunpack.c.l.b16 %v342
        %v494 = vunpack.c.h.b16 %v342
        %v495 = vunpack.c.l.b16 %v343
        %v496 = vunpack.c.h.b16 %v343
        %v497 = vunpack.c.l.b16 %v344
        %v498 = vunpack.c.h.b16 %v344
        %v499 = vpack.c.b16 %v439, %v435
        %v500 = vpack.c.b16 %v440, %v436
        %v501 = vpack.c.b16 %v441, %v437
        %v502 = vpack.c.b16 %v442, %v438
        %v503 = vpack.c.b16 %v447, %v443
        %v504 = vpack.c.b16 %v448, %v444
        %v505 = vpack.c.b16 %v449, %v445
        %v506 = vpack.c.b16 %v450, %v446
        %v507 = vpack.c.b16 %v455, %v451
        %v508 = vpack.c.b16 %v456, %v452
        %v509 = vpack.c.b16 %v457, %v453
        %v510 = vpack.c.b16 %v458, %v454
        %v511 = vpack.c.b16 %v463, %v459
        %v512 = vpack.c.b16 %v464, %v460
        %v513 = vpack.c.b16 %v465, %v461
        %v514 = vpack.c.b16 %v466, %v462
        %v515 = vpack.c.b16 %v471, %v467
        %v516 = vpack.c.b16 %v472, %v468
        %v517 = vpack.c.b16 %v473, %v469
        %v518 = vpack.c.b16 %v474, %v470
        %v519 = vpack.c.b16 %v479, %v475
        %v520 = vpack.c.b16 %v480, %v476
        %v521 = vpack.c.b16 %v481, %v477
        %v522 = vpack.c.b16 %v482, %v478
        %v523 = vpack.c.b16 %v487, %v483
        %v524 = vpack.c.b16 %v488, %v484
        %v525 = vpack.c.b16 %v489, %v485
        %v526 = vpack.c.b16 %v490, %v486
        %v527 = vpack.c.b16 %v495, %v491
        %v528 = vpack.c.b16 %v496, %v492
        %v529 = vpack.c.b16 %v497, %v493
        %v530 = vpack.c.b16 %v498, %v494
        %563 = vmatpush.bf16.msra.mxu0 %v527
        %564 = vmatpush.bf16.msra.mxu0 %v523
        %565 = vmatpush.bf16.msra.mxu0 %v519
        %566 = vmatpush.bf16.msra.mxu0 %v515
        %567 = vmatpush.bf16.msra.mxu0 %v511
        %568 = vmatpush.bf16.msra.mxu0 %v507
        %569 = vmatpush.bf16.msra.mxu0 %v503
        %570 = vmatpush.bf16.msra.mxu0 %v499
        %571 = vmatmul.bf16.gmra.mxu0 %v387
        %v572 = vpop.f32.mrf.mxu0
        %v573 = vadd.f32 %v347, %v572
        %v574 = vpop.f32.mrf.mxu0
        %v575 = vadd.f32 %v347, %v574
        %576 = vmatmul.bf16.gmra.mxu0 %v388
        %v577 = vpop.f32.mrf.mxu0
        %v578 = vadd.f32 %v347, %v577
        %v579 = vpop.f32.mrf.mxu0
        %v580 = vadd.f32 %v347, %v579
        %581 = vmatmul.bf16.gmra.mxu0 %v389
        %v582 = vpop.f32.mrf.mxu0
        %v583 = vadd.f32 %v347, %v582
        %v584 = vpop.f32.mrf.mxu0
        %v585 = vadd.f32 %v347, %v584
        %586 = vmatmul.bf16.gmra.mxu0 %v390
        %v587 = vpop.f32.mrf.mxu0
        %v588 = vadd.f32 %v347, %v587
        %v589 = vpop.f32.mrf.mxu0
        %v590 = vadd.f32 %v347, %v589
        %591 = vmatmul.bf16.gmra.mxu0 %v391
        %v592 = vpop.f32.mrf.mxu0
        %v593 = vadd.f32 %v347, %v592
        %v594 = vpop.f32.mrf.mxu0
        %v595 = vadd.f32 %v347, %v594
        %596 = vmatmul.bf16.gmra.mxu0 %v392
        %v597 = vpop.f32.mrf.mxu0
        %v598 = vadd.f32 %v347, %v597
        %v599 = vpop.f32.mrf.mxu0
        %v600 = vadd.f32 %v347, %v599
        %601 = vmatmul.bf16.gmra.mxu0 %v393
        %v602 = vpop.f32.mrf.mxu0
        %v603 = vadd.f32 %v347, %v602
        %v604 = vpop.f32.mrf.mxu0
        %v605 = vadd.f32 %v347, %v604
        %606 = vmatmul.bf16.gmra.mxu0 %v394
        %v607 = vpop.f32.mrf.mxu0
        %v608 = vadd.f32 %v347, %v607
        %v609 = vpop.f32.mrf.mxu0
        %v610 = vadd.f32 %v347, %v609
        %611 = vdwg.mxu0
        %612 = vmatpush.bf16.msra.mxu0 %v528
        %613 = vmatpush.bf16.msra.mxu0 %v524
        %614 = vmatpush.bf16.msra.mxu0 %v520
        %615 = vmatpush.bf16.msra.mxu0 %v516
        %616 = vmatpush.bf16.msra.mxu0 %v512
        %617 = vmatpush.bf16.msra.mxu0 %v508
        %618 = vmatpush.bf16.msra.mxu0 %v504
        %619 = vmatpush.bf16.msra.mxu0 %v500
        %620 = vmatmul.bf16.gmra.mxu0 %v387
        %v621 = vpop.f32.mrf.mxu0
        %v622 = vadd.f32 %v348, %v621
        %v623 = vpop.f32.mrf.mxu0
        %v624 = vadd.f32 %v348, %v623
        %625 = vmatmul.bf16.gmra.mxu0 %v388
        %v626 = vpop.f32.mrf.mxu0
        %v627 = vadd.f32 %v348, %v626
        %v628 = vpop.f32.mrf.mxu0
        %v629 = vadd.f32 %v348, %v628
        %630 = vmatmul.bf16.gmra.mxu0 %v389
        %v631 = vpop.f32.mrf.mxu0
        %v632 = vadd.f32 %v348, %v631
        %v633 = vpop.f32.mrf.mxu0
        %v634 = vadd.f32 %v348, %v633
        %635 = vmatmul.bf16.gmra.mxu0 %v390
        %v636 = vpop.f32.mrf.mxu0
        %v637 = vadd.f32 %v348, %v636
        %v638 = vpop.f32.mrf.mxu0
        %v639 = vadd.f32 %v348, %v638
        %640 = vmatmul.bf16.gmra.mxu0 %v391
        %v641 = vpop.f32.mrf.mxu0
        %v642 = vadd.f32 %v348, %v641
        %v643 = vpop.f32.mrf.mxu0
        %v644 = vadd.f32 %v348, %v643
        %645 = vmatmul.bf16.gmra.mxu0 %v392
        %v646 = vpop.f32.mrf.mxu0
        %v647 = vadd.f32 %v348, %v646
        %v648 = vpop.f32.mrf.mxu0
        %v649 = vadd.f32 %v348, %v648
        %650 = vmatmul.bf16.gmra.mxu0 %v393
        %v651 = vpop.f32.mrf.mxu0
        %v652 = vadd.f32 %v348, %v651
        %v653 = vpop.f32.mrf.mxu0
        %v654 = vadd.f32 %v348, %v653
        %655 = vmatmul.bf16.gmra.mxu0 %v394
        %v656 = vpop.f32.mrf.mxu0
        %v657 = vadd.f32 %v348, %v656
        %v658 = vpop.f32.mrf.mxu0
        %v659 = vadd.f32 %v348, %v658
        %660 = vdwg.mxu0
        %661 = vmatpush.bf16.msra.mxu0 %v529
        %662 = vmatpush.bf16.msra.mxu0 %v525
        %663 = vmatpush.bf16.msra.mxu0 %v521
        %664 = vmatpush.bf16.msra.mxu0 %v517
        %665 = vmatpush.bf16.msra.mxu0 %v513
        %666 = vmatpush.bf16.msra.mxu0 %v509
        %667 = vmatpush.bf16.msra.mxu0 %v505
        %668 = vmatpush.bf16.msra.mxu0 %v501
        %669 = vmatmul.bf16.gmra.mxu0 %v387
        %v670 = vpop.f32.mrf.mxu0
        %v671 = vadd.f32 %v349, %v670
        %v672 = vpop.f32.mrf.mxu0
        %v673 = vadd.f32 %v349, %v672
        %674 = vmatmul.bf16.gmra.mxu0 %v388
        %v675 = vpop.f32.mrf.mxu0
        %v676 = vadd.f32 %v349, %v675
        %v677 = vpop.f32.mrf.mxu0
        %v678 = vadd.f32 %v349, %v677
        %679 = vmatmul.bf16.gmra.mxu0 %v389
        %v680 = vpop.f32.mrf.mxu0
        %v681 = vadd.f32 %v349, %v680
        %v682 = vpop.f32.mrf.mxu0
        %v683 = vadd.f32 %v349, %v682
        %684 = vmatmul.bf16.gmra.mxu0 %v390
        %v685 = vpop.f32.mrf.mxu0
        %v686 = vadd.f32 %v349, %v685
        %v687 = vpop.f32.mrf.mxu0
        %v688 = vadd.f32 %v349, %v687
        %689 = vmatmul.bf16.gmra.mxu0 %v391
        %v690 = vpop.f32.mrf.mxu0
        %v691 = vadd.f32 %v349, %v690
        %v692 = vpop.f32.mrf.mxu0
        %v693 = vadd.f32 %v349, %v692
        %694 = vmatmul.bf16.gmra.mxu0 %v392
        %v695 = vpop.f32.mrf.mxu0
        %v696 = vadd.f32 %v349, %v695
        %v697 = vpop.f32.mrf.mxu0
        %v698 = vadd.f32 %v349, %v697
        %699 = vmatmul.bf16.gmra.mxu0 %v393
        %v700 = vpop.f32.mrf.mxu0
        %v701 = vadd.f32 %v349, %v700
        %v702 = vpop.f32.mrf.mxu0
        %v703 = vadd.f32 %v349, %v702
        %704 = vmatmul.bf16.gmra.mxu0 %v394
        %v705 = vpop.f32.mrf.mxu0
        %v706 = vadd.f32 %v349, %v705
        %v707 = vpop.f32.mrf.mxu0
        %v708 = vadd.f32 %v349, %v707
        %709 = vdwg.mxu0
        %710 = vmatpush.bf16.msra.mxu0 %v530
        %711 = vmatpush.bf16.msra.mxu0 %v526
        %712 = vmatpush.bf16.msra.mxu0 %v522
        %713 = vmatpush.bf16.msra.mxu0 %v518
        %714 = vmatpush.bf16.msra.mxu0 %v514
        %715 = vmatpush.bf16.msra.mxu0 %v510
        %716 = vmatpush.bf16.msra.mxu0 %v506
        %717 = vmatpush.bf16.msra.mxu0 %v502
        %718 = vmatmul.bf16.gmra.mxu0 %v387
        %v719 = vpop.f32.mrf.mxu0
        %v720 = vadd.f32 %v350, %v719
        %v721 = vpop.f32.mrf.mxu0
        %v722 = vadd.f32 %v350, %v721
        %723 = vmatmul.bf16.gmra.mxu0 %v388
        %v724 = vpop.f32.mrf.mxu0
        %v725 = vadd.f32 %v350, %v724
        %v726 = vpop.f32.mrf.mxu0
        %v727 = vadd.f32 %v350, %v726
        %728 = vmatmul.bf16.gmra.mxu0 %v389
        %v729 = vpop.f32.mrf.mxu0
        %v730 = vadd.f32 %v350, %v729
        %v731 = vpop.f32.mrf.mxu0
        %v732 = vadd.f32 %v350, %v731
        %733 = vmatmul.bf16.gmra.mxu0 %v390
        %v734 = vpop.f32.mrf.mxu0
        %v735 = vadd.f32 %v350, %v734
        %v736 = vpop.f32.mrf.mxu0
        %v737 = vadd.f32 %v350, %v736
        %738 = vmatmul.bf16.gmra.mxu0 %v391
        %v739 = vpop.f32.mrf.mxu0
        %v740 = vadd.f32 %v350, %v739
        %v741 = vpop.f32.mrf.mxu0
        %v742 = vadd.f32 %v350, %v741
        %743 = vmatmul.bf16.gmra.mxu0 %v392
        %v744 = vpop.f32.mrf.mxu0
        %v745 = vadd.f32 %v350, %v744
        %v746 = vpop.f32.mrf.mxu0
        %v747 = vadd.f32 %v350, %v746
        %748 = vmatmul.bf16.gmra.mxu0 %v393
        %v749 = vpop.f32.mrf.mxu0
        %v750 = vadd.f32 %v350, %v749
        %v751 = vpop.f32.mrf.mxu0
        %v752 = vadd.f32 %v350, %v751
        %753 = vmatmul.bf16.gmra.mxu0 %v394
        %v754 = vpop.f32.mrf.mxu0
        %v755 = vadd.f32 %v350, %v754
        %v756 = vpop.f32.mrf.mxu0
        %v757 = vadd.f32 %v350, %v756
        %758 = vdwg.mxu0
        %759 = vst [vmem:[#allocation4] sm:$0xff] %v573
        %760 = vst [vmem:[#allocation4 + $0x8] sm:$0xff] %v622
        %761 = vst [vmem:[#allocation4 + $0x10] sm:$0xff] %v671
        %762 = vst [vmem:[#allocation4 + $0x18] sm:$0xff] %v720
        %763 = vst [vmem:[#allocation4 + $0x20] sm:$0xff] %v575
        %764 = vst [vmem:[#allocation4 + $0x28] sm:$0xff] %v624
        %765 = vst [vmem:[#allocation4 + $0x30] sm:$0xff] %v673
        %766 = vst [vmem:[#allocation4 + $0x38] sm:$0xff] %v722
        %767 = vst [vmem:[#allocation4 + $0x40] sm:$0xff] %v578
        %768 = vst [vmem:[#allocation4 + $0x48] sm:$0xff] %v627
        %769 = vst [vmem:[#allocation4 + $0x50] sm:$0xff] %v676
        %770 = vst [vmem:[#allocation4 + $0x58] sm:$0xff] %v725
        %771 = vst [vmem:[#allocation4 + $0x60] sm:$0xff] %v580
        %772 = vst [vmem:[#allocation4 + $0x68] sm:$0xff] %v629
        %773 = vst [vmem:[#allocation4 + $0x70] sm:$0xff] %v678
        %774 = vst [vmem:[#allocation4 + $0x78] sm:$0xff] %v727
        %775 = vst [vmem:[#allocation4 + $0x80] sm:$0xff] %v583
        %776 = vst [vmem:[#allocation4 + $0x88] sm:$0xff] %v632
        %777 = vst [vmem:[#allocation4 + $0x90] sm:$0xff] %v681
        %778 = vst [vmem:[#allocation4 + $0x98] sm:$0xff] %v730
        %779 = vst [vmem:[#allocation4 + $0xa0] sm:$0xff] %v585
        %780 = vst [vmem:[#allocation4 + $0xa8] sm:$0xff] %v634
        %781 = vst [vmem:[#allocation4 + $0xb0] sm:$0xff] %v683
        %782 = vst [vmem:[#allocation4 + $0xb8] sm:$0xff] %v732
        %783 = vst [vmem:[#allocation4 + $0xc0] sm:$0xff] %v588
        %784 = vst [vmem:[#allocation4 + $0xc8] sm:$0xff] %v637
        %785 = vst [vmem:[#allocation4 + $0xd0] sm:$0xff] %v686
        %786 = vst [vmem:[#allocation4 + $0xd8] sm:$0xff] %v735
        %787 = vst [vmem:[#allocation4 + $0xe0] sm:$0xff] %v590
        %788 = vst [vmem:[#allocation4 + $0xe8] sm:$0xff] %v639
        %789 = vst [vmem:[#allocation4 + $0xf0] sm:$0xff] %v688
        %790 = vst [vmem:[#allocation4 + $0xf8] sm:$0xff] %v737
        %791 = vst [vmem:[#allocation4 + $0x100] sm:$0xff] %v593
        %792 = vst [vmem:[#allocation4 + $0x108] sm:$0xff] %v642
        %793 = vst [vmem:[#allocation4 + $0x110] sm:$0xff] %v691
        %794 = vst [vmem:[#allocation4 + $0x118] sm:$0xff] %v740
        %795 = vst [vmem:[#allocation4 + $0x120] sm:$0xff] %v595
        %796 = vst [vmem:[#allocation4 + $0x128] sm:$0xff] %v644
        %797 = vst [vmem:[#allocation4 + $0x130] sm:$0xff] %v693
        %798 = vst [vmem:[#allocation4 + $0x138] sm:$0xff] %v742
        %799 = vst [vmem:[#allocation4 + $0x140] sm:$0xff] %v598
        %800 = vst [vmem:[#allocation4 + $0x148] sm:$0xff] %v647
        %801 = vst [vmem:[#allocation4 + $0x150] sm:$0xff] %v696
        %802 = vst [vmem:[#allocation4 + $0x158] sm:$0xff] %v745
        %803 = vst [vmem:[#allocation4 + $0x160] sm:$0xff] %v600
        %804 = vst [vmem:[#allocation4 + $0x168] sm:$0xff] %v649
        %805 = vst [vmem:[#allocation4 + $0x170] sm:$0xff] %v698
        %806 = vst [vmem:[#allocation4 + $0x178] sm:$0xff] %v747
        %807 = vst [vmem:[#allocation4 + $0x180] sm:$0xff] %v603
        %808 = vst [vmem:[#allocation4 + $0x188] sm:$0xff] %v652
        %809 = vst [vmem:[#allocation4 + $0x190] sm:$0xff] %v701
        %810 = vst [vmem:[#allocation4 + $0x198] sm:$0xff] %v750
        %811 = vst [vmem:[#allocation4 + $0x1a0] sm:$0xff] %v605
        %812 = vst [vmem:[#allocation4 + $0x1a8] sm:$0xff] %v654
        %813 = vst [vmem:[#allocation4 + $0x1b0] sm:$0xff] %v703
        %814 = vst [vmem:[#allocation4 + $0x1b8] sm:$0xff] %v752
        %815 = vst [vmem:[#allocation4 + $0x1c0] sm:$0xff] %v608
        %816 = vst [vmem:[#allocation4 + $0x1c8] sm:$0xff] %v657
        %817 = vst [vmem:[#allocation4 + $0x1d0] sm:$0xff] %v706
        %818 = vst [vmem:[#allocation4 + $0x1d8] sm:$0xff] %v755
        %819 = vst [vmem:[#allocation4 + $0x1e0] sm:$0xff] %v610
        %820 = vst [vmem:[#allocation4 + $0x1e8] sm:$0xff] %v659
        %821 = vst [vmem:[#allocation4 + $0x1f0] sm:$0xff] %v708
        %822 = vst [vmem:[#allocation4 + $0x1f8] sm:$0xff] %v757
        %v823 = vld [vmem:[#allocation2] sm:$0xff]
        %v824 = vld [vmem:[#allocation2 + $0x8] sm:$0xff]
        %v825 = vld [vmem:[#allocation3] sm:$0xff]
        %v826 = vld [vmem:[#allocation3 + $0x8] sm:$0xff]
        %v827 = vld [vmem:[#allocation4] sm:$0xff]
        %v828 = vld [vmem:[#allocation4 + $0x8] sm:$0xff]
        %v829 = vld [vmem:[#allocation4 + $0x10] sm:$0xff]
        %v830 = vld [vmem:[#allocation4 + $0x18] sm:$0xff]
        %v831 = vld [vmem:[#allocation4 + $0x20] sm:$0xff]
        %v832 = vld [vmem:[#allocation4 + $0x28] sm:$0xff]
        %v833 = vld [vmem:[#allocation4 + $0x30] sm:$0xff]
        %v834 = vld [vmem:[#allocation4 + $0x38] sm:$0xff]
        %v835 = vpack.c.bf16 %v824, %v823
        %v836 = vld [vmem:[#allocation11] sm:$0xff]
        %v837 = vld [vmem:[#allocation11 + $0x8] sm:$0xff]
        %v838 = vld [vmem:[#allocation11 + $0x10] sm:$0xff]
        %v839 = vld [vmem:[#allocation11 + $0x18] sm:$0xff]
        %v840 = vld [vmem:[#allocation11 + $0x20] sm:$0xff]
        %v841 = vld [vmem:[#allocation11 + $0x28] sm:$0xff]
        %v842 = vld [vmem:[#allocation11 + $0x30] sm:$0xff]
        %v843 = vld [vmem:[#allocation11 + $0x38] sm:$0xff]
        %v844 = vld [vmem:[#allocation11 + $0x40] sm:$0xff]
        %v845 = vld [vmem:[#allocation11 + $0x48] sm:$0xff]
        %v846 = vld [vmem:[#allocation11 + $0x50] sm:$0xff]
        %v847 = vld [vmem:[#allocation11 + $0x58] sm:$0xff]
        %v848 = vld [vmem:[#allocation11 + $0x60] sm:$0xff]
        %v849 = vld [vmem:[#allocation11 + $0x68] sm:$0xff]
        %v850 = vld [vmem:[#allocation11 + $0x70] sm:$0xff]
        %v851 = vld [vmem:[#allocation11 + $0x78] sm:$0xff]
        %v852 = vld [vmem:[#allocation11 + $0x80] sm:$0xff]
        %v853 = vld [vmem:[#allocation11 + $0x88] sm:$0xff]
        %v854 = vld [vmem:[#allocation11 + $0x90] sm:$0xff]
        %v855 = vld [vmem:[#allocation11 + $0x98] sm:$0xff]
        %v856 = vld [vmem:[#allocation11 + $0xa0] sm:$0xff]
        %v857 = vld [vmem:[#allocation11 + $0xa8] sm:$0xff]
        %v858 = vld [vmem:[#allocation11 + $0xb0] sm:$0xff]
        %v859 = vld [vmem:[#allocation11 + $0xb8] sm:$0xff]
        %v860 = vld [vmem:[#allocation11 + $0xc0] sm:$0xff]
        %v861 = vld [vmem:[#allocation11 + $0xc8] sm:$0xff]
        %v862 = vld [vmem:[#allocation11 + $0xd0] sm:$0xff]
        %v863 = vld [vmem:[#allocation11 + $0xd8] sm:$0xff]
        %v864 = vld [vmem:[#allocation11 + $0xe0] sm:$0xff]
        %v865 = vld [vmem:[#allocation11 + $0xe8] sm:$0xff]
        %v866 = vld [vmem:[#allocation11 + $0xf0] sm:$0xff]
        %v867 = vld [vmem:[#allocation11 + $0xf8] sm:$0xff]
        %v900 = vunpack.c.l.b16 %v836
        %v901 = vunpack.c.h.b16 %v836
        %v902 = vunpack.c.l.b16 %v837
        %v903 = vunpack.c.h.b16 %v837
        %v904 = vunpack.c.l.b16 %v838
        %v905 = vunpack.c.h.b16 %v838
        %v906 = vunpack.c.l.b16 %v839
        %v907 = vunpack.c.h.b16 %v839
        %v908 = vunpack.c.l.b16 %v840
        %v909 = vunpack.c.h.b16 %v840
        %v910 = vunpack.c.l.b16 %v841
        %v911 = vunpack.c.h.b16 %v841
        %v912 = vunpack.c.l.b16 %v842
        %v913 = vunpack.c.h.b16 %v842
        %v914 = vunpack.c.l.b16 %v843
        %v915 = vunpack.c.h.b16 %v843
        %v916 = vunpack.c.l.b16 %v844
        %v917 = vunpack.c.h.b16 %v844
        %v918 = vunpack.c.l.b16 %v845
        %v919 = vunpack.c.h.b16 %v845
        %v920 = vunpack.c.l.b16 %v846
        %v921 = vunpack.c.h.b16 %v846
        %v922 = vunpack.c.l.b16 %v847
        %v923 = vunpack.c.h.b16 %v847
        %v924 = vunpack.c.l.b16 %v848
        %v925 = vunpack.c.h.b16 %v848
        %v926 = vunpack.c.l.b16 %v849
        %v927 = vunpack.c.h.b16 %v849
        %v928 = vunpack.c.l.b16 %v850
        %v929 = vunpack.c.h.b16 %v850
        %v930 = vunpack.c.l.b16 %v851
        %v931 = vunpack.c.h.b16 %v851
        %v932 = vunpack.c.l.b16 %v852
        %v933 = vunpack.c.h.b16 %v852
        %v934 = vunpack.c.l.b16 %v853
        %v935 = vunpack.c.h.b16 %v853
        %v936 = vunpack.c.l.b16 %v854
        %v937 = vunpack.c.h.b16 %v854
        %v938 = vunpack.c.l.b16 %v855
        %v939 = vunpack.c.h.b16 %v855
        %v940 = vunpack.c.l.b16 %v856
        %v941 = vunpack.c.h.b16 %v856
        %v942 = vunpack.c.l.b16 %v857
        %v943 = vunpack.c.h.b16 %v857
        %v944 = vunpack.c.l.b16 %v858
        %v945 = vunpack.c.h.b16 %v858
        %v946 = vunpack.c.l.b16 %v859
        %v947 = vunpack.c.h.b16 %v859
        %v948 = vunpack.c.l.b16 %v860
        %v949 = vunpack.c.h.b16 %v860
        %v950 = vunpack.c.l.b16 %v861
        %v951 = vunpack.c.h.b16 %v861
        %v952 = vunpack.c.l.b16 %v862
        %v953 = vunpack.c.h.b16 %v862
        %v954 = vunpack.c.l.b16 %v863
        %v955 = vunpack.c.h.b16 %v863
        %v956 = vunpack.c.l.b16 %v864
        %v957 = vunpack.c.h.b16 %v864
        %v958 = vunpack.c.l.b16 %v865
        %v959 = vunpack.c.h.b16 %v865
        %v960 = vunpack.c.l.b16 %v866
        %v961 = vunpack.c.h.b16 %v866
        %v962 = vunpack.c.l.b16 %v867
        %v963 = vunpack.c.h.b16 %v867
        %v964 = vpack.c.b16 %v904, %v900
        %v965 = vpack.c.b16 %v905, %v901
        %v966 = vpack.c.b16 %v906, %v902
        %v967 = vpack.c.b16 %v907, %v903
        %v968 = vpack.c.b16 %v912, %v908
        %v969 = vpack.c.b16 %v913, %v909
        %v970 = vpack.c.b16 %v914, %v910
        %v971 = vpack.c.b16 %v915, %v911
        %v972 = vpack.c.b16 %v920, %v916
        %v973 = vpack.c.b16 %v921, %v917
        %v974 = vpack.c.b16 %v922, %v918
        %v975 = vpack.c.b16 %v923, %v919
        %v976 = vpack.c.b16 %v928, %v924
        %v977 = vpack.c.b16 %v929, %v925
        %v978 = vpack.c.b16 %v930, %v926
        %v979 = vpack.c.b16 %v931, %v927
        %v980 = vpack.c.b16 %v936, %v932
        %v981 = vpack.c.b16 %v937, %v933
        %v982 = vpack.c.b16 %v938, %v934
        %v983 = vpack.c.b16 %v939, %v935
        %v984 = vpack.c.b16 %v944, %v940
        %v985 = vpack.c.b16 %v945, %v941
        %v986 = vpack.c.b16 %v946, %v942
        %v987 = vpack.c.b16 %v947, %v943
        %v988 = vpack.c.b16 %v952, %v948
        %v989 = vpack.c.b16 %v953, %v949
        %v990 = vpack.c.b16 %v954, %v950
        %v991 = vpack.c.b16 %v955, %v951
        %v992 = vpack.c.b16 %v960, %v956
        %v993 = vpack.c.b16 %v961, %v957
        %v994 = vpack.c.b16 %v962, %v958
        %v995 = vpack.c.b16 %v963, %v959
        %1028 = vmatpush.bf16.msra.mxu0 %v992
        %1029 = vmatpush.bf16.msra.mxu0 %v988
        %1030 = vmatpush.bf16.msra.mxu0 %v984
        %1031 = vmatpush.bf16.msra.mxu0 %v980
        %1032 = vmatpush.bf16.msra.mxu0 %v976
        %1033 = vmatpush.bf16.msra.mxu0 %v972
        %1034 = vmatpush.bf16.msra.mxu0 %v968
        %1035 = vmatpush.bf16.msra.mxu0 %v964
        %1036 = vmatmul.bf16.gmra.mxu0 %v835
        %v1037 = vpop.f32.mrf.mxu0
        %v1038 = vadd.f32 0.0, %v1037
        %v1039 = vpop.f32.mrf.mxu0
        %v1040 = vadd.f32 0.0, %v1039
        %1041 = vdwg.mxu0
        %1042 = vmatpush.bf16.msra.mxu0 %v993
        %1043 = vmatpush.bf16.msra.mxu0 %v989
        %1044 = vmatpush.bf16.msra.mxu0 %v985
        %1045 = vmatpush.bf16.msra.mxu0 %v981
        %1046 = vmatpush.bf16.msra.mxu0 %v977
        %1047 = vmatpush.bf16.msra.mxu0 %v973
        %1048 = vmatpush.bf16.msra.mxu0 %v969
        %1049 = vmatpush.bf16.msra.mxu0 %v965
        %1050 = vmatmul.bf16.gmra.mxu0 %v835
        %v1051 = vpop.f32.mrf.mxu0
        %v1052 = vadd.f32 0.0, %v1051
        %v1053 = vpop.f32.mrf.mxu0
        %v1054 = vadd.f32 0.0, %v1053
        %1055 = vdwg.mxu0
        %1056 = vmatpush.bf16.msra.mxu0 %v994
        %1057 = vmatpush.bf16.msra.mxu0 %v990
        %1058 = vmatpush.bf16.msra.mxu0 %v986
        %1059 = vmatpush.bf16.msra.mxu0 %v982
        %1060 = vmatpush.bf16.msra.mxu0 %v978
        %1061 = vmatpush.bf16.msra.mxu0 %v974
        %1062 = vmatpush.bf16.msra.mxu0 %v970
        %1063 = vmatpush.bf16.msra.mxu0 %v966
        %1064 = vmatmul.bf16.gmra.mxu0 %v835
        %v1065 = vpop.f32.mrf.mxu0
        %v1066 = vadd.f32 0.0, %v1065
        %v1067 = vpop.f32.mrf.mxu0
        %v1068 = vadd.f32 0.0, %v1067
        %1069 = vdwg.mxu0
        %1070 = vmatpush.bf16.msra.mxu0 %v995
        %1071 = vmatpush.bf16.msra.mxu0 %v991
        %1072 = vmatpush.bf16.msra.mxu0 %v987
        %1073 = vmatpush.bf16.msra.mxu0 %v983
        %1074 = vmatpush.bf16.msra.mxu0 %v979
        %1075 = vmatpush.bf16.msra.mxu0 %v975
        %1076 = vmatpush.bf16.msra.mxu0 %v971
        %1077 = vmatpush.bf16.msra.mxu0 %v967
        %1078 = vmatmul.bf16.gmra.mxu0 %v835
        %v1079 = vpop.f32.mrf.mxu0
        %v1080 = vadd.f32 0.0, %v1079
        %v1081 = vpop.f32.mrf.mxu0
        %v1082 = vadd.f32 0.0, %v1081
        %1083 = vdwg.mxu0
        %v1084 = vadd.f32 %v827, %v1038
        %v1085 = vadd.f32 %v828, %v1052
        %v1086 = vadd.f32 %v829, %v1066
        %v1087 = vadd.f32 %v830, %v1080
        %v1088 = vadd.f32 %v831, %v1040
        %v1089 = vadd.f32 %v832, %v1054
        %v1090 = vadd.f32 %v833, %v1068
        %v1091 = vadd.f32 %v834, %v1082
        %v1092 = vxor.u32 %v1084, 2147483648
        %v1093 = vxor.u32 %v1088, 2147483648
        %v1094 = vmul.f32 %v1092, 1.442695
        %v1095 = vpow.pop %v1094
        %v1096 = vmul.f32 %v1093, 1.442695
        %v1097 = vpow.pop %v1096
        %v1098 = vadd.f32 %v1095, 1.0
        %v1099 = vadd.f32 %v1097, 1.0
        %v1100 = vrcp.pop %v1098
        %v1101 = vmul.f32 %v1098, %v1100
        %v1102 = vsub.f32 1.0, %v1101
        %v1103 = vmul.f32 %v1100, %v1102
        %v1104 = vadd.f32 %v1100, %v1103
        %vm1105 = vweird.f32 %v1098
        %vm1106 = vweird.f32 %v1100
        %vm1107 = vmor %vm1105, %vm1106
        %v1108 = vsel %vm1107, %v1100, %v1104
        %v1109 = vand.u32 2147483647, %v1098
        %vm1110 = vcmp.eq.f32.partialorder %v1109, 8.507059e+37
        %v1111 = vand.u32 %v1098, 2147483648
        %v1112 = vor.u32 1.1754944e-38, %v1111
        %v1113 = vsel %vm1110, %v1112, %v1108
        %v1114 = vmul.f32 1.0, %v1113
        %v1115 = vrcp.pop %v1099
        %v1116 = vmul.f32 %v1099, %v1115
        %v1117 = vsub.f32 1.0, %v1116
        %v1118 = vmul.f32 %v1115, %v1117
        %v1119 = vadd.f32 %v1115, %v1118
        %vm1120 = vweird.f32 %v1099
        %vm1121 = vweird.f32 %v1115
        %vm1122 = vmor %vm1120, %vm1121
        %v1123 = vsel %vm1122, %v1115, %v1119
        %v1124 = vand.u32 2147483647, %v1099
        %vm1125 = vcmp.eq.f32.partialorder %v1124, 8.507059e+37
        %v1126 = vand.u32 %v1099, 2147483648
        %v1127 = vor.u32 1.1754944e-38, %v1126
        %v1128 = vsel %vm1125, %v1127, %v1123
        %v1129 = vmul.f32 1.0, %v1128
        %v1130 = vxor.u32 %v1085, 2147483648
        %v1131 = vxor.u32 %v1089, 2147483648
        %v1132 = vmul.f32 %v1130, 1.442695
        %v1133 = vpow.pop %v1132
        %v1134 = vmul.f32 %v1131, 1.442695
        %v1135 = vpow.pop %v1134
        %v1136 = vadd.f32 %v1133, 1.0
        %v1137 = vadd.f32 %v1135, 1.0
        %v1138 = vrcp.pop %v1136
        %v1139 = vmul.f32 %v1136, %v1138
        %v1140 = vsub.f32 1.0, %v1139
        %v1141 = vmul.f32 %v1138, %v1140
        %v1142 = vadd.f32 %v1138, %v1141
        %vm1143 = vweird.f32 %v1136
        %vm1144 = vweird.f32 %v1138
        %vm1145 = vmor %vm1143, %vm1144
        %v1146 = vsel %vm1145, %v1138, %v1142
        %v1147 = vand.u32 2147483647, %v1136
        %vm1148 = vcmp.eq.f32.partialorder %v1147, 8.507059e+37
        %v1149 = vand.u32 %v1136, 2147483648
        %v1150 = vor.u32 1.1754944e-38, %v1149
        %v1151 = vsel %vm1148, %v1150, %v1146
        %v1152 = vmul.f32 1.0, %v1151
        %v1153 = vrcp.pop %v1137
        %v1154 = vmul.f32 %v1137, %v1153
        %v1155 = vsub.f32 1.0, %v1154
        %v1156 = vmul.f32 %v1153, %v1155
        %v1157 = vadd.f32 %v1153, %v1156
        %vm1158 = vweird.f32 %v1137
        %vm1159 = vweird.f32 %v1153
        %vm1160 = vmor %vm1158, %vm1159
        %v1161 = vsel %vm1160, %v1153, %v1157
        %v1162 = vand.u32 2147483647, %v1137
        %vm1163 = vcmp.eq.f32.partialorder %v1162, 8.507059e+37
        %v1164 = vand.u32 %v1137, 2147483648
        %v1165 = vor.u32 1.1754944e-38, %v1164
        %v1166 = vsel %vm1163, %v1165, %v1161
        %v1167 = vmul.f32 1.0, %v1166
        %v1168 = vtanh.pop %v1086
        %v1169 = vtanh.pop %v1090
        %v1170 = vxor.u32 %v1087, 2147483648
        %v1171 = vxor.u32 %v1091, 2147483648
        %v1172 = vmul.f32 %v1170, 1.442695
        %v1173 = vpow.pop %v1172
        %v1174 = vmul.f32 %v1171, 1.442695
        %v1175 = vpow.pop %v1174
        %v1176 = vadd.f32 %v1173, 1.0
        %v1177 = vadd.f32 %v1175, 1.0
        %v1178 = vrcp.pop %v1176
        %v1179 = vmul.f32 %v1176, %v1178
        %v1180 = vsub.f32 1.0, %v1179
        %v1181 = vmul.f32 %v1178, %v1180
        %v1182 = vadd.f32 %v1178, %v1181
        %vm1183 = vweird.f32 %v1176
        %vm1184 = vweird.f32 %v1178
        %vm1185 = vmor %vm1183, %vm1184
        %v1186 = vsel %vm1185, %v1178, %v1182
        %v1187 = vand.u32 2147483647, %v1176
        %vm1188 = vcmp.eq.f32.partialorder %v1187, 8.507059e+37
        %v1189 = vand.u32 %v1176, 2147483648
        %v1190 = vor.u32 1.1754944e-38, %v1189
        %v1191 = vsel %vm1188, %v1190, %v1186
        %v1192 = vmul.f32 1.0, %v1191
        %v1193 = vrcp.pop %v1177
        %v1194 = vmul.f32 %v1177, %v1193
        %v1195 = vsub.f32 1.0, %v1194
        %v1196 = vmul.f32 %v1193, %v1195
        %v1197 = vadd.f32 %v1193, %v1196
        %vm1198 = vweird.f32 %v1177
        %vm1199 = vweird.f32 %v1193
        %vm1200 = vmor %vm1198, %vm1199
        %v1201 = vsel %vm1200, %v1193, %v1197
        %v1202 = vand.u32 2147483647, %v1177
        %vm1203 = vcmp.eq.f32.partialorder %v1202, 8.507059e+37
        %v1204 = vand.u32 %v1177, 2147483648
        %v1205 = vor.u32 1.1754944e-38, %v1204
        %v1206 = vsel %vm1203, %v1205, %v1201
        %v1207 = vmul.f32 1.0, %v1206
        %v1208 = vmul.f32 %v1152, %v825
        %v1209 = vmul.f32 %v1167, %v826
        %v1210 = vmul.f32 %v1114, %v1168
        %v1211 = vmul.f32 %v1129, %v1169
        %v1212 = vadd.f32 %v1208, %v1210
        %v1213 = vadd.f32 %v1209, %v1211
        %v1214 = vtanh.pop %v1212
        %v1215 = vtanh.pop %v1213
        %v1216 = vmul.f32 %v1192, %v1214
        %v1217 = vmul.f32 %v1207, %v1215
        %v1218 = vpack.c.bf16 %v1216, %v1216
        %v1219 = vpack.c.bf16 %v1217, %v1217
        %1220 = vst [vmem:[%s284] sm:$0xf] %v1218
        %1221 = vst [vmem:[%s284 + $0x4] sm:$0xf] %v1219
        %s1222 = scalar_lea.vmem [#allocation4], 64
        %v1223 = vld [vmem:[%s1222] sm:$0xff]
        %v1224 = vld [vmem:[%s1222 + $0x8] sm:$0xff]
        %v1225 = vld [vmem:[%s1222 + $0x10] sm:$0xff]
        %v1226 = vld [vmem:[%s1222 + $0x18] sm:$0xff]
        %v1227 = vld [vmem:[%s1222 + $0x20] sm:$0xff]
        %v1228 = vld [vmem:[%s1222 + $0x28] sm:$0xff]
        %v1229 = vld [vmem:[%s1222 + $0x30] sm:$0xff]
        %v1230 = vld [vmem:[%s1222 + $0x38] sm:$0xff]
        %v1231 = vld [vmem:[#allocation11] sm:$0xff]
        %v1232 = vld [vmem:[#allocation11 + $0x8] sm:$0xff]
        %v1233 = vld [vmem:[#allocation11 + $0x10] sm:$0xff]
        %v1234 = vld [vmem:[#allocation11 + $0x18] sm:$0xff]
        %v1235 = vld [vmem:[#allocation11 + $0x20] sm:$0xff]
        %v1236 = vld [vmem:[#allocation11 + $0x28] sm:$0xff]
        %v1237 = vld [vmem:[#allocation11 + $0x30] sm:$0xff]
        %v1238 = vld [vmem:[#allocation11 + $0x38] sm:$0xff]
        %v1239 = vld [vmem:[#allocation11 + $0x40] sm:$0xff]
        %v1240 = vld [vmem:[#allocation11 + $0x48] sm:$0xff]
        %v1241 = vld [vmem:[#allocation11 + $0x50] sm:$0xff]
        %v1242 = vld [vmem:[#allocation11 + $0x58] sm:$0xff]
        %v1243 = vld [vmem:[#allocation11 + $0x60] sm:$0xff]
        %v1244 = vld [vmem:[#allocation11 + $0x68] sm:$0xff]
        %v1245 = vld [vmem:[#allocation11 + $0x70] sm:$0xff]
        %v1246 = vld [vmem:[#allocation11 + $0x78] sm:$0xff]
        %v1247 = vld [vmem:[#allocation11 + $0x80] sm:$0xff]
        %v1248 = vld [vmem:[#allocation11 + $0x88] sm:$0xff]
        %v1249 = vld [vmem:[#allocation11 + $0x90] sm:$0xff]
        %v1250 = vld [vmem:[#allocation11 + $0x98] sm:$0xff]
        %v1251 = vld [vmem:[#allocation11 + $0xa0] sm:$0xff]
        %v1252 = vld [vmem:[#allocation11 + $0xa8] sm:$0xff]
        %v1253 = vld [vmem:[#allocation11 + $0xb0] sm:$0xff]
        %v1254 = vld [vmem:[#allocation11 + $0xb8] sm:$0xff]
        %v1255 = vld [vmem:[#allocation11 + $0xc0] sm:$0xff]
        %v1256 = vld [vmem:[#allocation11 + $0xc8] sm:$0xff]
        %v1257 = vld [vmem:[#allocation11 + $0xd0] sm:$0xff]
        %v1258 = vld [vmem:[#allocation11 + $0xd8] sm:$0xff]
        %v1259 = vld [vmem:[#allocation11 + $0xe0] sm:$0xff]
        %v1260 = vld [vmem:[#allocation11 + $0xe8] sm:$0xff]
        %v1261 = vld [vmem:[#allocation11 + $0xf0] sm:$0xff]
        %v1262 = vld [vmem:[#allocation11 + $0xf8] sm:$0xff]
        %v1265 = vunpack.c.l.b16 %v1218
        %v1266 = vunpack.c.l.b16 %v1219
        %v1267 = vpack.c.b16 %v1266, %v1265
        %v1301 = vunpack.c.l.b16 %v1231
        %v1302 = vunpack.c.h.b16 %v1231
        %v1303 = vunpack.c.l.b16 %v1232
        %v1304 = vunpack.c.h.b16 %v1232
        %v1305 = vunpack.c.l.b16 %v1233
        %v1306 = vunpack.c.h.b16 %v1233
        %v1307 = vunpack.c.l.b16 %v1234
        %v1308 = vunpack.c.h.b16 %v1234
        %v1309 = vunpack.c.l.b16 %v1235
        %v1310 = vunpack.c.h.b16 %v1235
        %v1311 = vunpack.c.l.b16 %v1236
        %v1312 = vunpack.c.h.b16 %v1236
        %v1313 = vunpack.c.l.b16 %v1237
        %v1314 = vunpack.c.h.b16 %v1237
        %v1315 = vunpack.c.l.b16 %v1238
        %v1316 = vunpack.c.h.b16 %v1238
        %v1317 = vunpack.c.l.b16 %v1239
        %v1318 = vunpack.c.h.b16 %v1239
        %v1319 = vunpack.c.l.b16 %v1240
        %v1320 = vunpack.c.h.b16 %v1240
        %v1321 = vunpack.c.l.b16 %v1241
        %v1322 = vunpack.c.h.b16 %v1241
        %v1323 = vunpack.c.l.b16 %v1242
        %v1324 = vunpack.c.h.b16 %v1242
        %v1325 = vunpack.c.l.b16 %v1243
        %v1326 = vunpack.c.h.b16 %v1243
        %v1327 = vunpack.c.l.b16 %v1244
        %v1328 = vunpack.c.h.b16 %v1244
        %v1329 = vunpack.c.l.b16 %v1245
        %v1330 = vunpack.c.h.b16 %v1245
        %v1331 = vunpack.c.l.b16 %v1246
        %v1332 = vunpack.c.h.b16 %v1246
        %v1333 = vunpack.c.l.b16 %v1247
        %v1334 = vunpack.c.h.b16 %v1247
        %v1335 = vunpack.c.l.b16 %v1248
        %v1336 = vunpack.c.h.b16 %v1248
        %v1337 = vunpack.c.l.b16 %v1249
        %v1338 = vunpack.c.h.b16 %v1249
        %v1339 = vunpack.c.l.b16 %v1250
        %v1340 = vunpack.c.h.b16 %v1250
        %v1341 = vunpack.c.l.b16 %v1251
        %v1342 = vunpack.c.h.b16 %v1251
        %v1343 = vunpack.c.l.b16 %v1252
        %v1344 = vunpack.c.h.b16 %v1252
        %v1345 = vunpack.c.l.b16 %v1253
        %v1346 = vunpack.c.h.b16 %v1253
        %v1347 = vunpack.c.l.b16 %v1254
        %v1348 = vunpack.c.h.b16 %v1254
        %v1349 = vunpack.c.l.b16 %v1255
        %v1350 = vunpack.c.h.b16 %v1255
        %v1351 = vunpack.c.l.b16 %v1256
        %v1352 = vunpack.c.h.b16 %v1256
        %v1353 = vunpack.c.l.b16 %v1257
        %v1354 = vunpack.c.h.b16 %v1257
        %v1355 = vunpack.c.l.b16 %v1258
        %v1356 = vunpack.c.h.b16 %v1258
        %v1357 = vunpack.c.l.b16 %v1259
        %v1358 = vunpack.c.h.b16 %v1259
        %v1359 = vunpack.c.l.b16 %v1260
        %v1360 = vunpack.c.h.b16 %v1260
        %v1361 = vunpack.c.l.b16 %v1261
        %v1362 = vunpack.c.h.b16 %v1261
        %v1363 = vunpack.c.l.b16 %v1262
        %v1364 = vunpack.c.h.b16 %v1262
        %v1365 = vpack.c.b16 %v1305, %v1301
        %v1366 = vpack.c.b16 %v1306, %v1302
        %v1367 = vpack.c.b16 %v1307, %v1303
        %v1368 = vpack.c.b16 %v1308, %v1304
        %v1369 = vpack.c.b16 %v1313, %v1309
        %v1370 = vpack.c.b16 %v1314, %v1310
        %v1371 = vpack.c.b16 %v1315, %v1311
        %v1372 = vpack.c.b16 %v1316, %v1312
        %v1373 = vpack.c.b16 %v1321, %v1317
        %v1374 = vpack.c.b16 %v1322, %v1318
        %v1375 = vpack.c.b16 %v1323, %v1319
        %v1376 = vpack.c.b16 %v1324, %v1320
        %v1377 = vpack.c.b16 %v1329, %v1325
        %v1378 = vpack.c.b16 %v1330, %v1326
        %v1379 = vpack.c.b16 %v1331, %v1327
        %v1380 = vpack.c.b16 %v1332, %v1328
        %v1381 = vpack.c.b16 %v1337, %v1333
        %v1382 = vpack.c.b16 %v1338, %v1334
        %v1383 = vpack.c.b16 %v1339, %v1335
        %v1384 = vpack.c.b16 %v1340, %v1336
        %v1385 = vpack.c.b16 %v1345, %v1341
        %v1386 = vpack.c.b16 %v1346, %v1342
        %v1387 = vpack.c.b16 %v1347, %v1343
        %v1388 = vpack.c.b16 %v1348, %v1344
        %v1389 = vpack.c.b16 %v1353, %v1349
        %v1390 = vpack.c.b16 %v1354, %v1350
        %v1391 = vpack.c.b16 %v1355, %v1351
        %v1392 = vpack.c.b16 %v1356, %v1352
        %v1393 = vpack.c.b16 %v1361, %v1357
        %v1394 = vpack.c.b16 %v1362, %v1358
        %v1395 = vpack.c.b16 %v1363, %v1359
        %v1396 = vpack.c.b16 %v1364, %v1360
        %1429 = vmatpush.bf16.msra.mxu0 %v1393
        %1430 = vmatpush.bf16.msra.mxu0 %v1389
        %1431 = vmatpush.bf16.msra.mxu0 %v1385
        %1432 = vmatpush.bf16.msra.mxu0 %v1381
        %1433 = vmatpush.bf16.msra.mxu0 %v1377
        %1434 = vmatpush.bf16.msra.mxu0 %v1373
        %1435 = vmatpush.bf16.msra.mxu0 %v1369
        %1436 = vmatpush.bf16.msra.mxu0 %v1365
        %1437 = vmatmul.bf16.gmra.mxu0 %v1267
        %v1438 = vpop.f32.mrf.mxu0
        %v1439 = vadd.f32 0.0, %v1438
        %v1440 = vpop.f32.mrf.mxu0
        %v1441 = vadd.f32 0.0, %v1440
        %1442 = vdwg.mxu0
        %1443 = vmatpush.bf16.msra.mxu0 %v1394
        %1444 = vmatpush.bf16.msra.mxu0 %v1390
        %1445 = vmatpush.bf16.msra.mxu0 %v1386
        %1446 = vmatpush.bf16.msra.mxu0 %v1382
        %1447 = vmatpush.bf16.msra.mxu0 %v1378
        %1448 = vmatpush.bf16.msra.mxu0 %v1374
        %1449 = vmatpush.bf16.msra.mxu0 %v1370
        %1450 = vmatpush.bf16.msra.mxu0 %v1366
        %1451 = vmatmul.bf16.gmra.mxu0 %v1267
        %v1452 = vpop.f32.mrf.mxu0
        %v1453 = vadd.f32 0.0, %v1452
        %v1454 = vpop.f32.mrf.mxu0
        %v1455 = vadd.f32 0.0, %v1454
        %1456 = vdwg.mxu0
        %1457 = vmatpush.bf16.msra.mxu0 %v1395
        %1458 = vmatpush.bf16.msra.mxu0 %v1391
        %1459 = vmatpush.bf16.msra.mxu0 %v1387
        %1460 = vmatpush.bf16.msra.mxu0 %v1383
        %1461 = vmatpush.bf16.msra.mxu0 %v1379
        %1462 = vmatpush.bf16.msra.mxu0 %v1375
        %1463 = vmatpush.bf16.msra.mxu0 %v1371
        %1464 = vmatpush.bf16.msra.mxu0 %v1367
        %1465 = vmatmul.bf16.gmra.mxu0 %v1267
        %v1466 = vpop.f32.mrf.mxu0
        %v1467 = vadd.f32 0.0, %v1466
        %v1468 = vpop.f32.mrf.mxu0
        %v1469 = vadd.f32 0.0, %v1468
        %1470 = vdwg.mxu0
        %1471 = vmatpush.bf16.msra.mxu0 %v1396
        %1472 = vmatpush.bf16.msra.mxu0 %v1392
        %1473 = vmatpush.bf16.msra.mxu0 %v1388
        %1474 = vmatpush.bf16.msra.mxu0 %v1384
        %1475 = vmatpush.bf16.msra.mxu0 %v1380
        %1476 = vmatpush.bf16.msra.mxu0 %v1376
        %1477 = vmatpush.bf16.msra.mxu0 %v1372
        %1478 = vmatpush.bf16.msra.mxu0 %v1368
        %1479 = vmatmul.bf16.gmra.mxu0 %v1267
        %v1480 = vpop.f32.mrf.mxu0
        %v1481 = vadd.f32 0.0, %v1480
        %v1482 = vpop.f32.mrf.mxu0
        %v1483 = vadd.f32 0.0, %v1482
        %1484 = vdwg.mxu0
        %v1485 = vadd.f32 %v1223, %v1439
        %v1486 = vadd.f32 %v1224, %v1453
        %v1487 = vadd.f32 %v1225, %v1467
        %v1488 = vadd.f32 %v1226, %v1481
        %v1489 = vadd.f32 %v1227, %v1441
        %v1490 = vadd.f32 %v1228, %v1455
        %v1491 = vadd.f32 %v1229, %v1469
        %v1492 = vadd.f32 %v1230, %v1483
        %v1493 = vxor.u32 %v1485, 2147483648
        %v1494 = vxor.u32 %v1489, 2147483648
        %v1495 = vmul.f32 %v1493, 1.442695
        %v1496 = vpow.pop %v1495
        %v1497 = vmul.f32 %v1494, 1.442695
        %v1498 = vpow.pop %v1497
        %v1499 = vadd.f32 %v1496, 1.0
        %v1500 = vadd.f32 %v1498, 1.0
        %v1501 = vrcp.pop %v1499
        %v1502 = vmul.f32 %v1499, %v1501
        %v1503 = vsub.f32 1.0, %v1502
        %v1504 = vmul.f32 %v1501, %v1503
        %v1505 = vadd.f32 %v1501, %v1504
        %vm1506 = vweird.f32 %v1499
        %vm1507 = vweird.f32 %v1501
        %vm1508 = vmor %vm1506, %vm1507
        %v1509 = vsel %vm1508, %v1501, %v1505
        %v1510 = vand.u32 2147483647, %v1499
        %vm1511 = vcmp.eq.f32.partialorder %v1510, 8.507059e+37
        %v1512 = vand.u32 %v1499, 2147483648
        %v1513 = vor.u32 1.1754944e-38, %v1512
        %v1514 = vsel %vm1511, %v1513, %v1509
        %v1515 = vmul.f32 1.0, %v1514
        %v1516 = vrcp.pop %v1500
        %v1517 = vmul.f32 %v1500, %v1516
        %v1518 = vsub.f32 1.0, %v1517
        %v1519 = vmul.f32 %v1516, %v1518
        %v1520 = vadd.f32 %v1516, %v1519
        %vm1521 = vweird.f32 %v1500
        %vm1522 = vweird.f32 %v1516
        %vm1523 = vmor %vm1521, %vm1522
        %v1524 = vsel %vm1523, %v1516, %v1520
        %v1525 = vand.u32 2147483647, %v1500
        %vm1526 = vcmp.eq.f32.partialorder %v1525, 8.507059e+37
        %v1527 = vand.u32 %v1500, 2147483648
        %v1528 = vor.u32 1.1754944e-38, %v1527
        %v1529 = vsel %vm1526, %v1528, %v1524
        %v1530 = vmul.f32 1.0, %v1529
        %v1531 = vxor.u32 %v1486, 2147483648
        %v1532 = vxor.u32 %v1490, 2147483648
        %v1533 = vmul.f32 %v1531, 1.442695
        %v1534 = vpow.pop %v1533
        %v1535 = vmul.f32 %v1532, 1.442695
        %v1536 = vpow.pop %v1535
        %v1537 = vadd.f32 %v1534, 1.0
        %v1538 = vadd.f32 %v1536, 1.0
        %v1539 = vrcp.pop %v1537
        %v1540 = vmul.f32 %v1537, %v1539
        %v1541 = vsub.f32 1.0, %v1540
        %v1542 = vmul.f32 %v1539, %v1541
        %v1543 = vadd.f32 %v1539, %v1542
        %vm1544 = vweird.f32 %v1537
        %vm1545 = vweird.f32 %v1539
        %vm1546 = vmor %vm1544, %vm1545
        %v1547 = vsel %vm1546, %v1539, %v1543
        %v1548 = vand.u32 2147483647, %v1537
        %vm1549 = vcmp.eq.f32.partialorder %v1548, 8.507059e+37
        %v1550 = vand.u32 %v1537, 2147483648
        %v1551 = vor.u32 1.1754944e-38, %v1550
        %v1552 = vsel %vm1549, %v1551, %v1547
        %v1553 = vmul.f32 1.0, %v1552
        %v1554 = vrcp.pop %v1538
        %v1555 = vmul.f32 %v1538, %v1554
        %v1556 = vsub.f32 1.0, %v1555
        %v1557 = vmul.f32 %v1554, %v1556
        %v1558 = vadd.f32 %v1554, %v1557
        %vm1559 = vweird.f32 %v1538
        %vm1560 = vweird.f32 %v1554
        %vm1561 = vmor %vm1559, %vm1560
        %v1562 = vsel %vm1561, %v1554, %v1558
        %v1563 = vand.u32 2147483647, %v1538
        %vm1564 = vcmp.eq.f32.partialorder %v1563, 8.507059e+37
        %v1565 = vand.u32 %v1538, 2147483648
        %v1566 = vor.u32 1.1754944e-38, %v1565
        %v1567 = vsel %vm1564, %v1566, %v1562
        %v1568 = vmul.f32 1.0, %v1567
        %v1569 = vtanh.pop %v1487
        %v1570 = vtanh.pop %v1491
        %v1571 = vxor.u32 %v1488, 2147483648
        %v1572 = vxor.u32 %v1492, 2147483648
        %v1573 = vmul.f32 %v1571, 1.442695
        %v1574 = vpow.pop %v1573
        %v1575 = vmul.f32 %v1572, 1.442695
        %v1576 = vpow.pop %v1575
        %v1577 = vadd.f32 %v1574, 1.0
        %v1578 = vadd.f32 %v1576, 1.0
        %v1579 = vrcp.pop %v1577
        %v1580 = vmul.f32 %v1577, %v1579
        %v1581 = vsub.f32 1.0, %v1580
        %v1582 = vmul.f32 %v1579, %v1581
        %v1583 = vadd.f32 %v1579, %v1582
        %vm1584 = vweird.f32 %v1577
        %vm1585 = vweird.f32 %v1579
        %vm1586 = vmor %vm1584, %vm1585
        %v1587 = vsel %vm1586, %v1579, %v1583
        %v1588 = vand.u32 2147483647, %v1577
        %vm1589 = vcmp.eq.f32.partialorder %v1588, 8.507059e+37
        %v1590 = vand.u32 %v1577, 2147483648
        %v1591 = vor.u32 1.1754944e-38, %v1590
        %v1592 = vsel %vm1589, %v1591, %v1587
        %v1593 = vmul.f32 1.0, %v1592
        %v1594 = vrcp.pop %v1578
        %v1595 = vmul.f32 %v1578, %v1594
        %v1596 = vsub.f32 1.0, %v1595
        %v1597 = vmul.f32 %v1594, %v1596
        %v1598 = vadd.f32 %v1594, %v1597
        %vm1599 = vweird.f32 %v1578
        %vm1600 = vweird.f32 %v1594
        %vm1601 = vmor %vm1599, %vm1600
        %v1602 = vsel %vm1601, %v1594, %v1598
        %v1603 = vand.u32 2147483647, %v1578
        %vm1604 = vcmp.eq.f32.partialorder %v1603, 8.507059e+37
        %v1605 = vand.u32 %v1578, 2147483648
        %v1606 = vor.u32 1.1754944e-38, %v1605
        %v1607 = vsel %vm1604, %v1606, %v1602
        %v1608 = vmul.f32 1.0, %v1607
        %v1609 = vmul.f32 %v1553, %v1212
        %v1610 = vmul.f32 %v1568, %v1213
        %v1611 = vmul.f32 %v1515, %v1569
        %v1612 = vmul.f32 %v1530, %v1570
        %v1613 = vadd.f32 %v1609, %v1611
        %v1614 = vadd.f32 %v1610, %v1612
        %v1615 = vtanh.pop %v1613
        %v1616 = vtanh.pop %v1614
        %v1617 = vmul.f32 %v1593, %v1615
        %v1618 = vmul.f32 %v1608, %v1616
        %v1619 = vpack.c.bf16 %v1617, %v1617
        %v1620 = vpack.c.bf16 %v1618, %v1618
        %s1621 = scalar_lea.vmem %s284, 8 [#allocation13]
        %1622 = vst [vmem:[%s1621] sm:$0xf] %v1619
        %1623 = vst [vmem:[%s1621 + $0x4] sm:$0xf] %v1620
        %s1624 = scalar_lea.vmem [#allocation4], 128
        %v1625 = vld [vmem:[%s1624] sm:$0xff]
        %v1626 = vld [vmem:[%s1624 + $0x8] sm:$0xff]
        %v1627 = vld [vmem:[%s1624 + $0x10] sm:$0xff]
        %v1628 = vld [vmem:[%s1624 + $0x18] sm:$0xff]
        %v1629 = vld [vmem:[%s1624 + $0x20] sm:$0xff]
        %v1630 = vld [vmem:[%s1624 + $0x28] sm:$0xff]
        %v1631 = vld [vmem:[%s1624 + $0x30] sm:$0xff]
        %v1632 = vld [vmem:[%s1624 + $0x38] sm:$0xff]
        %v1633 = vld [vmem:[#allocation11] sm:$0xff]
        %v1634 = vld [vmem:[#allocation11 + $0x8] sm:$0xff]
        %v1635 = vld [vmem:[#allocation11 + $0x10] sm:$0xff]
        %v1636 = vld [vmem:[#allocation11 + $0x18] sm:$0xff]
        %v1637 = vld [vmem:[#allocation11 + $0x20] sm:$0xff]
        %v1638 = vld [vmem:[#allocation11 + $0x28] sm:$0xff]
        %v1639 = vld [vmem:[#allocation11 + $0x30] sm:$0xff]
        %v1640 = vld [vmem:[#allocation11 + $0x38] sm:$0xff]
        %v1641 = vld [vmem:[#allocation11 + $0x40] sm:$0xff]
        %v1642 = vld [vmem:[#allocation11 + $0x48] sm:$0xff]
        %v1643 = vld [vmem:[#allocation11 + $0x50] sm:$0xff]
        %v1644 = vld [vmem:[#allocation11 + $0x58] sm:$0xff]
        %v1645 = vld [vmem:[#allocation11 + $0x60] sm:$0xff]
        %v1646 = vld [vmem:[#allocation11 + $0x68] sm:$0xff]
        %v1647 = vld [vmem:[#allocation11 + $0x70] sm:$0xff]
        %v1648 = vld [vmem:[#allocation11 + $0x78] sm:$0xff]
        %v1649 = vld [vmem:[#allocation11 + $0x80] sm:$0xff]
        %v1650 = vld [vmem:[#allocation11 + $0x88] sm:$0xff]
        %v1651 = vld [vmem:[#allocation11 + $0x90] sm:$0xff]
        %v1652 = vld [vmem:[#allocation11 + $0x98] sm:$0xff]
        %v1653 = vld [vmem:[#allocation11 + $0xa0] sm:$0xff]
        %v1654 = vld [vmem:[#allocation11 + $0xa8] sm:$0xff]
        %v1655 = vld [vmem:[#allocation11 + $0xb0] sm:$0xff]
        %v1656 = vld [vmem:[#allocation11 + $0xb8] sm:$0xff]
        %v1657 = vld [vmem:[#allocation11 + $0xc0] sm:$0xff]
        %v1658 = vld [vmem:[#allocation11 + $0xc8] sm:$0xff]
        %v1659 = vld [vmem:[#allocation11 + $0xd0] sm:$0xff]
        %v1660 = vld [vmem:[#allocation11 + $0xd8] sm:$0xff]
        %v1661 = vld [vmem:[#allocation11 + $0xe0] sm:$0xff]
        %v1662 = vld [vmem:[#allocation11 + $0xe8] sm:$0xff]
        %v1663 = vld [vmem:[#allocation11 + $0xf0] sm:$0xff]
        %v1664 = vld [vmem:[#allocation11 + $0xf8] sm:$0xff]
        %v1667 = vunpack.c.l.b16 %v1619
        %v1668 = vunpack.c.l.b16 %v1620
        %v1669 = vpack.c.b16 %v1668, %v1667
        %v1703 = vunpack.c.l.b16 %v1633
        %v1704 = vunpack.c.h.b16 %v1633
        %v1705 = vunpack.c.l.b16 %v1634
        %v1706 = vunpack.c.h.b16 %v1634
        %v1707 = vunpack.c.l.b16 %v1635
        %v1708 = vunpack.c.h.b16 %v1635
        %v1709 = vunpack.c.l.b16 %v1636
        %v1710 = vunpack.c.h.b16 %v1636
        %v1711 = vunpack.c.l.b16 %v1637
        %v1712 = vunpack.c.h.b16 %v1637
        %v1713 = vunpack.c.l.b16 %v1638
        %v1714 = vunpack.c.h.b16 %v1638
        %v1715 = vunpack.c.l.b16 %v1639
        %v1716 = vunpack.c.h.b16 %v1639
        %v1717 = vunpack.c.l.b16 %v1640
        %v1718 = vunpack.c.h.b16 %v1640
        %v1719 = vunpack.c.l.b16 %v1641
        %v1720 = vunpack.c.h.b16 %v1641
        %v1721 = vunpack.c.l.b16 %v1642
        %v1722 = vunpack.c.h.b16 %v1642
        %v1723 = vunpack.c.l.b16 %v1643
        %v1724 = vunpack.c.h.b16 %v1643
        %v1725 = vunpack.c.l.b16 %v1644
        %v1726 = vunpack.c.h.b16 %v1644
        %v1727 = vunpack.c.l.b16 %v1645
        %v1728 = vunpack.c.h.b16 %v1645
        %v1729 = vunpack.c.l.b16 %v1646
        %v1730 = vunpack.c.h.b16 %v1646
        %v1731 = vunpack.c.l.b16 %v1647
        %v1732 = vunpack.c.h.b16 %v1647
        %v1733 = vunpack.c.l.b16 %v1648
        %v1734 = vunpack.c.h.b16 %v1648
        %v1735 = vunpack.c.l.b16 %v1649
        %v1736 = vunpack.c.h.b16 %v1649
        %v1737 = vunpack.c.l.b16 %v1650
        %v1738 = vunpack.c.h.b16 %v1650
        %v1739 = vunpack.c.l.b16 %v1651
        %v1740 = vunpack.c.h.b16 %v1651
        %v1741 = vunpack.c.l.b16 %v1652
        %v1742 = vunpack.c.h.b16 %v1652
        %v1743 = vunpack.c.l.b16 %v1653
        %v1744 = vunpack.c.h.b16 %v1653
        %v1745 = vunpack.c.l.b16 %v1654
        %v1746 = vunpack.c.h.b16 %v1654
        %v1747 = vunpack.c.l.b16 %v1655
        %v1748 = vunpack.c.h.b16 %v1655
        %v1749 = vunpack.c.l.b16 %v1656
        %v1750 = vunpack.c.h.b16 %v1656
        %v1751 = vunpack.c.l.b16 %v1657
        %v1752 = vunpack.c.h.b16 %v1657
        %v1753 = vunpack.c.l.b16 %v1658
        %v1754 = vunpack.c.h.b16 %v1658
        %v1755 = vunpack.c.l.b16 %v1659
        %v1756 = vunpack.c.h.b16 %v1659
        %v1757 = vunpack.c.l.b16 %v1660
        %v1758 = vunpack.c.h.b16 %v1660
        %v1759 = vunpack.c.l.b16 %v1661
        %v1760 = vunpack.c.h.b16 %v1661
        %v1761 = vunpack.c.l.b16 %v1662
        %v1762 = vunpack.c.h.b16 %v1662
        %v1763 = vunpack.c.l.b16 %v1663
        %v1764 = vunpack.c.h.b16 %v1663
        %v1765 = vunpack.c.l.b16 %v1664
        %v1766 = vunpack.c.h.b16 %v1664
        %v1767 = vpack.c.b16 %v1707, %v1703
        %v1768 = vpack.c.b16 %v1708, %v1704
        %v1769 = vpack.c.b16 %v1709, %v1705
        %v1770 = vpack.c.b16 %v1710, %v1706
        %v1771 = vpack.c.b16 %v1715, %v1711
        %v1772 = vpack.c.b16 %v1716, %v1712
        %v1773 = vpack.c.b16 %v1717, %v1713
        %v1774 = vpack.c.b16 %v1718, %v1714
        %v1775 = vpack.c.b16 %v1723, %v1719
        %v1776 = vpack.c.b16 %v1724, %v1720
        %v1777 = vpack.c.b16 %v1725, %v1721
        %v1778 = vpack.c.b16 %v1726, %v1722
        %v1779 = vpack.c.b16 %v1731, %v1727
        %v1780 = vpack.c.b16 %v1732, %v1728
        %v1781 = vpack.c.b16 %v1733, %v1729
        %v1782 = vpack.c.b16 %v1734, %v1730
        %v1783 = vpack.c.b16 %v1739, %v1735
        %v1784 = vpack.c.b16 %v1740, %v1736
        %v1785 = vpack.c.b16 %v1741, %v1737
        %v1786 = vpack.c.b16 %v1742, %v1738
        %v1787 = vpack.c.b16 %v1747, %v1743
        %v1788 = vpack.c.b16 %v1748, %v1744
        %v1789 = vpack.c.b16 %v1749, %v1745
        %v1790 = vpack.c.b16 %v1750, %v1746
        %v1791 = vpack.c.b16 %v1755, %v1751
        %v1792 = vpack.c.b16 %v1756, %v1752
        %v1793 = vpack.c.b16 %v1757, %v1753
        %v1794 = vpack.c.b16 %v1758, %v1754
        %v1795 = vpack.c.b16 %v1763, %v1759
        %v1796 = vpack.c.b16 %v1764, %v1760
        %v1797 = vpack.c.b16 %v1765, %v1761
        %v1798 = vpack.c.b16 %v1766, %v1762
        %1831 = vmatpush.bf16.msra.mxu0 %v1795
        %1832 = vmatpush.bf16.msra.mxu0 %v1791
        %1833 = vmatpush.bf16.msra.mxu0 %v1787
        %1834 = vmatpush.bf16.msra.mxu0 %v1783
        %1835 = vmatpush.bf16.msra.mxu0 %v1779
        %1836 = vmatpush.bf16.msra.mxu0 %v1775
        %1837 = vmatpush.bf16.msra.mxu0 %v1771
        %1838 = vmatpush.bf16.msra.mxu0 %v1767
        %1839 = vmatmul.bf16.gmra.mxu0 %v1669
        %v1840 = vpop.f32.mrf.mxu0
        %v1841 = vadd.f32 0.0, %v1840
        %v1842 = vpop.f32.mrf.mxu0
        %v1843 = vadd.f32 0.0, %v1842
        %1844 = vdwg.mxu0
        %1845 = vmatpush.bf16.msra.mxu0 %v1796
        %1846 = vmatpush.bf16.msra.mxu0 %v1792
        %1847 = vmatpush.bf16.msra.mxu0 %v1788
        %1848 = vmatpush.bf16.msra.mxu0 %v1784
        %1849 = vmatpush.bf16.msra.mxu0 %v1780
        %1850 = vmatpush.bf16.msra.mxu0 %v1776
        %1851 = vmatpush.bf16.msra.mxu0 %v1772
        %1852 = vmatpush.bf16.msra.mxu0 %v1768
        %1853 = vmatmul.bf16.gmra.mxu0 %v1669
        %v1854 = vpop.f32.mrf.mxu0
        %v1855 = vadd.f32 0.0, %v1854
        %v1856 = vpop.f32.mrf.mxu0
        %v1857 = vadd.f32 0.0, %v1856
        %1858 = vdwg.mxu0
        %1859 = vmatpush.bf16.msra.mxu0 %v1797
        %1860 = vmatpush.bf16.msra.mxu0 %v1793
        %1861 = vmatpush.bf16.msra.mxu0 %v1789
        %1862 = vmatpush.bf16.msra.mxu0 %v1785
        %1863 = vmatpush.bf16.msra.mxu0 %v1781
        %1864 = vmatpush.bf16.msra.mxu0 %v1777
        %1865 = vmatpush.bf16.msra.mxu0 %v1773
        %1866 = vmatpush.bf16.msra.mxu0 %v1769
        %1867 = vmatmul.bf16.gmra.mxu0 %v1669
        %v1868 = vpop.f32.mrf.mxu0
        %v1869 = vadd.f32 0.0, %v1868
        %v1870 = vpop.f32.mrf.mxu0
        %v1871 = vadd.f32 0.0, %v1870
        %1872 = vdwg.mxu0
        %1873 = vmatpush.bf16.msra.mxu0 %v1798
        %1874 = vmatpush.bf16.msra.mxu0 %v1794
        %1875 = vmatpush.bf16.msra.mxu0 %v1790
        %1876 = vmatpush.bf16.msra.mxu0 %v1786
        %1877 = vmatpush.bf16.msra.mxu0 %v1782
        %1878 = vmatpush.bf16.msra.mxu0 %v1778
        %1879 = vmatpush.bf16.msra.mxu0 %v1774
        %1880 = vmatpush.bf16.msra.mxu0 %v1770
        %1881 = vmatmul.bf16.gmra.mxu0 %v1669
        %v1882 = vpop.f32.mrf.mxu0
        %v1883 = vadd.f32 0.0, %v1882
        %v1884 = vpop.f32.mrf.mxu0
        %v1885 = vadd.f32 0.0, %v1884
        %1886 = vdwg.mxu0
        %v1887 = vadd.f32 %v1625, %v1841
        %v1888 = vadd.f32 %v1626, %v1855
        %v1889 = vadd.f32 %v1627, %v1869
        %v1890 = vadd.f32 %v1628, %v1883
        %v1891 = vadd.f32 %v1629, %v1843
        %v1892 = vadd.f32 %v1630, %v1857
        %v1893 = vadd.f32 %v1631, %v1871
        %v1894 = vadd.f32 %v1632, %v1885
        %v1895 = vxor.u32 %v1887, 2147483648
        %v1896 = vxor.u32 %v1891, 2147483648
        %v1897 = vmul.f32 %v1895, 1.442695
        %v1898 = vpow.pop %v1897
        %v1899 = vmul.f32 %v1896, 1.442695
        %v1900 = vpow.pop %v1899
        %v1901 = vadd.f32 %v1898, 1.0
        %v1902 = vadd.f32 %v1900, 1.0
        %v1903 = vrcp.pop %v1901
        %v1904 = vmul.f32 %v1901, %v1903
        %v1905 = vsub.f32 1.0, %v1904
        %v1906 = vmul.f32 %v1903, %v1905
        %v1907 = vadd.f32 %v1903, %v1906
        %vm1908 = vweird.f32 %v1901
        %vm1909 = vweird.f32 %v1903
        %vm1910 = vmor %vm1908, %vm1909
        %v1911 = vsel %vm1910, %v1903, %v1907
        %v1912 = vand.u32 2147483647, %v1901
        %vm1913 = vcmp.eq.f32.partialorder %v1912, 8.507059e+37
        %v1914 = vand.u32 %v1901, 2147483648
        %v1915 = vor.u32 1.1754944e-38, %v1914
        %v1916 = vsel %vm1913, %v1915, %v1911
        %v1917 = vmul.f32 1.0, %v1916
        %v1918 = vrcp.pop %v1902
        %v1919 = vmul.f32 %v1902, %v1918
        %v1920 = vsub.f32 1.0, %v1919
        %v1921 = vmul.f32 %v1918, %v1920
        %v1922 = vadd.f32 %v1918, %v1921
        %vm1923 = vweird.f32 %v1902
        %vm1924 = vweird.f32 %v1918
        %vm1925 = vmor %vm1923, %vm1924
        %v1926 = vsel %vm1925, %v1918, %v1922
        %v1927 = vand.u32 2147483647, %v1902
        %vm1928 = vcmp.eq.f32.partialorder %v1927, 8.507059e+37
        %v1929 = vand.u32 %v1902, 2147483648
        %v1930 = vor.u32 1.1754944e-38, %v1929
        %v1931 = vsel %vm1928, %v1930, %v1926
        %v1932 = vmul.f32 1.0, %v1931
        %v1933 = vxor.u32 %v1888, 2147483648
        %v1934 = vxor.u32 %v1892, 2147483648
        %v1935 = vmul.f32 %v1933, 1.442695
        %v1936 = vpow.pop %v1935
        %v1937 = vmul.f32 %v1934, 1.442695
        %v1938 = vpow.pop %v1937
        %v1939 = vadd.f32 %v1936, 1.0
        %v1940 = vadd.f32 %v1938, 1.0
        %v1941 = vrcp.pop %v1939
        %v1942 = vmul.f32 %v1939, %v1941
        %v1943 = vsub.f32 1.0, %v1942
        %v1944 = vmul.f32 %v1941, %v1943
        %v1945 = vadd.f32 %v1941, %v1944
        %vm1946 = vweird.f32 %v1939
        %vm1947 = vweird.f32 %v1941
        %vm1948 = vmor %vm1946, %vm1947
        %v1949 = vsel %vm1948, %v1941, %v1945
        %v1950 = vand.u32 2147483647, %v1939
        %vm1951 = vcmp.eq.f32.partialorder %v1950, 8.507059e+37
        %v1952 = vand.u32 %v1939, 2147483648
        %v1953 = vor.u32 1.1754944e-38, %v1952
        %v1954 = vsel %vm1951, %v1953, %v1949
        %v1955 = vmul.f32 1.0, %v1954
        %v1956 = vrcp.pop %v1940
        %v1957 = vmul.f32 %v1940, %v1956
        %v1958 = vsub.f32 1.0, %v1957
        %v1959 = vmul.f32 %v1956, %v1958
        %v1960 = vadd.f32 %v1956, %v1959
        %vm1961 = vweird.f32 %v1940
        %vm1962 = vweird.f32 %v1956
        %vm1963 = vmor %vm1961, %vm1962
        %v1964 = vsel %vm1963, %v1956, %v1960
        %v1965 = vand.u32 2147483647, %v1940
        %vm1966 = vcmp.eq.f32.partialorder %v1965, 8.507059e+37
        %v1967 = vand.u32 %v1940, 2147483648
        %v1968 = vor.u32 1.1754944e-38, %v1967
        %v1969 = vsel %vm1966, %v1968, %v1964
        %v1970 = vmul.f32 1.0, %v1969
        %v1971 = vtanh.pop %v1889
        %v1972 = vtanh.pop %v1893
        %v1973 = vxor.u32 %v1890, 2147483648
        %v1974 = vxor.u32 %v1894, 2147483648
        %v1975 = vmul.f32 %v1973, 1.442695
        %v1976 = vpow.pop %v1975
        %v1977 = vmul.f32 %v1974, 1.442695
        %v1978 = vpow.pop %v1977
        %v1979 = vadd.f32 %v1976, 1.0
        %v1980 = vadd.f32 %v1978, 1.0
        %v1981 = vrcp.pop %v1979
        %v1982 = vmul.f32 %v1979, %v1981
        %v1983 = vsub.f32 1.0, %v1982
        %v1984 = vmul.f32 %v1981, %v1983
        %v1985 = vadd.f32 %v1981, %v1984
        %vm1986 = vweird.f32 %v1979
        %vm1987 = vweird.f32 %v1981
        %vm1988 = vmor %vm1986, %vm1987
        %v1989 = vsel %vm1988, %v1981, %v1985
        %v1990 = vand.u32 2147483647, %v1979
        %vm1991 = vcmp.eq.f32.partialorder %v1990, 8.507059e+37
        %v1992 = vand.u32 %v1979, 2147483648
        %v1993 = vor.u32 1.1754944e-38, %v1992
        %v1994 = vsel %vm1991, %v1993, %v1989
        %v1995 = vmul.f32 1.0, %v1994
        %v1996 = vrcp.pop %v1980
        %v1997 = vmul.f32 %v1980, %v1996
        %v1998 = vsub.f32 1.0, %v1997
        %v1999 = vmul.f32 %v1996, %v1998
        %v2000 = vadd.f32 %v1996, %v1999
        %vm2001 = vweird.f32 %v1980
        %vm2002 = vweird.f32 %v1996
        %vm2003 = vmor %vm2001, %vm2002
        %v2004 = vsel %vm2003, %v1996, %v2000
        %v2005 = vand.u32 2147483647, %v1980
        %vm2006 = vcmp.eq.f32.partialorder %v2005, 8.507059e+37
        %v2007 = vand.u32 %v1980, 2147483648
        %v2008 = vor.u32 1.1754944e-38, %v2007
        %v2009 = vsel %vm2006, %v2008, %v2004
        %v2010 = vmul.f32 1.0, %v2009
        %v2011 = vmul.f32 %v1955, %v1613
        %v2012 = vmul.f32 %v1970, %v1614
        %v2013 = vmul.f32 %v1917, %v1971
        %v2014 = vmul.f32 %v1932, %v1972
        %v2015 = vadd.f32 %v2011, %v2013
        %v2016 = vadd.f32 %v2012, %v2014
        %v2017 = vtanh.pop %v2015
        %v2018 = vtanh.pop %v2016
        %v2019 = vmul.f32 %v1995, %v2017
        %v2020 = vmul.f32 %v2010, %v2018
        %v2021 = vpack.c.bf16 %v2019, %v2019
        %v2022 = vpack.c.bf16 %v2020, %v2020
        %s2023 = scalar_lea.vmem %s284, 16 [#allocation13]
        %2024 = vst [vmem:[%s2023] sm:$0xf] %v2021
        %2025 = vst [vmem:[%s2023 + $0x4] sm:$0xf] %v2022
        %s2026 = scalar_lea.vmem [#allocation4], 192
        %v2027 = vld [vmem:[%s2026] sm:$0xff]
        %v2028 = vld [vmem:[%s2026 + $0x8] sm:$0xff]
        %v2029 = vld [vmem:[%s2026 + $0x10] sm:$0xff]
        %v2030 = vld [vmem:[%s2026 + $0x18] sm:$0xff]
        %v2031 = vld [vmem:[%s2026 + $0x20] sm:$0xff]
        %v2032 = vld [vmem:[%s2026 + $0x28] sm:$0xff]
        %v2033 = vld [vmem:[%s2026 + $0x30] sm:$0xff]
        %v2034 = vld [vmem:[%s2026 + $0x38] sm:$0xff]
        %v2035 = vld [vmem:[#allocation11] sm:$0xff]
        %v2036 = vld [vmem:[#allocation11 + $0x8] sm:$0xff]
        %v2037 = vld [vmem:[#allocation11 + $0x10] sm:$0xff]
        %v2038 = vld [vmem:[#allocation11 + $0x18] sm:$0xff]
        %v2039 = vld [vmem:[#allocation11 + $0x20] sm:$0xff]
        %v2040 = vld [vmem:[#allocation11 + $0x28] sm:$0xff]
        %v2041 = vld [vmem:[#allocation11 + $0x30] sm:$0xff]
        %v2042 = vld [vmem:[#allocation11 + $0x38] sm:$0xff]
        %v2043 = vld [vmem:[#allocation11 + $0x40] sm:$0xff]
        %v2044 = vld [vmem:[#allocation11 + $0x48] sm:$0xff]
        %v2045 = vld [vmem:[#allocation11 + $0x50] sm:$0xff]
        %v2046 = vld [vmem:[#allocation11 + $0x58] sm:$0xff]
        %v2047 = vld [vmem:[#allocation11 + $0x60] sm:$0xff]
        %v2048 = vld [vmem:[#allocation11 + $0x68] sm:$0xff]
        %v2049 = vld [vmem:[#allocation11 + $0x70] sm:$0xff]
        %v2050 = vld [vmem:[#allocation11 + $0x78] sm:$0xff]
        %v2051 = vld [vmem:[#allocation11 + $0x80] sm:$0xff]
        %v2052 = vld [vmem:[#allocation11 + $0x88] sm:$0xff]
        %v2053 = vld [vmem:[#allocation11 + $0x90] sm:$0xff]
        %v2054 = vld [vmem:[#allocation11 + $0x98] sm:$0xff]
        %v2055 = vld [vmem:[#allocation11 + $0xa0] sm:$0xff]
        %v2056 = vld [vmem:[#allocation11 + $0xa8] sm:$0xff]
        %v2057 = vld [vmem:[#allocation11 + $0xb0] sm:$0xff]
        %v2058 = vld [vmem:[#allocation11 + $0xb8] sm:$0xff]
        %v2059 = vld [vmem:[#allocation11 + $0xc0] sm:$0xff]
        %v2060 = vld [vmem:[#allocation11 + $0xc8] sm:$0xff]
        %v2061 = vld [vmem:[#allocation11 + $0xd0] sm:$0xff]
        %v2062 = vld [vmem:[#allocation11 + $0xd8] sm:$0xff]
        %v2063 = vld [vmem:[#allocation11 + $0xe0] sm:$0xff]
        %v2064 = vld [vmem:[#allocation11 + $0xe8] sm:$0xff]
        %v2065 = vld [vmem:[#allocation11 + $0xf0] sm:$0xff]
        %v2066 = vld [vmem:[#allocation11 + $0xf8] sm:$0xff]
        %v2069 = vunpack.c.l.b16 %v2021
        %v2070 = vunpack.c.l.b16 %v2022
        %v2071 = vpack.c.b16 %v2070, %v2069
        %v2105 = vunpack.c.l.b16 %v2035
        %v2106 = vunpack.c.h.b16 %v2035
        %v2107 = vunpack.c.l.b16 %v2036
        %v2108 = vunpack.c.h.b16 %v2036
        %v2109 = vunpack.c.l.b16 %v2037
        %v2110 = vunpack.c.h.b16 %v2037
        %v2111 = vunpack.c.l.b16 %v2038
        %v2112 = vunpack.c.h.b16 %v2038
        %v2113 = vunpack.c.l.b16 %v2039
        %v2114 = vunpack.c.h.b16 %v2039
        %v2115 = vunpack.c.l.b16 %v2040
        %v2116 = vunpack.c.h.b16 %v2040
        %v2117 = vunpack.c.l.b16 %v2041
        %v2118 = vunpack.c.h.b16 %v2041
        %v2119 = vunpack.c.l.b16 %v2042
        %v2120 = vunpack.c.h.b16 %v2042
        %v2121 = vunpack.c.l.b16 %v2043
        %v2122 = vunpack.c.h.b16 %v2043
        %v2123 = vunpack.c.l.b16 %v2044
        %v2124 = vunpack.c.h.b16 %v2044
        %v2125 = vunpack.c.l.b16 %v2045
        %v2126 = vunpack.c.h.b16 %v2045
        %v2127 = vunpack.c.l.b16 %v2046
        %v2128 = vunpack.c.h.b16 %v2046
        %v2129 = vunpack.c.l.b16 %v2047
        %v2130 = vunpack.c.h.b16 %v2047
        %v2131 = vunpack.c.l.b16 %v2048
        %v2132 = vunpack.c.h.b16 %v2048
        %v2133 = vunpack.c.l.b16 %v2049
        %v2134 = vunpack.c.h.b16 %v2049
        %v2135 = vunpack.c.l.b16 %v2050
        %v2136 = vunpack.c.h.b16 %v2050
        %v2137 = vunpack.c.l.b16 %v2051
        %v2138 = vunpack.c.h.b16 %v2051
        %v2139 = vunpack.c.l.b16 %v2052
        %v2140 = vunpack.c.h.b16 %v2052
        %v2141 = vunpack.c.l.b16 %v2053
        %v2142 = vunpack.c.h.b16 %v2053
        %v2143 = vunpack.c.l.b16 %v2054
        %v2144 = vunpack.c.h.b16 %v2054
        %v2145 = vunpack.c.l.b16 %v2055
        %v2146 = vunpack.c.h.b16 %v2055
        %v2147 = vunpack.c.l.b16 %v2056
        %v2148 = vunpack.c.h.b16 %v2056
        %v2149 = vunpack.c.l.b16 %v2057
        %v2150 = vunpack.c.h.b16 %v2057
        %v2151 = vunpack.c.l.b16 %v2058
        %v2152 = vunpack.c.h.b16 %v2058
        %v2153 = vunpack.c.l.b16 %v2059
        %v2154 = vunpack.c.h.b16 %v2059
        %v2155 = vunpack.c.l.b16 %v2060
        %v2156 = vunpack.c.h.b16 %v2060
        %v2157 = vunpack.c.l.b16 %v2061
        %v2158 = vunpack.c.h.b16 %v2061
        %v2159 = vunpack.c.l.b16 %v2062
        %v2160 = vunpack.c.h.b16 %v2062
        %v2161 = vunpack.c.l.b16 %v2063
        %v2162 = vunpack.c.h.b16 %v2063
        %v2163 = vunpack.c.l.b16 %v2064
        %v2164 = vunpack.c.h.b16 %v2064
        %v2165 = vunpack.c.l.b16 %v2065
        %v2166 = vunpack.c.h.b16 %v2065
        %v2167 = vunpack.c.l.b16 %v2066
        %v2168 = vunpack.c.h.b16 %v2066
        %v2169 = vpack.c.b16 %v2109, %v2105
        %v2170 = vpack.c.b16 %v2110, %v2106
        %v2171 = vpack.c.b16 %v2111, %v2107
        %v2172 = vpack.c.b16 %v2112, %v2108
        %v2173 = vpack.c.b16 %v2117, %v2113
        %v2174 = vpack.c.b16 %v2118, %v2114
        %v2175 = vpack.c.b16 %v2119, %v2115
        %v2176 = vpack.c.b16 %v2120, %v2116
        %v2177 = vpack.c.b16 %v2125, %v2121
        %v2178 = vpack.c.b16 %v2126, %v2122
        %v2179 = vpack.c.b16 %v2127, %v2123
        %v2180 = vpack.c.b16 %v2128, %v2124
        %v2181 = vpack.c.b16 %v2133, %v2129
        %v2182 = vpack.c.b16 %v2134, %v2130
        %v2183 = vpack.c.b16 %v2135, %v2131
        %v2184 = vpack.c.b16 %v2136, %v2132
        %v2185 = vpack.c.b16 %v2141, %v2137
        %v2186 = vpack.c.b16 %v2142, %v2138
        %v2187 = vpack.c.b16 %v2143, %v2139
        %v2188 = vpack.c.b16 %v2144, %v2140
        %v2189 = vpack.c.b16 %v2149, %v2145
        %v2190 = vpack.c.b16 %v2150, %v2146
        %v2191 = vpack.c.b16 %v2151, %v2147
        %v2192 = vpack.c.b16 %v2152, %v2148
        %v2193 = vpack.c.b16 %v2157, %v2153
        %v2194 = vpack.c.b16 %v2158, %v2154
        %v2195 = vpack.c.b16 %v2159, %v2155
        %v2196 = vpack.c.b16 %v2160, %v2156
        %v2197 = vpack.c.b16 %v2165, %v2161
        %v2198 = vpack.c.b16 %v2166, %v2162
        %v2199 = vpack.c.b16 %v2167, %v2163
        %v2200 = vpack.c.b16 %v2168, %v2164
        %2233 = vmatpush.bf16.msra.mxu0 %v2197
        %2234 = vmatpush.bf16.msra.mxu0 %v2193
        %2235 = vmatpush.bf16.msra.mxu0 %v2189
        %2236 = vmatpush.bf16.msra.mxu0 %v2185
        %2237 = vmatpush.bf16.msra.mxu0 %v2181
        %2238 = vmatpush.bf16.msra.mxu0 %v2177
        %2239 = vmatpush.bf16.msra.mxu0 %v2173
        %2240 = vmatpush.bf16.msra.mxu0 %v2169
        %2241 = vmatmul.bf16.gmra.mxu0 %v2071
        %v2242 = vpop.f32.mrf.mxu0
        %v2243 = vadd.f32 0.0, %v2242
        %v2244 = vpop.f32.mrf.mxu0
        %v2245 = vadd.f32 0.0, %v2244
        %2246 = vdwg.mxu0
        %2247 = vmatpush.bf16.msra.mxu0 %v2198
        %2248 = vmatpush.bf16.msra.mxu0 %v2194
        %2249 = vmatpush.bf16.msra.mxu0 %v2190
        %2250 = vmatpush.bf16.msra.mxu0 %v2186
        %2251 = vmatpush.bf16.msra.mxu0 %v2182
        %2252 = vmatpush.bf16.msra.mxu0 %v2178
        %2253 = vmatpush.bf16.msra.mxu0 %v2174
        %2254 = vmatpush.bf16.msra.mxu0 %v2170
        %2255 = vmatmul.bf16.gmra.mxu0 %v2071
        %v2256 = vpop.f32.mrf.mxu0
        %v2257 = vadd.f32 0.0, %v2256
        %v2258 = vpop.f32.mrf.mxu0
        %v2259 = vadd.f32 0.0, %v2258
        %2260 = vdwg.mxu0
        %2261 = vmatpush.bf16.msra.mxu0 %v2199
        %2262 = vmatpush.bf16.msra.mxu0 %v2195
        %2263 = vmatpush.bf16.msra.mxu0 %v2191
        %2264 = vmatpush.bf16.msra.mxu0 %v2187
        %2265 = vmatpush.bf16.msra.mxu0 %v2183
        %2266 = vmatpush.bf16.msra.mxu0 %v2179
        %2267 = vmatpush.bf16.msra.mxu0 %v2175
        %2268 = vmatpush.bf16.msra.mxu0 %v2171
        %2269 = vmatmul.bf16.gmra.mxu0 %v2071
        %v2270 = vpop.f32.mrf.mxu0
        %v2271 = vadd.f32 0.0, %v2270
        %v2272 = vpop.f32.mrf.mxu0
        %v2273 = vadd.f32 0.0, %v2272
        %2274 = vdwg.mxu0
        %2275 = vmatpush.bf16.msra.mxu0 %v2200
        %2276 = vmatpush.bf16.msra.mxu0 %v2196
        %2277 = vmatpush.bf16.msra.mxu0 %v2192
        %2278 = vmatpush.bf16.msra.mxu0 %v2188
        %2279 = vmatpush.bf16.msra.mxu0 %v2184
        %2280 = vmatpush.bf16.msra.mxu0 %v2180
        %2281 = vmatpush.bf16.msra.mxu0 %v2176
        %2282 = vmatpush.bf16.msra.mxu0 %v2172
        %2283 = vmatmul.bf16.gmra.mxu0 %v2071
        %v2284 = vpop.f32.mrf.mxu0
        %v2285 = vadd.f32 0.0, %v2284
        %v2286 = vpop.f32.mrf.mxu0
        %v2287 = vadd.f32 0.0, %v2286
        %2288 = vdwg.mxu0
        %v2289 = vadd.f32 %v2027, %v2243
        %v2290 = vadd.f32 %v2028, %v2257
        %v2291 = vadd.f32 %v2029, %v2271
        %v2292 = vadd.f32 %v2030, %v2285
        %v2293 = vadd.f32 %v2031, %v2245
        %v2294 = vadd.f32 %v2032, %v2259
        %v2295 = vadd.f32 %v2033, %v2273
        %v2296 = vadd.f32 %v2034, %v2287
        %v2297 = vxor.u32 %v2289, 2147483648
        %v2298 = vxor.u32 %v2293, 2147483648
        %v2299 = vmul.f32 %v2297, 1.442695
        %v2300 = vpow.pop %v2299
        %v2301 = vmul.f32 %v2298, 1.442695
        %v2302 = vpow.pop %v2301
        %v2303 = vadd.f32 %v2300, 1.0
        %v2304 = vadd.f32 %v2302, 1.0
        %v2305 = vrcp.pop %v2303
        %v2306 = vmul.f32 %v2303, %v2305
        %v2307 = vsub.f32 1.0, %v2306
        %v2308 = vmul.f32 %v2305, %v2307
        %v2309 = vadd.f32 %v2305, %v2308
        %vm2310 = vweird.f32 %v2303
        %vm2311 = vweird.f32 %v2305
        %vm2312 = vmor %vm2310, %vm2311
        %v2313 = vsel %vm2312, %v2305, %v2309
        %v2314 = vand.u32 2147483647, %v2303
        %vm2315 = vcmp.eq.f32.partialorder %v2314, 8.507059e+37
        %v2316 = vand.u32 %v2303, 2147483648
        %v2317 = vor.u32 1.1754944e-38, %v2316
        %v2318 = vsel %vm2315, %v2317, %v2313
        %v2319 = vmul.f32 1.0, %v2318
        %v2320 = vrcp.pop %v2304
        %v2321 = vmul.f32 %v2304, %v2320
        %v2322 = vsub.f32 1.0, %v2321
        %v2323 = vmul.f32 %v2320, %v2322
        %v2324 = vadd.f32 %v2320, %v2323
        %vm2325 = vweird.f32 %v2304
        %vm2326 = vweird.f32 %v2320
        %vm2327 = vmor %vm2325, %vm2326
        %v2328 = vsel %vm2327, %v2320, %v2324
        %v2329 = vand.u32 2147483647, %v2304
        %vm2330 = vcmp.eq.f32.partialorder %v2329, 8.507059e+37
        %v2331 = vand.u32 %v2304, 2147483648
        %v2332 = vor.u32 1.1754944e-38, %v2331
        %v2333 = vsel %vm2330, %v2332, %v2328
        %v2334 = vmul.f32 1.0, %v2333
        %v2335 = vxor.u32 %v2290, 2147483648
        %v2336 = vxor.u32 %v2294, 2147483648
        %v2337 = vmul.f32 %v2335, 1.442695
        %v2338 = vpow.pop %v2337
        %v2339 = vmul.f32 %v2336, 1.442695
        %v2340 = vpow.pop %v2339
        %v2341 = vadd.f32 %v2338, 1.0
        %v2342 = vadd.f32 %v2340, 1.0
        %v2343 = vrcp.pop %v2341
        %v2344 = vmul.f32 %v2341, %v2343
        %v2345 = vsub.f32 1.0, %v2344
        %v2346 = vmul.f32 %v2343, %v2345
        %v2347 = vadd.f32 %v2343, %v2346
        %vm2348 = vweird.f32 %v2341
        %vm2349 = vweird.f32 %v2343
        %vm2350 = vmor %vm2348, %vm2349
        %v2351 = vsel %vm2350, %v2343, %v2347
        %v2352 = vand.u32 2147483647, %v2341
        %vm2353 = vcmp.eq.f32.partialorder %v2352, 8.507059e+37
        %v2354 = vand.u32 %v2341, 2147483648
        %v2355 = vor.u32 1.1754944e-38, %v2354
        %v2356 = vsel %vm2353, %v2355, %v2351
        %v2357 = vmul.f32 1.0, %v2356
        %v2358 = vrcp.pop %v2342
        %v2359 = vmul.f32 %v2342, %v2358
        %v2360 = vsub.f32 1.0, %v2359
        %v2361 = vmul.f32 %v2358, %v2360
        %v2362 = vadd.f32 %v2358, %v2361
        %vm2363 = vweird.f32 %v2342
        %vm2364 = vweird.f32 %v2358
        %vm2365 = vmor %vm2363, %vm2364
        %v2366 = vsel %vm2365, %v2358, %v2362
        %v2367 = vand.u32 2147483647, %v2342
        %vm2368 = vcmp.eq.f32.partialorder %v2367, 8.507059e+37
        %v2369 = vand.u32 %v2342, 2147483648
        %v2370 = vor.u32 1.1754944e-38, %v2369
        %v2371 = vsel %vm2368, %v2370, %v2366
        %v2372 = vmul.f32 1.0, %v2371
        %v2373 = vtanh.pop %v2291
        %v2374 = vtanh.pop %v2295
        %v2375 = vxor.u32 %v2292, 2147483648
        %v2376 = vxor.u32 %v2296, 2147483648
        %v2377 = vmul.f32 %v2375, 1.442695
        %v2378 = vpow.pop %v2377
        %v2379 = vmul.f32 %v2376, 1.442695
        %v2380 = vpow.pop %v2379
        %v2381 = vadd.f32 %v2378, 1.0
        %v2382 = vadd.f32 %v2380, 1.0
        %v2383 = vrcp.pop %v2381
        %v2384 = vmul.f32 %v2381, %v2383
        %v2385 = vsub.f32 1.0, %v2384
        %v2386 = vmul.f32 %v2383, %v2385
        %v2387 = vadd.f32 %v2383, %v2386
        %vm2388 = vweird.f32 %v2381
        %vm2389 = vweird.f32 %v2383
        %vm2390 = vmor %vm2388, %vm2389
        %v2391 = vsel %vm2390, %v2383, %v2387
        %v2392 = vand.u32 2147483647, %v2381
        %vm2393 = vcmp.eq.f32.partialorder %v2392, 8.507059e+37
        %v2394 = vand.u32 %v2381, 2147483648
        %v2395 = vor.u32 1.1754944e-38, %v2394
        %v2396 = vsel %vm2393, %v2395, %v2391
        %v2397 = vmul.f32 1.0, %v2396
        %v2398 = vrcp.pop %v2382
        %v2399 = vmul.f32 %v2382, %v2398
        %v2400 = vsub.f32 1.0, %v2399
        %v2401 = vmul.f32 %v2398, %v2400
        %v2402 = vadd.f32 %v2398, %v2401
        %vm2403 = vweird.f32 %v2382
        %vm2404 = vweird.f32 %v2398
        %vm2405 = vmor %vm2403, %vm2404
        %v2406 = vsel %vm2405, %v2398, %v2402
        %v2407 = vand.u32 2147483647, %v2382
        %vm2408 = vcmp.eq.f32.partialorder %v2407, 8.507059e+37
        %v2409 = vand.u32 %v2382, 2147483648
        %v2410 = vor.u32 1.1754944e-38, %v2409
        %v2411 = vsel %vm2408, %v2410, %v2406
        %v2412 = vmul.f32 1.0, %v2411
        %v2413 = vmul.f32 %v2357, %v2015
        %v2414 = vmul.f32 %v2372, %v2016
        %v2415 = vmul.f32 %v2319, %v2373
        %v2416 = vmul.f32 %v2334, %v2374
        %v2417 = vadd.f32 %v2413, %v2415
        %v2418 = vadd.f32 %v2414, %v2416
        %v2419 = vtanh.pop %v2417
        %v2420 = vtanh.pop %v2418
        %v2421 = vmul.f32 %v2397, %v2419
        %v2422 = vmul.f32 %v2412, %v2420
        %v2423 = vpack.c.bf16 %v2421, %v2421
        %v2424 = vpack.c.bf16 %v2422, %v2422
        %s2425 = scalar_lea.vmem %s284, 24 [#allocation13]
        %2426 = vst [vmem:[%s2425] sm:$0xf] %v2423
        %2427 = vst [vmem:[%s2425 + $0x4] sm:$0xf] %v2424
        %s2428 = scalar_lea.vmem [#allocation4], 256
        %v2429 = vld [vmem:[%s2428] sm:$0xff]
        %v2430 = vld [vmem:[%s2428 + $0x8] sm:$0xff]
        %v2431 = vld [vmem:[%s2428 + $0x10] sm:$0xff]
        %v2432 = vld [vmem:[%s2428 + $0x18] sm:$0xff]
        %v2433 = vld [vmem:[%s2428 + $0x20] sm:$0xff]
        %v2434 = vld [vmem:[%s2428 + $0x28] sm:$0xff]
        %v2435 = vld [vmem:[%s2428 + $0x30] sm:$0xff]
        %v2436 = vld [vmem:[%s2428 + $0x38] sm:$0xff]
        %v2437 = vld [vmem:[#allocation11] sm:$0xff]
        %v2438 = vld [vmem:[#allocation11 + $0x8] sm:$0xff]
        %v2439 = vld [vmem:[#allocation11 + $0x10] sm:$0xff]
        %v2440 = vld [vmem:[#allocation11 + $0x18] sm:$0xff]
        %v2441 = vld [vmem:[#allocation11 + $0x20] sm:$0xff]
        %v2442 = vld [vmem:[#allocation11 + $0x28] sm:$0xff]
        %v2443 = vld [vmem:[#allocation11 + $0x30] sm:$0xff]
        %v2444 = vld [vmem:[#allocation11 + $0x38] sm:$0xff]
        %v2445 = vld [vmem:[#allocation11 + $0x40] sm:$0xff]
        %v2446 = vld [vmem:[#allocation11 + $0x48] sm:$0xff]
        %v2447 = vld [vmem:[#allocation11 + $0x50] sm:$0xff]
        %v2448 = vld [vmem:[#allocation11 + $0x58] sm:$0xff]
        %v2449 = vld [vmem:[#allocation11 + $0x60] sm:$0xff]
        %v2450 = vld [vmem:[#allocation11 + $0x68] sm:$0xff]
        %v2451 = vld [vmem:[#allocation11 + $0x70] sm:$0xff]
        %v2452 = vld [vmem:[#allocation11 + $0x78] sm:$0xff]
        %v2453 = vld [vmem:[#allocation11 + $0x80] sm:$0xff]
        %v2454 = vld [vmem:[#allocation11 + $0x88] sm:$0xff]
        %v2455 = vld [vmem:[#allocation11 + $0x90] sm:$0xff]
        %v2456 = vld [vmem:[#allocation11 + $0x98] sm:$0xff]
        %v2457 = vld [vmem:[#allocation11 + $0xa0] sm:$0xff]
        %v2458 = vld [vmem:[#allocation11 + $0xa8] sm:$0xff]
        %v2459 = vld [vmem:[#allocation11 + $0xb0] sm:$0xff]
        %v2460 = vld [vmem:[#allocation11 + $0xb8] sm:$0xff]
        %v2461 = vld [vmem:[#allocation11 + $0xc0] sm:$0xff]
        %v2462 = vld [vmem:[#allocation11 + $0xc8] sm:$0xff]
        %v2463 = vld [vmem:[#allocation11 + $0xd0] sm:$0xff]
        %v2464 = vld [vmem:[#allocation11 + $0xd8] sm:$0xff]
        %v2465 = vld [vmem:[#allocation11 + $0xe0] sm:$0xff]
        %v2466 = vld [vmem:[#allocation11 + $0xe8] sm:$0xff]
        %v2467 = vld [vmem:[#allocation11 + $0xf0] sm:$0xff]
        %v2468 = vld [vmem:[#allocation11 + $0xf8] sm:$0xff]
        %v2471 = vunpack.c.l.b16 %v2423
        %v2472 = vunpack.c.l.b16 %v2424
        %v2473 = vpack.c.b16 %v2472, %v2471
        %v2507 = vunpack.c.l.b16 %v2437
        %v2508 = vunpack.c.h.b16 %v2437
        %v2509 = vunpack.c.l.b16 %v2438
        %v2510 = vunpack.c.h.b16 %v2438
        %v2511 = vunpack.c.l.b16 %v2439
        %v2512 = vunpack.c.h.b16 %v2439
        %v2513 = vunpack.c.l.b16 %v2440
        %v2514 = vunpack.c.h.b16 %v2440
        %v2515 = vunpack.c.l.b16 %v2441
        %v2516 = vunpack.c.h.b16 %v2441
        %v2517 = vunpack.c.l.b16 %v2442
        %v2518 = vunpack.c.h.b16 %v2442
        %v2519 = vunpack.c.l.b16 %v2443
        %v2520 = vunpack.c.h.b16 %v2443
        %v2521 = vunpack.c.l.b16 %v2444
        %v2522 = vunpack.c.h.b16 %v2444
        %v2523 = vunpack.c.l.b16 %v2445
        %v2524 = vunpack.c.h.b16 %v2445
        %v2525 = vunpack.c.l.b16 %v2446
        %v2526 = vunpack.c.h.b16 %v2446
        %v2527 = vunpack.c.l.b16 %v2447
        %v2528 = vunpack.c.h.b16 %v2447
        %v2529 = vunpack.c.l.b16 %v2448
        %v2530 = vunpack.c.h.b16 %v2448
        %v2531 = vunpack.c.l.b16 %v2449
        %v2532 = vunpack.c.h.b16 %v2449
        %v2533 = vunpack.c.l.b16 %v2450
        %v2534 = vunpack.c.h.b16 %v2450
        %v2535 = vunpack.c.l.b16 %v2451
        %v2536 = vunpack.c.h.b16 %v2451
        %v2537 = vunpack.c.l.b16 %v2452
        %v2538 = vunpack.c.h.b16 %v2452
        %v2539 = vunpack.c.l.b16 %v2453
        %v2540 = vunpack.c.h.b16 %v2453
        %v2541 = vunpack.c.l.b16 %v2454
        %v2542 = vunpack.c.h.b16 %v2454
        %v2543 = vunpack.c.l.b16 %v2455
        %v2544 = vunpack.c.h.b16 %v2455
        %v2545 = vunpack.c.l.b16 %v2456
        %v2546 = vunpack.c.h.b16 %v2456
        %v2547 = vunpack.c.l.b16 %v2457
        %v2548 = vunpack.c.h.b16 %v2457
        %v2549 = vunpack.c.l.b16 %v2458
        %v2550 = vunpack.c.h.b16 %v2458
        %v2551 = vunpack.c.l.b16 %v2459
        %v2552 = vunpack.c.h.b16 %v2459
        %v2553 = vunpack.c.l.b16 %v2460
        %v2554 = vunpack.c.h.b16 %v2460
        %v2555 = vunpack.c.l.b16 %v2461
        %v2556 = vunpack.c.h.b16 %v2461
        %v2557 = vunpack.c.l.b16 %v2462
        %v2558 = vunpack.c.h.b16 %v2462
        %v2559 = vunpack.c.l.b16 %v2463
        %v2560 = vunpack.c.h.b16 %v2463
        %v2561 = vunpack.c.l.b16 %v2464
        %v2562 = vunpack.c.h.b16 %v2464
        %v2563 = vunpack.c.l.b16 %v2465
        %v2564 = vunpack.c.h.b16 %v2465
        %v2565 = vunpack.c.l.b16 %v2466
        %v2566 = vunpack.c.h.b16 %v2466
        %v2567 = vunpack.c.l.b16 %v2467
        %v2568 = vunpack.c.h.b16 %v2467
        %v2569 = vunpack.c.l.b16 %v2468
        %v2570 = vunpack.c.h.b16 %v2468
        %v2571 = vpack.c.b16 %v2511, %v2507
        %v2572 = vpack.c.b16 %v2512, %v2508
        %v2573 = vpack.c.b16 %v2513, %v2509
        %v2574 = vpack.c.b16 %v2514, %v2510
        %v2575 = vpack.c.b16 %v2519, %v2515
        %v2576 = vpack.c.b16 %v2520, %v2516
        %v2577 = vpack.c.b16 %v2521, %v2517
        %v2578 = vpack.c.b16 %v2522, %v2518
        %v2579 = vpack.c.b16 %v2527, %v2523
        %v2580 = vpack.c.b16 %v2528, %v2524
        %v2581 = vpack.c.b16 %v2529, %v2525
        %v2582 = vpack.c.b16 %v2530, %v2526
        %v2583 = vpack.c.b16 %v2535, %v2531
        %v2584 = vpack.c.b16 %v2536, %v2532
        %v2585 = vpack.c.b16 %v2537, %v2533
        %v2586 = vpack.c.b16 %v2538, %v2534
        %v2587 = vpack.c.b16 %v2543, %v2539
        %v2588 = vpack.c.b16 %v2544, %v2540
        %v2589 = vpack.c.b16 %v2545, %v2541
        %v2590 = vpack.c.b16 %v2546, %v2542
        %v2591 = vpack.c.b16 %v2551, %v2547
        %v2592 = vpack.c.b16 %v2552, %v2548
        %v2593 = vpack.c.b16 %v2553, %v2549
        %v2594 = vpack.c.b16 %v2554, %v2550
        %v2595 = vpack.c.b16 %v2559, %v2555
        %v2596 = vpack.c.b16 %v2560, %v2556
        %v2597 = vpack.c.b16 %v2561, %v2557
        %v2598 = vpack.c.b16 %v2562, %v2558
        %v2599 = vpack.c.b16 %v2567, %v2563
        %v2600 = vpack.c.b16 %v2568, %v2564
        %v2601 = vpack.c.b16 %v2569, %v2565
        %v2602 = vpack.c.b16 %v2570, %v2566
        %2635 = vmatpush.bf16.msra.mxu0 %v2599
        %2636 = vmatpush.bf16.msra.mxu0 %v2595
        %2637 = vmatpush.bf16.msra.mxu0 %v2591
        %2638 = vmatpush.bf16.msra.mxu0 %v2587
        %2639 = vmatpush.bf16.msra.mxu0 %v2583
        %2640 = vmatpush.bf16.msra.mxu0 %v2579
        %2641 = vmatpush.bf16.msra.mxu0 %v2575
        %2642 = vmatpush.bf16.msra.mxu0 %v2571
        %2643 = vmatmul.bf16.gmra.mxu0 %v2473
        %v2644 = vpop.f32.mrf.mxu0
        %v2645 = vadd.f32 0.0, %v2644
        %v2646 = vpop.f32.mrf.mxu0
        %v2647 = vadd.f32 0.0, %v2646
        %2648 = vdwg.mxu0
        %2649 = vmatpush.bf16.msra.mxu0 %v2600
        %2650 = vmatpush.bf16.msra.mxu0 %v2596
        %2651 = vmatpush.bf16.msra.mxu0 %v2592
        %2652 = vmatpush.bf16.msra.mxu0 %v2588
        %2653 = vmatpush.bf16.msra.mxu0 %v2584
        %2654 = vmatpush.bf16.msra.mxu0 %v2580
        %2655 = vmatpush.bf16.msra.mxu0 %v2576
        %2656 = vmatpush.bf16.msra.mxu0 %v2572
        %2657 = vmatmul.bf16.gmra.mxu0 %v2473
        %v2658 = vpop.f32.mrf.mxu0
        %v2659 = vadd.f32 0.0, %v2658
        %v2660 = vpop.f32.mrf.mxu0
        %v2661 = vadd.f32 0.0, %v2660
        %2662 = vdwg.mxu0
        %2663 = vmatpush.bf16.msra.mxu0 %v2601
        %2664 = vmatpush.bf16.msra.mxu0 %v2597
        %2665 = vmatpush.bf16.msra.mxu0 %v2593
        %2666 = vmatpush.bf16.msra.mxu0 %v2589
        %2667 = vmatpush.bf16.msra.mxu0 %v2585
        %2668 = vmatpush.bf16.msra.mxu0 %v2581
        %2669 = vmatpush.bf16.msra.mxu0 %v2577
        %2670 = vmatpush.bf16.msra.mxu0 %v2573
        %2671 = vmatmul.bf16.gmra.mxu0 %v2473
        %v2672 = vpop.f32.mrf.mxu0
        %v2673 = vadd.f32 0.0, %v2672
        %v2674 = vpop.f32.mrf.mxu0
        %v2675 = vadd.f32 0.0, %v2674
        %2676 = vdwg.mxu0
        %2677 = vmatpush.bf16.msra.mxu0 %v2602
        %2678 = vmatpush.bf16.msra.mxu0 %v2598
        %2679 = vmatpush.bf16.msra.mxu0 %v2594
        %2680 = vmatpush.bf16.msra.mxu0 %v2590
        %2681 = vmatpush.bf16.msra.mxu0 %v2586
        %2682 = vmatpush.bf16.msra.mxu0 %v2582
        %2683 = vmatpush.bf16.msra.mxu0 %v2578
        %2684 = vmatpush.bf16.msra.mxu0 %v2574
        %2685 = vmatmul.bf16.gmra.mxu0 %v2473
        %v2686 = vpop.f32.mrf.mxu0
        %v2687 = vadd.f32 0.0, %v2686
        %v2688 = vpop.f32.mrf.mxu0
        %v2689 = vadd.f32 0.0, %v2688
        %2690 = vdwg.mxu0
        %v2691 = vadd.f32 %v2429, %v2645
        %v2692 = vadd.f32 %v2430, %v2659
        %v2693 = vadd.f32 %v2431, %v2673
        %v2694 = vadd.f32 %v2432, %v2687
        %v2695 = vadd.f32 %v2433, %v2647
        %v2696 = vadd.f32 %v2434, %v2661
        %v2697 = vadd.f32 %v2435, %v2675
        %v2698 = vadd.f32 %v2436, %v2689
        %v2699 = vxor.u32 %v2691, 2147483648
        %v2700 = vxor.u32 %v2695, 2147483648
        %v2701 = vmul.f32 %v2699, 1.442695
        %v2702 = vpow.pop %v2701
        %v2703 = vmul.f32 %v2700, 1.442695
        %v2704 = vpow.pop %v2703
        %v2705 = vadd.f32 %v2702, 1.0
        %v2706 = vadd.f32 %v2704, 1.0
        %v2707 = vrcp.pop %v2705
        %v2708 = vmul.f32 %v2705, %v2707
        %v2709 = vsub.f32 1.0, %v2708
        %v2710 = vmul.f32 %v2707, %v2709
        %v2711 = vadd.f32 %v2707, %v2710
        %vm2712 = vweird.f32 %v2705
        %vm2713 = vweird.f32 %v2707
        %vm2714 = vmor %vm2712, %vm2713
        %v2715 = vsel %vm2714, %v2707, %v2711
        %v2716 = vand.u32 2147483647, %v2705
        %vm2717 = vcmp.eq.f32.partialorder %v2716, 8.507059e+37
        %v2718 = vand.u32 %v2705, 2147483648
        %v2719 = vor.u32 1.1754944e-38, %v2718
        %v2720 = vsel %vm2717, %v2719, %v2715
        %v2721 = vmul.f32 1.0, %v2720
        %v2722 = vrcp.pop %v2706
        %v2723 = vmul.f32 %v2706, %v2722
        %v2724 = vsub.f32 1.0, %v2723
        %v2725 = vmul.f32 %v2722, %v2724
        %v2726 = vadd.f32 %v2722, %v2725
        %vm2727 = vweird.f32 %v2706
        %vm2728 = vweird.f32 %v2722
        %vm2729 = vmor %vm2727, %vm2728
        %v2730 = vsel %vm2729, %v2722, %v2726
        %v2731 = vand.u32 2147483647, %v2706
        %vm2732 = vcmp.eq.f32.partialorder %v2731, 8.507059e+37
        %v2733 = vand.u32 %v2706, 2147483648
        %v2734 = vor.u32 1.1754944e-38, %v2733
        %v2735 = vsel %vm2732, %v2734, %v2730
        %v2736 = vmul.f32 1.0, %v2735
        %v2737 = vxor.u32 %v2692, 2147483648
        %v2738 = vxor.u32 %v2696, 2147483648
        %v2739 = vmul.f32 %v2737, 1.442695
        %v2740 = vpow.pop %v2739
        %v2741 = vmul.f32 %v2738, 1.442695
        %v2742 = vpow.pop %v2741
        %v2743 = vadd.f32 %v2740, 1.0
        %v2744 = vadd.f32 %v2742, 1.0
        %v2745 = vrcp.pop %v2743
        %v2746 = vmul.f32 %v2743, %v2745
        %v2747 = vsub.f32 1.0, %v2746
        %v2748 = vmul.f32 %v2745, %v2747
        %v2749 = vadd.f32 %v2745, %v2748
        %vm2750 = vweird.f32 %v2743
        %vm2751 = vweird.f32 %v2745
        %vm2752 = vmor %vm2750, %vm2751
        %v2753 = vsel %vm2752, %v2745, %v2749
        %v2754 = vand.u32 2147483647, %v2743
        %vm2755 = vcmp.eq.f32.partialorder %v2754, 8.507059e+37
        %v2756 = vand.u32 %v2743, 2147483648
        %v2757 = vor.u32 1.1754944e-38, %v2756
        %v2758 = vsel %vm2755, %v2757, %v2753
        %v2759 = vmul.f32 1.0, %v2758
        %v2760 = vrcp.pop %v2744
        %v2761 = vmul.f32 %v2744, %v2760
        %v2762 = vsub.f32 1.0, %v2761
        %v2763 = vmul.f32 %v2760, %v2762
        %v2764 = vadd.f32 %v2760, %v2763
        %vm2765 = vweird.f32 %v2744
        %vm2766 = vweird.f32 %v2760
        %vm2767 = vmor %vm2765, %vm2766
        %v2768 = vsel %vm2767, %v2760, %v2764
        %v2769 = vand.u32 2147483647, %v2744
        %vm2770 = vcmp.eq.f32.partialorder %v2769, 8.507059e+37
        %v2771 = vand.u32 %v2744, 2147483648
        %v2772 = vor.u32 1.1754944e-38, %v2771
        %v2773 = vsel %vm2770, %v2772, %v2768
        %v2774 = vmul.f32 1.0, %v2773
        %v2775 = vtanh.pop %v2693
        %v2776 = vtanh.pop %v2697
        %v2777 = vxor.u32 %v2694, 2147483648
        %v2778 = vxor.u32 %v2698, 2147483648
        %v2779 = vmul.f32 %v2777, 1.442695
        %v2780 = vpow.pop %v2779
        %v2781 = vmul.f32 %v2778, 1.442695
        %v2782 = vpow.pop %v2781
        %v2783 = vadd.f32 %v2780, 1.0
        %v2784 = vadd.f32 %v2782, 1.0
        %v2785 = vrcp.pop %v2783
        %v2786 = vmul.f32 %v2783, %v2785
        %v2787 = vsub.f32 1.0, %v2786
        %v2788 = vmul.f32 %v2785, %v2787
        %v2789 = vadd.f32 %v2785, %v2788
        %vm2790 = vweird.f32 %v2783
        %vm2791 = vweird.f32 %v2785
        %vm2792 = vmor %vm2790, %vm2791
        %v2793 = vsel %vm2792, %v2785, %v2789
        %v2794 = vand.u32 2147483647, %v2783
        %vm2795 = vcmp.eq.f32.partialorder %v2794, 8.507059e+37
        %v2796 = vand.u32 %v2783, 2147483648
        %v2797 = vor.u32 1.1754944e-38, %v2796
        %v2798 = vsel %vm2795, %v2797, %v2793
        %v2799 = vmul.f32 1.0, %v2798
        %v2800 = vrcp.pop %v2784
        %v2801 = vmul.f32 %v2784, %v2800
        %v2802 = vsub.f32 1.0, %v2801
        %v2803 = vmul.f32 %v2800, %v2802
        %v2804 = vadd.f32 %v2800, %v2803
        %vm2805 = vweird.f32 %v2784
        %vm2806 = vweird.f32 %v2800
        %vm2807 = vmor %vm2805, %vm2806
        %v2808 = vsel %vm2807, %v2800, %v2804
        %v2809 = vand.u32 2147483647, %v2784
        %vm2810 = vcmp.eq.f32.partialorder %v2809, 8.507059e+37
        %v2811 = vand.u32 %v2784, 2147483648
        %v2812 = vor.u32 1.1754944e-38, %v2811
        %v2813 = vsel %vm2810, %v2812, %v2808
        %v2814 = vmul.f32 1.0, %v2813
        %v2815 = vmul.f32 %v2759, %v2417
        %v2816 = vmul.f32 %v2774, %v2418
        %v2817 = vmul.f32 %v2721, %v2775
        %v2818 = vmul.f32 %v2736, %v2776
        %v2819 = vadd.f32 %v2815, %v2817
        %v2820 = vadd.f32 %v2816, %v2818
        %v2821 = vtanh.pop %v2819
        %v2822 = vtanh.pop %v2820
        %v2823 = vmul.f32 %v2799, %v2821
        %v2824 = vmul.f32 %v2814, %v2822
        %v2825 = vpack.c.bf16 %v2823, %v2823
        %v2826 = vpack.c.bf16 %v2824, %v2824
        %s2827 = scalar_lea.vmem %s284, 32 [#allocation13]
        %2828 = vst [vmem:[%s2827] sm:$0xf] %v2825
        %2829 = vst [vmem:[%s2827 + $0x4] sm:$0xf] %v2826
        %s2830 = scalar_lea.vmem [#allocation4], 320
        %v2831 = vld [vmem:[%s2830] sm:$0xff]
        %v2832 = vld [vmem:[%s2830 + $0x8] sm:$0xff]
        %v2833 = vld [vmem:[%s2830 + $0x10] sm:$0xff]
        %v2834 = vld [vmem:[%s2830 + $0x18] sm:$0xff]
        %v2835 = vld [vmem:[%s2830 + $0x20] sm:$0xff]
        %v2836 = vld [vmem:[%s2830 + $0x28] sm:$0xff]
        %v2837 = vld [vmem:[%s2830 + $0x30] sm:$0xff]
        %v2838 = vld [vmem:[%s2830 + $0x38] sm:$0xff]
        %v2839 = vld [vmem:[#allocation11] sm:$0xff]
        %v2840 = vld [vmem:[#allocation11 + $0x8] sm:$0xff]
        %v2841 = vld [vmem:[#allocation11 + $0x10] sm:$0xff]
        %v2842 = vld [vmem:[#allocation11 + $0x18] sm:$0xff]
        %v2843 = vld [vmem:[#allocation11 + $0x20] sm:$0xff]
        %v2844 = vld [vmem:[#allocation11 + $0x28] sm:$0xff]
        %v2845 = vld [vmem:[#allocation11 + $0x30] sm:$0xff]
        %v2846 = vld [vmem:[#allocation11 + $0x38] sm:$0xff]
        %v2847 = vld [vmem:[#allocation11 + $0x40] sm:$0xff]
        %v2848 = vld [vmem:[#allocation11 + $0x48] sm:$0xff]
        %v2849 = vld [vmem:[#allocation11 + $0x50] sm:$0xff]
        %v2850 = vld [vmem:[#allocation11 + $0x58] sm:$0xff]
        %v2851 = vld [vmem:[#allocation11 + $0x60] sm:$0xff]
        %v2852 = vld [vmem:[#allocation11 + $0x68] sm:$0xff]
        %v2853 = vld [vmem:[#allocation11 + $0x70] sm:$0xff]
        %v2854 = vld [vmem:[#allocation11 + $0x78] sm:$0xff]
        %v2855 = vld [vmem:[#allocation11 + $0x80] sm:$0xff]
        %v2856 = vld [vmem:[#allocation11 + $0x88] sm:$0xff]
        %v2857 = vld [vmem:[#allocation11 + $0x90] sm:$0xff]
        %v2858 = vld [vmem:[#allocation11 + $0x98] sm:$0xff]
        %v2859 = vld [vmem:[#allocation11 + $0xa0] sm:$0xff]
        %v2860 = vld [vmem:[#allocation11 + $0xa8] sm:$0xff]
        %v2861 = vld [vmem:[#allocation11 + $0xb0] sm:$0xff]
        %v2862 = vld [vmem:[#allocation11 + $0xb8] sm:$0xff]
        %v2863 = vld [vmem:[#allocation11 + $0xc0] sm:$0xff]
        %v2864 = vld [vmem:[#allocation11 + $0xc8] sm:$0xff]
        %v2865 = vld [vmem:[#allocation11 + $0xd0] sm:$0xff]
        %v2866 = vld [vmem:[#allocation11 + $0xd8] sm:$0xff]
        %v2867 = vld [vmem:[#allocation11 + $0xe0] sm:$0xff]
        %v2868 = vld [vmem:[#allocation11 + $0xe8] sm:$0xff]
        %v2869 = vld [vmem:[#allocation11 + $0xf0] sm:$0xff]
        %v2870 = vld [vmem:[#allocation11 + $0xf8] sm:$0xff]
        %v2873 = vunpack.c.l.b16 %v2825
        %v2874 = vunpack.c.l.b16 %v2826
        %v2875 = vpack.c.b16 %v2874, %v2873
        %v2909 = vunpack.c.l.b16 %v2839
        %v2910 = vunpack.c.h.b16 %v2839
        %v2911 = vunpack.c.l.b16 %v2840
        %v2912 = vunpack.c.h.b16 %v2840
        %v2913 = vunpack.c.l.b16 %v2841
        %v2914 = vunpack.c.h.b16 %v2841
        %v2915 = vunpack.c.l.b16 %v2842
        %v2916 = vunpack.c.h.b16 %v2842
        %v2917 = vunpack.c.l.b16 %v2843
        %v2918 = vunpack.c.h.b16 %v2843
        %v2919 = vunpack.c.l.b16 %v2844
        %v2920 = vunpack.c.h.b16 %v2844
        %v2921 = vunpack.c.l.b16 %v2845
        %v2922 = vunpack.c.h.b16 %v2845
        %v2923 = vunpack.c.l.b16 %v2846
        %v2924 = vunpack.c.h.b16 %v2846
        %v2925 = vunpack.c.l.b16 %v2847
        %v2926 = vunpack.c.h.b16 %v2847
        %v2927 = vunpack.c.l.b16 %v2848
        %v2928 = vunpack.c.h.b16 %v2848
        %v2929 = vunpack.c.l.b16 %v2849
        %v2930 = vunpack.c.h.b16 %v2849
        %v2931 = vunpack.c.l.b16 %v2850
        %v2932 = vunpack.c.h.b16 %v2850
        %v2933 = vunpack.c.l.b16 %v2851
        %v2934 = vunpack.c.h.b16 %v2851
        %v2935 = vunpack.c.l.b16 %v2852
        %v2936 = vunpack.c.h.b16 %v2852
        %v2937 = vunpack.c.l.b16 %v2853
        %v2938 = vunpack.c.h.b16 %v2853
        %v2939 = vunpack.c.l.b16 %v2854
        %v2940 = vunpack.c.h.b16 %v2854
        %v2941 = vunpack.c.l.b16 %v2855
        %v2942 = vunpack.c.h.b16 %v2855
        %v2943 = vunpack.c.l.b16 %v2856
        %v2944 = vunpack.c.h.b16 %v2856
        %v2945 = vunpack.c.l.b16 %v2857
        %v2946 = vunpack.c.h.b16 %v2857
        %v2947 = vunpack.c.l.b16 %v2858
        %v2948 = vunpack.c.h.b16 %v2858
        %v2949 = vunpack.c.l.b16 %v2859
        %v2950 = vunpack.c.h.b16 %v2859
        %v2951 = vunpack.c.l.b16 %v2860
        %v2952 = vunpack.c.h.b16 %v2860
        %v2953 = vunpack.c.l.b16 %v2861
        %v2954 = vunpack.c.h.b16 %v2861
        %v2955 = vunpack.c.l.b16 %v2862
        %v2956 = vunpack.c.h.b16 %v2862
        %v2957 = vunpack.c.l.b16 %v2863
        %v2958 = vunpack.c.h.b16 %v2863
        %v2959 = vunpack.c.l.b16 %v2864
        %v2960 = vunpack.c.h.b16 %v2864
        %v2961 = vunpack.c.l.b16 %v2865
        %v2962 = vunpack.c.h.b16 %v2865
        %v2963 = vunpack.c.l.b16 %v2866
        %v2964 = vunpack.c.h.b16 %v2866
        %v2965 = vunpack.c.l.b16 %v2867
        %v2966 = vunpack.c.h.b16 %v2867
        %v2967 = vunpack.c.l.b16 %v2868
        %v2968 = vunpack.c.h.b16 %v2868
        %v2969 = vunpack.c.l.b16 %v2869
        %v2970 = vunpack.c.h.b16 %v2869
        %v2971 = vunpack.c.l.b16 %v2870
        %v2972 = vunpack.c.h.b16 %v2870
        %v2973 = vpack.c.b16 %v2913, %v2909
        %v2974 = vpack.c.b16 %v2914, %v2910
        %v2975 = vpack.c.b16 %v2915, %v2911
        %v2976 = vpack.c.b16 %v2916, %v2912
        %v2977 = vpack.c.b16 %v2921, %v2917
        %v2978 = vpack.c.b16 %v2922, %v2918
        %v2979 = vpack.c.b16 %v2923, %v2919
        %v2980 = vpack.c.b16 %v2924, %v2920
        %v2981 = vpack.c.b16 %v2929, %v2925
        %v2982 = vpack.c.b16 %v2930, %v2926
        %v2983 = vpack.c.b16 %v2931, %v2927
        %v2984 = vpack.c.b16 %v2932, %v2928
        %v2985 = vpack.c.b16 %v2937, %v2933
        %v2986 = vpack.c.b16 %v2938, %v2934
        %v2987 = vpack.c.b16 %v2939, %v2935
        %v2988 = vpack.c.b16 %v2940, %v2936
        %v2989 = vpack.c.b16 %v2945, %v2941
        %v2990 = vpack.c.b16 %v2946, %v2942
        %v2991 = vpack.c.b16 %v2947, %v2943
        %v2992 = vpack.c.b16 %v2948, %v2944
        %v2993 = vpack.c.b16 %v2953, %v2949
        %v2994 = vpack.c.b16 %v2954, %v2950
        %v2995 = vpack.c.b16 %v2955, %v2951
        %v2996 = vpack.c.b16 %v2956, %v2952
        %v2997 = vpack.c.b16 %v2961, %v2957
        %v2998 = vpack.c.b16 %v2962, %v2958
        %v2999 = vpack.c.b16 %v2963, %v2959
        %v3000 = vpack.c.b16 %v2964, %v2960
        %v3001 = vpack.c.b16 %v2969, %v2965
        %v3002 = vpack.c.b16 %v2970, %v2966
        %v3003 = vpack.c.b16 %v2971, %v2967
        %v3004 = vpack.c.b16 %v2972, %v2968
        %3037 = vmatpush.bf16.msra.mxu0 %v3001
        %3038 = vmatpush.bf16.msra.mxu0 %v2997
        %3039 = vmatpush.bf16.msra.mxu0 %v2993
        %3040 = vmatpush.bf16.msra.mxu0 %v2989
        %3041 = vmatpush.bf16.msra.mxu0 %v2985
        %3042 = vmatpush.bf16.msra.mxu0 %v2981
        %3043 = vmatpush.bf16.msra.mxu0 %v2977
        %3044 = vmatpush.bf16.msra.mxu0 %v2973
        %3045 = vmatmul.bf16.gmra.mxu0 %v2875
        %v3046 = vpop.f32.mrf.mxu0
        %v3047 = vadd.f32 0.0, %v3046
        %v3048 = vpop.f32.mrf.mxu0
        %v3049 = vadd.f32 0.0, %v3048
        %3050 = vdwg.mxu0
        %3051 = vmatpush.bf16.msra.mxu0 %v3002
        %3052 = vmatpush.bf16.msra.mxu0 %v2998
        %3053 = vmatpush.bf16.msra.mxu0 %v2994
        %3054 = vmatpush.bf16.msra.mxu0 %v2990
        %3055 = vmatpush.bf16.msra.mxu0 %v2986
        %3056 = vmatpush.bf16.msra.mxu0 %v2982
        %3057 = vmatpush.bf16.msra.mxu0 %v2978
        %3058 = vmatpush.bf16.msra.mxu0 %v2974
        %3059 = vmatmul.bf16.gmra.mxu0 %v2875
        %v3060 = vpop.f32.mrf.mxu0
        %v3061 = vadd.f32 0.0, %v3060
        %v3062 = vpop.f32.mrf.mxu0
        %v3063 = vadd.f32 0.0, %v3062
        %3064 = vdwg.mxu0
        %3065 = vmatpush.bf16.msra.mxu0 %v3003
        %3066 = vmatpush.bf16.msra.mxu0 %v2999
        %3067 = vmatpush.bf16.msra.mxu0 %v2995
        %3068 = vmatpush.bf16.msra.mxu0 %v2991
        %3069 = vmatpush.bf16.msra.mxu0 %v2987
        %3070 = vmatpush.bf16.msra.mxu0 %v2983
        %3071 = vmatpush.bf16.msra.mxu0 %v2979
        %3072 = vmatpush.bf16.msra.mxu0 %v2975
        %3073 = vmatmul.bf16.gmra.mxu0 %v2875
        %v3074 = vpop.f32.mrf.mxu0
        %v3075 = vadd.f32 0.0, %v3074
        %v3076 = vpop.f32.mrf.mxu0
        %v3077 = vadd.f32 0.0, %v3076
        %3078 = vdwg.mxu0
        %3079 = vmatpush.bf16.msra.mxu0 %v3004
        %3080 = vmatpush.bf16.msra.mxu0 %v3000
        %3081 = vmatpush.bf16.msra.mxu0 %v2996
        %3082 = vmatpush.bf16.msra.mxu0 %v2992
        %3083 = vmatpush.bf16.msra.mxu0 %v2988
        %3084 = vmatpush.bf16.msra.mxu0 %v2984
        %3085 = vmatpush.bf16.msra.mxu0 %v2980
        %3086 = vmatpush.bf16.msra.mxu0 %v2976
        %3087 = vmatmul.bf16.gmra.mxu0 %v2875
        %v3088 = vpop.f32.mrf.mxu0
        %v3089 = vadd.f32 0.0, %v3088
        %v3090 = vpop.f32.mrf.mxu0
        %v3091 = vadd.f32 0.0, %v3090
        %3092 = vdwg.mxu0
        %v3093 = vadd.f32 %v2831, %v3047
        %v3094 = vadd.f32 %v2832, %v3061
        %v3095 = vadd.f32 %v2833, %v3075
        %v3096 = vadd.f32 %v2834, %v3089
        %v3097 = vadd.f32 %v2835, %v3049
        %v3098 = vadd.f32 %v2836, %v3063
        %v3099 = vadd.f32 %v2837, %v3077
        %v3100 = vadd.f32 %v2838, %v3091
        %v3101 = vxor.u32 %v3093, 2147483648
        %v3102 = vxor.u32 %v3097, 2147483648
        %v3103 = vmul.f32 %v3101, 1.442695
        %v3104 = vpow.pop %v3103
        %v3105 = vmul.f32 %v3102, 1.442695
        %v3106 = vpow.pop %v3105
        %v3107 = vadd.f32 %v3104, 1.0
        %v3108 = vadd.f32 %v3106, 1.0
        %v3109 = vrcp.pop %v3107
        %v3110 = vmul.f32 %v3107, %v3109
        %v3111 = vsub.f32 1.0, %v3110
        %v3112 = vmul.f32 %v3109, %v3111
        %v3113 = vadd.f32 %v3109, %v3112
        %vm3114 = vweird.f32 %v3107
        %vm3115 = vweird.f32 %v3109
        %vm3116 = vmor %vm3114, %vm3115
        %v3117 = vsel %vm3116, %v3109, %v3113
        %v3118 = vand.u32 2147483647, %v3107
        %vm3119 = vcmp.eq.f32.partialorder %v3118, 8.507059e+37
        %v3120 = vand.u32 %v3107, 2147483648
        %v3121 = vor.u32 1.1754944e-38, %v3120
        %v3122 = vsel %vm3119, %v3121, %v3117
        %v3123 = vmul.f32 1.0, %v3122
        %v3124 = vrcp.pop %v3108
        %v3125 = vmul.f32 %v3108, %v3124
        %v3126 = vsub.f32 1.0, %v3125
        %v3127 = vmul.f32 %v3124, %v3126
        %v3128 = vadd.f32 %v3124, %v3127
        %vm3129 = vweird.f32 %v3108
        %vm3130 = vweird.f32 %v3124
        %vm3131 = vmor %vm3129, %vm3130
        %v3132 = vsel %vm3131, %v3124, %v3128
        %v3133 = vand.u32 2147483647, %v3108
        %vm3134 = vcmp.eq.f32.partialorder %v3133, 8.507059e+37
        %v3135 = vand.u32 %v3108, 2147483648
        %v3136 = vor.u32 1.1754944e-38, %v3135
        %v3137 = vsel %vm3134, %v3136, %v3132
        %v3138 = vmul.f32 1.0, %v3137
        %v3139 = vxor.u32 %v3094, 2147483648
        %v3140 = vxor.u32 %v3098, 2147483648
        %v3141 = vmul.f32 %v3139, 1.442695
        %v3142 = vpow.pop %v3141
        %v3143 = vmul.f32 %v3140, 1.442695
        %v3144 = vpow.pop %v3143
        %v3145 = vadd.f32 %v3142, 1.0
        %v3146 = vadd.f32 %v3144, 1.0
        %v3147 = vrcp.pop %v3145
        %v3148 = vmul.f32 %v3145, %v3147
        %v3149 = vsub.f32 1.0, %v3148
        %v3150 = vmul.f32 %v3147, %v3149
        %v3151 = vadd.f32 %v3147, %v3150
        %vm3152 = vweird.f32 %v3145
        %vm3153 = vweird.f32 %v3147
        %vm3154 = vmor %vm3152, %vm3153
        %v3155 = vsel %vm3154, %v3147, %v3151
        %v3156 = vand.u32 2147483647, %v3145
        %vm3157 = vcmp.eq.f32.partialorder %v3156, 8.507059e+37
        %v3158 = vand.u32 %v3145, 2147483648
        %v3159 = vor.u32 1.1754944e-38, %v3158
        %v3160 = vsel %vm3157, %v3159, %v3155
        %v3161 = vmul.f32 1.0, %v3160
        %v3162 = vrcp.pop %v3146
        %v3163 = vmul.f32 %v3146, %v3162
        %v3164 = vsub.f32 1.0, %v3163
        %v3165 = vmul.f32 %v3162, %v3164
        %v3166 = vadd.f32 %v3162, %v3165
        %vm3167 = vweird.f32 %v3146
        %vm3168 = vweird.f32 %v3162
        %vm3169 = vmor %vm3167, %vm3168
        %v3170 = vsel %vm3169, %v3162, %v3166
        %v3171 = vand.u32 2147483647, %v3146
        %vm3172 = vcmp.eq.f32.partialorder %v3171, 8.507059e+37
        %v3173 = vand.u32 %v3146, 2147483648
        %v3174 = vor.u32 1.1754944e-38, %v3173
        %v3175 = vsel %vm3172, %v3174, %v3170
        %v3176 = vmul.f32 1.0, %v3175
        %v3177 = vtanh.pop %v3095
        %v3178 = vtanh.pop %v3099
        %v3179 = vxor.u32 %v3096, 2147483648
        %v3180 = vxor.u32 %v3100, 2147483648
        %v3181 = vmul.f32 %v3179, 1.442695
        %v3182 = vpow.pop %v3181
        %v3183 = vmul.f32 %v3180, 1.442695
        %v3184 = vpow.pop %v3183
        %v3185 = vadd.f32 %v3182, 1.0
        %v3186 = vadd.f32 %v3184, 1.0
        %v3187 = vrcp.pop %v3185
        %v3188 = vmul.f32 %v3185, %v3187
        %v3189 = vsub.f32 1.0, %v3188
        %v3190 = vmul.f32 %v3187, %v3189
        %v3191 = vadd.f32 %v3187, %v3190
        %vm3192 = vweird.f32 %v3185
        %vm3193 = vweird.f32 %v3187
        %vm3194 = vmor %vm3192, %vm3193
        %v3195 = vsel %vm3194, %v3187, %v3191
        %v3196 = vand.u32 2147483647, %v3185
        %vm3197 = vcmp.eq.f32.partialorder %v3196, 8.507059e+37
        %v3198 = vand.u32 %v3185, 2147483648
        %v3199 = vor.u32 1.1754944e-38, %v3198
        %v3200 = vsel %vm3197, %v3199, %v3195
        %v3201 = vmul.f32 1.0, %v3200
        %v3202 = vrcp.pop %v3186
        %v3203 = vmul.f32 %v3186, %v3202
        %v3204 = vsub.f32 1.0, %v3203
        %v3205 = vmul.f32 %v3202, %v3204
        %v3206 = vadd.f32 %v3202, %v3205
        %vm3207 = vweird.f32 %v3186
        %vm3208 = vweird.f32 %v3202
        %vm3209 = vmor %vm3207, %vm3208
        %v3210 = vsel %vm3209, %v3202, %v3206
        %v3211 = vand.u32 2147483647, %v3186
        %vm3212 = vcmp.eq.f32.partialorder %v3211, 8.507059e+37
        %v3213 = vand.u32 %v3186, 2147483648
        %v3214 = vor.u32 1.1754944e-38, %v3213
        %v3215 = vsel %vm3212, %v3214, %v3210
        %v3216 = vmul.f32 1.0, %v3215
        %v3217 = vmul.f32 %v3161, %v2819
        %v3218 = vmul.f32 %v3176, %v2820
        %v3219 = vmul.f32 %v3123, %v3177
        %v3220 = vmul.f32 %v3138, %v3178
        %v3221 = vadd.f32 %v3217, %v3219
        %v3222 = vadd.f32 %v3218, %v3220
        %v3223 = vtanh.pop %v3221
        %v3224 = vtanh.pop %v3222
        %v3225 = vmul.f32 %v3201, %v3223
        %v3226 = vmul.f32 %v3216, %v3224
        %v3227 = vpack.c.bf16 %v3225, %v3225
        %v3228 = vpack.c.bf16 %v3226, %v3226
        %s3229 = scalar_lea.vmem %s284, 40 [#allocation13]
        %3230 = vst [vmem:[%s3229] sm:$0xf] %v3227
        %3231 = vst [vmem:[%s3229 + $0x4] sm:$0xf] %v3228
        %s3232 = scalar_lea.vmem [#allocation4], 384
        %v3233 = vld [vmem:[%s3232] sm:$0xff]
        %v3234 = vld [vmem:[%s3232 + $0x8] sm:$0xff]
        %v3235 = vld [vmem:[%s3232 + $0x10] sm:$0xff]
        %v3236 = vld [vmem:[%s3232 + $0x18] sm:$0xff]
        %v3237 = vld [vmem:[%s3232 + $0x20] sm:$0xff]
        %v3238 = vld [vmem:[%s3232 + $0x28] sm:$0xff]
        %v3239 = vld [vmem:[%s3232 + $0x30] sm:$0xff]
        %v3240 = vld [vmem:[%s3232 + $0x38] sm:$0xff]
        %v3241 = vld [vmem:[#allocation11] sm:$0xff]
        %v3242 = vld [vmem:[#allocation11 + $0x8] sm:$0xff]
        %v3243 = vld [vmem:[#allocation11 + $0x10] sm:$0xff]
        %v3244 = vld [vmem:[#allocation11 + $0x18] sm:$0xff]
        %v3245 = vld [vmem:[#allocation11 + $0x20] sm:$0xff]
        %v3246 = vld [vmem:[#allocation11 + $0x28] sm:$0xff]
        %v3247 = vld [vmem:[#allocation11 + $0x30] sm:$0xff]
        %v3248 = vld [vmem:[#allocation11 + $0x38] sm:$0xff]
        %v3249 = vld [vmem:[#allocation11 + $0x40] sm:$0xff]
        %v3250 = vld [vmem:[#allocation11 + $0x48] sm:$0xff]
        %v3251 = vld [vmem:[#allocation11 + $0x50] sm:$0xff]
        %v3252 = vld [vmem:[#allocation11 + $0x58] sm:$0xff]
        %v3253 = vld [vmem:[#allocation11 + $0x60] sm:$0xff]
        %v3254 = vld [vmem:[#allocation11 + $0x68] sm:$0xff]
        %v3255 = vld [vmem:[#allocation11 + $0x70] sm:$0xff]
        %v3256 = vld [vmem:[#allocation11 + $0x78] sm:$0xff]
        %v3257 = vld [vmem:[#allocation11 + $0x80] sm:$0xff]
        %v3258 = vld [vmem:[#allocation11 + $0x88] sm:$0xff]
        %v3259 = vld [vmem:[#allocation11 + $0x90] sm:$0xff]
        %v3260 = vld [vmem:[#allocation11 + $0x98] sm:$0xff]
        %v3261 = vld [vmem:[#allocation11 + $0xa0] sm:$0xff]
        %v3262 = vld [vmem:[#allocation11 + $0xa8] sm:$0xff]
        %v3263 = vld [vmem:[#allocation11 + $0xb0] sm:$0xff]
        %v3264 = vld [vmem:[#allocation11 + $0xb8] sm:$0xff]
        %v3265 = vld [vmem:[#allocation11 + $0xc0] sm:$0xff]
        %v3266 = vld [vmem:[#allocation11 + $0xc8] sm:$0xff]
        %v3267 = vld [vmem:[#allocation11 + $0xd0] sm:$0xff]
        %v3268 = vld [vmem:[#allocation11 + $0xd8] sm:$0xff]
        %v3269 = vld [vmem:[#allocation11 + $0xe0] sm:$0xff]
        %v3270 = vld [vmem:[#allocation11 + $0xe8] sm:$0xff]
        %v3271 = vld [vmem:[#allocation11 + $0xf0] sm:$0xff]
        %v3272 = vld [vmem:[#allocation11 + $0xf8] sm:$0xff]
        %v3275 = vunpack.c.l.b16 %v3227
        %v3276 = vunpack.c.l.b16 %v3228
        %v3277 = vpack.c.b16 %v3276, %v3275
        %v3311 = vunpack.c.l.b16 %v3241
        %v3312 = vunpack.c.h.b16 %v3241
        %v3313 = vunpack.c.l.b16 %v3242
        %v3314 = vunpack.c.h.b16 %v3242
        %v3315 = vunpack.c.l.b16 %v3243
        %v3316 = vunpack.c.h.b16 %v3243
        %v3317 = vunpack.c.l.b16 %v3244
        %v3318 = vunpack.c.h.b16 %v3244
        %v3319 = vunpack.c.l.b16 %v3245
        %v3320 = vunpack.c.h.b16 %v3245
        %v3321 = vunpack.c.l.b16 %v3246
        %v3322 = vunpack.c.h.b16 %v3246
        %v3323 = vunpack.c.l.b16 %v3247
        %v3324 = vunpack.c.h.b16 %v3247
        %v3325 = vunpack.c.l.b16 %v3248
        %v3326 = vunpack.c.h.b16 %v3248
        %v3327 = vunpack.c.l.b16 %v3249
        %v3328 = vunpack.c.h.b16 %v3249
        %v3329 = vunpack.c.l.b16 %v3250
        %v3330 = vunpack.c.h.b16 %v3250
        %v3331 = vunpack.c.l.b16 %v3251
        %v3332 = vunpack.c.h.b16 %v3251
        %v3333 = vunpack.c.l.b16 %v3252
        %v3334 = vunpack.c.h.b16 %v3252
        %v3335 = vunpack.c.l.b16 %v3253
        %v3336 = vunpack.c.h.b16 %v3253
        %v3337 = vunpack.c.l.b16 %v3254
        %v3338 = vunpack.c.h.b16 %v3254
        %v3339 = vunpack.c.l.b16 %v3255
        %v3340 = vunpack.c.h.b16 %v3255
        %v3341 = vunpack.c.l.b16 %v3256
        %v3342 = vunpack.c.h.b16 %v3256
        %v3343 = vunpack.c.l.b16 %v3257
        %v3344 = vunpack.c.h.b16 %v3257
        %v3345 = vunpack.c.l.b16 %v3258
        %v3346 = vunpack.c.h.b16 %v3258
        %v3347 = vunpack.c.l.b16 %v3259
        %v3348 = vunpack.c.h.b16 %v3259
        %v3349 = vunpack.c.l.b16 %v3260
        %v3350 = vunpack.c.h.b16 %v3260
        %v3351 = vunpack.c.l.b16 %v3261
        %v3352 = vunpack.c.h.b16 %v3261
        %v3353 = vunpack.c.l.b16 %v3262
        %v3354 = vunpack.c.h.b16 %v3262
        %v3355 = vunpack.c.l.b16 %v3263
        %v3356 = vunpack.c.h.b16 %v3263
        %v3357 = vunpack.c.l.b16 %v3264
        %v3358 = vunpack.c.h.b16 %v3264
        %v3359 = vunpack.c.l.b16 %v3265
        %v3360 = vunpack.c.h.b16 %v3265
        %v3361 = vunpack.c.l.b16 %v3266
        %v3362 = vunpack.c.h.b16 %v3266
        %v3363 = vunpack.c.l.b16 %v3267
        %v3364 = vunpack.c.h.b16 %v3267
        %v3365 = vunpack.c.l.b16 %v3268
        %v3366 = vunpack.c.h.b16 %v3268
        %v3367 = vunpack.c.l.b16 %v3269
        %v3368 = vunpack.c.h.b16 %v3269
        %v3369 = vunpack.c.l.b16 %v3270
        %v3370 = vunpack.c.h.b16 %v3270
        %v3371 = vunpack.c.l.b16 %v3271
        %v3372 = vunpack.c.h.b16 %v3271
        %v3373 = vunpack.c.l.b16 %v3272
        %v3374 = vunpack.c.h.b16 %v3272
        %v3375 = vpack.c.b16 %v3315, %v3311
        %v3376 = vpack.c.b16 %v3316, %v3312
        %v3377 = vpack.c.b16 %v3317, %v3313
        %v3378 = vpack.c.b16 %v3318, %v3314
        %v3379 = vpack.c.b16 %v3323, %v3319
        %v3380 = vpack.c.b16 %v3324, %v3320
        %v3381 = vpack.c.b16 %v3325, %v3321
        %v3382 = vpack.c.b16 %v3326, %v3322
        %v3383 = vpack.c.b16 %v3331, %v3327
        %v3384 = vpack.c.b16 %v3332, %v3328
        %v3385 = vpack.c.b16 %v3333, %v3329
        %v3386 = vpack.c.b16 %v3334, %v3330
        %v3387 = vpack.c.b16 %v3339, %v3335
        %v3388 = vpack.c.b16 %v3340, %v3336
        %v3389 = vpack.c.b16 %v3341, %v3337
        %v3390 = vpack.c.b16 %v3342, %v3338
        %v3391 = vpack.c.b16 %v3347, %v3343
        %v3392 = vpack.c.b16 %v3348, %v3344
        %v3393 = vpack.c.b16 %v3349, %v3345
        %v3394 = vpack.c.b16 %v3350, %v3346
        %v3395 = vpack.c.b16 %v3355, %v3351
        %v3396 = vpack.c.b16 %v3356, %v3352
        %v3397 = vpack.c.b16 %v3357, %v3353
        %v3398 = vpack.c.b16 %v3358, %v3354
        %v3399 = vpack.c.b16 %v3363, %v3359
        %v3400 = vpack.c.b16 %v3364, %v3360
        %v3401 = vpack.c.b16 %v3365, %v3361
        %v3402 = vpack.c.b16 %v3366, %v3362
        %v3403 = vpack.c.b16 %v3371, %v3367
        %v3404 = vpack.c.b16 %v3372, %v3368
        %v3405 = vpack.c.b16 %v3373, %v3369
        %v3406 = vpack.c.b16 %v3374, %v3370
        %3439 = vmatpush.bf16.msra.mxu0 %v3403
        %3440 = vmatpush.bf16.msra.mxu0 %v3399
        %3441 = vmatpush.bf16.msra.mxu0 %v3395
        %3442 = vmatpush.bf16.msra.mxu0 %v3391
        %3443 = vmatpush.bf16.msra.mxu0 %v3387
        %3444 = vmatpush.bf16.msra.mxu0 %v3383
        %3445 = vmatpush.bf16.msra.mxu0 %v3379
        %3446 = vmatpush.bf16.msra.mxu0 %v3375
        %3447 = vmatmul.bf16.gmra.mxu0 %v3277
        %v3448 = vpop.f32.mrf.mxu0
        %v3449 = vadd.f32 0.0, %v3448
        %v3450 = vpop.f32.mrf.mxu0
        %v3451 = vadd.f32 0.0, %v3450
        %3452 = vdwg.mxu0
        %3453 = vmatpush.bf16.msra.mxu0 %v3404
        %3454 = vmatpush.bf16.msra.mxu0 %v3400
        %3455 = vmatpush.bf16.msra.mxu0 %v3396
        %3456 = vmatpush.bf16.msra.mxu0 %v3392
        %3457 = vmatpush.bf16.msra.mxu0 %v3388
        %3458 = vmatpush.bf16.msra.mxu0 %v3384
        %3459 = vmatpush.bf16.msra.mxu0 %v3380
        %3460 = vmatpush.bf16.msra.mxu0 %v3376
        %3461 = vmatmul.bf16.gmra.mxu0 %v3277
        %v3462 = vpop.f32.mrf.mxu0
        %v3463 = vadd.f32 0.0, %v3462
        %v3464 = vpop.f32.mrf.mxu0
        %v3465 = vadd.f32 0.0, %v3464
        %3466 = vdwg.mxu0
        %3467 = vmatpush.bf16.msra.mxu0 %v3405
        %3468 = vmatpush.bf16.msra.mxu0 %v3401
        %3469 = vmatpush.bf16.msra.mxu0 %v3397
        %3470 = vmatpush.bf16.msra.mxu0 %v3393
        %3471 = vmatpush.bf16.msra.mxu0 %v3389
        %3472 = vmatpush.bf16.msra.mxu0 %v3385
        %3473 = vmatpush.bf16.msra.mxu0 %v3381
        %3474 = vmatpush.bf16.msra.mxu0 %v3377
        %3475 = vmatmul.bf16.gmra.mxu0 %v3277
        %v3476 = vpop.f32.mrf.mxu0
        %v3477 = vadd.f32 0.0, %v3476
        %v3478 = vpop.f32.mrf.mxu0
        %v3479 = vadd.f32 0.0, %v3478
        %3480 = vdwg.mxu0
        %3481 = vmatpush.bf16.msra.mxu0 %v3406
        %3482 = vmatpush.bf16.msra.mxu0 %v3402
        %3483 = vmatpush.bf16.msra.mxu0 %v3398
        %3484 = vmatpush.bf16.msra.mxu0 %v3394
        %3485 = vmatpush.bf16.msra.mxu0 %v3390
        %3486 = vmatpush.bf16.msra.mxu0 %v3386
        %3487 = vmatpush.bf16.msra.mxu0 %v3382
        %3488 = vmatpush.bf16.msra.mxu0 %v3378
        %3489 = vmatmul.bf16.gmra.mxu0 %v3277
        %v3490 = vpop.f32.mrf.mxu0
        %v3491 = vadd.f32 0.0, %v3490
        %v3492 = vpop.f32.mrf.mxu0
        %v3493 = vadd.f32 0.0, %v3492
        %3494 = vdwg.mxu0
        %v3495 = vadd.f32 %v3233, %v3449
        %v3496 = vadd.f32 %v3234, %v3463
        %v3497 = vadd.f32 %v3235, %v3477
        %v3498 = vadd.f32 %v3236, %v3491
        %v3499 = vadd.f32 %v3237, %v3451
        %v3500 = vadd.f32 %v3238, %v3465
        %v3501 = vadd.f32 %v3239, %v3479
        %v3502 = vadd.f32 %v3240, %v3493
        %v3503 = vxor.u32 %v3495, 2147483648
        %v3504 = vxor.u32 %v3499, 2147483648
        %v3505 = vmul.f32 %v3503, 1.442695
        %v3506 = vpow.pop %v3505
        %v3507 = vmul.f32 %v3504, 1.442695
        %v3508 = vpow.pop %v3507
        %v3509 = vadd.f32 %v3506, 1.0
        %v3510 = vadd.f32 %v3508, 1.0
        %v3511 = vrcp.pop %v3509
        %v3512 = vmul.f32 %v3509, %v3511
        %v3513 = vsub.f32 1.0, %v3512
        %v3514 = vmul.f32 %v3511, %v3513
        %v3515 = vadd.f32 %v3511, %v3514
        %vm3516 = vweird.f32 %v3509
        %vm3517 = vweird.f32 %v3511
        %vm3518 = vmor %vm3516, %vm3517
        %v3519 = vsel %vm3518, %v3511, %v3515
        %v3520 = vand.u32 2147483647, %v3509
        %vm3521 = vcmp.eq.f32.partialorder %v3520, 8.507059e+37
        %v3522 = vand.u32 %v3509, 2147483648
        %v3523 = vor.u32 1.1754944e-38, %v3522
        %v3524 = vsel %vm3521, %v3523, %v3519
        %v3525 = vmul.f32 1.0, %v3524
        %v3526 = vrcp.pop %v3510
        %v3527 = vmul.f32 %v3510, %v3526
        %v3528 = vsub.f32 1.0, %v3527
        %v3529 = vmul.f32 %v3526, %v3528
        %v3530 = vadd.f32 %v3526, %v3529
        %vm3531 = vweird.f32 %v3510
        %vm3532 = vweird.f32 %v3526
        %vm3533 = vmor %vm3531, %vm3532
        %v3534 = vsel %vm3533, %v3526, %v3530
        %v3535 = vand.u32 2147483647, %v3510
        %vm3536 = vcmp.eq.f32.partialorder %v3535, 8.507059e+37
        %v3537 = vand.u32 %v3510, 2147483648
        %v3538 = vor.u32 1.1754944e-38, %v3537
        %v3539 = vsel %vm3536, %v3538, %v3534
        %v3540 = vmul.f32 1.0, %v3539
        %v3541 = vxor.u32 %v3496, 2147483648
        %v3542 = vxor.u32 %v3500, 2147483648
        %v3543 = vmul.f32 %v3541, 1.442695
        %v3544 = vpow.pop %v3543
        %v3545 = vmul.f32 %v3542, 1.442695
        %v3546 = vpow.pop %v3545
        %v3547 = vadd.f32 %v3544, 1.0
        %v3548 = vadd.f32 %v3546, 1.0
        %v3549 = vrcp.pop %v3547
        %v3550 = vmul.f32 %v3547, %v3549
        %v3551 = vsub.f32 1.0, %v3550
        %v3552 = vmul.f32 %v3549, %v3551
        %v3553 = vadd.f32 %v3549, %v3552
        %vm3554 = vweird.f32 %v3547
        %vm3555 = vweird.f32 %v3549
        %vm3556 = vmor %vm3554, %vm3555
        %v3557 = vsel %vm3556, %v3549, %v3553
        %v3558 = vand.u32 2147483647, %v3547
        %vm3559 = vcmp.eq.f32.partialorder %v3558, 8.507059e+37
        %v3560 = vand.u32 %v3547, 2147483648
        %v3561 = vor.u32 1.1754944e-38, %v3560
        %v3562 = vsel %vm3559, %v3561, %v3557
        %v3563 = vmul.f32 1.0, %v3562
        %v3564 = vrcp.pop %v3548
        %v3565 = vmul.f32 %v3548, %v3564
        %v3566 = vsub.f32 1.0, %v3565
        %v3567 = vmul.f32 %v3564, %v3566
        %v3568 = vadd.f32 %v3564, %v3567
        %vm3569 = vweird.f32 %v3548
        %vm3570 = vweird.f32 %v3564
        %vm3571 = vmor %vm3569, %vm3570
        %v3572 = vsel %vm3571, %v3564, %v3568
        %v3573 = vand.u32 2147483647, %v3548
        %vm3574 = vcmp.eq.f32.partialorder %v3573, 8.507059e+37
        %v3575 = vand.u32 %v3548, 2147483648
        %v3576 = vor.u32 1.1754944e-38, %v3575
        %v3577 = vsel %vm3574, %v3576, %v3572
        %v3578 = vmul.f32 1.0, %v3577
        %v3579 = vtanh.pop %v3497
        %v3580 = vtanh.pop %v3501
        %v3581 = vxor.u32 %v3498, 2147483648
        %v3582 = vxor.u32 %v3502, 2147483648
        %v3583 = vmul.f32 %v3581, 1.442695
        %v3584 = vpow.pop %v3583
        %v3585 = vmul.f32 %v3582, 1.442695
        %v3586 = vpow.pop %v3585
        %v3587 = vadd.f32 %v3584, 1.0
        %v3588 = vadd.f32 %v3586, 1.0
        %v3589 = vrcp.pop %v3587
        %v3590 = vmul.f32 %v3587, %v3589
        %v3591 = vsub.f32 1.0, %v3590
        %v3592 = vmul.f32 %v3589, %v3591
        %v3593 = vadd.f32 %v3589, %v3592
        %vm3594 = vweird.f32 %v3587
        %vm3595 = vweird.f32 %v3589
        %vm3596 = vmor %vm3594, %vm3595
        %v3597 = vsel %vm3596, %v3589, %v3593
        %v3598 = vand.u32 2147483647, %v3587
        %vm3599 = vcmp.eq.f32.partialorder %v3598, 8.507059e+37
        %v3600 = vand.u32 %v3587, 2147483648
        %v3601 = vor.u32 1.1754944e-38, %v3600
        %v3602 = vsel %vm3599, %v3601, %v3597
        %v3603 = vmul.f32 1.0, %v3602
        %v3604 = vrcp.pop %v3588
        %v3605 = vmul.f32 %v3588, %v3604
        %v3606 = vsub.f32 1.0, %v3605
        %v3607 = vmul.f32 %v3604, %v3606
        %v3608 = vadd.f32 %v3604, %v3607
        %vm3609 = vweird.f32 %v3588
        %vm3610 = vweird.f32 %v3604
        %vm3611 = vmor %vm3609, %vm3610
        %v3612 = vsel %vm3611, %v3604, %v3608
        %v3613 = vand.u32 2147483647, %v3588
        %vm3614 = vcmp.eq.f32.partialorder %v3613, 8.507059e+37
        %v3615 = vand.u32 %v3588, 2147483648
        %v3616 = vor.u32 1.1754944e-38, %v3615
        %v3617 = vsel %vm3614, %v3616, %v3612
        %v3618 = vmul.f32 1.0, %v3617
        %v3619 = vmul.f32 %v3563, %v3221
        %v3620 = vmul.f32 %v3578, %v3222
        %v3621 = vmul.f32 %v3525, %v3579
        %v3622 = vmul.f32 %v3540, %v3580
        %v3623 = vadd.f32 %v3619, %v3621
        %v3624 = vadd.f32 %v3620, %v3622
        %v3625 = vtanh.pop %v3623
        %v3626 = vtanh.pop %v3624
        %v3627 = vmul.f32 %v3603, %v3625
        %v3628 = vmul.f32 %v3618, %v3626
        %v3629 = vpack.c.bf16 %v3627, %v3627
        %v3630 = vpack.c.bf16 %v3628, %v3628
        %s3631 = scalar_lea.vmem %s284, 48 [#allocation13]
        %3632 = vst [vmem:[%s3631] sm:$0xf] %v3629
        %3633 = vst [vmem:[%s3631 + $0x4] sm:$0xf] %v3630
        %s3634 = scalar_lea.vmem [#allocation4], 448
        %v3635 = vld [vmem:[%s3634] sm:$0xff]
        %v3636 = vld [vmem:[%s3634 + $0x8] sm:$0xff]
        %v3637 = vld [vmem:[%s3634 + $0x10] sm:$0xff]
        %v3638 = vld [vmem:[%s3634 + $0x18] sm:$0xff]
        %v3639 = vld [vmem:[%s3634 + $0x20] sm:$0xff]
        %v3640 = vld [vmem:[%s3634 + $0x28] sm:$0xff]
        %v3641 = vld [vmem:[%s3634 + $0x30] sm:$0xff]
        %v3642 = vld [vmem:[%s3634 + $0x38] sm:$0xff]
        %v3643 = vld [vmem:[#allocation11] sm:$0xff]
        %v3644 = vld [vmem:[#allocation11 + $0x8] sm:$0xff]
        %v3645 = vld [vmem:[#allocation11 + $0x10] sm:$0xff]
        %v3646 = vld [vmem:[#allocation11 + $0x18] sm:$0xff]
        %v3647 = vld [vmem:[#allocation11 + $0x20] sm:$0xff]
        %v3648 = vld [vmem:[#allocation11 + $0x28] sm:$0xff]
        %v3649 = vld [vmem:[#allocation11 + $0x30] sm:$0xff]
        %v3650 = vld [vmem:[#allocation11 + $0x38] sm:$0xff]
        %v3651 = vld [vmem:[#allocation11 + $0x40] sm:$0xff]
        %v3652 = vld [vmem:[#allocation11 + $0x48] sm:$0xff]
        %v3653 = vld [vmem:[#allocation11 + $0x50] sm:$0xff]
        %v3654 = vld [vmem:[#allocation11 + $0x58] sm:$0xff]
        %v3655 = vld [vmem:[#allocation11 + $0x60] sm:$0xff]
        %v3656 = vld [vmem:[#allocation11 + $0x68] sm:$0xff]
        %v3657 = vld [vmem:[#allocation11 + $0x70] sm:$0xff]
        %v3658 = vld [vmem:[#allocation11 + $0x78] sm:$0xff]
        %v3659 = vld [vmem:[#allocation11 + $0x80] sm:$0xff]
        %v3660 = vld [vmem:[#allocation11 + $0x88] sm:$0xff]
        %v3661 = vld [vmem:[#allocation11 + $0x90] sm:$0xff]
        %v3662 = vld [vmem:[#allocation11 + $0x98] sm:$0xff]
        %v3663 = vld [vmem:[#allocation11 + $0xa0] sm:$0xff]
        %v3664 = vld [vmem:[#allocation11 + $0xa8] sm:$0xff]
        %v3665 = vld [vmem:[#allocation11 + $0xb0] sm:$0xff]
        %v3666 = vld [vmem:[#allocation11 + $0xb8] sm:$0xff]
        %v3667 = vld [vmem:[#allocation11 + $0xc0] sm:$0xff]
        %v3668 = vld [vmem:[#allocation11 + $0xc8] sm:$0xff]
        %v3669 = vld [vmem:[#allocation11 + $0xd0] sm:$0xff]
        %v3670 = vld [vmem:[#allocation11 + $0xd8] sm:$0xff]
        %v3671 = vld [vmem:[#allocation11 + $0xe0] sm:$0xff]
        %v3672 = vld [vmem:[#allocation11 + $0xe8] sm:$0xff]
        %v3673 = vld [vmem:[#allocation11 + $0xf0] sm:$0xff]
        %v3674 = vld [vmem:[#allocation11 + $0xf8] sm:$0xff]
        %v3677 = vunpack.c.l.b16 %v3629
        %v3678 = vunpack.c.l.b16 %v3630
        %v3679 = vpack.c.b16 %v3678, %v3677
        %v3713 = vunpack.c.l.b16 %v3643
        %v3714 = vunpack.c.h.b16 %v3643
        %v3715 = vunpack.c.l.b16 %v3644
        %v3716 = vunpack.c.h.b16 %v3644
        %v3717 = vunpack.c.l.b16 %v3645
        %v3718 = vunpack.c.h.b16 %v3645
        %v3719 = vunpack.c.l.b16 %v3646
        %v3720 = vunpack.c.h.b16 %v3646
        %v3721 = vunpack.c.l.b16 %v3647
        %v3722 = vunpack.c.h.b16 %v3647
        %v3723 = vunpack.c.l.b16 %v3648
        %v3724 = vunpack.c.h.b16 %v3648
        %v3725 = vunpack.c.l.b16 %v3649
        %v3726 = vunpack.c.h.b16 %v3649
        %v3727 = vunpack.c.l.b16 %v3650
        %v3728 = vunpack.c.h.b16 %v3650
        %v3729 = vunpack.c.l.b16 %v3651
        %v3730 = vunpack.c.h.b16 %v3651
        %v3731 = vunpack.c.l.b16 %v3652
        %v3732 = vunpack.c.h.b16 %v3652
        %v3733 = vunpack.c.l.b16 %v3653
        %v3734 = vunpack.c.h.b16 %v3653
        %v3735 = vunpack.c.l.b16 %v3654
        %v3736 = vunpack.c.h.b16 %v3654
        %v3737 = vunpack.c.l.b16 %v3655
        %v3738 = vunpack.c.h.b16 %v3655
        %v3739 = vunpack.c.l.b16 %v3656
        %v3740 = vunpack.c.h.b16 %v3656
        %v3741 = vunpack.c.l.b16 %v3657
        %v3742 = vunpack.c.h.b16 %v3657
        %v3743 = vunpack.c.l.b16 %v3658
        %v3744 = vunpack.c.h.b16 %v3658
        %v3745 = vunpack.c.l.b16 %v3659
        %v3746 = vunpack.c.h.b16 %v3659
        %v3747 = vunpack.c.l.b16 %v3660
        %v3748 = vunpack.c.h.b16 %v3660
        %v3749 = vunpack.c.l.b16 %v3661
        %v3750 = vunpack.c.h.b16 %v3661
        %v3751 = vunpack.c.l.b16 %v3662
        %v3752 = vunpack.c.h.b16 %v3662
        %v3753 = vunpack.c.l.b16 %v3663
        %v3754 = vunpack.c.h.b16 %v3663
        %v3755 = vunpack.c.l.b16 %v3664
        %v3756 = vunpack.c.h.b16 %v3664
        %v3757 = vunpack.c.l.b16 %v3665
        %v3758 = vunpack.c.h.b16 %v3665
        %v3759 = vunpack.c.l.b16 %v3666
        %v3760 = vunpack.c.h.b16 %v3666
        %v3761 = vunpack.c.l.b16 %v3667
        %v3762 = vunpack.c.h.b16 %v3667
        %v3763 = vunpack.c.l.b16 %v3668
        %v3764 = vunpack.c.h.b16 %v3668
        %v3765 = vunpack.c.l.b16 %v3669
        %v3766 = vunpack.c.h.b16 %v3669
        %v3767 = vunpack.c.l.b16 %v3670
        %v3768 = vunpack.c.h.b16 %v3670
        %v3769 = vunpack.c.l.b16 %v3671
        %v3770 = vunpack.c.h.b16 %v3671
        %v3771 = vunpack.c.l.b16 %v3672
        %v3772 = vunpack.c.h.b16 %v3672
        %v3773 = vunpack.c.l.b16 %v3673
        %v3774 = vunpack.c.h.b16 %v3673
        %v3775 = vunpack.c.l.b16 %v3674
        %v3776 = vunpack.c.h.b16 %v3674
        %v3777 = vpack.c.b16 %v3717, %v3713
        %v3778 = vpack.c.b16 %v3718, %v3714
        %v3779 = vpack.c.b16 %v3719, %v3715
        %v3780 = vpack.c.b16 %v3720, %v3716
        %v3781 = vpack.c.b16 %v3725, %v3721
        %v3782 = vpack.c.b16 %v3726, %v3722
        %v3783 = vpack.c.b16 %v3727, %v3723
        %v3784 = vpack.c.b16 %v3728, %v3724
        %v3785 = vpack.c.b16 %v3733, %v3729
        %v3786 = vpack.c.b16 %v3734, %v3730
        %v3787 = vpack.c.b16 %v3735, %v3731
        %v3788 = vpack.c.b16 %v3736, %v3732
        %v3789 = vpack.c.b16 %v3741, %v3737
        %v3790 = vpack.c.b16 %v3742, %v3738
        %v3791 = vpack.c.b16 %v3743, %v3739
        %v3792 = vpack.c.b16 %v3744, %v3740
        %v3793 = vpack.c.b16 %v3749, %v3745
        %v3794 = vpack.c.b16 %v3750, %v3746
        %v3795 = vpack.c.b16 %v3751, %v3747
        %v3796 = vpack.c.b16 %v3752, %v3748
        %v3797 = vpack.c.b16 %v3757, %v3753
        %v3798 = vpack.c.b16 %v3758, %v3754
        %v3799 = vpack.c.b16 %v3759, %v3755
        %v3800 = vpack.c.b16 %v3760, %v3756
        %v3801 = vpack.c.b16 %v3765, %v3761
        %v3802 = vpack.c.b16 %v3766, %v3762
        %v3803 = vpack.c.b16 %v3767, %v3763
        %v3804 = vpack.c.b16 %v3768, %v3764
        %v3805 = vpack.c.b16 %v3773, %v3769
        %v3806 = vpack.c.b16 %v3774, %v3770
        %v3807 = vpack.c.b16 %v3775, %v3771
        %v3808 = vpack.c.b16 %v3776, %v3772
        %3841 = vmatpush.bf16.msra.mxu0 %v3805
        %3842 = vmatpush.bf16.msra.mxu0 %v3801
        %3843 = vmatpush.bf16.msra.mxu0 %v3797
        %3844 = vmatpush.bf16.msra.mxu0 %v3793
        %3845 = vmatpush.bf16.msra.mxu0 %v3789
        %3846 = vmatpush.bf16.msra.mxu0 %v3785
        %3847 = vmatpush.bf16.msra.mxu0 %v3781
        %3848 = vmatpush.bf16.msra.mxu0 %v3777
        %3849 = vmatmul.bf16.gmra.mxu0 %v3679
        %v3850 = vpop.f32.mrf.mxu0
        %v3851 = vadd.f32 0.0, %v3850
        %v3852 = vpop.f32.mrf.mxu0
        %v3853 = vadd.f32 0.0, %v3852
        %3854 = vdwg.mxu0
        %3855 = vmatpush.bf16.msra.mxu0 %v3806
        %3856 = vmatpush.bf16.msra.mxu0 %v3802
        %3857 = vmatpush.bf16.msra.mxu0 %v3798
        %3858 = vmatpush.bf16.msra.mxu0 %v3794
        %3859 = vmatpush.bf16.msra.mxu0 %v3790
        %3860 = vmatpush.bf16.msra.mxu0 %v3786
        %3861 = vmatpush.bf16.msra.mxu0 %v3782
        %3862 = vmatpush.bf16.msra.mxu0 %v3778
        %3863 = vmatmul.bf16.gmra.mxu0 %v3679
        %v3864 = vpop.f32.mrf.mxu0
        %v3865 = vadd.f32 0.0, %v3864
        %v3866 = vpop.f32.mrf.mxu0
        %v3867 = vadd.f32 0.0, %v3866
        %3868 = vdwg.mxu0
        %3869 = vmatpush.bf16.msra.mxu0 %v3807
        %3870 = vmatpush.bf16.msra.mxu0 %v3803
        %3871 = vmatpush.bf16.msra.mxu0 %v3799
        %3872 = vmatpush.bf16.msra.mxu0 %v3795
        %3873 = vmatpush.bf16.msra.mxu0 %v3791
        %3874 = vmatpush.bf16.msra.mxu0 %v3787
        %3875 = vmatpush.bf16.msra.mxu0 %v3783
        %3876 = vmatpush.bf16.msra.mxu0 %v3779
        %3877 = vmatmul.bf16.gmra.mxu0 %v3679
        %v3878 = vpop.f32.mrf.mxu0
        %v3879 = vadd.f32 0.0, %v3878
        %v3880 = vpop.f32.mrf.mxu0
        %v3881 = vadd.f32 0.0, %v3880
        %3882 = vdwg.mxu0
        %3883 = vmatpush.bf16.msra.mxu0 %v3808
        %3884 = vmatpush.bf16.msra.mxu0 %v3804
        %3885 = vmatpush.bf16.msra.mxu0 %v3800
        %3886 = vmatpush.bf16.msra.mxu0 %v3796
        %3887 = vmatpush.bf16.msra.mxu0 %v3792
        %3888 = vmatpush.bf16.msra.mxu0 %v3788
        %3889 = vmatpush.bf16.msra.mxu0 %v3784
        %3890 = vmatpush.bf16.msra.mxu0 %v3780
        %3891 = vmatmul.bf16.gmra.mxu0 %v3679
        %v3892 = vpop.f32.mrf.mxu0
        %v3893 = vadd.f32 0.0, %v3892
        %v3894 = vpop.f32.mrf.mxu0
        %v3895 = vadd.f32 0.0, %v3894
        %3896 = vdwg.mxu0
        %v3897 = vadd.f32 %v3635, %v3851
        %v3898 = vadd.f32 %v3636, %v3865
        %v3899 = vadd.f32 %v3637, %v3879
        %v3900 = vadd.f32 %v3638, %v3893
        %v3901 = vadd.f32 %v3639, %v3853
        %v3902 = vadd.f32 %v3640, %v3867
        %v3903 = vadd.f32 %v3641, %v3881
        %v3904 = vadd.f32 %v3642, %v3895
        %v3905 = vxor.u32 %v3897, 2147483648
        %v3906 = vxor.u32 %v3901, 2147483648
        %v3907 = vmul.f32 %v3905, 1.442695
        %v3908 = vpow.pop %v3907
        %v3909 = vmul.f32 %v3906, 1.442695
        %v3910 = vpow.pop %v3909
        %v3911 = vadd.f32 %v3908, 1.0
        %v3912 = vadd.f32 %v3910, 1.0
        %v3913 = vrcp.pop %v3911
        %v3914 = vmul.f32 %v3911, %v3913
        %v3915 = vsub.f32 1.0, %v3914
        %v3916 = vmul.f32 %v3913, %v3915
        %v3917 = vadd.f32 %v3913, %v3916
        %vm3918 = vweird.f32 %v3911
        %vm3919 = vweird.f32 %v3913
        %vm3920 = vmor %vm3918, %vm3919
        %v3921 = vsel %vm3920, %v3913, %v3917
        %v3922 = vand.u32 2147483647, %v3911
        %vm3923 = vcmp.eq.f32.partialorder %v3922, 8.507059e+37
        %v3924 = vand.u32 %v3911, 2147483648
        %v3925 = vor.u32 1.1754944e-38, %v3924
        %v3926 = vsel %vm3923, %v3925, %v3921
        %v3927 = vmul.f32 1.0, %v3926
        %v3928 = vrcp.pop %v3912
        %v3929 = vmul.f32 %v3912, %v3928
        %v3930 = vsub.f32 1.0, %v3929
        %v3931 = vmul.f32 %v3928, %v3930
        %v3932 = vadd.f32 %v3928, %v3931
        %vm3933 = vweird.f32 %v3912
        %vm3934 = vweird.f32 %v3928
        %vm3935 = vmor %vm3933, %vm3934
        %v3936 = vsel %vm3935, %v3928, %v3932
        %v3937 = vand.u32 2147483647, %v3912
        %vm3938 = vcmp.eq.f32.partialorder %v3937, 8.507059e+37
        %v3939 = vand.u32 %v3912, 2147483648
        %v3940 = vor.u32 1.1754944e-38, %v3939
        %v3941 = vsel %vm3938, %v3940, %v3936
        %v3942 = vmul.f32 1.0, %v3941
        %v3943 = vxor.u32 %v3898, 2147483648
        %v3944 = vxor.u32 %v3902, 2147483648
        %v3945 = vmul.f32 %v3943, 1.442695
        %v3946 = vpow.pop %v3945
        %v3947 = vmul.f32 %v3944, 1.442695
        %v3948 = vpow.pop %v3947
        %v3949 = vadd.f32 %v3946, 1.0
        %v3950 = vadd.f32 %v3948, 1.0
        %v3951 = vrcp.pop %v3949
        %v3952 = vmul.f32 %v3949, %v3951
        %v3953 = vsub.f32 1.0, %v3952
        %v3954 = vmul.f32 %v3951, %v3953
        %v3955 = vadd.f32 %v3951, %v3954
        %vm3956 = vweird.f32 %v3949
        %vm3957 = vweird.f32 %v3951
        %vm3958 = vmor %vm3956, %vm3957
        %v3959 = vsel %vm3958, %v3951, %v3955
        %v3960 = vand.u32 2147483647, %v3949
        %vm3961 = vcmp.eq.f32.partialorder %v3960, 8.507059e+37
        %v3962 = vand.u32 %v3949, 2147483648
        %v3963 = vor.u32 1.1754944e-38, %v3962
        %v3964 = vsel %vm3961, %v3963, %v3959
        %v3965 = vmul.f32 1.0, %v3964
        %v3966 = vrcp.pop %v3950
        %v3967 = vmul.f32 %v3950, %v3966
        %v3968 = vsub.f32 1.0, %v3967
        %v3969 = vmul.f32 %v3966, %v3968
        %v3970 = vadd.f32 %v3966, %v3969
        %vm3971 = vweird.f32 %v3950
        %vm3972 = vweird.f32 %v3966
        %vm3973 = vmor %vm3971, %vm3972
        %v3974 = vsel %vm3973, %v3966, %v3970
        %v3975 = vand.u32 2147483647, %v3950
        %vm3976 = vcmp.eq.f32.partialorder %v3975, 8.507059e+37
        %v3977 = vand.u32 %v3950, 2147483648
        %v3978 = vor.u32 1.1754944e-38, %v3977
        %v3979 = vsel %vm3976, %v3978, %v3974
        %v3980 = vmul.f32 1.0, %v3979
        %v3981 = vtanh.pop %v3899
        %v3982 = vtanh.pop %v3903
        %v3983 = vxor.u32 %v3900, 2147483648
        %v3984 = vxor.u32 %v3904, 2147483648
        %v3985 = vmul.f32 %v3983, 1.442695
        %v3986 = vpow.pop %v3985
        %v3987 = vmul.f32 %v3984, 1.442695
        %v3988 = vpow.pop %v3987
        %v3989 = vadd.f32 %v3986, 1.0
        %v3990 = vadd.f32 %v3988, 1.0
        %v3991 = vrcp.pop %v3989
        %v3992 = vmul.f32 %v3989, %v3991
        %v3993 = vsub.f32 1.0, %v3992
        %v3994 = vmul.f32 %v3991, %v3993
        %v3995 = vadd.f32 %v3991, %v3994
        %vm3996 = vweird.f32 %v3989
        %vm3997 = vweird.f32 %v3991
        %vm3998 = vmor %vm3996, %vm3997
        %v3999 = vsel %vm3998, %v3991, %v3995
        %v4000 = vand.u32 2147483647, %v3989
        %vm4001 = vcmp.eq.f32.partialorder %v4000, 8.507059e+37
        %v4002 = vand.u32 %v3989, 2147483648
        %v4003 = vor.u32 1.1754944e-38, %v4002
        %v4004 = vsel %vm4001, %v4003, %v3999
        %v4005 = vmul.f32 1.0, %v4004
        %v4006 = vrcp.pop %v3990
        %v4007 = vmul.f32 %v3990, %v4006
        %v4008 = vsub.f32 1.0, %v4007
        %v4009 = vmul.f32 %v4006, %v4008
        %v4010 = vadd.f32 %v4006, %v4009
        %vm4011 = vweird.f32 %v3990
        %vm4012 = vweird.f32 %v4006
        %vm4013 = vmor %vm4011, %vm4012
        %v4014 = vsel %vm4013, %v4006, %v4010
        %v4015 = vand.u32 2147483647, %v3990
        %vm4016 = vcmp.eq.f32.partialorder %v4015, 8.507059e+37
        %v4017 = vand.u32 %v3990, 2147483648
        %v4018 = vor.u32 1.1754944e-38, %v4017
        %v4019 = vsel %vm4016, %v4018, %v4014
        %v4020 = vmul.f32 1.0, %v4019
        %v4021 = vmul.f32 %v3965, %v3623
        %v4022 = vmul.f32 %v3980, %v3624
        %v4023 = vmul.f32 %v3927, %v3981
        %v4024 = vmul.f32 %v3942, %v3982
        %v4025 = vadd.f32 %v4021, %v4023
        %v4026 = vadd.f32 %v4022, %v4024
        %v4027 = vtanh.pop %v4025
        %v4028 = vtanh.pop %v4026
        %v4029 = vmul.f32 %v4005, %v4027
        %v4030 = vmul.f32 %v4020, %v4028
        %v4031 = vpack.c.bf16 %v4029, %v4029
        %v4032 = vpack.c.bf16 %v4030, %v4030
        %s4033 = scalar_lea.vmem %s284, 56 [#allocation13]
        %4034 = vst [vmem:[%s4033] sm:$0xf] %v4031
        %4035 = vst [vmem:[%s4033 + $0x4] sm:$0xf] %v4032
        %4036 = vst [vmem:[#allocation2] sm:$0xff] %v4029
        %4037 = vst [vmem:[#allocation2 + $0x8] sm:$0xff] %v4030
        %4038 = vst [vmem:[#allocation3] sm:$0xff] %v4025
        %4039 = vst [vmem:[#allocation3 + $0x8] sm:$0xff] %v4026
        %s4040 = sand.u32 %s136, 1
        %s4041 = scalar_lea.sflag [#allocation7], %s4040
        %s4042 = sand.u32 %s136, 1
        %s4043 = smul.addr %s4042, 64
        %s4044 = scalar_lea.vmem [#allocation13], %s4043
        // Predicated region
        $region57: #{tpu_custom_call.1} parent=35 // pred_check
          %p4045 = pneg %p146
        $region58: #{tpu_custom_call.1} parent=35 // pred_check_branch
          %4047 = sbr.rel (%p4045) target = $region60
        $region59: #{tpu_custom_call.1} parent=35 // pred_region
          %s4048 = smul.u32 8, %s28
          %s4049 = smul.u32 2, %s27
          %4051 = vsyncadd %s4041, 0
          %s4052 = smul.addr %s4048, 2
          %s4053 = sadd.s32 %s4049, %s4052
          %s4054 = smul.addr %s4053, 4
          %s4055 = scalar_lea.hbm %s4, %s4054
          %s4056 = sshll.u32 %s4044, 4
          %s4057 = int_to_ptr.vmem [resolvable:$true] %s4056
          %s4058 = sshll.u32 %s4055, 4
          %s4059 = int_to_ptr.hbm [resolvable:$true] %s4058
          %4064 = dma.vmem_to_hbm [thread:$0]  %s4057, 1024, %s4059, %s4041, 64, 64, 4
        $region60: #{tpu_custom_call.1} parent=35 // pred_fallthru
          _
      $region36: #{tpu_custom_call.1} parent=5 // pred_fallthru
        _
      %p4065 = scmp.le.s32.totalorder 2, %s18
      // Predicated region
      $region61: #{tpu_custom_call.1} parent=5 // pred_check
        %p4066 = pneg %p4065
      $region62: #{tpu_custom_call.1} parent=5 // pred_check_branch
        %4068 = sbr.rel (%p4066) target = $region64
      $region63: #{tpu_custom_call.1} parent=5 // pred_region
        %s4069 = ssub.s32 %s18, 2
        // Predicated region
        $region65: #{tpu_custom_call.1} parent=63 // pred_check
          %p4070 = pneg %p152
        $region66: #{tpu_custom_call.1} parent=63 // pred_check_branch
          %4072 = sbr.rel (%p4070) target = $region68
        $region67: #{tpu_custom_call.1} parent=63 // pred_region
          %s4073 = sand.u32 %s137, 1
          %s4074 = scalar_lea.sflag [#allocation7], %s4073
          %s4075 = sand.u32 %s137, 1
          %s4076 = smul.addr %s4075, 64
          %s4077 = scalar_lea.vmem [#allocation13], %s4076
          %4079 = dma.done %s4074, 1024
        $region68: #{tpu_custom_call.1} parent=63 // pred_fallthru
          _
      $region64: #{tpu_custom_call.1} parent=5 // pred_fallthru
        _
    $region6: #{tpu_custom_call.1} parent=1 // loop_footer
      %s22 = sadd.s32 1, %s18
    $region7: #{tpu_custom_call.1} parent=1 // loop_footer_branch
      %17 = sbr.rel target = $region3
    $region8: #{tpu_custom_call.1} parent=1 // loop_exit
      _
    %4080 = vsyncpa [#allocation6], 1
    %s4081 = scalar_lea.sflag [#allocation6], 1
    %4082 = vsyncpa %s4081, 1
    %4083 = vsyncpa [#allocation9], 1
    %4084 = vsyncpa [#allocation12], 1
    %4085 = vsyncpa [#allocation7], 1
    %s4086 = scalar_lea.sflag [#allocation7], 1
    %4087 = vsyncpa %s4086, 1

</llo_original>
